<compile_context>
chip_gen: v6e
topology: v6e:2x2x1
jax: 0.10.0
libtpu: 0.0.40
codegen_flags: <defaults>
</compile_context>

<pallas_src>
import functools
import numpy as np
import jax
import jax.numpy as jnp
from jax import lax
from jax.experimental import pallas as pl
from jax.experimental.pallas import tpu as pltpu

F32 = jnp.float32
BF16 = jnp.bfloat16
LANE = 128          # feature dim padded to a lane-dense multiple
TM = 512            # adjacency row tile
TK = 1024           # adjacency contraction tile
NODE_PAD = 1024     # lcm(TM, TK): node counts padded to this multiple
TM_MIX = 512        # row tile for the semantic-mix kernel
SSL_TILE = 256      # row/col tile for the ssl kernel


def _round_up(x, m):
    return ((x + m - 1) // m) * m


def _pad_rows_to(x, n):
    if x.shape[0] == n:
        return x
    pad = [(0, n - x.shape[0])] + [(0, 0)] * (x.ndim - 1)
    return jnp.pad(x, pad)


# ----------------------------------------------------------------------------
# Disen: fused (G @ cur) + intent disentanglement + residual, per layer.
# Accumulates straight into the resident f32 output block (no scratch).
# ----------------------------------------------------------------------------
def _disen_layer_kernel(g_ref, curk_ref, curr_ref, w_ref, out_ref,
                        *, n_users, n_intents):
    i = pl.program_id(0)          # hoisted: never call program_id inside when
    k = pl.program_id(1)
    nk = pl.num_programs(1)
    tm = out_ref.shape[0]
    row = i * tm + lax.broadcasted_iota(jnp.int32, (tm, 1), 0)

    @pl.when(k == 0)
    def _init():
        out_ref[...] = jnp.zeros_like(out_ref)

    out_ref[...] += jnp.dot(g_ref[...], curk_ref[...].astype(BF16),
                            preferred_element_type=F32)

    @pl.when(k == nk - 1)
    def _epilogue():
        x = curr_ref[...]                              # (tm, Dp) f32
        xb = x.astype(BF16)
        wb = w_ref[...].astype(BF16)                   # (Dp, 2*NI), resident
        logits = jnp.dot(xb, wb, preferred_element_type=F32)   # one MXU call

        def _softmax(l):
            m = jnp.max(l, axis=1, keepdims=True)
            e = jnp.exp(l - m)
            return e / jnp.sum(e, axis=1, keepdims=True)

        is_user = row < n_users
        pu = jnp.where(is_user, _softmax(logits[:, :n_intents]), 0.0)
        pi = jnp.where(is_user, 0.0, _softmax(logits[:, n_intents:]))
        dn = (((1,), (1,)), ((), ()))                  # p @ W.T, no transpose
        intl = lax.dot_general(pu.astype(BF16), wb[:, :n_intents], dn,
                               preferred_element_type=F32)
        intl += lax.dot_general(pi.astype(BF16), wb[:, n_intents:], dn,
                                preferred_element_type=F32)
        out_ref[...] += intl + x                       # gnn + intent + residual


def disen_layer(G_pad_bf16, cur_pad, w_cat, n_users):
    npad, dp = cur_pad.shape
    n_intents = w_cat.shape[1] // 2
    grid = (npad // TM, npad // TK)
    return pl.pallas_call(
        functools.partial(_disen_layer_kernel,
                          n_users=n_users, n_intents=n_intents),
        out_shape=jax.ShapeDtypeStruct((npad, dp), F32),
        grid=grid,
        in_specs=[
            pl.BlockSpec((TM, TK), lambda i, k: (i, k)),       # G tile (bf16)
            pl.BlockSpec((TK, dp), lambda i, k: (k, 0)),       # cur (contraction)
            pl.BlockSpec((TM, dp), lambda i, k: (i, 0)),       # cur (intent/resid)
            pl.BlockSpec((dp, 2 * n_intents), lambda i, k: (0, 0)),  # intents
        ],
        out_specs=pl.BlockSpec((TM, dp), lambda i, k: (i, 0)),
        compiler_params=pltpu.CompilerParams(
            dimension_semantics=("parallel", "arbitrary")),
    )(G_pad_bf16, cur_pad, cur_pad, w_cat)


# ----------------------------------------------------------------------------
# HAN GraphConv: sems[m] = A_norm[m] @ h, bf16 output, f32 VMEM accumulator.
# ----------------------------------------------------------------------------
def _han_conv_kernel(adj_ref, h_ref, sem_ref, acc_ref):
    k = pl.program_id(2)
    nk = pl.num_programs(2)

    @pl.when(k == 0)
    def _init():
        acc_ref[...] = jnp.zeros_like(acc_ref)

    acc_ref[...] += jnp.dot(adj_ref[0], h_ref[...].astype(BF16),
                            preferred_element_type=F32)

    @pl.when(k == nk - 1)
    def _store():
        sem_ref[0] = acc_ref[...].astype(sem_ref.dtype)


def han_conv(adjs_pad_bf16, h_pad):
    M, npad, _ = adjs_pad_bf16.shape
    dp = h_pad.shape[1]
    grid = (M, npad // TM, npad // TK)
    return pl.pallas_call(
        _han_conv_kernel,
        out_shape=jax.ShapeDtypeStruct((M, npad, dp), BF16),
        grid=grid,
        in_specs=[
            pl.BlockSpec((1, TM, TK), lambda m, i, k: (m, i, k)),
            pl.BlockSpec((TK, dp), lambda m, i, k: (k, 0)),
        ],
        out_specs=pl.BlockSpec((1, TM, dp), lambda m, i, k: (m, i, 0)),
        scratch_shapes=[pltpu.VMEM((TM, dp), F32)],
        compiler_params=pltpu.CompilerParams(
            dimension_semantics=("parallel", "parallel", "arbitrary")),
    )(adjs_pad_bf16, h_pad)


# ----------------------------------------------------------------------------
# Semantic-attention scores (M scalars) computed in JAX glue from sems.
# ----------------------------------------------------------------------------
def semantic_scores(sems_bf16, w1, b1, w2, n_valid):
    z = sems_bf16[:, :n_valid, :].astype(F32)                   # (M, n, Dp)
    h = jnp.tanh(jnp.einsum("mnd,dh->mnh", z, w1) + b1)         # (M, n, H)
    s = jnp.einsum("mnh,h->mn", h, w2[0])                       # (M, n)
    return jax.nn.softmax(jnp.mean(s, axis=1), axis=0)          # beta (M,)


# ----------------------------------------------------------------------------
# Weighted metapath mix h2 = sum_m beta[m]*sems[m] and 0.5*disen + 0.5*h2.
# ----------------------------------------------------------------------------
def _sem_mix_kernel(beta_ref, sems_ref, disen_ref, h2_ref, mix_ref):
    n_meta = sems_ref.shape[0]
    acc = sems_ref[0].astype(F32) * beta_ref[0]                 # (tm,Dp)*(1,Dp)
    for m in range(1, n_meta):
        acc = acc + sems_ref[m].astype(F32) * beta_ref[m]
    h2_ref[...] = acc
    mix_ref[...] = 0.5 * disen_ref[...] + 0.5 * acc


def semantic_mix(sems_bf16, beta, disen_pad):
    M, npad, dp = sems_bf16.shape
    beta_b = jnp.broadcast_to(beta.reshape(M, 1, 1).astype(F32), (M, 1, dp))
    grid = (npad // TM_MIX,)
    return pl.pallas_call(
        _sem_mix_kernel,
        out_shape=(jax.ShapeDtypeStruct((npad, dp), F32),
                   jax.ShapeDtypeStruct((npad, dp), F32)),
        grid=grid,
        in_specs=[
            pl.BlockSpec((M, 1, dp), lambda i: (0, 0, 0)),
            pl.BlockSpec((M, TM_MIX, dp), lambda i: (0, i, 0)),
            pl.BlockSpec((TM_MIX, dp), lambda i: (i, 0)),
        ],
        out_specs=(pl.BlockSpec((TM_MIX, dp), lambda i: (i, 0)),
                   pl.BlockSpec((TM_MIX, dp), lambda i: (i, 0))),
        compiler_params=pltpu.CompilerParams(
            dimension_semantics=("parallel",)),
    )(beta_b, sems_bf16, disen_pad)


# ----------------------------------------------------------------------------
# InfoNCE ssl_loss: tiled over (rows, cols).  Per-row partial losses are
# written out (row axis "parallel"), BxB similarity never hits HBM.
# ----------------------------------------------------------------------------
def _ssl_kernel(e1_ref, e2r_ref, e2c_ref, out_ref, acc_ref, n1_ref, *, b_real):
    i = pl.program_id(0)
    j = pl.program_id(1)
    nj = pl.num_programs(1)
    tr = out_ref.shape[0]
    tc = e2c_ref.shape[0]
    row = i * tr + lax.broadcasted_iota(jnp.int32, (tr, 1), 0)
    col = j * tc + lax.broadcasted_iota(jnp.int32, (1, tc), 1)

    @pl.when(j == 0)
    def _init():
        e1 = e1_ref[...]
        n1_ref[...] = e1 * lax.rsqrt(
            jnp.maximum(jnp.sum(e1 * e1, axis=1, keepdims=True), 1e-12))
        acc_ref[...] = jnp.zeros_like(acc_ref)

    n1 = n1_ref[...]
    e2c = e2c_ref[...]
    n2c = e2c * lax.rsqrt(
        jnp.maximum(jnp.sum(e2c * e2c, axis=1, keepdims=True), 1e-12))
    sim = lax.dot_general(n1.astype(BF16), n2c.astype(BF16),
                          (((1,), (1,)), ((), ())),
                          preferred_element_type=F32)           # (tr, tc)
    acc_ref[...] += jnp.sum(jnp.where(col < b_real, jnp.exp(sim * 2.0), 0.0),
                            axis=1, keepdims=True)

    @pl.when(j == nj - 1)
    def _finalize():
        e2r = e2r_ref[...]
        n2r = e2r * lax.rsqrt(
            jnp.maximum(jnp.sum(e2r * e2r, axis=1, keepdims=True), 1e-12))
        pos = jnp.sum(n1 * n2r, axis=1, keepdims=True)          # (tr, 1)
        out_ref[...] = jnp.where(row < b_real,
                                 2.0 * pos - jnp.log(acc_ref[...]), 0.0)


def ssl_loss(data1, data2, index_unique):
    e1 = jnp.take(data1, index_unique, axis=0)
    e2 = jnp.take(data2, index_unique, axis=0)
    b = int(e1.shape[0])
    dp = e1.shape[1]
    bpad = _round_up(b, SSL_TILE)
    e1p = _pad_rows_to(e1, bpad)
    e2p = _pad_rows_to(e2, bpad)
    grid = (bpad // SSL_TILE, bpad // SSL_TILE)
    per_row = pl.pallas_call(
        functools.partial(_ssl_kernel, b_real=b),
        out_shape=jax.ShapeDtypeStruct((bpad, 1), F32),
        grid=grid,
        in_specs=[
            pl.BlockSpec((SSL_TILE, dp), lambda i, j: (i, 0)),   # view-1 rows
            pl.BlockSpec((SSL_TILE, dp), lambda i, j: (i, 0)),   # matching view-2 rows
            pl.BlockSpec((SSL_TILE, dp), lambda i, j: (j, 0)),   # view-2 column tiles
        ],
        out_specs=pl.BlockSpec((SSL_TILE, 1), lambda i, j: (i, 0)),
        scratch_shapes=[pltpu.VMEM((SSL_TILE, 1), F32),
                        pltpu.VMEM((SSL_TILE, dp), F32)],
        compiler_params=pltpu.CompilerParams(
            dimension_semantics=("parallel", "arbitrary")),
    )(e1p, e2p, e2p)
    return -jnp.sum(per_row) / b


# ----------------------------------------------------------------------------
# Synthetic graph construction (replaces DGL graph / torch_sparse spspmm).
# ----------------------------------------------------------------------------
def build_graphs(n_users, n_items):
    A_ui = np.zeros((n_users, n_items), np.float32)
    for u in range(n_users):
        A_ui[u, u % n_items] = 1.0
        A_ui[u, (u + 3) % n_items] = 1.0

    n_nodes = n_users + n_items
    A = np.zeros((n_nodes, n_nodes), np.float32)
    A[:n_users, n_users:] = A_ui
    A[n_users:, :n_users] = A_ui.T

    def sym_norm(M):
        d = M.sum(1)
        d_inv = np.where(d > 0.0, d, 1.0) ** -0.5
        return (d_inv[:, None] * M * d_inv[None, :]).astype(np.float32)

    G = sym_norm(A)                                    # D^-1/2 A D^-1/2

    A_uu_1 = (A_ui @ A_ui.T > 0).astype(np.float32)    # U-I-U
    A_uu_2 = (A_uu_1 @ A_uu_1 > 0).astype(np.float32)  # (U-I-U)^2
    A_ii_1 = (A_ui.T @ A_ui > 0).astype(np.float32)    # I-U-I
    A_ii_2 = (A_ii_1 @ A_ii_1 > 0).astype(np.float32)  # (I-U-I)^2

    user_adjs = np.stack([sym_norm(A_uu_1), sym_norm(A_uu_2)], axis=0)
    item_adjs = np.stack([sym_norm(A_ii_1), sym_norm(A_ii_2)], axis=0)
    return jnp.asarray(G), jnp.asarray(user_adjs), jnp.asarray(item_adjs)


# ----------------------------------------------------------------------------
# Deterministic parameter init + lane padding helpers
# ----------------------------------------------------------------------------
def xavier_uniform(key, shape):
    fan_in, fan_out = shape[1], shape[0]
    bound = float(np.sqrt(6.0 / (fan_in + fan_out)))
    return jax.random.uniform(key, shape, F32, -bound, bound)


def xavier_normal(key, shape):
    std = float(np.sqrt(2.0 / (shape[0] + shape[1])))
    return std * jax.random.normal(key, shape, F32)


def pad_cols(x, d_pad):
    return x if x.shape[1] == d_pad else jnp.pad(x, ((0, 0), (0, d_pad - x.shape[1])))


def pad_rows(x, d_pad):
    return x if x.shape[0] == d_pad else jnp.pad(x, ((0, d_pad - x.shape[0]), (0, 0)))


# ----------------------------------------------------------------------------
# BHGCL forward
# ----------------------------------------------------------------------------
def bhgcl_forward(params, G, user_adjs, item_adjs,
                  user_idx, item_idx, neg_item_idx,
                  n_users, n_items, in_size, n_layers=2):
    dp = params["feat_user"].shape[1]

    # ---- Disen (intent-disentangled light GCN), fused per layer ----
    n_nodes = n_users + n_items
    npad = _round_up(n_nodes, NODE_PAD)
    G_pad = jnp.pad(G, ((0, npad - n_nodes), (0, npad - n_nodes))).astype(BF16)
    cur = _pad_rows_to(
        jnp.concatenate([params["feat_user"], params["feat_item"]], axis=0), npad)
    w_cat = jnp.concatenate([params["user_intent"], params["item_intent"]], axis=1)

    summed = cur
    for _ in range(n_layers):
        cur = disen_layer(G_pad, cur, w_cat, n_users)
        summed = summed + cur                          # stack + sum(dim=1)
    ua_embedding = summed[:n_users]
    ia_embedding = summed[n_users:n_nodes]

    # ---- HAN layers (GraphConv + SemanticAttention, han_layers = 1) ----
    def han_branch(adjs, feat, w1, b1, w2, disen_part, n_real):
        nupad = _round_up(n_real, NODE_PAD)
        adjs_pad = jnp.pad(
            adjs, ((0, 0),
                   (0, nupad - adjs.shape[1]),
                   (0, nupad - adjs.shape[2]))).astype(BF16)
        h_pad = _pad_rows_to(feat, nupad)
        sems = han_conv(adjs_pad, h_pad)                       # (M, nupad, Dp) bf16
        beta = semantic_scores(sems, w1, b1, w2, n_real)       # (M,)
        h2_pad, mix_pad = semantic_mix(sems, beta, _pad_rows_to(disen_part, nupad))
        return h2_pad[:n_real], mix_pad[:n_real]

    h2_user, user_emb = han_branch(user_adjs, params["feat_user"],
                                   params["han_user_w1"], params["han_user_b1"],
                                   params["han_user_w2"], ua_embedding, n_users)
    h2_item, item_emb = han_branch(item_adjs, params["feat_item"],
                                   params["han_item_w1"], params["han_item_b1"],
                                   params["han_item_w2"], ia_embedding, n_items)

    # ---- SSL losses (torch.unique done host-side as glue) ----
    uniq_u = jnp.asarray(np.unique(np.asarray(user_idx)), jnp.int32)
    uniq_i = jnp.asarray(np.unique(np.asarray(item_idx)), jnp.int32)
    ssl = ssl_loss(h2_user, ua_embedding, uniq_u) + \
          ssl_loss(h2_item, ia_embedding, uniq_i)

    # TODO(synk): Contrast_IB submodule source not provided; its BPR/IB scores
    # and regularizers cannot be reproduced, returned as zeros.
    zero = jnp.zeros((), F32)

    u_out = jnp.take(user_emb, user_idx, axis=0)[:, :in_size]
    p_out = jnp.take(item_emb, item_idx, axis=0)[:, :in_size]
    n_out = jnp.take(item_emb, neg_item_idx, axis=0)[:, :in_size]
    return (u_out, p_out, n_out,
            zero,      # bpr_loss_edge_drop + bpr_loss_node_drop
            zero,      # sum of unique-score terms
            zero,      # edge_reg + node_reg
            ssl)


# ----------------------------------------------------------------------------
if __name__ == "__main__":
    n_users, n_items = 8, 8
    in_size = 32            # emb_dim / in_size / out_size (num_heads = 1)
    n_intents = 128
    hidden = 128            # SemanticAttention hidden_size
    d_pad = _round_up(in_size, LANE)     # lane-dense padded feature dim (128)

    key = jax.random.PRNGKey(0)
    ks = jax.random.split(key, 10)
    params = {
        "feat_user":   pad_cols(xavier_uniform(ks[0], (n_users, in_size)), d_pad),
        "feat_item":   pad_cols(xavier_uniform(ks[1], (n_items, in_size)), d_pad),
        "user_intent": pad_rows(xavier_normal(ks[2], (in_size, n_intents)), d_pad),
        "item_intent": pad_rows(xavier_normal(ks[3], (in_size, n_intents)), d_pad),
        "han_user_w1": pad_rows(xavier_uniform(ks[4], (in_size, hidden)), d_pad),
        "han_user_b1": 0.01 * jax.random.normal(ks[5], (1, hidden), F32),
        "han_user_w2": xavier_uniform(ks[6], (1, hidden)),
        "han_item_w1": pad_rows(xavier_uniform(ks[7], (in_size, hidden)), d_pad),
        "han_item_b1": 0.01 * jax.random.normal(ks[8], (1, hidden), F32),
        "han_item_w2": xavier_uniform(ks[9], (1, hidden)),
    }

    G, user_adjs, item_adjs = build_graphs(n_users, n_items)

    user_idx = jnp.asarray([0, 1, 2, 3], jnp.int32)
    item_idx = jnp.asarray([1, 2, 3, 4], jnp.int32)
    neg_item_idx = jnp.asarray([5, 6, 7, 0], jnp.int32)

    outs = bhgcl_forward(params, G, user_adjs, item_adjs,
                         user_idx, item_idx, neg_item_idx,
                         n_users, n_items, in_size)
    jax.block_until_ready(outs)
    print("KERNEL_OK")
</pallas_src>

<mosaic_0001>
module attributes {stable_mosaic.version = 11 : i64} {
  func.func @_disen_layer_kernel(%arg0: i32, %arg1: i32, %arg2: memref<512x1024xbf16, #tpu.memory_space<vmem>>, %arg3: memref<1024x128xf32, #tpu.memory_space<vmem>>, %arg4: memref<512x128xf32, #tpu.memory_space<vmem>>, %arg5: memref<128x256xf32, #tpu.memory_space<vmem>>, %arg6: memref<512x128xf32, #tpu.memory_space<vmem>>) attributes {dimension_semantics = [#tpu.dimension_semantics<parallel>, #tpu.dimension_semantics<arbitrary>], iteration_bounds = array<i64: 2, 1>, scalar_prefetch = 0 : i64, scratch_operands = 0 : i64, tpu.core_type = #tpu.core_type<tc>, window_params = [{transform_indices = @transform_0, window_bounds = array<i64: 512, 1024>}, {transform_indices = @transform_1, window_bounds = array<i64: 1024, 128>}, {transform_indices = @transform_2, window_bounds = array<i64: 512, 128>}, {pipeline_mode = #tpu.pipeline_mode<synchronous>, transform_indices = @transform_3, window_bounds = array<i64: 128, 256>}, {transform_indices = @transform_4, window_bounds = array<i64: 512, 128>}]} {
    %c512_i32 = arith.constant 512 : i32
    %0 = arith.muli %arg0, %c512_i32 : i32
    %1 = tpu.iota {dimensions = array<i32: 0>} : vector<512x1xi32>
    %2 = vector.broadcast %0 : i32 to vector<512x1xi32>
    %3 = arith.addi %2, %1 : vector<512x1xi32>
    %c0_i32 = arith.constant 0 : i32
    %4 = arith.cmpi eq, %arg1, %c0_i32 : i32
    %5 = arith.extui %4 : i1 to i32
    %c0_i32_0 = arith.constant 0 : i32
    %6 = arith.cmpi ne, %5, %c0_i32_0 : i32
    scf.if %6 {
      %cst_10 = arith.constant 0.000000e+00 : f32
      %17 = vector.broadcast %cst_10 : f32 to vector<512x128xf32>
      %c0_11 = arith.constant 0 : index
      %c0_12 = arith.constant 0 : index
      %18 = vector.load %arg6[%c0_11, %c0_12] : memref<512x128xf32, #tpu.memory_space<vmem>>, vector<512x128xf32>
      tpu.vector_store %arg6[%c0_11, %c0_12], %17 {strides = array<i32>} : memref<512x128xf32, #tpu.memory_space<vmem>>, vector<512x128xf32>,
    } else {
    }
    %c0 = arith.constant 0 : index
    %c0_1 = arith.constant 0 : index
    %7 = vector.load %arg6[%c0, %c0_1] : memref<512x128xf32, #tpu.memory_space<vmem>>, vector<512x128xf32>
    %c0_2 = arith.constant 0 : index
    %c0_3 = arith.constant 0 : index
    %8 = vector.load %arg2[%c0_2, %c0_3] : memref<512x1024xbf16, #tpu.memory_space<vmem>>, vector<512x1024xbf16>
    %c0_4 = arith.constant 0 : index
    %c0_5 = arith.constant 0 : index
    %9 = vector.load %arg3[%c0_4, %c0_5] : memref<1024x128xf32, #tpu.memory_space<vmem>>, vector<1024x128xf32>
    %10 = arith.truncf %9 : vector<1024x128xf32> to vector<1024x128xbf16>
    %cst = arith.constant dense<0.000000e+00> : vector<512x128xf32>
    %11 = tpu.matmul %8, %10, %cst {dimension_numbers = #tpu.dot_dimension_numbers<[1], [0], [0], [1], [0, 0, 1, 1], [], []>} : vector<512x1024xbf16>, vector<1024x128xbf16>, vector<512x128xf32> -> vector<512x128xf32>
    %12 = arith.addf %7, %11 : vector<512x128xf32>
    %c0_6 = arith.constant 0 : index
    %c0_7 = arith.constant 0 : index
    %13 = vector.load %arg6[%c0_6, %c0_7] : memref<512x128xf32, #tpu.memory_space<vmem>>, vector<512x128xf32>
    tpu.vector_store %arg6[%c0_6, %c0_7], %12 {strides = array<i32>} : memref<512x128xf32, #tpu.memory_space<vmem>>, vector<512x128xf32>,
    %c0_i32_8 = arith.constant 0 : i32
    %14 = arith.cmpi eq, %arg1, %c0_i32_8 : i32
    %15 = arith.extui %14 : i1 to i32
    %c0_i32_9 = arith.constant 0 : i32
    %16 = arith.cmpi ne, %15, %c0_i32_9 : i32
    scf.if %16 {
      %c0_10 = arith.constant 0 : index
      %c0_11 = arith.constant 0 : index
      %17 = vector.load %arg4[%c0_10, %c0_11] : memref<512x128xf32, #tpu.memory_space<vmem>>, vector<512x128xf32>
      %18 = arith.truncf %17 : vector<512x128xf32> to vector<512x128xbf16>
      %c0_12 = arith.constant 0 : index
      %c0_13 = arith.constant 0 : index
      %19 = vector.load %arg5[%c0_12, %c0_13] : memref<128x256xf32, #tpu.memory_space<vmem>>, vector<128x256xf32>
      %20 = arith.truncf %19 : vector<128x256xf32> to vector<128x256xbf16>
      %cst_14 = arith.constant dense<0.000000e+00> : vector<512x256xf32>
      %21 = tpu.matmul %18, %20, %cst_14 {dimension_numbers = #tpu.dot_dimension_numbers<[1], [0], [0], [1], [0, 0, 1, 1], [], []>} : vector<512x128xbf16>, vector<128x256xbf16>, vector<512x256xf32> -> vector<512x256xf32>
      %c8_i32 = arith.constant 8 : i32
      %22 = vector.broadcast %c8_i32 : i32 to vector<512x1xi32>
      %23 = arith.cmpi slt, %3, %22 : vector<512x1xi32>
      %24 = vector.extract_strided_slice %21 {offsets = [0, 0], sizes = [512, 128], strides = [1, 1]} : vector<512x256xf32> to vector<512x128xf32>
      %cst_15 = arith.constant dense<0xFF800000> : vector<512xf32>
      %25 = vector.multi_reduction <maximumf>, %24, %cst_15 [1] : vector<512x128xf32> to vector<512xf32>
      %26 = vector.shape_cast %25 : vector<512xf32> to vector<512x1xf32>
      %27 = vector.broadcast %26 : vector<512x1xf32> to vector<512x128xf32>
      %28 = arith.subf %24, %27 : vector<512x128xf32>
      %29 = math.exp %28 : vector<512x128xf32>
      %cst_16 = arith.constant dense<0.000000e+00> : vector<512xf32>
      %30 = vector.multi_reduction <add>, %29, %cst_16 [1] : vector<512x128xf32> to vector<512xf32>
      %31 = vector.shape_cast %30 : vector<512xf32> to vector<512x1xf32>
      %32 = vector.broadcast %31 : vector<512x1xf32> to vector<512x128xf32>
      %33 = arith.divf %29, %32 : vector<512x128xf32>
      %cst_17 = arith.constant 0.000000e+00 : f32
      %34 = vector.shape_cast %23 : vector<512x1xi1> to vector<512x1xi1>
      %35 = vector.broadcast %34 : vector<512x1xi1> to vector<512x128xi1>
      %36 = vector.broadcast %cst_17 : f32 to vector<512x128xf32>
      %37 = arith.select %35, %33, %36 : vector<512x128xi1>, vector<512x128xf32>
      %38 = vector.extract_strided_slice %21 {offsets = [0, 128], sizes = [512, 128], strides = [1, 1]} : vector<512x256xf32> to vector<512x128xf32>
      %cst_18 = arith.constant dense<0xFF800000> : vector<512xf32>
      %39 = vector.multi_reduction <maximumf>, %38, %cst_18 [1] : vector<512x128xf32> to vector<512xf32>
      %40 = vector.shape_cast %39 : vector<512xf32> to vector<512x1xf32>
      %41 = vector.broadcast %40 : vector<512x1xf32> to vector<512x128xf32>
      %42 = arith.subf %38, %41 : vector<512x128xf32>
      %43 = math.exp %42 : vector<512x128xf32>
      %cst_19 = arith.constant dense<0.000000e+00> : vector<512xf32>
      %44 = vector.multi_reduction <add>, %43, %cst_19 [1] : vector<512x128xf32> to vector<512xf32>
      %45 = vector.shape_cast %44 : vector<512xf32> to vector<512x1xf32>
      %46 = vector.broadcast %45 : vector<512x1xf32> to vector<512x128xf32>
      %47 = arith.divf %43, %46 : vector<512x128xf32>
      %cst_20 = arith.constant 0.000000e+00 : f32
      %48 = vector.shape_cast %23 : vector<512x1xi1> to vector<512x1xi1>
      %49 = vector.broadcast %48 : vector<512x1xi1> to vector<512x128xi1>
      %50 = vector.broadcast %cst_20 : f32 to vector<512x128xf32>
      %51 = arith.select %49, %50, %47 : vector<512x128xi1>, vector<512x128xf32>
      %52 = arith.truncf %37 : vector<512x128xf32> to vector<512x128xbf16>
      %53 = vector.extract_strided_slice %20 {offsets = [0, 0], sizes = [128, 128], strides = [1, 1]} : vector<128x256xbf16> to vector<128x128xbf16>
      %cst_21 = arith.constant dense<0.000000e+00> : vector<512x128xf32>
      %54 = tpu.matmul %52, %53, %cst_21 {dimension_numbers = #tpu.dot_dimension_numbers<[1], [1], [0], [0], [0, 0, 1, 0], [], []>} : vector<512x128xbf16>, vector<128x128xbf16>, vector<512x128xf32> -> vector<512x128xf32>
      %55 = arith.truncf %51 : vector<512x128xf32> to vector<512x128xbf16>
      %56 = vector.extract_strided_slice %20 {offsets = [0, 128], sizes = [128, 128], strides = [1, 1]} : vector<128x256xbf16> to vector<128x128xbf16>
      %cst_22 = arith.constant dense<0.000000e+00> : vector<512x128xf32>
      %57 = tpu.matmul %55, %56, %cst_22 {dimension_numbers = #tpu.dot_dimension_numbers<[1], [1], [0], [0], [0, 0, 1, 0], [], []>} : vector<512x128xbf16>, vector<128x128xbf16>, vector<512x128xf32> -> vector<512x128xf32>
      %58 = arith.addf %54, %57 : vector<512x128xf32>
      %c0_23 = arith.constant 0 : index
      %c0_24 = arith.constant 0 : index
      %59 = vector.load %arg6[%c0_23, %c0_24] : memref<512x128xf32, #tpu.memory_space<vmem>>, vector<512x128xf32>
      %60 = arith.addf %58, %17 : vector<512x128xf32>
      %61 = arith.addf %59, %60 : vector<512x128xf32>
      %c0_25 = arith.constant 0 : index
      %c0_26 = arith.constant 0 : index
      %62 = vector.load %arg6[%c0_25, %c0_26] : memref<512x128xf32, #tpu.memory_space<vmem>>, vector<512x128xf32>
      tpu.vector_store %arg6[%c0_25, %c0_26], %61 {strides = array<i32>} : memref<512x128xf32, #tpu.memory_space<vmem>>, vector<512x128xf32>,
    } else {
    }
    return
  }
  func.func @transform_0(%arg0: i32, %arg1: i32) -> (i32, i32) {
    %c0_i32 = arith.constant 0 : i32
    return %arg0, %arg1 : i32, i32
  }
  func.func @transform_1(%arg0: i32, %arg1: i32) -> (i32, i32) {
    %c0_i32 = arith.constant 0 : i32
    %c0_i32_0 = arith.constant 0 : i32
    return %arg1, %c0_i32 : i32, i32
  }
  func.func @transform_2(%arg0: i32, %arg1: i32) -> (i32, i32) {
    %c0_i32 = arith.constant 0 : i32
    %c0_i32_0 = arith.constant 0 : i32
    return %arg0, %c0_i32 : i32, i32
  }
  func.func @transform_3(%arg0: i32, %arg1: i32) -> (i32, i32) {
    %c0_i32 = arith.constant 0 : i32
    %c0_i32_0 = arith.constant 0 : i32
    %c0_i32_1 = arith.constant 0 : i32
    return %c0_i32, %c0_i32_0 : i32, i32
  }
  func.func @transform_4(%arg0: i32, %arg1: i32) -> (i32, i32) {
    %c0_i32 = arith.constant 0 : i32
    %c0_i32_0 = arith.constant 0 : i32
    return %arg0, %c0_i32 : i32, i32
  }
}

</mosaic_0001>

<llo_original>
// kernel: tpu_custom_call.1
$region0: #{tpu_custom_call.1}
  #allocation0 [shape = 'u32[]', space=smem, size = 0x4, offset = 0x4, fixed_abs, tag = 'smem constant byte address 0x4 - core index']
  #allocation1 [shape = 'u32[144,128]{1,0:T(1,128)}', space=vmem, size = 0x12000, scoped, tag = 'internal scratch']
  %s0 = inlined_call_operand.hbm [shape: bf16[1024,1024], index: 0, kind: input, shape index: {}]
  %s1 = inlined_call_operand.hbm [shape: f32[1024,128], index: 1, kind: input, shape index: {}]
  %s2 = inlined_call_operand.hbm [shape: f32[1024,128], index: 2, kind: input, shape index: {}]
  %s3 = inlined_call_operand.hbm [shape: f32[128,256], index: 3, kind: input, shape index: {}]
  %s4 = inlined_call_operand.hbm [shape: f32[1024,128], index: 4, kind: output, shape index: {}]
  %s5 = sld [smem:[#allocation0]]
  $region73: #{tpu_custom_call.1} parent=0
    _
  %s7 = ssub.s32 1, %s5
  %s8 = scalar_select 0, %s7, %s5
  $region1: #{tpu_custom_call.1} parent=0
    #allocation2 [shape = 'u8[2097152]{0}', space=vmem, size = 0x200000, scoped, tag = 'input window, operand 0']
    #allocation3 [shape = 's32[2]{0}', space=sflag, size = 0x8, scoped, tag = 'scoped memory for tpu_custom_call.1']
    #allocation4 [shape = 's32[2]{0}', space=sflag, size = 0x8, scoped, tag = 'scoped memory for tpu_custom_call.1']
    #allocation5 [shape = 'u8[524288]{0}', space=vmem, size = 0x80000, scoped, tag = 'input window, operand 1, single buffered']
    #allocation6 [shape = 's32[1]{0}', space=sflag, size = 0x4, scoped, tag = 'scoped memory for tpu_custom_call.1']
    #allocation7 [shape = 'u8[524288]{0}', space=vmem, size = 0x80000, scoped, tag = 'input window, operand 2']
    #allocation8 [shape = 'u8[131072]{0}', space=vmem, size = 0x20000, scoped, tag = 'input window, operand 3, single buffered']
    #allocation9 [shape = 'u8[524288]{0}', space=vmem, size = 0x80000, scoped, tag = 'output window, operand 0']
    %9 = vsyncpa [#allocation3], 0
    %s10 = scalar_lea.sflag [#allocation3], 1
    %11 = vsyncpa %s10, 0
    %12 = vsyncpa [#allocation6], 0
    %13 = vsyncpa [#allocation4], 0
    %s14 = scalar_lea.sflag [#allocation4], 1
    %15 = vsyncpa %s14, 0
    loop: start=0, step=1, limit=4
    $region2: #{tpu_custom_call.1} parent=1 // loop_pre_header
      _
    $region3: #{tpu_custom_call.1} parent=1 // loop_header
      %s17 = sphi 0, %s21
      %p18 = scmp.ge.s32.totalorder %s17, 4
      %s24 = sphi 0, %s36
      %s25 = sphi 0, %s32
      %s26 = sphi 0, %s24
      %s27 = sphi 0, %s25
      %s28 = sphi 0, %s26
      %s29 = sphi 0, %s27
      %s41 = sphi 0, %s43
      %s44 = sphi 0, %s41
      %s45 = sphi 0, %s44
      %s61 = sphi 0, %s45
      %s67 = sphi 0, %s69
      %s70 = sphi 0, %s67
      %s71 = sphi 0, %s70
      %s87 = sphi 0, %s71
      %s93 = sphi 0, %s95
      %s96 = sphi 0, %s93
      %s97 = sphi 0, %s96
      %s113 = sphi 0, %s97
      %s117 = sphi 0, %s117
      %s119 = sphi 0, %s117
      %s120 = sphi 0, %s119
      %s134 = sphi 0, %s120
      %s140 = sphi 0, %s142
      %s143 = sphi 0, %s140
      %s144 = sphi 0, %s143
      %s160 = sphi 0, %s144
    $region4: #{tpu_custom_call.1} parent=1 // loop_header_branch
      %20 = sbr.rel (%p18) target = $region8
    $region5: #{tpu_custom_call.1} parent=1 // loop_body
      %s22 = ssub.s32 %s17, 1
      %s23 = ssub.s32 %s17, 2
      %s30 = sadd.s32 1, %s25
      %p31 = scmp.ge.s32.totalorder %s30, 1
      %s32 = scalar_select %p31, 0, %s30
      %s33 = sadd.s32 1, %s24
      %s34 = scalar_select %p31, %s33, %s24
      %p35 = scmp.ge.s32.totalorder %s34, 2
      %s36 = scalar_select %p35, 0, %s34
      %s37 = ssub.s32 %s24, %s36
      %s38 = ssub.s32 %s25, %s32
      %s39 = sor.u32 %s37, %s38
      %p40 = scmp.eq.s32.totalorder %s39, 0
      %s42 = sadd.s32 %s41, 1
      %s43 = scalar_select %p40, %s41, %s42
      %p46 = pneg %p40
      %p47 = scmp.eq.s32.totalorder %s17, 1
      %p48 = por %p46, %p47
      %p49 = scmp.ne.s32.totalorder %s41, %s44
      %p50 = scmp.eq.s32.totalorder %s17, 0
      %p51 = por %p49, %p50
      %p52 = scmp.ne.s32.totalorder %s41, %s44
      %p53 = scmp.eq.s32.totalorder %s22, 1
      %p54 = por %p52, %p53
      %p55 = scmp.ne.s32.totalorder %s44, %s45
      %p56 = scmp.eq.s32.totalorder %s22, 0
      %p57 = por %p55, %p56
      %p58 = scmp.ne.s32.totalorder %s44, %s45
      %p59 = scmp.eq.s32.totalorder %s23, 1
      %p60 = por %p58, %p59
      %p62 = scmp.ne.s32.totalorder %s45, %s61
      %p63 = scmp.eq.s32.totalorder %s23, 0
      %p64 = por %p62, %p63
      %s65 = ssub.s32 %s25, %s32
      %p66 = scmp.eq.s32.totalorder %s65, 0
      %s68 = sadd.s32 %s67, 1
      %s69 = scalar_select %p66, %s67, %s68
      %p72 = pneg %p66
      %p73 = scmp.eq.s32.totalorder %s17, 1
      %p74 = por %p72, %p73
      %p75 = scmp.ne.s32.totalorder %s67, %s70
      %p76 = scmp.eq.s32.totalorder %s17, 0
      %p77 = por %p75, %p76
      %p78 = scmp.ne.s32.totalorder %s67, %s70
      %p79 = scmp.eq.s32.totalorder %s22, 1
      %p80 = por %p78, %p79
      %p81 = scmp.ne.s32.totalorder %s70, %s71
      %p82 = scmp.eq.s32.totalorder %s22, 0
      %p83 = por %p81, %p82
      %p84 = scmp.ne.s32.totalorder %s70, %s71
      %p85 = scmp.eq.s32.totalorder %s23, 1
      %p86 = por %p84, %p85
      %p88 = scmp.ne.s32.totalorder %s71, %s87
      %p89 = scmp.eq.s32.totalorder %s23, 0
      %p90 = por %p88, %p89
      %s91 = ssub.s32 %s24, %s36
      %p92 = scmp.eq.s32.totalorder %s91, 0
      %s94 = sadd.s32 %s93, 1
      %s95 = scalar_select %p92, %s93, %s94
      %p98 = pneg %p92
      %p99 = scmp.eq.s32.totalorder %s17, 1
      %p100 = por %p98, %p99
      %p101 = scmp.ne.s32.totalorder %s93, %s96
      %p102 = scmp.eq.s32.totalorder %s17, 0
      %p103 = por %p101, %p102
      %p104 = scmp.ne.s32.totalorder %s93, %s96
      %p105 = scmp.eq.s32.totalorder %s22, 1
      %p106 = por %p104, %p105
      %p107 = scmp.ne.s32.totalorder %s96, %s97
      %p108 = scmp.eq.s32.totalorder %s22, 0
      %p109 = por %p107, %p108
      %p110 = scmp.ne.s32.totalorder %s96, %s97
      %p111 = scmp.eq.s32.totalorder %s23, 1
      %p112 = por %p110, %p111
      %p114 = scmp.ne.s32.totalorder %s97, %s113
      %p115 = scmp.eq.s32.totalorder %s23, 0
      %p116 = por %p114, %p115
      %s118 = sadd.s32 %s117, 1
      %p121 = scmp.eq.s32.totalorder %s17, 1
      %p122 = scmp.ne.s32.totalorder %s117, %s119
      %p123 = scmp.eq.s32.totalorder %s17, 0
      %p124 = por %p122, %p123
      %p125 = scmp.ne.s32.totalorder %s117, %s119
      %p126 = scmp.eq.s32.totalorder %s22, 1
      %p127 = por %p125, %p126
      %p128 = scmp.ne.s32.totalorder %s119, %s120
      %p129 = scmp.eq.s32.totalorder %s22, 0
      %p130 = por %p128, %p129
      %p131 = scmp.ne.s32.totalorder %s119, %s120
      %p132 = scmp.eq.s32.totalorder %s23, 1
      %p133 = por %p131, %p132
      %p135 = scmp.ne.s32.totalorder %s120, %s134
      %p136 = scmp.eq.s32.totalorder %s23, 0
      %p137 = por %p135, %p136
      %s138 = ssub.s32 %s24, %s36
      %p139 = scmp.eq.s32.totalorder %s138, 0
      %s141 = sadd.s32 %s140, 1
      %s142 = scalar_select %p139, %s140, %s141
      %p145 = pneg %p139
      %p146 = scmp.eq.s32.totalorder %s17, 1
      %p147 = por %p145, %p146
      %p148 = scmp.ne.s32.totalorder %s140, %s143
      %p149 = scmp.eq.s32.totalorder %s17, 0
      %p150 = por %p148, %p149
      %p151 = scmp.ne.s32.totalorder %s140, %s143
      %p152 = scmp.eq.s32.totalorder %s22, 1
      %p153 = por %p151, %p152
      %p154 = scmp.ne.s32.totalorder %s143, %s144
      %p155 = scmp.eq.s32.totalorder %s22, 0
      %p156 = por %p154, %p155
      %p157 = scmp.ne.s32.totalorder %s143, %s144
      %p158 = scmp.eq.s32.totalorder %s23, 1
      %p159 = por %p157, %p158
      %p161 = scmp.ne.s32.totalorder %s144, %s160
      %p162 = scmp.eq.s32.totalorder %s23, 0
      %p163 = por %p161, %p162
      %p164 = scmp.le.s32.totalorder 1, %s17
      %p165 = scmp.lt.s32.totalorder %s17, 3
      %p166 = pnand %p164, %p165
      %p167 = pneg %p166
      // Predicated region
      $region9: #{tpu_custom_call.1} parent=5 // pred_check
        _
      $region10: #{tpu_custom_call.1} parent=5 // pred_check_branch
        %169 = sbr.rel (%p166) target = $region12
      $region11: #{tpu_custom_call.1} parent=5 // pred_region
        %s170 = ssub.s32 %s17, 1
        // Predicated region
        $region13: #{tpu_custom_call.1} parent=11 // pred_check
          %p171 = pneg %p83
        $region14: #{tpu_custom_call.1} parent=11 // pred_check_branch
          %173 = sbr.rel (%p171) target = $region16
        $region15: #{tpu_custom_call.1} parent=11 // pred_region
          %s174 = smul.u32 128, %s27
          %s176 = ssub.s32 16384, 16384
          %177 = vsyncadd [#allocation6], %s176
          %s178 = smul.addr %s174, 128
          %s179 = scalar_lea.hbm %s1, %s178
          %s180 = sshll.u32 [#allocation5], 4
          %s181 = int_to_ptr.vmem [resolvable:$true] %s180
          %186 = dma.hbm_to_vmem [thread:$0]  %s179, 16384, %s181, [#allocation6], 128, 128, 8
        $region16: #{tpu_custom_call.1} parent=11 // pred_fallthru
          _
        // Predicated region
        $region17: #{tpu_custom_call.1} parent=11 // pred_check
          %p187 = pneg %p130
        $region18: #{tpu_custom_call.1} parent=11 // pred_check_branch
          %189 = sbr.rel (%p187) target = $region20
        $region19: #{tpu_custom_call.1} parent=11 // pred_region
          %s191 = ssub.s32 4096, 4096
          %192 = vsyncadd [#allocation6], %s191
          %s193 = sshll.u32 [#allocation8], 4
          %s194 = int_to_ptr.vmem [resolvable:$true] %s193
          %199 = dma.hbm_to_vmem [thread:$0]  %s3, 4096, %s194, [#allocation6], 256, 256, 16
        $region20: #{tpu_custom_call.1} parent=11 // pred_fallthru
          _
      $region12: #{tpu_custom_call.1} parent=5 // pred_fallthru
        _
      %p200 = scmp.lt.s32.totalorder %s17, 2
      // Predicated region
      $region21: #{tpu_custom_call.1} parent=5 // pred_check
        %p201 = pneg %p200
      $region22: #{tpu_custom_call.1} parent=5 // pred_check_branch
        %203 = sbr.rel (%p201) target = $region24
      $region23: #{tpu_custom_call.1} parent=5 // pred_region
        // Predicated region
        $region25: #{tpu_custom_call.1} parent=23 // pred_check
          %p204 = pneg %p51
        $region26: #{tpu_custom_call.1} parent=23 // pred_check_branch
          %206 = sbr.rel (%p204) target = $region28
        $region27: #{tpu_custom_call.1} parent=23 // pred_region
          %s207 = sand.u32 %s17, 1
          %s208 = scalar_lea.sflag [#allocation3], %s207
          %s209 = sand.u32 %s41, 1
          %s210 = smul.addr %s209, 2048
          %s211 = scalar_lea.vmem [#allocation2], %s210
          %s212 = smul.u32 64, %s24
          %s213 = smul.u32 8, %s25
          %s215 = ssub.s32 32768, 32768
          %216 = vsyncadd %s208, %s215
          %s217 = smul.addr %s212, 8
          %s218 = sadd.s32 %s213, %s217
          %s219 = smul.addr %s218, 64
          %s220 = scalar_lea.hbm %s0, %s219
          %s221 = sshll.u32 %s211, 4
          %s222 = int_to_ptr.vmem [resolvable:$true] %s221
          %227 = dma.hbm_to_vmem [thread:$0]  %s220, 32768, %s222, %s208, 512, 512, 32
        $region28: #{tpu_custom_call.1} parent=23 // pred_fallthru
          _
        // Predicated region
        $region29: #{tpu_custom_call.1} parent=23 // pred_check
          %p228 = pneg %p103
        $region30: #{tpu_custom_call.1} parent=23 // pred_check_branch
          %230 = sbr.rel (%p228) target = $region32
        $region31: #{tpu_custom_call.1} parent=23 // pred_region
          %s231 = sand.u32 %s17, 1
          %s232 = scalar_lea.sflag [#allocation3], %s231
          %s233 = sand.u32 %s93, 1
          %s234 = smul.addr %s233, 512
          %s235 = scalar_lea.vmem [#allocation7], %s234
          %s236 = smul.u32 64, %s24
          %s238 = ssub.s32 8192, 8192
          %239 = vsyncadd %s232, %s238
          %s240 = smul.addr %s236, 128
          %s241 = scalar_lea.hbm %s2, %s240
          %s242 = sshll.u32 %s235, 4
          %s243 = int_to_ptr.vmem [resolvable:$true] %s242
          %248 = dma.hbm_to_vmem [thread:$0]  %s241, 8192, %s243, %s232, 128, 128, 8
        $region32: #{tpu_custom_call.1} parent=23 // pred_fallthru
          _
      $region24: #{tpu_custom_call.1} parent=5 // pred_fallthru
        _
      %p249 = scmp.le.s32.totalorder 1, %s17
      %p250 = scmp.lt.s32.totalorder %s17, 3
      %p251 = pnand %p249, %p250
      %p252 = pneg %p251
      // Predicated region
      $region33: #{tpu_custom_call.1} parent=5 // pred_check
        _
      $region34: #{tpu_custom_call.1} parent=5 // pred_check_branch
        %254 = sbr.rel (%p251) target = $region36
      $region35: #{tpu_custom_call.1} parent=5 // pred_region
        %s255 = ssub.s32 %s17, 1
        %s256 = sand.u32 %s22, 1
        %s257 = scalar_lea.sflag [#allocation3], %s256
        %s258 = sand.u32 %s44, 1
        %s259 = smul.addr %s258, 2048
        %s260 = scalar_lea.vmem [#allocation2], %s259
        // Predicated region
        $region37: #{tpu_custom_call.1} parent=35 // pred_check
          %p261 = pneg %p57
        $region38: #{tpu_custom_call.1} parent=35 // pred_check_branch
          %263 = sbr.rel (%p261) target = $region40
        $region39: #{tpu_custom_call.1} parent=35 // pred_region
          %264 = dma.done %s257, 32768
        $region40: #{tpu_custom_call.1} parent=35 // pred_fallthru
          _
        // Predicated region
        $region41: #{tpu_custom_call.1} parent=35 // pred_check
          %p265 = pneg %p83
        $region42: #{tpu_custom_call.1} parent=35 // pred_check_branch
          %267 = sbr.rel (%p265) target = $region44
        $region43: #{tpu_custom_call.1} parent=35 // pred_region
          %268 = dma.done [#allocation6], 16384
        $region44: #{tpu_custom_call.1} parent=35 // pred_fallthru
          _
        %s269 = sand.u32 %s22, 1
        %s270 = scalar_lea.sflag [#allocation3], %s269
        %s271 = sand.u32 %s96, 1
        %s272 = smul.addr %s271, 512
        %s273 = scalar_lea.vmem [#allocation7], %s272
        // Predicated region
        $region45: #{tpu_custom_call.1} parent=35 // pred_check
          %p274 = pneg %p109
        $region46: #{tpu_custom_call.1} parent=35 // pred_check_branch
          %276 = sbr.rel (%p274) target = $region48
        $region47: #{tpu_custom_call.1} parent=35 // pred_region
          %277 = dma.done %s270, 8192
        $region48: #{tpu_custom_call.1} parent=35 // pred_fallthru
          _
        // Predicated region
        $region49: #{tpu_custom_call.1} parent=35 // pred_check
          %p278 = pneg %p130
        $region50: #{tpu_custom_call.1} parent=35 // pred_check_branch
          %280 = sbr.rel (%p278) target = $region52
        $region51: #{tpu_custom_call.1} parent=35 // pred_region
          %281 = dma.done [#allocation6], 4096
        $region52: #{tpu_custom_call.1} parent=35 // pred_fallthru
          _
        %s282 = sand.u32 %s22, 1
        %s283 = scalar_lea.sflag [#allocation3], %s282
        %s284 = sand.u32 %s44, 1
        %s285 = smul.addr %s284, 2048
        %s286 = scalar_lea.vmem [#allocation2], %s285
        %p287 = pneg %p57
        %p288 = pneg %p54
        %p289 = pneg %p83
        %p290 = pneg %p80
        %s291 = sand.u32 %s22, 1
        %s292 = scalar_lea.sflag [#allocation3], %s291
        %s293 = sand.u32 %s96, 1
        %s294 = smul.addr %s293, 512
        %s295 = scalar_lea.vmem [#allocation7], %s294
        %p296 = pneg %p109
        %p297 = pneg %p106
        %p298 = pneg %p130
        %p299 = pneg %p127
        %p300 = pneg %p156
        %p301 = pneg %p153
        %s302 = sand.u32 %s143, 1
        %s303 = scalar_lea.sflag [#allocation4], %s302
        %s304 = sand.u32 %s143, 1
        %s305 = smul.addr %s304, 512
        %s306 = scalar_lea.vmem [#allocation9], %s305
        %s307 = smul.u32 64, %s26
        %s308 = smul.u32 8, %s27
        %s309 = smul.u32 128, %s27
        %s310 = smul.u32 64, %s26
        %s311 = smul.u32 64, %s26
        %s313 = smul.u32 %s26, 512
        %v314 = vlaneseq
        %v315 = vshrl.u32 %v314, 7
        %v316 = vadd.s32 %v315, 8
        %v317 = vadd.s32 %v315, 16
        %v318 = vadd.s32 %v315, 24
        %v319 = vadd.s32 %v315, 32
        %v320 = vadd.s32 %v315, 40
        %v321 = vadd.s32 %v315, 48
        %v322 = vadd.s32 %v315, 56
        %v323 = vadd.s32 %v315, 64
        %v324 = vadd.s32 %v315, 72
        %v325 = vadd.s32 %v315, 80
        %v326 = vadd.s32 %v315, 88
        %v327 = vadd.s32 %v315, 96
        %v328 = vadd.s32 %v315, 104
        %v329 = vadd.s32 %v315, 112
        %v330 = vadd.s32 %v315, 120
        %v331 = vadd.s32 %v315, 128
        %v332 = vadd.s32 %v315, 136
        %v333 = vadd.s32 %v315, 144
        %v334 = vadd.s32 %v315, 152
        %v335 = vadd.s32 %v315, 160
        %v336 = vadd.s32 %v315, 168
        %v337 = vadd.s32 %v315, 176
        %v338 = vadd.s32 %v315, 184
        %v339 = vadd.s32 %v315, 192
        %v340 = vadd.s32 %v315, 200
        %v341 = vadd.s32 %v315, 208
        %v342 = vadd.s32 %v315, 216
        %v343 = vadd.s32 %v315, 224
        %v344 = vadd.s32 %v315, 232
        %v345 = vadd.s32 %v315, 240
        %v346 = vadd.s32 %v315, 248
        %v347 = vadd.s32 %v315, 256
        %v348 = vadd.s32 %v315, 264
        %v349 = vadd.s32 %v315, 272
        %v350 = vadd.s32 %v315, 280
        %v351 = vadd.s32 %v315, 288
        %v352 = vadd.s32 %v315, 296
        %v353 = vadd.s32 %v315, 304
        %v354 = vadd.s32 %v315, 312
        %v355 = vadd.s32 %v315, 320
        %v356 = vadd.s32 %v315, 328
        %v357 = vadd.s32 %v315, 336
        %v358 = vadd.s32 %v315, 344
        %v359 = vadd.s32 %v315, 352
        %v360 = vadd.s32 %v315, 360
        %v361 = vadd.s32 %v315, 368
        %v362 = vadd.s32 %v315, 376
        %v363 = vadd.s32 %v315, 384
        %v364 = vadd.s32 %v315, 392
        %v365 = vadd.s32 %v315, 400
        %v366 = vadd.s32 %v315, 408
        %v367 = vadd.s32 %v315, 416
        %v368 = vadd.s32 %v315, 424
        %v369 = vadd.s32 %v315, 432
        %v370 = vadd.s32 %v315, 440
        %v371 = vadd.s32 %v315, 448
        %v372 = vadd.s32 %v315, 456
        %v373 = vadd.s32 %v315, 464
        %v374 = vadd.s32 %v315, 472
        %v375 = vadd.s32 %v315, 480
        %v376 = vadd.s32 %v315, 488
        %v377 = vadd.s32 %v315, 496
        %v378 = vadd.s32 %v315, 504
        %v379 = vstv %s313
        %v380 = vadd.s32 %v379, %v315
        %v381 = vadd.s32 %v379, %v316
        %v382 = vadd.s32 %v379, %v317
        %v383 = vadd.s32 %v379, %v318
        %v384 = vadd.s32 %v379, %v319
        %v385 = vadd.s32 %v379, %v320
        %v386 = vadd.s32 %v379, %v321
        %v387 = vadd.s32 %v379, %v322
        %v388 = vadd.s32 %v379, %v323
        %v389 = vadd.s32 %v379, %v324
        %v390 = vadd.s32 %v379, %v325
        %v391 = vadd.s32 %v379, %v326
        %v392 = vadd.s32 %v379, %v327
        %v393 = vadd.s32 %v379, %v328
        %v394 = vadd.s32 %v379, %v329
        %v395 = vadd.s32 %v379, %v330
        %v396 = vadd.s32 %v379, %v331
        %v397 = vadd.s32 %v379, %v332
        %v398 = vadd.s32 %v379, %v333
        %v399 = vadd.s32 %v379, %v334
        %v400 = vadd.s32 %v379, %v335
        %v401 = vadd.s32 %v379, %v336
        %v402 = vadd.s32 %v379, %v337
        %v403 = vadd.s32 %v379, %v338
        %v404 = vadd.s32 %v379, %v339
        %v405 = vadd.s32 %v379, %v340
        %v406 = vadd.s32 %v379, %v341
        %v407 = vadd.s32 %v379, %v342
        %v408 = vadd.s32 %v379, %v343
        %v409 = vadd.s32 %v379, %v344
        %v410 = vadd.s32 %v379, %v345
        %v411 = vadd.s32 %v379, %v346
        %v412 = vadd.s32 %v379, %v347
        %v413 = vadd.s32 %v379, %v348
        %v414 = vadd.s32 %v379, %v349
        %v415 = vadd.s32 %v379, %v350
        %v416 = vadd.s32 %v379, %v351
        %v417 = vadd.s32 %v379, %v352
        %v418 = vadd.s32 %v379, %v353
        %v419 = vadd.s32 %v379, %v354
        %v420 = vadd.s32 %v379, %v355
        %v421 = vadd.s32 %v379, %v356
        %v422 = vadd.s32 %v379, %v357
        %v423 = vadd.s32 %v379, %v358
        %v424 = vadd.s32 %v379, %v359
        %v425 = vadd.s32 %v379, %v360
        %v426 = vadd.s32 %v379, %v361
        %v427 = vadd.s32 %v379, %v362
        %v428 = vadd.s32 %v379, %v363
        %v429 = vadd.s32 %v379, %v364
        %v430 = vadd.s32 %v379, %v365
        %v431 = vadd.s32 %v379, %v366
        %v432 = vadd.s32 %v379, %v367
        %v433 = vadd.s32 %v379, %v368
        %v434 = vadd.s32 %v379, %v369
        %v435 = vadd.s32 %v379, %v370
        %v436 = vadd.s32 %v379, %v371
        %v437 = vadd.s32 %v379, %v372
        %v438 = vadd.s32 %v379, %v373
        %v439 = vadd.s32 %v379, %v374
        %v440 = vadd.s32 %v379, %v375
        %v441 = vadd.s32 %v379, %v376
        %v442 = vadd.s32 %v379, %v377
        %v443 = vadd.s32 %v379, %v378
        %p444 = scmp.eq.s32.totalorder %s27, 0
        // Predicated region
        $region53: #{tpu_custom_call.1} parent=35 // pred_check
          %p445 = pneg %p444
        $region54: #{tpu_custom_call.1} parent=35 // pred_check_branch
          %447 = sbr.rel (%p445) target = $region56
        $region55: #{tpu_custom_call.1} parent=35 // pred_region
          %448 = vst [vmem:[%s306] sm:$0xff] 0.0
          %449 = vst [vmem:[%s306 + $0x8] sm:$0xff] 0.0
          %450 = vst [vmem:[%s306 + $0x10] sm:$0xff] 0.0
          %451 = vst [vmem:[%s306 + $0x18] sm:$0xff] 0.0
          %452 = vst [vmem:[%s306 + $0x20] sm:$0xff] 0.0
          %453 = vst [vmem:[%s306 + $0x28] sm:$0xff] 0.0
          %454 = vst [vmem:[%s306 + $0x30] sm:$0xff] 0.0
          %455 = vst [vmem:[%s306 + $0x38] sm:$0xff] 0.0
          %456 = vst [vmem:[%s306 + $0x40] sm:$0xff] 0.0
          %457 = vst [vmem:[%s306 + $0x48] sm:$0xff] 0.0
          %458 = vst [vmem:[%s306 + $0x50] sm:$0xff] 0.0
          %459 = vst [vmem:[%s306 + $0x58] sm:$0xff] 0.0
          %460 = vst [vmem:[%s306 + $0x60] sm:$0xff] 0.0
          %461 = vst [vmem:[%s306 + $0x68] sm:$0xff] 0.0
          %462 = vst [vmem:[%s306 + $0x70] sm:$0xff] 0.0
          %463 = vst [vmem:[%s306 + $0x78] sm:$0xff] 0.0
          %464 = vst [vmem:[%s306 + $0x80] sm:$0xff] 0.0
          %465 = vst [vmem:[%s306 + $0x88] sm:$0xff] 0.0
          %466 = vst [vmem:[%s306 + $0x90] sm:$0xff] 0.0
          %467 = vst [vmem:[%s306 + $0x98] sm:$0xff] 0.0
          %468 = vst [vmem:[%s306 + $0xa0] sm:$0xff] 0.0
          %469 = vst [vmem:[%s306 + $0xa8] sm:$0xff] 0.0
          %470 = vst [vmem:[%s306 + $0xb0] sm:$0xff] 0.0
          %471 = vst [vmem:[%s306 + $0xb8] sm:$0xff] 0.0
          %472 = vst [vmem:[%s306 + $0xc0] sm:$0xff] 0.0
          %473 = vst [vmem:[%s306 + $0xc8] sm:$0xff] 0.0
          %474 = vst [vmem:[%s306 + $0xd0] sm:$0xff] 0.0
          %475 = vst [vmem:[%s306 + $0xd8] sm:$0xff] 0.0
          %476 = vst [vmem:[%s306 + $0xe0] sm:$0xff] 0.0
          %477 = vst [vmem:[%s306 + $0xe8] sm:$0xff] 0.0
          %478 = vst [vmem:[%s306 + $0xf0] sm:$0xff] 0.0
          %479 = vst [vmem:[%s306 + $0xf8] sm:$0xff] 0.0
          %480 = vst [vmem:[%s306 + $0x100] sm:$0xff] 0.0
          %481 = vst [vmem:[%s306 + $0x108] sm:$0xff] 0.0
          %482 = vst [vmem:[%s306 + $0x110] sm:$0xff] 0.0
          %483 = vst [vmem:[%s306 + $0x118] sm:$0xff] 0.0
          %484 = vst [vmem:[%s306 + $0x120] sm:$0xff] 0.0
          %485 = vst [vmem:[%s306 + $0x128] sm:$0xff] 0.0
          %486 = vst [vmem:[%s306 + $0x130] sm:$0xff] 0.0
          %487 = vst [vmem:[%s306 + $0x138] sm:$0xff] 0.0
          %488 = vst [vmem:[%s306 + $0x140] sm:$0xff] 0.0
          %489 = vst [vmem:[%s306 + $0x148] sm:$0xff] 0.0
          %490 = vst [vmem:[%s306 + $0x150] sm:$0xff] 0.0
          %491 = vst [vmem:[%s306 + $0x158] sm:$0xff] 0.0
          %492 = vst [vmem:[%s306 + $0x160] sm:$0xff] 0.0
          %493 = vst [vmem:[%s306 + $0x168] sm:$0xff] 0.0
          %494 = vst [vmem:[%s306 + $0x170] sm:$0xff] 0.0
          %495 = vst [vmem:[%s306 + $0x178] sm:$0xff] 0.0
          %496 = vst [vmem:[%s306 + $0x180] sm:$0xff] 0.0
          %497 = vst [vmem:[%s306 + $0x188] sm:$0xff] 0.0
          %498 = vst [vmem:[%s306 + $0x190] sm:$0xff] 0.0
          %499 = vst [vmem:[%s306 + $0x198] sm:$0xff] 0.0
          %500 = vst [vmem:[%s306 + $0x1a0] sm:$0xff] 0.0
          %501 = vst [vmem:[%s306 + $0x1a8] sm:$0xff] 0.0
          %502 = vst [vmem:[%s306 + $0x1b0] sm:$0xff] 0.0
          %503 = vst [vmem:[%s306 + $0x1b8] sm:$0xff] 0.0
          %504 = vst [vmem:[%s306 + $0x1c0] sm:$0xff] 0.0
          %505 = vst [vmem:[%s306 + $0x1c8] sm:$0xff] 0.0
          %506 = vst [vmem:[%s306 + $0x1d0] sm:$0xff] 0.0
          %507 = vst [vmem:[%s306 + $0x1d8] sm:$0xff] 0.0
          %508 = vst [vmem:[%s306 + $0x1e0] sm:$0xff] 0.0
          %509 = vst [vmem:[%s306 + $0x1e8] sm:$0xff] 0.0
          %510 = vst [vmem:[%s306 + $0x1f0] sm:$0xff] 0.0
          %511 = vst [vmem:[%s306 + $0x1f8] sm:$0xff] 0.0
        $region56: #{tpu_custom_call.1} parent=35 // pred_fallthru
          _
        %v512 = vld [vmem:[%s306] sm:$0xff]
        %v513 = vld [vmem:[%s306 + $0x8] sm:$0xff]
        %v514 = vld [vmem:[%s306 + $0x10] sm:$0xff]
        %v515 = vld [vmem:[%s306 + $0x18] sm:$0xff]
        %v516 = vld [vmem:[%s306 + $0x20] sm:$0xff]
        %v517 = vld [vmem:[%s306 + $0x28] sm:$0xff]
        %v518 = vld [vmem:[%s306 + $0x30] sm:$0xff]
        %v519 = vld [vmem:[%s306 + $0x38] sm:$0xff]
        %v520 = vld [vmem:[%s306 + $0x40] sm:$0xff]
        %v521 = vld [vmem:[%s306 + $0x48] sm:$0xff]
        %v522 = vld [vmem:[%s306 + $0x50] sm:$0xff]
        %v523 = vld [vmem:[%s306 + $0x58] sm:$0xff]
        %v524 = vld [vmem:[%s306 + $0x60] sm:$0xff]
        %v525 = vld [vmem:[%s306 + $0x68] sm:$0xff]
        %v526 = vld [vmem:[%s306 + $0x70] sm:$0xff]
        %v527 = vld [vmem:[%s306 + $0x78] sm:$0xff]
        %v528 = vld [vmem:[%s306 + $0x80] sm:$0xff]
        %v529 = vld [vmem:[%s306 + $0x88] sm:$0xff]
        %v530 = vld [vmem:[%s306 + $0x90] sm:$0xff]
        %v531 = vld [vmem:[%s306 + $0x98] sm:$0xff]
        %v532 = vld [vmem:[%s306 + $0xa0] sm:$0xff]
        %v533 = vld [vmem:[%s306 + $0xa8] sm:$0xff]
        %v534 = vld [vmem:[%s306 + $0xb0] sm:$0xff]
        %v535 = vld [vmem:[%s306 + $0xb8] sm:$0xff]
        %v536 = vld [vmem:[%s306 + $0xc0] sm:$0xff]
        %v537 = vld [vmem:[%s306 + $0xc8] sm:$0xff]
        %v538 = vld [vmem:[%s306 + $0xd0] sm:$0xff]
        %v539 = vld [vmem:[%s306 + $0xd8] sm:$0xff]
        %v540 = vld [vmem:[%s306 + $0xe0] sm:$0xff]
        %v541 = vld [vmem:[%s306 + $0xe8] sm:$0xff]
        %v542 = vld [vmem:[%s306 + $0xf0] sm:$0xff]
        %v543 = vld [vmem:[%s306 + $0xf8] sm:$0xff]
        %v544 = vld [vmem:[%s306 + $0x100] sm:$0xff]
        %v545 = vld [vmem:[%s306 + $0x108] sm:$0xff]
        %v546 = vld [vmem:[%s306 + $0x110] sm:$0xff]
        %v547 = vld [vmem:[%s306 + $0x118] sm:$0xff]
        %v548 = vld [vmem:[%s306 + $0x120] sm:$0xff]
        %v549 = vld [vmem:[%s306 + $0x128] sm:$0xff]
        %v550 = vld [vmem:[%s306 + $0x130] sm:$0xff]
        %v551 = vld [vmem:[%s306 + $0x138] sm:$0xff]
        %v552 = vld [vmem:[%s306 + $0x140] sm:$0xff]
        %v553 = vld [vmem:[%s306 + $0x148] sm:$0xff]
        %v554 = vld [vmem:[%s306 + $0x150] sm:$0xff]
        %v555 = vld [vmem:[%s306 + $0x158] sm:$0xff]
        %v556 = vld [vmem:[%s306 + $0x160] sm:$0xff]
        %v557 = vld [vmem:[%s306 + $0x168] sm:$0xff]
        %v558 = vld [vmem:[%s306 + $0x170] sm:$0xff]
        %v559 = vld [vmem:[%s306 + $0x178] sm:$0xff]
        %v560 = vld [vmem:[%s306 + $0x180] sm:$0xff]
        %v561 = vld [vmem:[%s306 + $0x188] sm:$0xff]
        %v562 = vld [vmem:[%s306 + $0x190] sm:$0xff]
        %v563 = vld [vmem:[%s306 + $0x198] sm:$0xff]
        %v564 = vld [vmem:[%s306 + $0x1a0] sm:$0xff]
        %v565 = vld [vmem:[%s306 + $0x1a8] sm:$0xff]
        %v566 = vld [vmem:[%s306 + $0x1b0] sm:$0xff]
        %v567 = vld [vmem:[%s306 + $0x1b8] sm:$0xff]
        %v568 = vld [vmem:[%s306 + $0x1c0] sm:$0xff]
        %v569 = vld [vmem:[%s306 + $0x1c8] sm:$0xff]
        %v570 = vld [vmem:[%s306 + $0x1d0] sm:$0xff]
        %v571 = vld [vmem:[%s306 + $0x1d8] sm:$0xff]
        %v572 = vld [vmem:[%s306 + $0x1e0] sm:$0xff]
        %v573 = vld [vmem:[%s306 + $0x1e8] sm:$0xff]
        %v574 = vld [vmem:[%s306 + $0x1f0] sm:$0xff]
        %v575 = vld [vmem:[%s306 + $0x1f8] sm:$0xff]
        %v576 = vld [vmem:[%s260] sm:$0xff]
        %v577 = vld [vmem:[%s260 + $0x8] sm:$0xff]
        %v578 = vld [vmem:[%s260 + $0x10] sm:$0xff]
        %v579 = vld [vmem:[%s260 + $0x18] sm:$0xff]
        %v580 = vld [vmem:[%s260 + $0x20] sm:$0xff]
        %v581 = vld [vmem:[%s260 + $0x28] sm:$0xff]
        %v582 = vld [vmem:[%s260 + $0x30] sm:$0xff]
        %v583 = vld [vmem:[%s260 + $0x38] sm:$0xff]
        %v584 = vld [vmem:[%s260 + $0x40] sm:$0xff]
        %v585 = vld [vmem:[%s260 + $0x48] sm:$0xff]
        %v586 = vld [vmem:[%s260 + $0x50] sm:$0xff]
        %v587 = vld [vmem:[%s260 + $0x58] sm:$0xff]
        %v588 = vld [vmem:[%s260 + $0x60] sm:$0xff]
        %v589 = vld [vmem:[%s260 + $0x68] sm:$0xff]
        %v590 = vld [vmem:[%s260 + $0x70] sm:$0xff]
        %v591 = vld [vmem:[%s260 + $0x78] sm:$0xff]
        %v592 = vld [vmem:[%s260 + $0x80] sm:$0xff]
        %v593 = vld [vmem:[%s260 + $0x88] sm:$0xff]
        %v594 = vld [vmem:[%s260 + $0x90] sm:$0xff]
        %v595 = vld [vmem:[%s260 + $0x98] sm:$0xff]
        %v596 = vld [vmem:[%s260 + $0xa0] sm:$0xff]
        %v597 = vld [vmem:[%s260 + $0xa8] sm:$0xff]
        %v598 = vld [vmem:[%s260 + $0xb0] sm:$0xff]
        %v599 = vld [vmem:[%s260 + $0xb8] sm:$0xff]
        %v600 = vld [vmem:[%s260 + $0xc0] sm:$0xff]
        %v601 = vld [vmem:[%s260 + $0xc8] sm:$0xff]
        %v602 = vld [vmem:[%s260 + $0xd0] sm:$0xff]
        %v603 = vld [vmem:[%s260 + $0xd8] sm:$0xff]
        %v604 = vld [vmem:[%s260 + $0xe0] sm:$0xff]
        %v605 = vld [vmem:[%s260 + $0xe8] sm:$0xff]
        %v606 = vld [vmem:[%s260 + $0xf0] sm:$0xff]
        %v607 = vld [vmem:[%s260 + $0xf8] sm:$0xff]
        %v608 = vld [vmem:[%s260 + $0x100] sm:$0xff]
        %v609 = vld [vmem:[%s260 + $0x108] sm:$0xff]
        %v610 = vld [vmem:[%s260 + $0x110] sm:$0xff]
        %v611 = vld [vmem:[%s260 + $0x118] sm:$0xff]
        %v612 = vld [vmem:[%s260 + $0x120] sm:$0xff]
        %v613 = vld [vmem:[%s260 + $0x128] sm:$0xff]
        %v614 = vld [vmem:[%s260 + $0x130] sm:$0xff]
        %v615 = vld [vmem:[%s260 + $0x138] sm:$0xff]
        %v616 = vld [vmem:[%s260 + $0x140] sm:$0xff]
        %v617 = vld [vmem:[%s260 + $0x148] sm:$0xff]
        %v618 = vld [vmem:[%s260 + $0x150] sm:$0xff]
        %v619 = vld [vmem:[%s260 + $0x158] sm:$0xff]
        %v620 = vld [vmem:[%s260 + $0x160] sm:$0xff]
        %v621 = vld [vmem:[%s260 + $0x168] sm:$0xff]
        %v622 = vld [vmem:[%s260 + $0x170] sm:$0xff]
        %v623 = vld [vmem:[%s260 + $0x178] sm:$0xff]
        %v624 = vld [vmem:[%s260 + $0x180] sm:$0xff]
        %v625 = vld [vmem:[%s260 + $0x188] sm:$0xff]
        %v626 = vld [vmem:[%s260 + $0x190] sm:$0xff]
        %v627 = vld [vmem:[%s260 + $0x198] sm:$0xff]
        %v628 = vld [vmem:[%s260 + $0x1a0] sm:$0xff]
        %v629 = vld [vmem:[%s260 + $0x1a8] sm:$0xff]
        %v630 = vld [vmem:[%s260 + $0x1b0] sm:$0xff]
        %v631 = vld [vmem:[%s260 + $0x1b8] sm:$0xff]
        %v632 = vld [vmem:[%s260 + $0x1c0] sm:$0xff]
        %v633 = vld [vmem:[%s260 + $0x1c8] sm:$0xff]
        %v634 = vld [vmem:[%s260 + $0x1d0] sm:$0xff]
        %v635 = vld [vmem:[%s260 + $0x1d8] sm:$0xff]
        %v636 = vld [vmem:[%s260 + $0x1e0] sm:$0xff]
        %v637 = vld [vmem:[%s260 + $0x1e8] sm:$0xff]
        %v638 = vld [vmem:[%s260 + $0x1f0] sm:$0xff]
        %v639 = vld [vmem:[%s260 + $0x1f8] sm:$0xff]
        %v640 = vld [vmem:[%s260 + $0x200] sm:$0xff]
        %v641 = vld [vmem:[%s260 + $0x208] sm:$0xff]
        %v642 = vld [vmem:[%s260 + $0x210] sm:$0xff]
        %v643 = vld [vmem:[%s260 + $0x218] sm:$0xff]
        %v644 = vld [vmem:[%s260 + $0x220] sm:$0xff]
        %v645 = vld [vmem:[%s260 + $0x228] sm:$0xff]
        %v646 = vld [vmem:[%s260 + $0x230] sm:$0xff]
        %v647 = vld [vmem:[%s260 + $0x238] sm:$0xff]
        %v648 = vld [vmem:[%s260 + $0x240] sm:$0xff]
        %v649 = vld [vmem:[%s260 + $0x248] sm:$0xff]
        %v650 = vld [vmem:[%s260 + $0x250] sm:$0xff]
        %v651 = vld [vmem:[%s260 + $0x258] sm:$0xff]
        %v652 = vld [vmem:[%s260 + $0x260] sm:$0xff]
        %v653 = vld [vmem:[%s260 + $0x268] sm:$0xff]
        %v654 = vld [vmem:[%s260 + $0x270] sm:$0xff]
        %v655 = vld [vmem:[%s260 + $0x278] sm:$0xff]
        %v656 = vld [vmem:[%s260 + $0x280] sm:$0xff]
        %v657 = vld [vmem:[%s260 + $0x288] sm:$0xff]
        %v658 = vld [vmem:[%s260 + $0x290] sm:$0xff]
        %v659 = vld [vmem:[%s260 + $0x298] sm:$0xff]
        %v660 = vld [vmem:[%s260 + $0x2a0] sm:$0xff]
        %v661 = vld [vmem:[%s260 + $0x2a8] sm:$0xff]
        %v662 = vld [vmem:[%s260 + $0x2b0] sm:$0xff]
        %v663 = vld [vmem:[%s260 + $0x2b8] sm:$0xff]
        %v664 = vld [vmem:[%s260 + $0x2c0] sm:$0xff]
        %v665 = vld [vmem:[%s260 + $0x2c8] sm:$0xff]
        %v666 = vld [vmem:[%s260 + $0x2d0] sm:$0xff]
        %v667 = vld [vmem:[%s260 + $0x2d8] sm:$0xff]
        %v668 = vld [vmem:[%s260 + $0x2e0] sm:$0xff]
        %v669 = vld [vmem:[%s260 + $0x2e8] sm:$0xff]
        %v670 = vld [vmem:[%s260 + $0x2f0] sm:$0xff]
        %v671 = vld [vmem:[%s260 + $0x2f8] sm:$0xff]
        %v672 = vld [vmem:[%s260 + $0x300] sm:$0xff]
        %v673 = vld [vmem:[%s260 + $0x308] sm:$0xff]
        %v674 = vld [vmem:[%s260 + $0x310] sm:$0xff]
        %v675 = vld [vmem:[%s260 + $0x318] sm:$0xff]
        %v676 = vld [vmem:[%s260 + $0x320] sm:$0xff]
        %v677 = vld [vmem:[%s260 + $0x328] sm:$0xff]
        %v678 = vld [vmem:[%s260 + $0x330] sm:$0xff]
        %v679 = vld [vmem:[%s260 + $0x338] sm:$0xff]
        %v680 = vld [vmem:[%s260 + $0x340] sm:$0xff]
        %v681 = vld [vmem:[%s260 + $0x348] sm:$0xff]
        %v682 = vld [vmem:[%s260 + $0x350] sm:$0xff]
        %v683 = vld [vmem:[%s260 + $0x358] sm:$0xff]
        %v684 = vld [vmem:[%s260 + $0x360] sm:$0xff]
        %v685 = vld [vmem:[%s260 + $0x368] sm:$0xff]
        %v686 = vld [vmem:[%s260 + $0x370] sm:$0xff]
        %v687 = vld [vmem:[%s260 + $0x378] sm:$0xff]
        %v688 = vld [vmem:[%s260 + $0x380] sm:$0xff]
        %v689 = vld [vmem:[%s260 + $0x388] sm:$0xff]
        %v690 = vld [vmem:[%s260 + $0x390] sm:$0xff]
        %v691 = vld [vmem:[%s260 + $0x398] sm:$0xff]
        %v692 = vld [vmem:[%s260 + $0x3a0] sm:$0xff]
        %v693 = vld [vmem:[%s260 + $0x3a8] sm:$0xff]
        %v694 = vld [vmem:[%s260 + $0x3b0] sm:$0xff]
        %v695 = vld [vmem:[%s260 + $0x3b8] sm:$0xff]
        %v696 = vld [vmem:[%s260 + $0x3c0] sm:$0xff]
        %v697 = vld [vmem:[%s260 + $0x3c8] sm:$0xff]
        %v698 = vld [vmem:[%s260 + $0x3d0] sm:$0xff]
        %v699 = vld [vmem:[%s260 + $0x3d8] sm:$0xff]
        %v700 = vld [vmem:[%s260 + $0x3e0] sm:$0xff]
        %v701 = vld [vmem:[%s260 + $0x3e8] sm:$0xff]
        %v702 = vld [vmem:[%s260 + $0x3f0] sm:$0xff]
        %v703 = vld [vmem:[%s260 + $0x3f8] sm:$0xff]
        %v704 = vld [vmem:[%s260 + $0x400] sm:$0xff]
        %v705 = vld [vmem:[%s260 + $0x408] sm:$0xff]
        %v706 = vld [vmem:[%s260 + $0x410] sm:$0xff]
        %v707 = vld [vmem:[%s260 + $0x418] sm:$0xff]
        %v708 = vld [vmem:[%s260 + $0x420] sm:$0xff]
        %v709 = vld [vmem:[%s260 + $0x428] sm:$0xff]
        %v710 = vld [vmem:[%s260 + $0x430] sm:$0xff]
        %v711 = vld [vmem:[%s260 + $0x438] sm:$0xff]
        %v712 = vld [vmem:[%s260 + $0x440] sm:$0xff]
        %v713 = vld [vmem:[%s260 + $0x448] sm:$0xff]
        %v714 = vld [vmem:[%s260 + $0x450] sm:$0xff]
        %v715 = vld [vmem:[%s260 + $0x458] sm:$0xff]
        %v716 = vld [vmem:[%s260 + $0x460] sm:$0xff]
        %v717 = vld [vmem:[%s260 + $0x468] sm:$0xff]
        %v718 = vld [vmem:[%s260 + $0x470] sm:$0xff]
        %v719 = vld [vmem:[%s260 + $0x478] sm:$0xff]
        %v720 = vld [vmem:[%s260 + $0x480] sm:$0xff]
        %v721 = vld [vmem:[%s260 + $0x488] sm:$0xff]
        %v722 = vld [vmem:[%s260 + $0x490] sm:$0xff]
        %v723 = vld [vmem:[%s260 + $0x498] sm:$0xff]
        %v724 = vld [vmem:[%s260 + $0x4a0] sm:$0xff]
        %v725 = vld [vmem:[%s260 + $0x4a8] sm:$0xff]
        %v726 = vld [vmem:[%s260 + $0x4b0] sm:$0xff]
        %v727 = vld [vmem:[%s260 + $0x4b8] sm:$0xff]
        %v728 = vld [vmem:[%s260 + $0x4c0] sm:$0xff]
        %v729 = vld [vmem:[%s260 + $0x4c8] sm:$0xff]
        %v730 = vld [vmem:[%s260 + $0x4d0] sm:$0xff]
        %v731 = vld [vmem:[%s260 + $0x4d8] sm:$0xff]
        %v732 = vld [vmem:[%s260 + $0x4e0] sm:$0xff]
        %v733 = vld [vmem:[%s260 + $0x4e8] sm:$0xff]
        %v734 = vld [vmem:[%s260 + $0x4f0] sm:$0xff]
        %v735 = vld [vmem:[%s260 + $0x4f8] sm:$0xff]
        %v736 = vld [vmem:[%s260 + $0x500] sm:$0xff]
        %v737 = vld [vmem:[%s260 + $0x508] sm:$0xff]
        %v738 = vld [vmem:[%s260 + $0x510] sm:$0xff]
        %v739 = vld [vmem:[%s260 + $0x518] sm:$0xff]
        %v740 = vld [vmem:[%s260 + $0x520] sm:$0xff]
        %v741 = vld [vmem:[%s260 + $0x528] sm:$0xff]
        %v742 = vld [vmem:[%s260 + $0x530] sm:$0xff]
        %v743 = vld [vmem:[%s260 + $0x538] sm:$0xff]
        %v744 = vld [vmem:[%s260 + $0x540] sm:$0xff]
        %v745 = vld [vmem:[%s260 + $0x548] sm:$0xff]
        %v746 = vld [vmem:[%s260 + $0x550] sm:$0xff]
        %v747 = vld [vmem:[%s260 + $0x558] sm:$0xff]
        %v748 = vld [vmem:[%s260 + $0x560] sm:$0xff]
        %v749 = vld [vmem:[%s260 + $0x568] sm:$0xff]
        %v750 = vld [vmem:[%s260 + $0x570] sm:$0xff]
        %v751 = vld [vmem:[%s260 + $0x578] sm:$0xff]
        %v752 = vld [vmem:[%s260 + $0x580] sm:$0xff]
        %v753 = vld [vmem:[%s260 + $0x588] sm:$0xff]
        %v754 = vld [vmem:[%s260 + $0x590] sm:$0xff]
        %v755 = vld [vmem:[%s260 + $0x598] sm:$0xff]
        %v756 = vld [vmem:[%s260 + $0x5a0] sm:$0xff]
        %v757 = vld [vmem:[%s260 + $0x5a8] sm:$0xff]
        %v758 = vld [vmem:[%s260 + $0x5b0] sm:$0xff]
        %v759 = vld [vmem:[%s260 + $0x5b8] sm:$0xff]
        %v760 = vld [vmem:[%s260 + $0x5c0] sm:$0xff]
        %v761 = vld [vmem:[%s260 + $0x5c8] sm:$0xff]
        %v762 = vld [vmem:[%s260 + $0x5d0] sm:$0xff]
        %v763 = vld [vmem:[%s260 + $0x5d8] sm:$0xff]
        %v764 = vld [vmem:[%s260 + $0x5e0] sm:$0xff]
        %v765 = vld [vmem:[%s260 + $0x5e8] sm:$0xff]
        %v766 = vld [vmem:[%s260 + $0x5f0] sm:$0xff]
        %v767 = vld [vmem:[%s260 + $0x5f8] sm:$0xff]
        %v768 = vld [vmem:[%s260 + $0x600] sm:$0xff]
        %v769 = vld [vmem:[%s260 + $0x608] sm:$0xff]
        %v770 = vld [vmem:[%s260 + $0x610] sm:$0xff]
        %v771 = vld [vmem:[%s260 + $0x618] sm:$0xff]
        %v772 = vld [vmem:[%s260 + $0x620] sm:$0xff]
        %v773 = vld [vmem:[%s260 + $0x628] sm:$0xff]
        %v774 = vld [vmem:[%s260 + $0x630] sm:$0xff]
        %v775 = vld [vmem:[%s260 + $0x638] sm:$0xff]
        %v776 = vld [vmem:[%s260 + $0x640] sm:$0xff]
        %v777 = vld [vmem:[%s260 + $0x648] sm:$0xff]
        %v778 = vld [vmem:[%s260 + $0x650] sm:$0xff]
        %v779 = vld [vmem:[%s260 + $0x658] sm:$0xff]
        %v780 = vld [vmem:[%s260 + $0x660] sm:$0xff]
        %v781 = vld [vmem:[%s260 + $0x668] sm:$0xff]
        %v782 = vld [vmem:[%s260 + $0x670] sm:$0xff]
        %v783 = vld [vmem:[%s260 + $0x678] sm:$0xff]
        %v784 = vld [vmem:[%s260 + $0x680] sm:$0xff]
        %v785 = vld [vmem:[%s260 + $0x688] sm:$0xff]
        %v786 = vld [vmem:[%s260 + $0x690] sm:$0xff]
        %v787 = vld [vmem:[%s260 + $0x698] sm:$0xff]
        %v788 = vld [vmem:[%s260 + $0x6a0] sm:$0xff]
        %v789 = vld [vmem:[%s260 + $0x6a8] sm:$0xff]
        %v790 = vld [vmem:[%s260 + $0x6b0] sm:$0xff]
        %v791 = vld [vmem:[%s260 + $0x6b8] sm:$0xff]
        %v792 = vld [vmem:[%s260 + $0x6c0] sm:$0xff]
        %v793 = vld [vmem:[%s260 + $0x6c8] sm:$0xff]
        %v794 = vld [vmem:[%s260 + $0x6d0] sm:$0xff]
        %v795 = vld [vmem:[%s260 + $0x6d8] sm:$0xff]
        %v796 = vld [vmem:[%s260 + $0x6e0] sm:$0xff]
        %v797 = vld [vmem:[%s260 + $0x6e8] sm:$0xff]
        %v798 = vld [vmem:[%s260 + $0x6f0] sm:$0xff]
        %v799 = vld [vmem:[%s260 + $0x6f8] sm:$0xff]
        %v800 = vld [vmem:[%s260 + $0x700] sm:$0xff]
        %v801 = vld [vmem:[%s260 + $0x708] sm:$0xff]
        %v802 = vld [vmem:[%s260 + $0x710] sm:$0xff]
        %v803 = vld [vmem:[%s260 + $0x718] sm:$0xff]
        %v804 = vld [vmem:[%s260 + $0x720] sm:$0xff]
        %v805 = vld [vmem:[%s260 + $0x728] sm:$0xff]
        %v806 = vld [vmem:[%s260 + $0x730] sm:$0xff]
        %v807 = vld [vmem:[%s260 + $0x738] sm:$0xff]
        %v808 = vld [vmem:[%s260 + $0x740] sm:$0xff]
        %v809 = vld [vmem:[%s260 + $0x748] sm:$0xff]
        %v810 = vld [vmem:[%s260 + $0x750] sm:$0xff]
        %v811 = vld [vmem:[%s260 + $0x758] sm:$0xff]
        %v812 = vld [vmem:[%s260 + $0x760] sm:$0xff]
        %v813 = vld [vmem:[%s260 + $0x768] sm:$0xff]
        %v814 = vld [vmem:[%s260 + $0x770] sm:$0xff]
        %v815 = vld [vmem:[%s260 + $0x778] sm:$0xff]
        %v816 = vld [vmem:[%s260 + $0x780] sm:$0xff]
        %v817 = vld [vmem:[%s260 + $0x788] sm:$0xff]
        %v818 = vld [vmem:[%s260 + $0x790] sm:$0xff]
        %v819 = vld [vmem:[%s260 + $0x798] sm:$0xff]
        %v820 = vld [vmem:[%s260 + $0x7a0] sm:$0xff]
        %v821 = vld [vmem:[%s260 + $0x7a8] sm:$0xff]
        %v822 = vld [vmem:[%s260 + $0x7b0] sm:$0xff]
        %v823 = vld [vmem:[%s260 + $0x7b8] sm:$0xff]
        %v824 = vld [vmem:[%s260 + $0x7c0] sm:$0xff]
        %v825 = vld [vmem:[%s260 + $0x7c8] sm:$0xff]
        %v826 = vld [vmem:[%s260 + $0x7d0] sm:$0xff]
        %v827 = vld [vmem:[%s260 + $0x7d8] sm:$0xff]
        %v828 = vld [vmem:[%s260 + $0x7e0] sm:$0xff]
        %v829 = vld [vmem:[%s260 + $0x7e8] sm:$0xff]
        %v830 = vld [vmem:[%s260 + $0x7f0] sm:$0xff]
        %v831 = vld [vmem:[%s260 + $0x7f8] sm:$0xff]
        %v832 = vld [vmem:[#allocation5] sm:$0xff]
        %v833 = vld [vmem:[#allocation5 + $0x8] sm:$0xff]
        %v834 = vld [vmem:[#allocation5 + $0x10] sm:$0xff]
        %v835 = vld [vmem:[#allocation5 + $0x18] sm:$0xff]
        %v836 = vld [vmem:[#allocation5 + $0x20] sm:$0xff]
        %v837 = vld [vmem:[#allocation5 + $0x28] sm:$0xff]
        %v838 = vld [vmem:[#allocation5 + $0x30] sm:$0xff]
        %v839 = vld [vmem:[#allocation5 + $0x38] sm:$0xff]
        %v840 = vld [vmem:[#allocation5 + $0x40] sm:$0xff]
        %v841 = vld [vmem:[#allocation5 + $0x48] sm:$0xff]
        %v842 = vld [vmem:[#allocation5 + $0x50] sm:$0xff]
        %v843 = vld [vmem:[#allocation5 + $0x58] sm:$0xff]
        %v844 = vld [vmem:[#allocation5 + $0x60] sm:$0xff]
        %v845 = vld [vmem:[#allocation5 + $0x68] sm:$0xff]
        %v846 = vld [vmem:[#allocation5 + $0x70] sm:$0xff]
        %v847 = vld [vmem:[#allocation5 + $0x78] sm:$0xff]
        %v848 = vld [vmem:[#allocation5 + $0x80] sm:$0xff]
        %v849 = vld [vmem:[#allocation5 + $0x88] sm:$0xff]
        %v850 = vld [vmem:[#allocation5 + $0x90] sm:$0xff]
        %v851 = vld [vmem:[#allocation5 + $0x98] sm:$0xff]
        %v852 = vld [vmem:[#allocation5 + $0xa0] sm:$0xff]
        %v853 = vld [vmem:[#allocation5 + $0xa8] sm:$0xff]
        %v854 = vld [vmem:[#allocation5 + $0xb0] sm:$0xff]
        %v855 = vld [vmem:[#allocation5 + $0xb8] sm:$0xff]
        %v856 = vld [vmem:[#allocation5 + $0xc0] sm:$0xff]
        %v857 = vld [vmem:[#allocation5 + $0xc8] sm:$0xff]
        %v858 = vld [vmem:[#allocation5 + $0xd0] sm:$0xff]
        %v859 = vld [vmem:[#allocation5 + $0xd8] sm:$0xff]
        %v860 = vld [vmem:[#allocation5 + $0xe0] sm:$0xff]
        %v861 = vld [vmem:[#allocation5 + $0xe8] sm:$0xff]
        %v862 = vld [vmem:[#allocation5 + $0xf0] sm:$0xff]
        %v863 = vld [vmem:[#allocation5 + $0xf8] sm:$0xff]
        %v864 = vld [vmem:[#allocation5 + $0x100] sm:$0xff]
        %v865 = vld [vmem:[#allocation5 + $0x108] sm:$0xff]
        %v866 = vld [vmem:[#allocation5 + $0x110] sm:$0xff]
        %v867 = vld [vmem:[#allocation5 + $0x118] sm:$0xff]
        %v868 = vld [vmem:[#allocation5 + $0x120] sm:$0xff]
        %v869 = vld [vmem:[#allocation5 + $0x128] sm:$0xff]
        %v870 = vld [vmem:[#allocation5 + $0x130] sm:$0xff]
        %v871 = vld [vmem:[#allocation5 + $0x138] sm:$0xff]
        %v872 = vld [vmem:[#allocation5 + $0x140] sm:$0xff]
        %v873 = vld [vmem:[#allocation5 + $0x148] sm:$0xff]
        %v874 = vld [vmem:[#allocation5 + $0x150] sm:$0xff]
        %v875 = vld [vmem:[#allocation5 + $0x158] sm:$0xff]
        %v876 = vld [vmem:[#allocation5 + $0x160] sm:$0xff]
        %v877 = vld [vmem:[#allocation5 + $0x168] sm:$0xff]
        %v878 = vld [vmem:[#allocation5 + $0x170] sm:$0xff]
        %v879 = vld [vmem:[#allocation5 + $0x178] sm:$0xff]
        %v880 = vld [vmem:[#allocation5 + $0x180] sm:$0xff]
        %v881 = vld [vmem:[#allocation5 + $0x188] sm:$0xff]
        %v882 = vld [vmem:[#allocation5 + $0x190] sm:$0xff]
        %v883 = vld [vmem:[#allocation5 + $0x198] sm:$0xff]
        %v884 = vld [vmem:[#allocation5 + $0x1a0] sm:$0xff]
        %v885 = vld [vmem:[#allocation5 + $0x1a8] sm:$0xff]
        %v886 = vld [vmem:[#allocation5 + $0x1b0] sm:$0xff]
        %v887 = vld [vmem:[#allocation5 + $0x1b8] sm:$0xff]
        %v888 = vld [vmem:[#allocation5 + $0x1c0] sm:$0xff]
        %v889 = vld [vmem:[#allocation5 + $0x1c8] sm:$0xff]
        %v890 = vld [vmem:[#allocation5 + $0x1d0] sm:$0xff]
        %v891 = vld [vmem:[#allocation5 + $0x1d8] sm:$0xff]
        %v892 = vld [vmem:[#allocation5 + $0x1e0] sm:$0xff]
        %v893 = vld [vmem:[#allocation5 + $0x1e8] sm:$0xff]
        %v894 = vld [vmem:[#allocation5 + $0x1f0] sm:$0xff]
        %v895 = vld [vmem:[#allocation5 + $0x1f8] sm:$0xff]
        %v896 = vld [vmem:[#allocation5 + $0x200] sm:$0xff]
        %v897 = vld [vmem:[#allocation5 + $0x208] sm:$0xff]
        %v898 = vld [vmem:[#allocation5 + $0x210] sm:$0xff]
        %v899 = vld [vmem:[#allocation5 + $0x218] sm:$0xff]
        %v900 = vld [vmem:[#allocation5 + $0x220] sm:$0xff]
        %v901 = vld [vmem:[#allocation5 + $0x228] sm:$0xff]
        %v902 = vld [vmem:[#allocation5 + $0x230] sm:$0xff]
        %v903 = vld [vmem:[#allocation5 + $0x238] sm:$0xff]
        %v904 = vld [vmem:[#allocation5 + $0x240] sm:$0xff]
        %v905 = vld [vmem:[#allocation5 + $0x248] sm:$0xff]
        %v906 = vld [vmem:[#allocation5 + $0x250] sm:$0xff]
        %v907 = vld [vmem:[#allocation5 + $0x258] sm:$0xff]
        %v908 = vld [vmem:[#allocation5 + $0x260] sm:$0xff]
        %v909 = vld [vmem:[#allocation5 + $0x268] sm:$0xff]
        %v910 = vld [vmem:[#allocation5 + $0x270] sm:$0xff]
        %v911 = vld [vmem:[#allocation5 + $0x278] sm:$0xff]
        %v912 = vld [vmem:[#allocation5 + $0x280] sm:$0xff]
        %v913 = vld [vmem:[#allocation5 + $0x288] sm:$0xff]
        %v914 = vld [vmem:[#allocation5 + $0x290] sm:$0xff]
        %v915 = vld [vmem:[#allocation5 + $0x298] sm:$0xff]
        %v916 = vld [vmem:[#allocation5 + $0x2a0] sm:$0xff]
        %v917 = vld [vmem:[#allocation5 + $0x2a8] sm:$0xff]
        %v918 = vld [vmem:[#allocation5 + $0x2b0] sm:$0xff]
        %v919 = vld [vmem:[#allocation5 + $0x2b8] sm:$0xff]
        %v920 = vld [vmem:[#allocation5 + $0x2c0] sm:$0xff]
        %v921 = vld [vmem:[#allocation5 + $0x2c8] sm:$0xff]
        %v922 = vld [vmem:[#allocation5 + $0x2d0] sm:$0xff]
        %v923 = vld [vmem:[#allocation5 + $0x2d8] sm:$0xff]
        %v924 = vld [vmem:[#allocation5 + $0x2e0] sm:$0xff]
        %v925 = vld [vmem:[#allocation5 + $0x2e8] sm:$0xff]
        %v926 = vld [vmem:[#allocation5 + $0x2f0] sm:$0xff]
        %v927 = vld [vmem:[#allocation5 + $0x2f8] sm:$0xff]
        %v928 = vld [vmem:[#allocation5 + $0x300] sm:$0xff]
        %v929 = vld [vmem:[#allocation5 + $0x308] sm:$0xff]
        %v930 = vld [vmem:[#allocation5 + $0x310] sm:$0xff]
        %v931 = vld [vmem:[#allocation5 + $0x318] sm:$0xff]
        %v932 = vld [vmem:[#allocation5 + $0x320] sm:$0xff]
        %v933 = vld [vmem:[#allocation5 + $0x328] sm:$0xff]
        %v934 = vld [vmem:[#allocation5 + $0x330] sm:$0xff]
        %v935 = vld [vmem:[#allocation5 + $0x338] sm:$0xff]
        %v936 = vld [vmem:[#allocation5 + $0x340] sm:$0xff]
        %v937 = vld [vmem:[#allocation5 + $0x348] sm:$0xff]
        %v938 = vld [vmem:[#allocation5 + $0x350] sm:$0xff]
        %v939 = vld [vmem:[#allocation5 + $0x358] sm:$0xff]
        %v940 = vld [vmem:[#allocation5 + $0x360] sm:$0xff]
        %v941 = vld [vmem:[#allocation5 + $0x368] sm:$0xff]
        %v942 = vld [vmem:[#allocation5 + $0x370] sm:$0xff]
        %v943 = vld [vmem:[#allocation5 + $0x378] sm:$0xff]
        %v944 = vld [vmem:[#allocation5 + $0x380] sm:$0xff]
        %v945 = vld [vmem:[#allocation5 + $0x388] sm:$0xff]
        %v946 = vld [vmem:[#allocation5 + $0x390] sm:$0xff]
        %v947 = vld [vmem:[#allocation5 + $0x398] sm:$0xff]
        %v948 = vld [vmem:[#allocation5 + $0x3a0] sm:$0xff]
        %v949 = vld [vmem:[#allocation5 + $0x3a8] sm:$0xff]
        %v950 = vld [vmem:[#allocation5 + $0x3b0] sm:$0xff]
        %v951 = vld [vmem:[#allocation5 + $0x3b8] sm:$0xff]
        %v952 = vld [vmem:[#allocation5 + $0x3c0] sm:$0xff]
        %v953 = vld [vmem:[#allocation5 + $0x3c8] sm:$0xff]
        %v954 = vld [vmem:[#allocation5 + $0x3d0] sm:$0xff]
        %v955 = vld [vmem:[#allocation5 + $0x3d8] sm:$0xff]
        %v956 = vld [vmem:[#allocation5 + $0x3e0] sm:$0xff]
        %v957 = vld [vmem:[#allocation5 + $0x3e8] sm:$0xff]
        %v958 = vld [vmem:[#allocation5 + $0x3f0] sm:$0xff]
        %v959 = vld [vmem:[#allocation5 + $0x3f8] sm:$0xff]
        %v960 = vpack.c.bf16 %v833, %v832
        %v961 = vpack.c.bf16 %v835, %v834
        %v962 = vpack.c.bf16 %v837, %v836
        %v963 = vpack.c.bf16 %v839, %v838
        %v964 = vpack.c.bf16 %v841, %v840
        %v965 = vpack.c.bf16 %v843, %v842
        %v966 = vpack.c.bf16 %v845, %v844
        %v967 = vpack.c.bf16 %v847, %v846
        %v968 = vpack.c.bf16 %v849, %v848
        %v969 = vpack.c.bf16 %v851, %v850
        %v970 = vpack.c.bf16 %v853, %v852
        %v971 = vpack.c.bf16 %v855, %v854
        %v972 = vpack.c.bf16 %v857, %v856
        %v973 = vpack.c.bf16 %v859, %v858
        %v974 = vpack.c.bf16 %v861, %v860
        %v975 = vpack.c.bf16 %v863, %v862
        %v976 = vpack.c.bf16 %v865, %v864
        %v977 = vpack.c.bf16 %v867, %v866
        %v978 = vpack.c.bf16 %v869, %v868
        %v979 = vpack.c.bf16 %v871, %v870
        %v980 = vpack.c.bf16 %v873, %v872
        %v981 = vpack.c.bf16 %v875, %v874
        %v982 = vpack.c.bf16 %v877, %v876
        %v983 = vpack.c.bf16 %v879, %v878
        %v984 = vpack.c.bf16 %v881, %v880
        %v985 = vpack.c.bf16 %v883, %v882
        %v986 = vpack.c.bf16 %v885, %v884
        %v987 = vpack.c.bf16 %v887, %v886
        %v988 = vpack.c.bf16 %v889, %v888
        %v989 = vpack.c.bf16 %v891, %v890
        %v990 = vpack.c.bf16 %v893, %v892
        %v991 = vpack.c.bf16 %v895, %v894
        %v992 = vpack.c.bf16 %v897, %v896
        %v993 = vpack.c.bf16 %v899, %v898
        %v994 = vpack.c.bf16 %v901, %v900
        %v995 = vpack.c.bf16 %v903, %v902
        %v996 = vpack.c.bf16 %v905, %v904
        %v997 = vpack.c.bf16 %v907, %v906
        %v998 = vpack.c.bf16 %v909, %v908
        %v999 = vpack.c.bf16 %v911, %v910
        %v1000 = vpack.c.bf16 %v913, %v912
        %v1001 = vpack.c.bf16 %v915, %v914
        %v1002 = vpack.c.bf16 %v917, %v916
        %v1003 = vpack.c.bf16 %v919, %v918
        %v1004 = vpack.c.bf16 %v921, %v920
        %v1005 = vpack.c.bf16 %v923, %v922
        %v1006 = vpack.c.bf16 %v925, %v924
        %v1007 = vpack.c.bf16 %v927, %v926
        %v1008 = vpack.c.bf16 %v929, %v928
        %v1009 = vpack.c.bf16 %v931, %v930
        %v1010 = vpack.c.bf16 %v933, %v932
        %v1011 = vpack.c.bf16 %v935, %v934
        %v1012 = vpack.c.bf16 %v937, %v936
        %v1013 = vpack.c.bf16 %v939, %v938
        %v1014 = vpack.c.bf16 %v941, %v940
        %v1015 = vpack.c.bf16 %v943, %v942
        %v1016 = vpack.c.bf16 %v945, %v944
        %v1017 = vpack.c.bf16 %v947, %v946
        %v1018 = vpack.c.bf16 %v949, %v948
        %v1019 = vpack.c.bf16 %v951, %v950
        %v1020 = vpack.c.bf16 %v953, %v952
        %v1021 = vpack.c.bf16 %v955, %v954
        %v1022 = vpack.c.bf16 %v957, %v956
        %v1023 = vpack.c.bf16 %v959, %v958
        %v1280 = vunpack.c.l.b16 %v576
        %v1281 = vunpack.c.h.b16 %v576
        %v1282 = vunpack.c.l.b16 %v577
        %v1283 = vunpack.c.h.b16 %v577
        %v1284 = vunpack.c.l.b16 %v578
        %v1285 = vunpack.c.h.b16 %v578
        %v1286 = vunpack.c.l.b16 %v579
        %v1287 = vunpack.c.h.b16 %v579
        %v1288 = vunpack.c.l.b16 %v580
        %v1289 = vunpack.c.h.b16 %v580
        %v1290 = vunpack.c.l.b16 %v581
        %v1291 = vunpack.c.h.b16 %v581
        %v1292 = vunpack.c.l.b16 %v582
        %v1293 = vunpack.c.h.b16 %v582
        %v1294 = vunpack.c.l.b16 %v583
        %v1295 = vunpack.c.h.b16 %v583
        %v1296 = vunpack.c.l.b16 %v584
        %v1297 = vunpack.c.h.b16 %v584
        %v1298 = vunpack.c.l.b16 %v585
        %v1299 = vunpack.c.h.b16 %v585
        %v1300 = vunpack.c.l.b16 %v586
        %v1301 = vunpack.c.h.b16 %v586
        %v1302 = vunpack.c.l.b16 %v587
        %v1303 = vunpack.c.h.b16 %v587
        %v1304 = vunpack.c.l.b16 %v588
        %v1305 = vunpack.c.h.b16 %v588
        %v1306 = vunpack.c.l.b16 %v589
        %v1307 = vunpack.c.h.b16 %v589
        %v1308 = vunpack.c.l.b16 %v590
        %v1309 = vunpack.c.h.b16 %v590
        %v1310 = vunpack.c.l.b16 %v591
        %v1311 = vunpack.c.h.b16 %v591
        %v1312 = vunpack.c.l.b16 %v592
        %v1313 = vunpack.c.h.b16 %v592
        %v1314 = vunpack.c.l.b16 %v593
        %v1315 = vunpack.c.h.b16 %v593
        %v1316 = vunpack.c.l.b16 %v594
        %v1317 = vunpack.c.h.b16 %v594
        %v1318 = vunpack.c.l.b16 %v595
        %v1319 = vunpack.c.h.b16 %v595
        %v1320 = vunpack.c.l.b16 %v596
        %v1321 = vunpack.c.h.b16 %v596
        %v1322 = vunpack.c.l.b16 %v597
        %v1323 = vunpack.c.h.b16 %v597
        %v1324 = vunpack.c.l.b16 %v598
        %v1325 = vunpack.c.h.b16 %v598
        %v1326 = vunpack.c.l.b16 %v599
        %v1327 = vunpack.c.h.b16 %v599
        %v1328 = vunpack.c.l.b16 %v600
        %v1329 = vunpack.c.h.b16 %v600
        %v1330 = vunpack.c.l.b16 %v601
        %v1331 = vunpack.c.h.b16 %v601
        %v1332 = vunpack.c.l.b16 %v602
        %v1333 = vunpack.c.h.b16 %v602
        %v1334 = vunpack.c.l.b16 %v603
        %v1335 = vunpack.c.h.b16 %v603
        %v1336 = vunpack.c.l.b16 %v604
        %v1337 = vunpack.c.h.b16 %v604
        %v1338 = vunpack.c.l.b16 %v605
        %v1339 = vunpack.c.h.b16 %v605
        %v1340 = vunpack.c.l.b16 %v606
        %v1341 = vunpack.c.h.b16 %v606
        %v1342 = vunpack.c.l.b16 %v607
        %v1343 = vunpack.c.h.b16 %v607
        %v1344 = vunpack.c.l.b16 %v608
        %v1345 = vunpack.c.h.b16 %v608
        %v1346 = vunpack.c.l.b16 %v609
        %v1347 = vunpack.c.h.b16 %v609
        %v1348 = vunpack.c.l.b16 %v610
        %v1349 = vunpack.c.h.b16 %v610
        %v1350 = vunpack.c.l.b16 %v611
        %v1351 = vunpack.c.h.b16 %v611
        %v1352 = vunpack.c.l.b16 %v612
        %v1353 = vunpack.c.h.b16 %v612
        %v1354 = vunpack.c.l.b16 %v613
        %v1355 = vunpack.c.h.b16 %v613
        %v1356 = vunpack.c.l.b16 %v614
        %v1357 = vunpack.c.h.b16 %v614
        %v1358 = vunpack.c.l.b16 %v615
        %v1359 = vunpack.c.h.b16 %v615
        %v1360 = vunpack.c.l.b16 %v616
        %v1361 = vunpack.c.h.b16 %v616
        %v1362 = vunpack.c.l.b16 %v617
        %v1363 = vunpack.c.h.b16 %v617
        %v1364 = vunpack.c.l.b16 %v618
        %v1365 = vunpack.c.h.b16 %v618
        %v1366 = vunpack.c.l.b16 %v619
        %v1367 = vunpack.c.h.b16 %v619
        %v1368 = vunpack.c.l.b16 %v620
        %v1369 = vunpack.c.h.b16 %v620
        %v1370 = vunpack.c.l.b16 %v621
        %v1371 = vunpack.c.h.b16 %v621
        %v1372 = vunpack.c.l.b16 %v622
        %v1373 = vunpack.c.h.b16 %v622
        %v1374 = vunpack.c.l.b16 %v623
        %v1375 = vunpack.c.h.b16 %v623
        %v1376 = vunpack.c.l.b16 %v624
        %v1377 = vunpack.c.h.b16 %v624
        %v1378 = vunpack.c.l.b16 %v625
        %v1379 = vunpack.c.h.b16 %v625
        %v1380 = vunpack.c.l.b16 %v626
        %v1381 = vunpack.c.h.b16 %v626
        %v1382 = vunpack.c.l.b16 %v627
        %v1383 = vunpack.c.h.b16 %v627
        %v1384 = vunpack.c.l.b16 %v628
        %v1385 = vunpack.c.h.b16 %v628
        %v1386 = vunpack.c.l.b16 %v629
        %v1387 = vunpack.c.h.b16 %v629
        %v1388 = vunpack.c.l.b16 %v630
        %v1389 = vunpack.c.h.b16 %v630
        %v1390 = vunpack.c.l.b16 %v631
        %v1391 = vunpack.c.h.b16 %v631
        %v1392 = vunpack.c.l.b16 %v632
        %v1393 = vunpack.c.h.b16 %v632
        %v1394 = vunpack.c.l.b16 %v633
        %v1395 = vunpack.c.h.b16 %v633
        %v1396 = vunpack.c.l.b16 %v634
        %v1397 = vunpack.c.h.b16 %v634
        %v1398 = vunpack.c.l.b16 %v635
        %v1399 = vunpack.c.h.b16 %v635
        %v1400 = vunpack.c.l.b16 %v636
        %v1401 = vunpack.c.h.b16 %v636
        %v1402 = vunpack.c.l.b16 %v637
        %v1403 = vunpack.c.h.b16 %v637
        %v1404 = vunpack.c.l.b16 %v638
        %v1405 = vunpack.c.h.b16 %v638
        %v1406 = vunpack.c.l.b16 %v639
        %v1407 = vunpack.c.h.b16 %v639
        %v1408 = vunpack.c.l.b16 %v640
        %v1409 = vunpack.c.h.b16 %v640
        %v1410 = vunpack.c.l.b16 %v641
        %v1411 = vunpack.c.h.b16 %v641
        %v1412 = vunpack.c.l.b16 %v642
        %v1413 = vunpack.c.h.b16 %v642
        %v1414 = vunpack.c.l.b16 %v643
        %v1415 = vunpack.c.h.b16 %v643
        %v1416 = vunpack.c.l.b16 %v644
        %v1417 = vunpack.c.h.b16 %v644
        %v1418 = vunpack.c.l.b16 %v645
        %v1419 = vunpack.c.h.b16 %v645
        %v1420 = vunpack.c.l.b16 %v646
        %v1421 = vunpack.c.h.b16 %v646
        %v1422 = vunpack.c.l.b16 %v647
        %v1423 = vunpack.c.h.b16 %v647
        %v1424 = vunpack.c.l.b16 %v648
        %v1425 = vunpack.c.h.b16 %v648
        %v1426 = vunpack.c.l.b16 %v649
        %v1427 = vunpack.c.h.b16 %v649
        %v1428 = vunpack.c.l.b16 %v650
        %v1429 = vunpack.c.h.b16 %v650
        %v1430 = vunpack.c.l.b16 %v651
        %v1431 = vunpack.c.h.b16 %v651
        %v1432 = vunpack.c.l.b16 %v652
        %v1433 = vunpack.c.h.b16 %v652
        %v1434 = vunpack.c.l.b16 %v653
        %v1435 = vunpack.c.h.b16 %v653
        %v1436 = vunpack.c.l.b16 %v654
        %v1437 = vunpack.c.h.b16 %v654
        %v1438 = vunpack.c.l.b16 %v655
        %v1439 = vunpack.c.h.b16 %v655
        %v1440 = vunpack.c.l.b16 %v656
        %v1441 = vunpack.c.h.b16 %v656
        %v1442 = vunpack.c.l.b16 %v657
        %v1443 = vunpack.c.h.b16 %v657
        %v1444 = vunpack.c.l.b16 %v658
        %v1445 = vunpack.c.h.b16 %v658
        %v1446 = vunpack.c.l.b16 %v659
        %v1447 = vunpack.c.h.b16 %v659
        %v1448 = vunpack.c.l.b16 %v660
        %v1449 = vunpack.c.h.b16 %v660
        %v1450 = vunpack.c.l.b16 %v661
        %v1451 = vunpack.c.h.b16 %v661
        %v1452 = vunpack.c.l.b16 %v662
        %v1453 = vunpack.c.h.b16 %v662
        %v1454 = vunpack.c.l.b16 %v663
        %v1455 = vunpack.c.h.b16 %v663
        %v1456 = vunpack.c.l.b16 %v664
        %v1457 = vunpack.c.h.b16 %v664
        %v1458 = vunpack.c.l.b16 %v665
        %v1459 = vunpack.c.h.b16 %v665
        %v1460 = vunpack.c.l.b16 %v666
        %v1461 = vunpack.c.h.b16 %v666
        %v1462 = vunpack.c.l.b16 %v667
        %v1463 = vunpack.c.h.b16 %v667
        %v1464 = vunpack.c.l.b16 %v668
        %v1465 = vunpack.c.h.b16 %v668
        %v1466 = vunpack.c.l.b16 %v669
        %v1467 = vunpack.c.h.b16 %v669
        %v1468 = vunpack.c.l.b16 %v670
        %v1469 = vunpack.c.h.b16 %v670
        %v1470 = vunpack.c.l.b16 %v671
        %v1471 = vunpack.c.h.b16 %v671
        %v1472 = vunpack.c.l.b16 %v672
        %v1473 = vunpack.c.h.b16 %v672
        %v1474 = vunpack.c.l.b16 %v673
        %v1475 = vunpack.c.h.b16 %v673
        %v1476 = vunpack.c.l.b16 %v674
        %v1477 = vunpack.c.h.b16 %v674
        %v1478 = vunpack.c.l.b16 %v675
        %v1479 = vunpack.c.h.b16 %v675
        %v1480 = vunpack.c.l.b16 %v676
        %v1481 = vunpack.c.h.b16 %v676
        %v1482 = vunpack.c.l.b16 %v677
        %v1483 = vunpack.c.h.b16 %v677
        %v1484 = vunpack.c.l.b16 %v678
        %v1485 = vunpack.c.h.b16 %v678
        %v1486 = vunpack.c.l.b16 %v679
        %v1487 = vunpack.c.h.b16 %v679
        %v1488 = vunpack.c.l.b16 %v680
        %v1489 = vunpack.c.h.b16 %v680
        %v1490 = vunpack.c.l.b16 %v681
        %v1491 = vunpack.c.h.b16 %v681
        %v1492 = vunpack.c.l.b16 %v682
        %v1493 = vunpack.c.h.b16 %v682
        %v1494 = vunpack.c.l.b16 %v683
        %v1495 = vunpack.c.h.b16 %v683
        %v1496 = vunpack.c.l.b16 %v684
        %v1497 = vunpack.c.h.b16 %v684
        %v1498 = vunpack.c.l.b16 %v685
        %v1499 = vunpack.c.h.b16 %v685
        %v1500 = vunpack.c.l.b16 %v686
        %v1501 = vunpack.c.h.b16 %v686
        %v1502 = vunpack.c.l.b16 %v687
        %v1503 = vunpack.c.h.b16 %v687
        %v1504 = vunpack.c.l.b16 %v688
        %v1505 = vunpack.c.h.b16 %v688
        %v1506 = vunpack.c.l.b16 %v689
        %v1507 = vunpack.c.h.b16 %v689
        %v1508 = vunpack.c.l.b16 %v690
        %v1509 = vunpack.c.h.b16 %v690
        %v1510 = vunpack.c.l.b16 %v691
        %v1511 = vunpack.c.h.b16 %v691
        %v1512 = vunpack.c.l.b16 %v692
        %v1513 = vunpack.c.h.b16 %v692
        %v1514 = vunpack.c.l.b16 %v693
        %v1515 = vunpack.c.h.b16 %v693
        %v1516 = vunpack.c.l.b16 %v694
        %v1517 = vunpack.c.h.b16 %v694
        %v1518 = vunpack.c.l.b16 %v695
        %v1519 = vunpack.c.h.b16 %v695
        %v1520 = vunpack.c.l.b16 %v696
        %v1521 = vunpack.c.h.b16 %v696
        %v1522 = vunpack.c.l.b16 %v697
        %v1523 = vunpack.c.h.b16 %v697
        %v1524 = vunpack.c.l.b16 %v698
        %v1525 = vunpack.c.h.b16 %v698
        %v1526 = vunpack.c.l.b16 %v699
        %v1527 = vunpack.c.h.b16 %v699
        %v1528 = vunpack.c.l.b16 %v700
        %v1529 = vunpack.c.h.b16 %v700
        %v1530 = vunpack.c.l.b16 %v701
        %v1531 = vunpack.c.h.b16 %v701
        %v1532 = vunpack.c.l.b16 %v702
        %v1533 = vunpack.c.h.b16 %v702
        %v1534 = vunpack.c.l.b16 %v703
        %v1535 = vunpack.c.h.b16 %v703
        %v1536 = vunpack.c.l.b16 %v704
        %v1537 = vunpack.c.h.b16 %v704
        %v1538 = vunpack.c.l.b16 %v705
        %v1539 = vunpack.c.h.b16 %v705
        %v1540 = vunpack.c.l.b16 %v706
        %v1541 = vunpack.c.h.b16 %v706
        %v1542 = vunpack.c.l.b16 %v707
        %v1543 = vunpack.c.h.b16 %v707
        %v1544 = vunpack.c.l.b16 %v708
        %v1545 = vunpack.c.h.b16 %v708
        %v1546 = vunpack.c.l.b16 %v709
        %v1547 = vunpack.c.h.b16 %v709
        %v1548 = vunpack.c.l.b16 %v710
        %v1549 = vunpack.c.h.b16 %v710
        %v1550 = vunpack.c.l.b16 %v711
        %v1551 = vunpack.c.h.b16 %v711
        %v1552 = vunpack.c.l.b16 %v712
        %v1553 = vunpack.c.h.b16 %v712
        %v1554 = vunpack.c.l.b16 %v713
        %v1555 = vunpack.c.h.b16 %v713
        %v1556 = vunpack.c.l.b16 %v714
        %v1557 = vunpack.c.h.b16 %v714
        %v1558 = vunpack.c.l.b16 %v715
        %v1559 = vunpack.c.h.b16 %v715
        %v1560 = vunpack.c.l.b16 %v716
        %v1561 = vunpack.c.h.b16 %v716
        %v1562 = vunpack.c.l.b16 %v717
        %v1563 = vunpack.c.h.b16 %v717
        %v1564 = vunpack.c.l.b16 %v718
        %v1565 = vunpack.c.h.b16 %v718
        %v1566 = vunpack.c.l.b16 %v719
        %v1567 = vunpack.c.h.b16 %v719
        %v1568 = vunpack.c.l.b16 %v720
        %v1569 = vunpack.c.h.b16 %v720
        %v1570 = vunpack.c.l.b16 %v721
        %v1571 = vunpack.c.h.b16 %v721
        %v1572 = vunpack.c.l.b16 %v722
        %v1573 = vunpack.c.h.b16 %v722
        %v1574 = vunpack.c.l.b16 %v723
        %v1575 = vunpack.c.h.b16 %v723
        %v1576 = vunpack.c.l.b16 %v724
        %v1577 = vunpack.c.h.b16 %v724
        %v1578 = vunpack.c.l.b16 %v725
        %v1579 = vunpack.c.h.b16 %v725
        %v1580 = vunpack.c.l.b16 %v726
        %v1581 = vunpack.c.h.b16 %v726
        %v1582 = vunpack.c.l.b16 %v727
        %v1583 = vunpack.c.h.b16 %v727
        %v1584 = vunpack.c.l.b16 %v728
        %v1585 = vunpack.c.h.b16 %v728
        %v1586 = vunpack.c.l.b16 %v729
        %v1587 = vunpack.c.h.b16 %v729
        %v1588 = vunpack.c.l.b16 %v730
        %v1589 = vunpack.c.h.b16 %v730
        %v1590 = vunpack.c.l.b16 %v731
        %v1591 = vunpack.c.h.b16 %v731
        %v1592 = vunpack.c.l.b16 %v732
        %v1593 = vunpack.c.h.b16 %v732
        %v1594 = vunpack.c.l.b16 %v733
        %v1595 = vunpack.c.h.b16 %v733
        %v1596 = vunpack.c.l.b16 %v734
        %v1597 = vunpack.c.h.b16 %v734
        %v1598 = vunpack.c.l.b16 %v735
        %v1599 = vunpack.c.h.b16 %v735
        %v1600 = vunpack.c.l.b16 %v736
        %v1601 = vunpack.c.h.b16 %v736
        %v1602 = vunpack.c.l.b16 %v737
        %v1603 = vunpack.c.h.b16 %v737
        %v1604 = vunpack.c.l.b16 %v738
        %v1605 = vunpack.c.h.b16 %v738
        %v1606 = vunpack.c.l.b16 %v739
        %v1607 = vunpack.c.h.b16 %v739
        %v1608 = vunpack.c.l.b16 %v740
        %v1609 = vunpack.c.h.b16 %v740
        %v1610 = vunpack.c.l.b16 %v741
        %v1611 = vunpack.c.h.b16 %v741
        %v1612 = vunpack.c.l.b16 %v742
        %v1613 = vunpack.c.h.b16 %v742
        %v1614 = vunpack.c.l.b16 %v743
        %v1615 = vunpack.c.h.b16 %v743
        %v1616 = vunpack.c.l.b16 %v744
        %v1617 = vunpack.c.h.b16 %v744
        %v1618 = vunpack.c.l.b16 %v745
        %v1619 = vunpack.c.h.b16 %v745
        %v1620 = vunpack.c.l.b16 %v746
        %v1621 = vunpack.c.h.b16 %v746
        %v1622 = vunpack.c.l.b16 %v747
        %v1623 = vunpack.c.h.b16 %v747
        %v1624 = vunpack.c.l.b16 %v748
        %v1625 = vunpack.c.h.b16 %v748
        %v1626 = vunpack.c.l.b16 %v749
        %v1627 = vunpack.c.h.b16 %v749
        %v1628 = vunpack.c.l.b16 %v750
        %v1629 = vunpack.c.h.b16 %v750
        %v1630 = vunpack.c.l.b16 %v751
        %v1631 = vunpack.c.h.b16 %v751
        %v1632 = vunpack.c.l.b16 %v752
        %v1633 = vunpack.c.h.b16 %v752
        %v1634 = vunpack.c.l.b16 %v753
        %v1635 = vunpack.c.h.b16 %v753
        %v1636 = vunpack.c.l.b16 %v754
        %v1637 = vunpack.c.h.b16 %v754
        %v1638 = vunpack.c.l.b16 %v755
        %v1639 = vunpack.c.h.b16 %v755
        %v1640 = vunpack.c.l.b16 %v756
        %v1641 = vunpack.c.h.b16 %v756
        %v1642 = vunpack.c.l.b16 %v757
        %v1643 = vunpack.c.h.b16 %v757
        %v1644 = vunpack.c.l.b16 %v758
        %v1645 = vunpack.c.h.b16 %v758
        %v1646 = vunpack.c.l.b16 %v759
        %v1647 = vunpack.c.h.b16 %v759
        %v1648 = vunpack.c.l.b16 %v760
        %v1649 = vunpack.c.h.b16 %v760
        %v1650 = vunpack.c.l.b16 %v761
        %v1651 = vunpack.c.h.b16 %v761
        %v1652 = vunpack.c.l.b16 %v762
        %v1653 = vunpack.c.h.b16 %v762
        %v1654 = vunpack.c.l.b16 %v763
        %v1655 = vunpack.c.h.b16 %v763
        %v1656 = vunpack.c.l.b16 %v764
        %v1657 = vunpack.c.h.b16 %v764
        %v1658 = vunpack.c.l.b16 %v765
        %v1659 = vunpack.c.h.b16 %v765
        %v1660 = vunpack.c.l.b16 %v766
        %v1661 = vunpack.c.h.b16 %v766
        %v1662 = vunpack.c.l.b16 %v767
        %v1663 = vunpack.c.h.b16 %v767
        %v1664 = vunpack.c.l.b16 %v768
        %v1665 = vunpack.c.h.b16 %v768
        %v1666 = vunpack.c.l.b16 %v769
        %v1667 = vunpack.c.h.b16 %v769
        %v1668 = vunpack.c.l.b16 %v770
        %v1669 = vunpack.c.h.b16 %v770
        %v1670 = vunpack.c.l.b16 %v771
        %v1671 = vunpack.c.h.b16 %v771
        %v1672 = vunpack.c.l.b16 %v772
        %v1673 = vunpack.c.h.b16 %v772
        %v1674 = vunpack.c.l.b16 %v773
        %v1675 = vunpack.c.h.b16 %v773
        %v1676 = vunpack.c.l.b16 %v774
        %v1677 = vunpack.c.h.b16 %v774
        %v1678 = vunpack.c.l.b16 %v775
        %v1679 = vunpack.c.h.b16 %v775
        %v1680 = vunpack.c.l.b16 %v776
        %v1681 = vunpack.c.h.b16 %v776
        %v1682 = vunpack.c.l.b16 %v777
        %v1683 = vunpack.c.h.b16 %v777
        %v1684 = vunpack.c.l.b16 %v778
        %v1685 = vunpack.c.h.b16 %v778
        %v1686 = vunpack.c.l.b16 %v779
        %v1687 = vunpack.c.h.b16 %v779
        %v1688 = vunpack.c.l.b16 %v780
        %v1689 = vunpack.c.h.b16 %v780
        %v1690 = vunpack.c.l.b16 %v781
        %v1691 = vunpack.c.h.b16 %v781
        %v1692 = vunpack.c.l.b16 %v782
        %v1693 = vunpack.c.h.b16 %v782
        %v1694 = vunpack.c.l.b16 %v783
        %v1695 = vunpack.c.h.b16 %v783
        %v1696 = vunpack.c.l.b16 %v784
        %v1697 = vunpack.c.h.b16 %v784
        %v1698 = vunpack.c.l.b16 %v785
        %v1699 = vunpack.c.h.b16 %v785
        %v1700 = vunpack.c.l.b16 %v786
        %v1701 = vunpack.c.h.b16 %v786
        %v1702 = vunpack.c.l.b16 %v787
        %v1703 = vunpack.c.h.b16 %v787
        %v1704 = vunpack.c.l.b16 %v788
        %v1705 = vunpack.c.h.b16 %v788
        %v1706 = vunpack.c.l.b16 %v789
        %v1707 = vunpack.c.h.b16 %v789
        %v1708 = vunpack.c.l.b16 %v790
        %v1709 = vunpack.c.h.b16 %v790
        %v1710 = vunpack.c.l.b16 %v791
        %v1711 = vunpack.c.h.b16 %v791
        %v1712 = vunpack.c.l.b16 %v792
        %v1713 = vunpack.c.h.b16 %v792
        %v1714 = vunpack.c.l.b16 %v793
        %v1715 = vunpack.c.h.b16 %v793
        %v1716 = vunpack.c.l.b16 %v794
        %v1717 = vunpack.c.h.b16 %v794
        %v1718 = vunpack.c.l.b16 %v795
        %v1719 = vunpack.c.h.b16 %v795
        %v1720 = vunpack.c.l.b16 %v796
        %v1721 = vunpack.c.h.b16 %v796
        %v1722 = vunpack.c.l.b16 %v797
        %v1723 = vunpack.c.h.b16 %v797
        %v1724 = vunpack.c.l.b16 %v798
        %v1725 = vunpack.c.h.b16 %v798
        %v1726 = vunpack.c.l.b16 %v799
        %v1727 = vunpack.c.h.b16 %v799
        %v1728 = vunpack.c.l.b16 %v800
        %v1729 = vunpack.c.h.b16 %v800
        %v1730 = vunpack.c.l.b16 %v801
        %v1731 = vunpack.c.h.b16 %v801
        %v1732 = vunpack.c.l.b16 %v802
        %v1733 = vunpack.c.h.b16 %v802
        %v1734 = vunpack.c.l.b16 %v803
        %v1735 = vunpack.c.h.b16 %v803
        %v1736 = vunpack.c.l.b16 %v804
        %v1737 = vunpack.c.h.b16 %v804
        %v1738 = vunpack.c.l.b16 %v805
        %v1739 = vunpack.c.h.b16 %v805
        %v1740 = vunpack.c.l.b16 %v806
        %v1741 = vunpack.c.h.b16 %v806
        %v1742 = vunpack.c.l.b16 %v807
        %v1743 = vunpack.c.h.b16 %v807
        %v1744 = vunpack.c.l.b16 %v808
        %v1745 = vunpack.c.h.b16 %v808
        %v1746 = vunpack.c.l.b16 %v809
        %v1747 = vunpack.c.h.b16 %v809
        %v1748 = vunpack.c.l.b16 %v810
        %v1749 = vunpack.c.h.b16 %v810
        %v1750 = vunpack.c.l.b16 %v811
        %v1751 = vunpack.c.h.b16 %v811
        %v1752 = vunpack.c.l.b16 %v812
        %v1753 = vunpack.c.h.b16 %v812
        %v1754 = vunpack.c.l.b16 %v813
        %v1755 = vunpack.c.h.b16 %v813
        %v1756 = vunpack.c.l.b16 %v814
        %v1757 = vunpack.c.h.b16 %v814
        %v1758 = vunpack.c.l.b16 %v815
        %v1759 = vunpack.c.h.b16 %v815
        %v1760 = vunpack.c.l.b16 %v816
        %v1761 = vunpack.c.h.b16 %v816
        %v1762 = vunpack.c.l.b16 %v817
        %v1763 = vunpack.c.h.b16 %v817
        %v1764 = vunpack.c.l.b16 %v818
        %v1765 = vunpack.c.h.b16 %v818
        %v1766 = vunpack.c.l.b16 %v819
        %v1767 = vunpack.c.h.b16 %v819
        %v1768 = vunpack.c.l.b16 %v820
        %v1769 = vunpack.c.h.b16 %v820
        %v1770 = vunpack.c.l.b16 %v821
        %v1771 = vunpack.c.h.b16 %v821
        %v1772 = vunpack.c.l.b16 %v822
        %v1773 = vunpack.c.h.b16 %v822
        %v1774 = vunpack.c.l.b16 %v823
        %v1775 = vunpack.c.h.b16 %v823
        %v1776 = vunpack.c.l.b16 %v824
        %v1777 = vunpack.c.h.b16 %v824
        %v1778 = vunpack.c.l.b16 %v825
        %v1779 = vunpack.c.h.b16 %v825
        %v1780 = vunpack.c.l.b16 %v826
        %v1781 = vunpack.c.h.b16 %v826
        %v1782 = vunpack.c.l.b16 %v827
        %v1783 = vunpack.c.h.b16 %v827
        %v1784 = vunpack.c.l.b16 %v828
        %v1785 = vunpack.c.h.b16 %v828
        %v1786 = vunpack.c.l.b16 %v829
        %v1787 = vunpack.c.h.b16 %v829
        %v1788 = vunpack.c.l.b16 %v830
        %v1789 = vunpack.c.h.b16 %v830
        %v1790 = vunpack.c.l.b16 %v831
        %v1791 = vunpack.c.h.b16 %v831
        %v1792 = vpack.c.b16 %v1288, %v1280
        %v1793 = vpack.c.b16 %v1289, %v1281
        %v1794 = vpack.c.b16 %v1290, %v1282
        %v1795 = vpack.c.b16 %v1291, %v1283
        %v1796 = vpack.c.b16 %v1292, %v1284
        %v1797 = vpack.c.b16 %v1293, %v1285
        %v1798 = vpack.c.b16 %v1294, %v1286
        %v1799 = vpack.c.b16 %v1295, %v1287
        %v1800 = vpack.c.b16 %v1304, %v1296
        %v1801 = vpack.c.b16 %v1305, %v1297
        %v1802 = vpack.c.b16 %v1306, %v1298
        %v1803 = vpack.c.b16 %v1307, %v1299
        %v1804 = vpack.c.b16 %v1308, %v1300
        %v1805 = vpack.c.b16 %v1309, %v1301
        %v1806 = vpack.c.b16 %v1310, %v1302
        %v1807 = vpack.c.b16 %v1311, %v1303
        %v1808 = vpack.c.b16 %v1320, %v1312
        %v1809 = vpack.c.b16 %v1321, %v1313
        %v1810 = vpack.c.b16 %v1322, %v1314
        %v1811 = vpack.c.b16 %v1323, %v1315
        %v1812 = vpack.c.b16 %v1324, %v1316
        %v1813 = vpack.c.b16 %v1325, %v1317
        %v1814 = vpack.c.b16 %v1326, %v1318
        %v1815 = vpack.c.b16 %v1327, %v1319
        %v1816 = vpack.c.b16 %v1336, %v1328
        %v1817 = vpack.c.b16 %v1337, %v1329
        %v1818 = vpack.c.b16 %v1338, %v1330
        %v1819 = vpack.c.b16 %v1339, %v1331
        %v1820 = vpack.c.b16 %v1340, %v1332
        %v1821 = vpack.c.b16 %v1341, %v1333
        %v1822 = vpack.c.b16 %v1342, %v1334
        %v1823 = vpack.c.b16 %v1343, %v1335
        %v1824 = vpack.c.b16 %v1352, %v1344
        %v1825 = vpack.c.b16 %v1353, %v1345
        %v1826 = vpack.c.b16 %v1354, %v1346
        %v1827 = vpack.c.b16 %v1355, %v1347
        %v1828 = vpack.c.b16 %v1356, %v1348
        %v1829 = vpack.c.b16 %v1357, %v1349
        %v1830 = vpack.c.b16 %v1358, %v1350
        %v1831 = vpack.c.b16 %v1359, %v1351
        %v1832 = vpack.c.b16 %v1368, %v1360
        %v1833 = vpack.c.b16 %v1369, %v1361
        %v1834 = vpack.c.b16 %v1370, %v1362
        %v1835 = vpack.c.b16 %v1371, %v1363
        %v1836 = vpack.c.b16 %v1372, %v1364
        %v1837 = vpack.c.b16 %v1373, %v1365
        %v1838 = vpack.c.b16 %v1374, %v1366
        %v1839 = vpack.c.b16 %v1375, %v1367
        %v1840 = vpack.c.b16 %v1384, %v1376
        %v1841 = vpack.c.b16 %v1385, %v1377
        %v1842 = vpack.c.b16 %v1386, %v1378
        %v1843 = vpack.c.b16 %v1387, %v1379
        %v1844 = vpack.c.b16 %v1388, %v1380
        %v1845 = vpack.c.b16 %v1389, %v1381
        %v1846 = vpack.c.b16 %v1390, %v1382
        %v1847 = vpack.c.b16 %v1391, %v1383
        %v1848 = vpack.c.b16 %v1400, %v1392
        %v1849 = vpack.c.b16 %v1401, %v1393
        %v1850 = vpack.c.b16 %v1402, %v1394
        %v1851 = vpack.c.b16 %v1403, %v1395
        %v1852 = vpack.c.b16 %v1404, %v1396
        %v1853 = vpack.c.b16 %v1405, %v1397
        %v1854 = vpack.c.b16 %v1406, %v1398
        %v1855 = vpack.c.b16 %v1407, %v1399
        %v1856 = vpack.c.b16 %v1416, %v1408
        %v1857 = vpack.c.b16 %v1417, %v1409
        %v1858 = vpack.c.b16 %v1418, %v1410
        %v1859 = vpack.c.b16 %v1419, %v1411
        %v1860 = vpack.c.b16 %v1420, %v1412
        %v1861 = vpack.c.b16 %v1421, %v1413
        %v1862 = vpack.c.b16 %v1422, %v1414
        %v1863 = vpack.c.b16 %v1423, %v1415
        %v1864 = vpack.c.b16 %v1432, %v1424
        %v1865 = vpack.c.b16 %v1433, %v1425
        %v1866 = vpack.c.b16 %v1434, %v1426
        %v1867 = vpack.c.b16 %v1435, %v1427
        %v1868 = vpack.c.b16 %v1436, %v1428
        %v1869 = vpack.c.b16 %v1437, %v1429
        %v1870 = vpack.c.b16 %v1438, %v1430
        %v1871 = vpack.c.b16 %v1439, %v1431
        %v1872 = vpack.c.b16 %v1448, %v1440
        %v1873 = vpack.c.b16 %v1449, %v1441
        %v1874 = vpack.c.b16 %v1450, %v1442
        %v1875 = vpack.c.b16 %v1451, %v1443
        %v1876 = vpack.c.b16 %v1452, %v1444
        %v1877 = vpack.c.b16 %v1453, %v1445
        %v1878 = vpack.c.b16 %v1454, %v1446
        %v1879 = vpack.c.b16 %v1455, %v1447
        %v1880 = vpack.c.b16 %v1464, %v1456
        %v1881 = vpack.c.b16 %v1465, %v1457
        %v1882 = vpack.c.b16 %v1466, %v1458
        %v1883 = vpack.c.b16 %v1467, %v1459
        %v1884 = vpack.c.b16 %v1468, %v1460
        %v1885 = vpack.c.b16 %v1469, %v1461
        %v1886 = vpack.c.b16 %v1470, %v1462
        %v1887 = vpack.c.b16 %v1471, %v1463
        %v1888 = vpack.c.b16 %v1480, %v1472
        %v1889 = vpack.c.b16 %v1481, %v1473
        %v1890 = vpack.c.b16 %v1482, %v1474
        %v1891 = vpack.c.b16 %v1483, %v1475
        %v1892 = vpack.c.b16 %v1484, %v1476
        %v1893 = vpack.c.b16 %v1485, %v1477
        %v1894 = vpack.c.b16 %v1486, %v1478
        %v1895 = vpack.c.b16 %v1487, %v1479
        %v1896 = vpack.c.b16 %v1496, %v1488
        %v1897 = vpack.c.b16 %v1497, %v1489
        %v1898 = vpack.c.b16 %v1498, %v1490
        %v1899 = vpack.c.b16 %v1499, %v1491
        %v1900 = vpack.c.b16 %v1500, %v1492
        %v1901 = vpack.c.b16 %v1501, %v1493
        %v1902 = vpack.c.b16 %v1502, %v1494
        %v1903 = vpack.c.b16 %v1503, %v1495
        %v1904 = vpack.c.b16 %v1512, %v1504
        %v1905 = vpack.c.b16 %v1513, %v1505
        %v1906 = vpack.c.b16 %v1514, %v1506
        %v1907 = vpack.c.b16 %v1515, %v1507
        %v1908 = vpack.c.b16 %v1516, %v1508
        %v1909 = vpack.c.b16 %v1517, %v1509
        %v1910 = vpack.c.b16 %v1518, %v1510
        %v1911 = vpack.c.b16 %v1519, %v1511
        %v1912 = vpack.c.b16 %v1528, %v1520
        %v1913 = vpack.c.b16 %v1529, %v1521
        %v1914 = vpack.c.b16 %v1530, %v1522
        %v1915 = vpack.c.b16 %v1531, %v1523
        %v1916 = vpack.c.b16 %v1532, %v1524
        %v1917 = vpack.c.b16 %v1533, %v1525
        %v1918 = vpack.c.b16 %v1534, %v1526
        %v1919 = vpack.c.b16 %v1535, %v1527
        %v1920 = vpack.c.b16 %v1544, %v1536
        %v1921 = vpack.c.b16 %v1545, %v1537
        %v1922 = vpack.c.b16 %v1546, %v1538
        %v1923 = vpack.c.b16 %v1547, %v1539
        %v1924 = vpack.c.b16 %v1548, %v1540
        %v1925 = vpack.c.b16 %v1549, %v1541
        %v1926 = vpack.c.b16 %v1550, %v1542
        %v1927 = vpack.c.b16 %v1551, %v1543
        %v1928 = vpack.c.b16 %v1560, %v1552
        %v1929 = vpack.c.b16 %v1561, %v1553
        %v1930 = vpack.c.b16 %v1562, %v1554
        %v1931 = vpack.c.b16 %v1563, %v1555
        %v1932 = vpack.c.b16 %v1564, %v1556
        %v1933 = vpack.c.b16 %v1565, %v1557
        %v1934 = vpack.c.b16 %v1566, %v1558
        %v1935 = vpack.c.b16 %v1567, %v1559
        %v1936 = vpack.c.b16 %v1576, %v1568
        %v1937 = vpack.c.b16 %v1577, %v1569
        %v1938 = vpack.c.b16 %v1578, %v1570
        %v1939 = vpack.c.b16 %v1579, %v1571
        %v1940 = vpack.c.b16 %v1580, %v1572
        %v1941 = vpack.c.b16 %v1581, %v1573
        %v1942 = vpack.c.b16 %v1582, %v1574
        %v1943 = vpack.c.b16 %v1583, %v1575
        %v1944 = vpack.c.b16 %v1592, %v1584
        %v1945 = vpack.c.b16 %v1593, %v1585
        %v1946 = vpack.c.b16 %v1594, %v1586
        %v1947 = vpack.c.b16 %v1595, %v1587
        %v1948 = vpack.c.b16 %v1596, %v1588
        %v1949 = vpack.c.b16 %v1597, %v1589
        %v1950 = vpack.c.b16 %v1598, %v1590
        %v1951 = vpack.c.b16 %v1599, %v1591
        %v1952 = vpack.c.b16 %v1608, %v1600
        %v1953 = vpack.c.b16 %v1609, %v1601
        %v1954 = vpack.c.b16 %v1610, %v1602
        %v1955 = vpack.c.b16 %v1611, %v1603
        %v1956 = vpack.c.b16 %v1612, %v1604
        %v1957 = vpack.c.b16 %v1613, %v1605
        %v1958 = vpack.c.b16 %v1614, %v1606
        %v1959 = vpack.c.b16 %v1615, %v1607
        %v1960 = vpack.c.b16 %v1624, %v1616
        %v1961 = vpack.c.b16 %v1625, %v1617
        %v1962 = vpack.c.b16 %v1626, %v1618
        %v1963 = vpack.c.b16 %v1627, %v1619
        %v1964 = vpack.c.b16 %v1628, %v1620
        %v1965 = vpack.c.b16 %v1629, %v1621
        %v1966 = vpack.c.b16 %v1630, %v1622
        %v1967 = vpack.c.b16 %v1631, %v1623
        %v1968 = vpack.c.b16 %v1640, %v1632
        %v1969 = vpack.c.b16 %v1641, %v1633
        %v1970 = vpack.c.b16 %v1642, %v1634
        %v1971 = vpack.c.b16 %v1643, %v1635
        %v1972 = vpack.c.b16 %v1644, %v1636
        %v1973 = vpack.c.b16 %v1645, %v1637
        %v1974 = vpack.c.b16 %v1646, %v1638
        %v1975 = vpack.c.b16 %v1647, %v1639
        %v1976 = vpack.c.b16 %v1656, %v1648
        %v1977 = vpack.c.b16 %v1657, %v1649
        %v1978 = vpack.c.b16 %v1658, %v1650
        %v1979 = vpack.c.b16 %v1659, %v1651
        %v1980 = vpack.c.b16 %v1660, %v1652
        %v1981 = vpack.c.b16 %v1661, %v1653
        %v1982 = vpack.c.b16 %v1662, %v1654
        %v1983 = vpack.c.b16 %v1663, %v1655
        %v1984 = vpack.c.b16 %v1672, %v1664
        %v1985 = vpack.c.b16 %v1673, %v1665
        %v1986 = vpack.c.b16 %v1674, %v1666
        %v1987 = vpack.c.b16 %v1675, %v1667
        %v1988 = vpack.c.b16 %v1676, %v1668
        %v1989 = vpack.c.b16 %v1677, %v1669
        %v1990 = vpack.c.b16 %v1678, %v1670
        %v1991 = vpack.c.b16 %v1679, %v1671
        %v1992 = vpack.c.b16 %v1688, %v1680
        %v1993 = vpack.c.b16 %v1689, %v1681
        %v1994 = vpack.c.b16 %v1690, %v1682
        %v1995 = vpack.c.b16 %v1691, %v1683
        %v1996 = vpack.c.b16 %v1692, %v1684
        %v1997 = vpack.c.b16 %v1693, %v1685
        %v1998 = vpack.c.b16 %v1694, %v1686
        %v1999 = vpack.c.b16 %v1695, %v1687
        %v2000 = vpack.c.b16 %v1704, %v1696
        %v2001 = vpack.c.b16 %v1705, %v1697
        %v2002 = vpack.c.b16 %v1706, %v1698
        %v2003 = vpack.c.b16 %v1707, %v1699
        %v2004 = vpack.c.b16 %v1708, %v1700
        %v2005 = vpack.c.b16 %v1709, %v1701
        %v2006 = vpack.c.b16 %v1710, %v1702
        %v2007 = vpack.c.b16 %v1711, %v1703
        %v2008 = vpack.c.b16 %v1720, %v1712
        %v2009 = vpack.c.b16 %v1721, %v1713
        %v2010 = vpack.c.b16 %v1722, %v1714
        %v2011 = vpack.c.b16 %v1723, %v1715
        %v2012 = vpack.c.b16 %v1724, %v1716
        %v2013 = vpack.c.b16 %v1725, %v1717
        %v2014 = vpack.c.b16 %v1726, %v1718
        %v2015 = vpack.c.b16 %v1727, %v1719
        %v2016 = vpack.c.b16 %v1736, %v1728
        %v2017 = vpack.c.b16 %v1737, %v1729
        %v2018 = vpack.c.b16 %v1738, %v1730
        %v2019 = vpack.c.b16 %v1739, %v1731
        %v2020 = vpack.c.b16 %v1740, %v1732
        %v2021 = vpack.c.b16 %v1741, %v1733
        %v2022 = vpack.c.b16 %v1742, %v1734
        %v2023 = vpack.c.b16 %v1743, %v1735
        %v2024 = vpack.c.b16 %v1752, %v1744
        %v2025 = vpack.c.b16 %v1753, %v1745
        %v2026 = vpack.c.b16 %v1754, %v1746
        %v2027 = vpack.c.b16 %v1755, %v1747
        %v2028 = vpack.c.b16 %v1756, %v1748
        %v2029 = vpack.c.b16 %v1757, %v1749
        %v2030 = vpack.c.b16 %v1758, %v1750
        %v2031 = vpack.c.b16 %v1759, %v1751
        %v2032 = vpack.c.b16 %v1768, %v1760
        %v2033 = vpack.c.b16 %v1769, %v1761
        %v2034 = vpack.c.b16 %v1770, %v1762
        %v2035 = vpack.c.b16 %v1771, %v1763
        %v2036 = vpack.c.b16 %v1772, %v1764
        %v2037 = vpack.c.b16 %v1773, %v1765
        %v2038 = vpack.c.b16 %v1774, %v1766
        %v2039 = vpack.c.b16 %v1775, %v1767
        %v2040 = vpack.c.b16 %v1784, %v1776
        %v2041 = vpack.c.b16 %v1785, %v1777
        %v2042 = vpack.c.b16 %v1786, %v1778
        %v2043 = vpack.c.b16 %v1787, %v1779
        %v2044 = vpack.c.b16 %v1788, %v1780
        %v2045 = vpack.c.b16 %v1789, %v1781
        %v2046 = vpack.c.b16 %v1790, %v1782
        %v2047 = vpack.c.b16 %v1791, %v1783
        %2304 = vmatprep.subr.bf16.mxu0 0
        %2305 = vmatpush1.bf16.msra.mxu0 %v967
        %2306 = vmatprep.subr.bf16.mxu0 0
        %2307 = vmatpush1.bf16.msra.mxu0 %v966
        %2308 = vmatprep.subr.bf16.mxu0 0
        %2309 = vmatpush1.bf16.msra.mxu0 %v965
        %2310 = vmatprep.subr.bf16.mxu0 0
        %2311 = vmatpush1.bf16.msra.mxu0 %v964
        %2312 = vmatprep.subr.bf16.mxu0 0
        %2313 = vmatpush1.bf16.msra.mxu0 %v963
        %2314 = vmatprep.subr.bf16.mxu0 0
        %2315 = vmatpush1.bf16.msra.mxu0 %v962
        %2316 = vmatprep.subr.bf16.mxu0 0
        %2317 = vmatpush1.bf16.msra.mxu0 %v961
        %2318 = vmatprep.subr.bf16.mxu0 0
        %2319 = vmatpush1.bf16.msra.mxu0 %v960
        %2320 = vmatprep.subr.bf16.mxu0 0
        %2321 = vmatpush2.bf16.msra.mxu0 %v975
        %2322 = vmatprep.subr.bf16.mxu0 0
        %2323 = vmatpush2.bf16.msra.mxu0 %v974
        %2324 = vmatprep.subr.bf16.mxu0 0
        %2325 = vmatpush2.bf16.msra.mxu0 %v973
        %2326 = vmatprep.subr.bf16.mxu0 0
        %2327 = vmatpush2.bf16.msra.mxu0 %v972
        %2328 = vmatprep.subr.bf16.mxu0 0
        %2329 = vmatpush2.bf16.msra.mxu0 %v971
        %2330 = vmatprep.subr.bf16.mxu0 0
        %2331 = vmatpush2.bf16.msra.mxu0 %v970
        %2332 = vmatprep.subr.bf16.mxu0 0
        %2333 = vmatpush2.bf16.msra.mxu0 %v969
        %2334 = vmatprep.subr.bf16.mxu0 0
        %2335 = vmatpush2.bf16.msra.mxu0 %v968
        %2336 = vmatprep.mubr.bf16.mxu0 %v1793
        %2337 = vmatmul.mubr.bf16.gmra.mxu0 %v1792
        %v2338 = vpop.f32.mrf.mxu0
        %v2339 = vadd.f32 0.0, %v2338
        %v2340 = vpop.f32.mrf.mxu0
        %v2341 = vpop.f32.mrf.mxu0
        %v2342 = vadd.f32 0.0, %v2341
        %v2343 = vpop.f32.mrf.mxu0
        %2344 = vmatprep.mubr.bf16.mxu0 %v1801
        %2345 = vmatmul.mubr.bf16.gmra.mxu0 %v1800
        %v2346 = vpop.f32.mrf.mxu0
        %v2347 = vadd.f32 0.0, %v2346
        %v2348 = vpop.f32.mrf.mxu0
        %v2349 = vpop.f32.mrf.mxu0
        %v2350 = vadd.f32 0.0, %v2349
        %v2351 = vpop.f32.mrf.mxu0
        %2352 = vmatprep.mubr.bf16.mxu0 %v1809
        %2353 = vmatmul.mubr.bf16.gmra.mxu0 %v1808
        %v2354 = vpop.f32.mrf.mxu0
        %v2355 = vadd.f32 0.0, %v2354
        %v2356 = vpop.f32.mrf.mxu0
        %v2357 = vpop.f32.mrf.mxu0
        %v2358 = vadd.f32 0.0, %v2357
        %v2359 = vpop.f32.mrf.mxu0
        %2360 = vmatprep.mubr.bf16.mxu0 %v1817
        %2361 = vmatmul.mubr.bf16.gmra.mxu0 %v1816
        %v2362 = vpop.f32.mrf.mxu0
        %v2363 = vadd.f32 0.0, %v2362
        %v2364 = vpop.f32.mrf.mxu0
        %v2365 = vpop.f32.mrf.mxu0
        %v2366 = vadd.f32 0.0, %v2365
        %v2367 = vpop.f32.mrf.mxu0
        %2368 = vmatprep.mubr.bf16.mxu0 %v1825
        %2369 = vmatmul.mubr.bf16.gmra.mxu0 %v1824
        %v2370 = vpop.f32.mrf.mxu0
        %v2371 = vadd.f32 0.0, %v2370
        %v2372 = vpop.f32.mrf.mxu0
        %v2373 = vpop.f32.mrf.mxu0
        %v2374 = vadd.f32 0.0, %v2373
        %v2375 = vpop.f32.mrf.mxu0
        %2376 = vmatprep.mubr.bf16.mxu0 %v1833
        %2377 = vmatmul.mubr.bf16.gmra.mxu0 %v1832
        %v2378 = vpop.f32.mrf.mxu0
        %v2379 = vadd.f32 0.0, %v2378
        %v2380 = vpop.f32.mrf.mxu0
        %v2381 = vpop.f32.mrf.mxu0
        %v2382 = vadd.f32 0.0, %v2381
        %v2383 = vpop.f32.mrf.mxu0
        %2384 = vmatprep.mubr.bf16.mxu0 %v1841
        %2385 = vmatmul.mubr.bf16.gmra.mxu0 %v1840
        %v2386 = vpop.f32.mrf.mxu0
        %v2387 = vadd.f32 0.0, %v2386
        %v2388 = vpop.f32.mrf.mxu0
        %v2389 = vpop.f32.mrf.mxu0
        %v2390 = vadd.f32 0.0, %v2389
        %v2391 = vpop.f32.mrf.mxu0
        %2392 = vmatprep.mubr.bf16.mxu0 %v1849
        %2393 = vmatmul.mubr.bf16.gmra.mxu0 %v1848
        %v2394 = vpop.f32.mrf.mxu0
        %v2395 = vadd.f32 0.0, %v2394
        %v2396 = vpop.f32.mrf.mxu0
        %v2397 = vpop.f32.mrf.mxu0
        %v2398 = vadd.f32 0.0, %v2397
        %v2399 = vpop.f32.mrf.mxu0
        %2400 = vmatprep.mubr.bf16.mxu0 %v1857
        %2401 = vmatmul.mubr.bf16.gmra.mxu0 %v1856
        %v2402 = vpop.f32.mrf.mxu0
        %v2403 = vadd.f32 0.0, %v2402
        %v2404 = vpop.f32.mrf.mxu0
        %v2405 = vpop.f32.mrf.mxu0
        %v2406 = vadd.f32 0.0, %v2405
        %v2407 = vpop.f32.mrf.mxu0
        %2408 = vmatprep.mubr.bf16.mxu0 %v1865
        %2409 = vmatmul.mubr.bf16.gmra.mxu0 %v1864
        %v2410 = vpop.f32.mrf.mxu0
        %v2411 = vadd.f32 0.0, %v2410
        %v2412 = vpop.f32.mrf.mxu0
        %v2413 = vpop.f32.mrf.mxu0
        %v2414 = vadd.f32 0.0, %v2413
        %v2415 = vpop.f32.mrf.mxu0
        %2416 = vmatprep.mubr.bf16.mxu0 %v1873
        %2417 = vmatmul.mubr.bf16.gmra.mxu0 %v1872
        %v2418 = vpop.f32.mrf.mxu0
        %v2419 = vadd.f32 0.0, %v2418
        %v2420 = vpop.f32.mrf.mxu0
        %v2421 = vpop.f32.mrf.mxu0
        %v2422 = vadd.f32 0.0, %v2421
        %v2423 = vpop.f32.mrf.mxu0
        %2424 = vmatprep.mubr.bf16.mxu0 %v1881
        %2425 = vmatmul.mubr.bf16.gmra.mxu0 %v1880
        %v2426 = vpop.f32.mrf.mxu0
        %v2427 = vadd.f32 0.0, %v2426
        %v2428 = vpop.f32.mrf.mxu0
        %v2429 = vpop.f32.mrf.mxu0
        %v2430 = vadd.f32 0.0, %v2429
        %v2431 = vpop.f32.mrf.mxu0
        %2432 = vmatprep.mubr.bf16.mxu0 %v1889
        %2433 = vmatmul.mubr.bf16.gmra.mxu0 %v1888
        %v2434 = vpop.f32.mrf.mxu0
        %v2435 = vadd.f32 0.0, %v2434
        %v2436 = vpop.f32.mrf.mxu0
        %v2437 = vpop.f32.mrf.mxu0
        %v2438 = vadd.f32 0.0, %v2437
        %v2439 = vpop.f32.mrf.mxu0
        %2440 = vmatprep.mubr.bf16.mxu0 %v1897
        %2441 = vmatmul.mubr.bf16.gmra.mxu0 %v1896
        %v2442 = vpop.f32.mrf.mxu0
        %v2443 = vadd.f32 0.0, %v2442
        %v2444 = vpop.f32.mrf.mxu0
        %v2445 = vpop.f32.mrf.mxu0
        %v2446 = vadd.f32 0.0, %v2445
        %v2447 = vpop.f32.mrf.mxu0
        %2448 = vmatprep.mubr.bf16.mxu0 %v1905
        %2449 = vmatmul.mubr.bf16.gmra.mxu0 %v1904
        %v2450 = vpop.f32.mrf.mxu0
        %v2451 = vadd.f32 0.0, %v2450
        %v2452 = vpop.f32.mrf.mxu0
        %v2453 = vpop.f32.mrf.mxu0
        %v2454 = vadd.f32 0.0, %v2453
        %v2455 = vpop.f32.mrf.mxu0
        %2456 = vmatprep.mubr.bf16.mxu0 %v1913
        %2457 = vmatmul.mubr.bf16.gmra.mxu0 %v1912
        %v2458 = vpop.f32.mrf.mxu0
        %v2459 = vadd.f32 0.0, %v2458
        %v2460 = vpop.f32.mrf.mxu0
        %v2461 = vpop.f32.mrf.mxu0
        %v2462 = vadd.f32 0.0, %v2461
        %v2463 = vpop.f32.mrf.mxu0
        %2464 = vmatprep.mubr.bf16.mxu0 %v1921
        %2465 = vmatmul.mubr.bf16.gmra.mxu0 %v1920
        %v2466 = vpop.f32.mrf.mxu0
        %v2467 = vadd.f32 0.0, %v2466
        %v2468 = vpop.f32.mrf.mxu0
        %v2469 = vpop.f32.mrf.mxu0
        %v2470 = vadd.f32 0.0, %v2469
        %v2471 = vpop.f32.mrf.mxu0
        %2472 = vmatprep.mubr.bf16.mxu0 %v1929
        %2473 = vmatmul.mubr.bf16.gmra.mxu0 %v1928
        %v2474 = vpop.f32.mrf.mxu0
        %v2475 = vadd.f32 0.0, %v2474
        %v2476 = vpop.f32.mrf.mxu0
        %v2477 = vpop.f32.mrf.mxu0
        %v2478 = vadd.f32 0.0, %v2477
        %v2479 = vpop.f32.mrf.mxu0
        %2480 = vmatprep.mubr.bf16.mxu0 %v1937
        %2481 = vmatmul.mubr.bf16.gmra.mxu0 %v1936
        %v2482 = vpop.f32.mrf.mxu0
        %v2483 = vadd.f32 0.0, %v2482
        %v2484 = vpop.f32.mrf.mxu0
        %v2485 = vpop.f32.mrf.mxu0
        %v2486 = vadd.f32 0.0, %v2485
        %v2487 = vpop.f32.mrf.mxu0
        %2488 = vmatprep.mubr.bf16.mxu0 %v1945
        %2489 = vmatmul.mubr.bf16.gmra.mxu0 %v1944
        %v2490 = vpop.f32.mrf.mxu0
        %v2491 = vadd.f32 0.0, %v2490
        %v2492 = vpop.f32.mrf.mxu0
        %v2493 = vpop.f32.mrf.mxu0
        %v2494 = vadd.f32 0.0, %v2493
        %v2495 = vpop.f32.mrf.mxu0
        %2496 = vmatprep.mubr.bf16.mxu0 %v1953
        %2497 = vmatmul.mubr.bf16.gmra.mxu0 %v1952
        %v2498 = vpop.f32.mrf.mxu0
        %v2499 = vadd.f32 0.0, %v2498
        %v2500 = vpop.f32.mrf.mxu0
        %v2501 = vpop.f32.mrf.mxu0
        %v2502 = vadd.f32 0.0, %v2501
        %v2503 = vpop.f32.mrf.mxu0
        %2504 = vmatprep.mubr.bf16.mxu0 %v1961
        %2505 = vmatmul.mubr.bf16.gmra.mxu0 %v1960
        %v2506 = vpop.f32.mrf.mxu0
        %v2507 = vadd.f32 0.0, %v2506
        %v2508 = vpop.f32.mrf.mxu0
        %v2509 = vpop.f32.mrf.mxu0
        %v2510 = vadd.f32 0.0, %v2509
        %v2511 = vpop.f32.mrf.mxu0
        %2512 = vmatprep.mubr.bf16.mxu0 %v1969
        %2513 = vmatmul.mubr.bf16.gmra.mxu0 %v1968
        %v2514 = vpop.f32.mrf.mxu0
        %v2515 = vadd.f32 0.0, %v2514
        %v2516 = vpop.f32.mrf.mxu0
        %v2517 = vpop.f32.mrf.mxu0
        %v2518 = vadd.f32 0.0, %v2517
        %v2519 = vpop.f32.mrf.mxu0
        %2520 = vmatprep.mubr.bf16.mxu0 %v1977
        %2521 = vmatmul.mubr.bf16.gmra.mxu0 %v1976
        %v2522 = vpop.f32.mrf.mxu0
        %v2523 = vadd.f32 0.0, %v2522
        %v2524 = vpop.f32.mrf.mxu0
        %v2525 = vpop.f32.mrf.mxu0
        %v2526 = vadd.f32 0.0, %v2525
        %v2527 = vpop.f32.mrf.mxu0
        %2528 = vmatprep.mubr.bf16.mxu0 %v1985
        %2529 = vmatmul.mubr.bf16.gmra.mxu0 %v1984
        %v2530 = vpop.f32.mrf.mxu0
        %v2531 = vadd.f32 0.0, %v2530
        %v2532 = vpop.f32.mrf.mxu0
        %v2533 = vpop.f32.mrf.mxu0
        %v2534 = vadd.f32 0.0, %v2533
        %v2535 = vpop.f32.mrf.mxu0
        %2536 = vmatprep.mubr.bf16.mxu0 %v1993
        %2537 = vmatmul.mubr.bf16.gmra.mxu0 %v1992
        %v2538 = vpop.f32.mrf.mxu0
        %v2539 = vadd.f32 0.0, %v2538
        %v2540 = vpop.f32.mrf.mxu0
        %v2541 = vpop.f32.mrf.mxu0
        %v2542 = vadd.f32 0.0, %v2541
        %v2543 = vpop.f32.mrf.mxu0
        %2544 = vmatprep.mubr.bf16.mxu0 %v2001
        %2545 = vmatmul.mubr.bf16.gmra.mxu0 %v2000
        %v2546 = vpop.f32.mrf.mxu0
        %v2547 = vadd.f32 0.0, %v2546
        %v2548 = vpop.f32.mrf.mxu0
        %v2549 = vpop.f32.mrf.mxu0
        %v2550 = vadd.f32 0.0, %v2549
        %v2551 = vpop.f32.mrf.mxu0
        %2552 = vmatprep.mubr.bf16.mxu0 %v2009
        %2553 = vmatmul.mubr.bf16.gmra.mxu0 %v2008
        %v2554 = vpop.f32.mrf.mxu0
        %v2555 = vadd.f32 0.0, %v2554
        %v2556 = vpop.f32.mrf.mxu0
        %v2557 = vpop.f32.mrf.mxu0
        %v2558 = vadd.f32 0.0, %v2557
        %v2559 = vpop.f32.mrf.mxu0
        %2560 = vmatprep.mubr.bf16.mxu0 %v2017
        %2561 = vmatmul.mubr.bf16.gmra.mxu0 %v2016
        %v2562 = vpop.f32.mrf.mxu0
        %v2563 = vadd.f32 0.0, %v2562
        %v2564 = vpop.f32.mrf.mxu0
        %v2565 = vpop.f32.mrf.mxu0
        %v2566 = vadd.f32 0.0, %v2565
        %v2567 = vpop.f32.mrf.mxu0
        %2568 = vmatprep.mubr.bf16.mxu0 %v2025
        %2569 = vmatmul.mubr.bf16.gmra.mxu0 %v2024
        %v2570 = vpop.f32.mrf.mxu0
        %v2571 = vadd.f32 0.0, %v2570
        %v2572 = vpop.f32.mrf.mxu0
        %v2573 = vpop.f32.mrf.mxu0
        %v2574 = vadd.f32 0.0, %v2573
        %v2575 = vpop.f32.mrf.mxu0
        %2576 = vmatprep.mubr.bf16.mxu0 %v2033
        %2577 = vmatmul.mubr.bf16.gmra.mxu0 %v2032
        %v2578 = vpop.f32.mrf.mxu0
        %v2579 = vadd.f32 0.0, %v2578
        %v2580 = vpop.f32.mrf.mxu0
        %v2581 = vpop.f32.mrf.mxu0
        %v2582 = vadd.f32 0.0, %v2581
        %v2583 = vpop.f32.mrf.mxu0
        %2584 = vmatprep.mubr.bf16.mxu0 %v2041
        %2585 = vmatmul.mubr.bf16.gmra.mxu0 %v2040
        %v2586 = vpop.f32.mrf.mxu0
        %v2587 = vadd.f32 0.0, %v2586
        %v2588 = vpop.f32.mrf.mxu0
        %v2589 = vpop.f32.mrf.mxu0
        %v2590 = vadd.f32 0.0, %v2589
        %v2591 = vpop.f32.mrf.mxu0
        %2592 = vdwg.mxu0
        %2593 = vmatprep.subr.bf16.mxu0 0
        %2594 = vmatpush1.bf16.msra.mxu0 %v983
        %2595 = vmatprep.subr.bf16.mxu0 0
        %2596 = vmatpush1.bf16.msra.mxu0 %v982
        %2597 = vmatprep.subr.bf16.mxu0 0
        %2598 = vmatpush1.bf16.msra.mxu0 %v981
        %2599 = vmatprep.subr.bf16.mxu0 0
        %2600 = vmatpush1.bf16.msra.mxu0 %v980
        %2601 = vmatprep.subr.bf16.mxu0 0
        %2602 = vmatpush1.bf16.msra.mxu0 %v979
        %2603 = vmatprep.subr.bf16.mxu0 0
        %2604 = vmatpush1.bf16.msra.mxu0 %v978
        %2605 = vmatprep.subr.bf16.mxu0 0
        %2606 = vmatpush1.bf16.msra.mxu0 %v977
        %2607 = vmatprep.subr.bf16.mxu0 0
        %2608 = vmatpush1.bf16.msra.mxu0 %v976
        %2609 = vmatprep.subr.bf16.mxu0 0
        %2610 = vmatpush2.bf16.msra.mxu0 %v991
        %2611 = vmatprep.subr.bf16.mxu0 0
        %2612 = vmatpush2.bf16.msra.mxu0 %v990
        %2613 = vmatprep.subr.bf16.mxu0 0
        %2614 = vmatpush2.bf16.msra.mxu0 %v989
        %2615 = vmatprep.subr.bf16.mxu0 0
        %2616 = vmatpush2.bf16.msra.mxu0 %v988
        %2617 = vmatprep.subr.bf16.mxu0 0
        %2618 = vmatpush2.bf16.msra.mxu0 %v987
        %2619 = vmatprep.subr.bf16.mxu0 0
        %2620 = vmatpush2.bf16.msra.mxu0 %v986
        %2621 = vmatprep.subr.bf16.mxu0 0
        %2622 = vmatpush2.bf16.msra.mxu0 %v985
        %2623 = vmatprep.subr.bf16.mxu0 0
        %2624 = vmatpush2.bf16.msra.mxu0 %v984
        %2625 = vmatprep.mubr.bf16.mxu0 %v1795
        %2626 = vmatmul.mubr.bf16.gmra.mxu0 %v1794
        %v2627 = vpop.f32.mrf.mxu0
        %v2628 = vadd.f32 %v2339, %v2627
        %v2629 = vpop.f32.mrf.mxu0
        %v2630 = vpop.f32.mrf.mxu0
        %v2631 = vadd.f32 %v2342, %v2630
        %v2632 = vpop.f32.mrf.mxu0
        %2633 = vmatprep.mubr.bf16.mxu0 %v1803
        %2634 = vmatmul.mubr.bf16.gmra.mxu0 %v1802
        %v2635 = vpop.f32.mrf.mxu0
        %v2636 = vadd.f32 %v2347, %v2635
        %v2637 = vpop.f32.mrf.mxu0
        %v2638 = vpop.f32.mrf.mxu0
        %v2639 = vadd.f32 %v2350, %v2638
        %v2640 = vpop.f32.mrf.mxu0
        %2641 = vmatprep.mubr.bf16.mxu0 %v1811
        %2642 = vmatmul.mubr.bf16.gmra.mxu0 %v1810
        %v2643 = vpop.f32.mrf.mxu0
        %v2644 = vadd.f32 %v2355, %v2643
        %v2645 = vpop.f32.mrf.mxu0
        %v2646 = vpop.f32.mrf.mxu0
        %v2647 = vadd.f32 %v2358, %v2646
        %v2648 = vpop.f32.mrf.mxu0
        %2649 = vmatprep.mubr.bf16.mxu0 %v1819
        %2650 = vmatmul.mubr.bf16.gmra.mxu0 %v1818
        %v2651 = vpop.f32.mrf.mxu0
        %v2652 = vadd.f32 %v2363, %v2651
        %v2653 = vpop.f32.mrf.mxu0
        %v2654 = vpop.f32.mrf.mxu0
        %v2655 = vadd.f32 %v2366, %v2654
        %v2656 = vpop.f32.mrf.mxu0
        %2657 = vmatprep.mubr.bf16.mxu0 %v1827
        %2658 = vmatmul.mubr.bf16.gmra.mxu0 %v1826
        %v2659 = vpop.f32.mrf.mxu0
        %v2660 = vadd.f32 %v2371, %v2659
        %v2661 = vpop.f32.mrf.mxu0
        %v2662 = vpop.f32.mrf.mxu0
        %v2663 = vadd.f32 %v2374, %v2662
        %v2664 = vpop.f32.mrf.mxu0
        %2665 = vmatprep.mubr.bf16.mxu0 %v1835
        %2666 = vmatmul.mubr.bf16.gmra.mxu0 %v1834
        %v2667 = vpop.f32.mrf.mxu0
        %v2668 = vadd.f32 %v2379, %v2667
        %v2669 = vpop.f32.mrf.mxu0
        %v2670 = vpop.f32.mrf.mxu0
        %v2671 = vadd.f32 %v2382, %v2670
        %v2672 = vpop.f32.mrf.mxu0
        %2673 = vmatprep.mubr.bf16.mxu0 %v1843
        %2674 = vmatmul.mubr.bf16.gmra.mxu0 %v1842
        %v2675 = vpop.f32.mrf.mxu0
        %v2676 = vadd.f32 %v2387, %v2675
        %v2677 = vpop.f32.mrf.mxu0
        %v2678 = vpop.f32.mrf.mxu0
        %v2679 = vadd.f32 %v2390, %v2678
        %v2680 = vpop.f32.mrf.mxu0
        %2681 = vmatprep.mubr.bf16.mxu0 %v1851
        %2682 = vmatmul.mubr.bf16.gmra.mxu0 %v1850
        %v2683 = vpop.f32.mrf.mxu0
        %v2684 = vadd.f32 %v2395, %v2683
        %v2685 = vpop.f32.mrf.mxu0
        %v2686 = vpop.f32.mrf.mxu0
        %v2687 = vadd.f32 %v2398, %v2686
        %v2688 = vpop.f32.mrf.mxu0
        %2689 = vmatprep.mubr.bf16.mxu0 %v1859
        %2690 = vmatmul.mubr.bf16.gmra.mxu0 %v1858
        %v2691 = vpop.f32.mrf.mxu0
        %v2692 = vadd.f32 %v2403, %v2691
        %v2693 = vpop.f32.mrf.mxu0
        %v2694 = vpop.f32.mrf.mxu0
        %v2695 = vadd.f32 %v2406, %v2694
        %v2696 = vpop.f32.mrf.mxu0
        %2697 = vmatprep.mubr.bf16.mxu0 %v1867
        %2698 = vmatmul.mubr.bf16.gmra.mxu0 %v1866
        %v2699 = vpop.f32.mrf.mxu0
        %v2700 = vadd.f32 %v2411, %v2699
        %v2701 = vpop.f32.mrf.mxu0
        %v2702 = vpop.f32.mrf.mxu0
        %v2703 = vadd.f32 %v2414, %v2702
        %v2704 = vpop.f32.mrf.mxu0
        %2705 = vmatprep.mubr.bf16.mxu0 %v1875
        %2706 = vmatmul.mubr.bf16.gmra.mxu0 %v1874
        %v2707 = vpop.f32.mrf.mxu0
        %v2708 = vadd.f32 %v2419, %v2707
        %v2709 = vpop.f32.mrf.mxu0
        %v2710 = vpop.f32.mrf.mxu0
        %v2711 = vadd.f32 %v2422, %v2710
        %v2712 = vpop.f32.mrf.mxu0
        %2713 = vmatprep.mubr.bf16.mxu0 %v1883
        %2714 = vmatmul.mubr.bf16.gmra.mxu0 %v1882
        %v2715 = vpop.f32.mrf.mxu0
        %v2716 = vadd.f32 %v2427, %v2715
        %v2717 = vpop.f32.mrf.mxu0
        %v2718 = vpop.f32.mrf.mxu0
        %v2719 = vadd.f32 %v2430, %v2718
        %v2720 = vpop.f32.mrf.mxu0
        %2721 = vmatprep.mubr.bf16.mxu0 %v1891
        %2722 = vmatmul.mubr.bf16.gmra.mxu0 %v1890
        %v2723 = vpop.f32.mrf.mxu0
        %v2724 = vadd.f32 %v2435, %v2723
        %v2725 = vpop.f32.mrf.mxu0
        %v2726 = vpop.f32.mrf.mxu0
        %v2727 = vadd.f32 %v2438, %v2726
        %v2728 = vpop.f32.mrf.mxu0
        %2729 = vmatprep.mubr.bf16.mxu0 %v1899
        %2730 = vmatmul.mubr.bf16.gmra.mxu0 %v1898
        %v2731 = vpop.f32.mrf.mxu0
        %v2732 = vadd.f32 %v2443, %v2731
        %v2733 = vpop.f32.mrf.mxu0
        %v2734 = vpop.f32.mrf.mxu0
        %v2735 = vadd.f32 %v2446, %v2734
        %v2736 = vpop.f32.mrf.mxu0
        %2737 = vmatprep.mubr.bf16.mxu0 %v1907
        %2738 = vmatmul.mubr.bf16.gmra.mxu0 %v1906
        %v2739 = vpop.f32.mrf.mxu0
        %v2740 = vadd.f32 %v2451, %v2739
        %v2741 = vpop.f32.mrf.mxu0
        %v2742 = vpop.f32.mrf.mxu0
        %v2743 = vadd.f32 %v2454, %v2742
        %v2744 = vpop.f32.mrf.mxu0
        %2745 = vmatprep.mubr.bf16.mxu0 %v1915
        %2746 = vmatmul.mubr.bf16.gmra.mxu0 %v1914
        %v2747 = vpop.f32.mrf.mxu0
        %v2748 = vadd.f32 %v2459, %v2747
        %v2749 = vpop.f32.mrf.mxu0
        %v2750 = vpop.f32.mrf.mxu0
        %v2751 = vadd.f32 %v2462, %v2750
        %v2752 = vpop.f32.mrf.mxu0
        %2753 = vmatprep.mubr.bf16.mxu0 %v1923
        %2754 = vmatmul.mubr.bf16.gmra.mxu0 %v1922
        %v2755 = vpop.f32.mrf.mxu0
        %v2756 = vadd.f32 %v2467, %v2755
        %v2757 = vpop.f32.mrf.mxu0
        %v2758 = vpop.f32.mrf.mxu0
        %v2759 = vadd.f32 %v2470, %v2758
        %v2760 = vpop.f32.mrf.mxu0
        %2761 = vmatprep.mubr.bf16.mxu0 %v1931
        %2762 = vmatmul.mubr.bf16.gmra.mxu0 %v1930
        %v2763 = vpop.f32.mrf.mxu0
        %v2764 = vadd.f32 %v2475, %v2763
        %v2765 = vpop.f32.mrf.mxu0
        %v2766 = vpop.f32.mrf.mxu0
        %v2767 = vadd.f32 %v2478, %v2766
        %v2768 = vpop.f32.mrf.mxu0
        %2769 = vmatprep.mubr.bf16.mxu0 %v1939
        %2770 = vmatmul.mubr.bf16.gmra.mxu0 %v1938
        %v2771 = vpop.f32.mrf.mxu0
        %v2772 = vadd.f32 %v2483, %v2771
        %v2773 = vpop.f32.mrf.mxu0
        %v2774 = vpop.f32.mrf.mxu0
        %v2775 = vadd.f32 %v2486, %v2774
        %v2776 = vpop.f32.mrf.mxu0
        %2777 = vmatprep.mubr.bf16.mxu0 %v1947
        %2778 = vmatmul.mubr.bf16.gmra.mxu0 %v1946
        %v2779 = vpop.f32.mrf.mxu0
        %v2780 = vadd.f32 %v2491, %v2779
        %v2781 = vpop.f32.mrf.mxu0
        %v2782 = vpop.f32.mrf.mxu0
        %v2783 = vadd.f32 %v2494, %v2782
        %v2784 = vpop.f32.mrf.mxu0
        %2785 = vmatprep.mubr.bf16.mxu0 %v1955
        %2786 = vmatmul.mubr.bf16.gmra.mxu0 %v1954
        %v2787 = vpop.f32.mrf.mxu0
        %v2788 = vadd.f32 %v2499, %v2787
        %v2789 = vpop.f32.mrf.mxu0
        %v2790 = vpop.f32.mrf.mxu0
        %v2791 = vadd.f32 %v2502, %v2790
        %v2792 = vpop.f32.mrf.mxu0
        %2793 = vmatprep.mubr.bf16.mxu0 %v1963
        %2794 = vmatmul.mubr.bf16.gmra.mxu0 %v1962
        %v2795 = vpop.f32.mrf.mxu0
        %v2796 = vadd.f32 %v2507, %v2795
        %v2797 = vpop.f32.mrf.mxu0
        %v2798 = vpop.f32.mrf.mxu0
        %v2799 = vadd.f32 %v2510, %v2798
        %v2800 = vpop.f32.mrf.mxu0
        %2801 = vmatprep.mubr.bf16.mxu0 %v1971
        %2802 = vmatmul.mubr.bf16.gmra.mxu0 %v1970
        %v2803 = vpop.f32.mrf.mxu0
        %v2804 = vadd.f32 %v2515, %v2803
        %v2805 = vpop.f32.mrf.mxu0
        %v2806 = vpop.f32.mrf.mxu0
        %v2807 = vadd.f32 %v2518, %v2806
        %v2808 = vpop.f32.mrf.mxu0
        %2809 = vmatprep.mubr.bf16.mxu0 %v1979
        %2810 = vmatmul.mubr.bf16.gmra.mxu0 %v1978
        %v2811 = vpop.f32.mrf.mxu0
        %v2812 = vadd.f32 %v2523, %v2811
        %v2813 = vpop.f32.mrf.mxu0
        %v2814 = vpop.f32.mrf.mxu0
        %v2815 = vadd.f32 %v2526, %v2814
        %v2816 = vpop.f32.mrf.mxu0
        %2817 = vmatprep.mubr.bf16.mxu0 %v1987
        %2818 = vmatmul.mubr.bf16.gmra.mxu0 %v1986
        %v2819 = vpop.f32.mrf.mxu0
        %v2820 = vadd.f32 %v2531, %v2819
        %v2821 = vpop.f32.mrf.mxu0
        %v2822 = vpop.f32.mrf.mxu0
        %v2823 = vadd.f32 %v2534, %v2822
        %v2824 = vpop.f32.mrf.mxu0
        %2825 = vmatprep.mubr.bf16.mxu0 %v1995
        %2826 = vmatmul.mubr.bf16.gmra.mxu0 %v1994
        %v2827 = vpop.f32.mrf.mxu0
        %v2828 = vadd.f32 %v2539, %v2827
        %v2829 = vpop.f32.mrf.mxu0
        %v2830 = vpop.f32.mrf.mxu0
        %v2831 = vadd.f32 %v2542, %v2830
        %v2832 = vpop.f32.mrf.mxu0
        %2833 = vmatprep.mubr.bf16.mxu0 %v2003
        %2834 = vmatmul.mubr.bf16.gmra.mxu0 %v2002
        %v2835 = vpop.f32.mrf.mxu0
        %v2836 = vadd.f32 %v2547, %v2835
        %v2837 = vpop.f32.mrf.mxu0
        %v2838 = vpop.f32.mrf.mxu0
        %v2839 = vadd.f32 %v2550, %v2838
        %v2840 = vpop.f32.mrf.mxu0
        %2841 = vmatprep.mubr.bf16.mxu0 %v2011
        %2842 = vmatmul.mubr.bf16.gmra.mxu0 %v2010
        %v2843 = vpop.f32.mrf.mxu0
        %v2844 = vadd.f32 %v2555, %v2843
        %v2845 = vpop.f32.mrf.mxu0
        %v2846 = vpop.f32.mrf.mxu0
        %v2847 = vadd.f32 %v2558, %v2846
        %v2848 = vpop.f32.mrf.mxu0
        %2849 = vmatprep.mubr.bf16.mxu0 %v2019
        %2850 = vmatmul.mubr.bf16.gmra.mxu0 %v2018
        %v2851 = vpop.f32.mrf.mxu0
        %v2852 = vadd.f32 %v2563, %v2851
        %v2853 = vpop.f32.mrf.mxu0
        %v2854 = vpop.f32.mrf.mxu0
        %v2855 = vadd.f32 %v2566, %v2854
        %v2856 = vpop.f32.mrf.mxu0
        %2857 = vmatprep.mubr.bf16.mxu0 %v2027
        %2858 = vmatmul.mubr.bf16.gmra.mxu0 %v2026
        %v2859 = vpop.f32.mrf.mxu0
        %v2860 = vadd.f32 %v2571, %v2859
        %v2861 = vpop.f32.mrf.mxu0
        %v2862 = vpop.f32.mrf.mxu0
        %v2863 = vadd.f32 %v2574, %v2862
        %v2864 = vpop.f32.mrf.mxu0
        %2865 = vmatprep.mubr.bf16.mxu0 %v2035
        %2866 = vmatmul.mubr.bf16.gmra.mxu0 %v2034
        %v2867 = vpop.f32.mrf.mxu0
        %v2868 = vadd.f32 %v2579, %v2867
        %v2869 = vpop.f32.mrf.mxu0
        %v2870 = vpop.f32.mrf.mxu0
        %v2871 = vadd.f32 %v2582, %v2870
        %v2872 = vpop.f32.mrf.mxu0
        %2873 = vmatprep.mubr.bf16.mxu0 %v2043
        %2874 = vmatmul.mubr.bf16.gmra.mxu0 %v2042
        %v2875 = vpop.f32.mrf.mxu0
        %v2876 = vadd.f32 %v2587, %v2875
        %v2877 = vpop.f32.mrf.mxu0
        %v2878 = vpop.f32.mrf.mxu0
        %v2879 = vadd.f32 %v2590, %v2878
        %v2880 = vpop.f32.mrf.mxu0
        %2881 = vdwg.mxu0
        %2882 = vmatprep.subr.bf16.mxu0 0
        %2883 = vmatpush1.bf16.msra.mxu0 %v999
        %2884 = vmatprep.subr.bf16.mxu0 0
        %2885 = vmatpush1.bf16.msra.mxu0 %v998
        %2886 = vmatprep.subr.bf16.mxu0 0
        %2887 = vmatpush1.bf16.msra.mxu0 %v997
        %2888 = vmatprep.subr.bf16.mxu0 0
        %2889 = vmatpush1.bf16.msra.mxu0 %v996
        %2890 = vmatprep.subr.bf16.mxu0 0
        %2891 = vmatpush1.bf16.msra.mxu0 %v995
        %2892 = vmatprep.subr.bf16.mxu0 0
        %2893 = vmatpush1.bf16.msra.mxu0 %v994
        %2894 = vmatprep.subr.bf16.mxu0 0
        %2895 = vmatpush1.bf16.msra.mxu0 %v993
        %2896 = vmatprep.subr.bf16.mxu0 0
        %2897 = vmatpush1.bf16.msra.mxu0 %v992
        %2898 = vmatprep.subr.bf16.mxu0 0
        %2899 = vmatpush2.bf16.msra.mxu0 %v1007
        %2900 = vmatprep.subr.bf16.mxu0 0
        %2901 = vmatpush2.bf16.msra.mxu0 %v1006
        %2902 = vmatprep.subr.bf16.mxu0 0
        %2903 = vmatpush2.bf16.msra.mxu0 %v1005
        %2904 = vmatprep.subr.bf16.mxu0 0
        %2905 = vmatpush2.bf16.msra.mxu0 %v1004
        %2906 = vmatprep.subr.bf16.mxu0 0
        %2907 = vmatpush2.bf16.msra.mxu0 %v1003
        %2908 = vmatprep.subr.bf16.mxu0 0
        %2909 = vmatpush2.bf16.msra.mxu0 %v1002
        %2910 = vmatprep.subr.bf16.mxu0 0
        %2911 = vmatpush2.bf16.msra.mxu0 %v1001
        %2912 = vmatprep.subr.bf16.mxu0 0
        %2913 = vmatpush2.bf16.msra.mxu0 %v1000
        %2914 = vmatprep.mubr.bf16.mxu0 %v1797
        %2915 = vmatmul.mubr.bf16.gmra.mxu0 %v1796
        %v2916 = vpop.f32.mrf.mxu0
        %v2917 = vadd.f32 %v2628, %v2916
        %v2918 = vpop.f32.mrf.mxu0
        %v2919 = vpop.f32.mrf.mxu0
        %v2920 = vadd.f32 %v2631, %v2919
        %v2921 = vpop.f32.mrf.mxu0
        %2922 = vmatprep.mubr.bf16.mxu0 %v1805
        %2923 = vmatmul.mubr.bf16.gmra.mxu0 %v1804
        %v2924 = vpop.f32.mrf.mxu0
        %v2925 = vadd.f32 %v2636, %v2924
        %v2926 = vpop.f32.mrf.mxu0
        %v2927 = vpop.f32.mrf.mxu0
        %v2928 = vadd.f32 %v2639, %v2927
        %v2929 = vpop.f32.mrf.mxu0
        %2930 = vmatprep.mubr.bf16.mxu0 %v1813
        %2931 = vmatmul.mubr.bf16.gmra.mxu0 %v1812
        %v2932 = vpop.f32.mrf.mxu0
        %v2933 = vadd.f32 %v2644, %v2932
        %v2934 = vpop.f32.mrf.mxu0
        %v2935 = vpop.f32.mrf.mxu0
        %v2936 = vadd.f32 %v2647, %v2935
        %v2937 = vpop.f32.mrf.mxu0
        %2938 = vmatprep.mubr.bf16.mxu0 %v1821
        %2939 = vmatmul.mubr.bf16.gmra.mxu0 %v1820
        %v2940 = vpop.f32.mrf.mxu0
        %v2941 = vadd.f32 %v2652, %v2940
        %v2942 = vpop.f32.mrf.mxu0
        %v2943 = vpop.f32.mrf.mxu0
        %v2944 = vadd.f32 %v2655, %v2943
        %v2945 = vpop.f32.mrf.mxu0
        %2946 = vmatprep.mubr.bf16.mxu0 %v1829
        %2947 = vmatmul.mubr.bf16.gmra.mxu0 %v1828
        %v2948 = vpop.f32.mrf.mxu0
        %v2949 = vadd.f32 %v2660, %v2948
        %v2950 = vpop.f32.mrf.mxu0
        %v2951 = vpop.f32.mrf.mxu0
        %v2952 = vadd.f32 %v2663, %v2951
        %v2953 = vpop.f32.mrf.mxu0
        %2954 = vmatprep.mubr.bf16.mxu0 %v1837
        %2955 = vmatmul.mubr.bf16.gmra.mxu0 %v1836
        %v2956 = vpop.f32.mrf.mxu0
        %v2957 = vadd.f32 %v2668, %v2956
        %v2958 = vpop.f32.mrf.mxu0
        %v2959 = vpop.f32.mrf.mxu0
        %v2960 = vadd.f32 %v2671, %v2959
        %v2961 = vpop.f32.mrf.mxu0
        %2962 = vmatprep.mubr.bf16.mxu0 %v1845
        %2963 = vmatmul.mubr.bf16.gmra.mxu0 %v1844
        %v2964 = vpop.f32.mrf.mxu0
        %v2965 = vadd.f32 %v2676, %v2964
        %v2966 = vpop.f32.mrf.mxu0
        %v2967 = vpop.f32.mrf.mxu0
        %v2968 = vadd.f32 %v2679, %v2967
        %v2969 = vpop.f32.mrf.mxu0
        %2970 = vmatprep.mubr.bf16.mxu0 %v1853
        %2971 = vmatmul.mubr.bf16.gmra.mxu0 %v1852
        %v2972 = vpop.f32.mrf.mxu0
        %v2973 = vadd.f32 %v2684, %v2972
        %v2974 = vpop.f32.mrf.mxu0
        %v2975 = vpop.f32.mrf.mxu0
        %v2976 = vadd.f32 %v2687, %v2975
        %v2977 = vpop.f32.mrf.mxu0
        %2978 = vmatprep.mubr.bf16.mxu0 %v1861
        %2979 = vmatmul.mubr.bf16.gmra.mxu0 %v1860
        %v2980 = vpop.f32.mrf.mxu0
        %v2981 = vadd.f32 %v2692, %v2980
        %v2982 = vpop.f32.mrf.mxu0
        %v2983 = vpop.f32.mrf.mxu0
        %v2984 = vadd.f32 %v2695, %v2983
        %v2985 = vpop.f32.mrf.mxu0
        %2986 = vmatprep.mubr.bf16.mxu0 %v1869
        %2987 = vmatmul.mubr.bf16.gmra.mxu0 %v1868
        %v2988 = vpop.f32.mrf.mxu0
        %v2989 = vadd.f32 %v2700, %v2988
        %v2990 = vpop.f32.mrf.mxu0
        %v2991 = vpop.f32.mrf.mxu0
        %v2992 = vadd.f32 %v2703, %v2991
        %v2993 = vpop.f32.mrf.mxu0
        %2994 = vmatprep.mubr.bf16.mxu0 %v1877
        %2995 = vmatmul.mubr.bf16.gmra.mxu0 %v1876
        %v2996 = vpop.f32.mrf.mxu0
        %v2997 = vadd.f32 %v2708, %v2996
        %v2998 = vpop.f32.mrf.mxu0
        %v2999 = vpop.f32.mrf.mxu0
        %v3000 = vadd.f32 %v2711, %v2999
        %v3001 = vpop.f32.mrf.mxu0
        %3002 = vmatprep.mubr.bf16.mxu0 %v1885
        %3003 = vmatmul.mubr.bf16.gmra.mxu0 %v1884
        %v3004 = vpop.f32.mrf.mxu0
        %v3005 = vadd.f32 %v2716, %v3004
        %v3006 = vpop.f32.mrf.mxu0
        %v3007 = vpop.f32.mrf.mxu0
        %v3008 = vadd.f32 %v2719, %v3007
        %v3009 = vpop.f32.mrf.mxu0
        %3010 = vmatprep.mubr.bf16.mxu0 %v1893
        %3011 = vmatmul.mubr.bf16.gmra.mxu0 %v1892
        %v3012 = vpop.f32.mrf.mxu0
        %v3013 = vadd.f32 %v2724, %v3012
        %v3014 = vpop.f32.mrf.mxu0
        %v3015 = vpop.f32.mrf.mxu0
        %v3016 = vadd.f32 %v2727, %v3015
        %v3017 = vpop.f32.mrf.mxu0
        %3018 = vmatprep.mubr.bf16.mxu0 %v1901
        %3019 = vmatmul.mubr.bf16.gmra.mxu0 %v1900
        %v3020 = vpop.f32.mrf.mxu0
        %v3021 = vadd.f32 %v2732, %v3020
        %v3022 = vpop.f32.mrf.mxu0
        %v3023 = vpop.f32.mrf.mxu0
        %v3024 = vadd.f32 %v2735, %v3023
        %v3025 = vpop.f32.mrf.mxu0
        %3026 = vmatprep.mubr.bf16.mxu0 %v1909
        %3027 = vmatmul.mubr.bf16.gmra.mxu0 %v1908
        %v3028 = vpop.f32.mrf.mxu0
        %v3029 = vadd.f32 %v2740, %v3028
        %v3030 = vpop.f32.mrf.mxu0
        %v3031 = vpop.f32.mrf.mxu0
        %v3032 = vadd.f32 %v2743, %v3031
        %v3033 = vpop.f32.mrf.mxu0
        %3034 = vmatprep.mubr.bf16.mxu0 %v1917
        %3035 = vmatmul.mubr.bf16.gmra.mxu0 %v1916
        %v3036 = vpop.f32.mrf.mxu0
        %v3037 = vadd.f32 %v2748, %v3036
        %v3038 = vpop.f32.mrf.mxu0
        %v3039 = vpop.f32.mrf.mxu0
        %v3040 = vadd.f32 %v2751, %v3039
        %v3041 = vpop.f32.mrf.mxu0
        %3042 = vmatprep.mubr.bf16.mxu0 %v1925
        %3043 = vmatmul.mubr.bf16.gmra.mxu0 %v1924
        %v3044 = vpop.f32.mrf.mxu0
        %v3045 = vadd.f32 %v2756, %v3044
        %v3046 = vpop.f32.mrf.mxu0
        %v3047 = vpop.f32.mrf.mxu0
        %v3048 = vadd.f32 %v2759, %v3047
        %v3049 = vpop.f32.mrf.mxu0
        %3050 = vmatprep.mubr.bf16.mxu0 %v1933
        %3051 = vmatmul.mubr.bf16.gmra.mxu0 %v1932
        %v3052 = vpop.f32.mrf.mxu0
        %v3053 = vadd.f32 %v2764, %v3052
        %v3054 = vpop.f32.mrf.mxu0
        %v3055 = vpop.f32.mrf.mxu0
        %v3056 = vadd.f32 %v2767, %v3055
        %v3057 = vpop.f32.mrf.mxu0
        %3058 = vmatprep.mubr.bf16.mxu0 %v1941
        %3059 = vmatmul.mubr.bf16.gmra.mxu0 %v1940
        %v3060 = vpop.f32.mrf.mxu0
        %v3061 = vadd.f32 %v2772, %v3060
        %v3062 = vpop.f32.mrf.mxu0
        %v3063 = vpop.f32.mrf.mxu0
        %v3064 = vadd.f32 %v2775, %v3063
        %v3065 = vpop.f32.mrf.mxu0
        %3066 = vmatprep.mubr.bf16.mxu0 %v1949
        %3067 = vmatmul.mubr.bf16.gmra.mxu0 %v1948
        %v3068 = vpop.f32.mrf.mxu0
        %v3069 = vadd.f32 %v2780, %v3068
        %v3070 = vpop.f32.mrf.mxu0
        %v3071 = vpop.f32.mrf.mxu0
        %v3072 = vadd.f32 %v2783, %v3071
        %v3073 = vpop.f32.mrf.mxu0
        %3074 = vmatprep.mubr.bf16.mxu0 %v1957
        %3075 = vmatmul.mubr.bf16.gmra.mxu0 %v1956
        %v3076 = vpop.f32.mrf.mxu0
        %v3077 = vadd.f32 %v2788, %v3076
        %v3078 = vpop.f32.mrf.mxu0
        %v3079 = vpop.f32.mrf.mxu0
        %v3080 = vadd.f32 %v2791, %v3079
        %v3081 = vpop.f32.mrf.mxu0
        %3082 = vmatprep.mubr.bf16.mxu0 %v1965
        %3083 = vmatmul.mubr.bf16.gmra.mxu0 %v1964
        %v3084 = vpop.f32.mrf.mxu0
        %v3085 = vadd.f32 %v2796, %v3084
        %v3086 = vpop.f32.mrf.mxu0
        %v3087 = vpop.f32.mrf.mxu0
        %v3088 = vadd.f32 %v2799, %v3087
        %v3089 = vpop.f32.mrf.mxu0
        %3090 = vmatprep.mubr.bf16.mxu0 %v1973
        %3091 = vmatmul.mubr.bf16.gmra.mxu0 %v1972
        %v3092 = vpop.f32.mrf.mxu0
        %v3093 = vadd.f32 %v2804, %v3092
        %v3094 = vpop.f32.mrf.mxu0
        %v3095 = vpop.f32.mrf.mxu0
        %v3096 = vadd.f32 %v2807, %v3095
        %v3097 = vpop.f32.mrf.mxu0
        %3098 = vmatprep.mubr.bf16.mxu0 %v1981
        %3099 = vmatmul.mubr.bf16.gmra.mxu0 %v1980
        %v3100 = vpop.f32.mrf.mxu0
        %v3101 = vadd.f32 %v2812, %v3100
        %v3102 = vpop.f32.mrf.mxu0
        %v3103 = vpop.f32.mrf.mxu0
        %v3104 = vadd.f32 %v2815, %v3103
        %v3105 = vpop.f32.mrf.mxu0
        %3106 = vmatprep.mubr.bf16.mxu0 %v1989
        %3107 = vmatmul.mubr.bf16.gmra.mxu0 %v1988
        %v3108 = vpop.f32.mrf.mxu0
        %v3109 = vadd.f32 %v2820, %v3108
        %v3110 = vpop.f32.mrf.mxu0
        %v3111 = vpop.f32.mrf.mxu0
        %v3112 = vadd.f32 %v2823, %v3111
        %v3113 = vpop.f32.mrf.mxu0
        %3114 = vmatprep.mubr.bf16.mxu0 %v1997
        %3115 = vmatmul.mubr.bf16.gmra.mxu0 %v1996
        %v3116 = vpop.f32.mrf.mxu0
        %v3117 = vadd.f32 %v2828, %v3116
        %v3118 = vpop.f32.mrf.mxu0
        %v3119 = vpop.f32.mrf.mxu0
        %v3120 = vadd.f32 %v2831, %v3119
        %v3121 = vpop.f32.mrf.mxu0
        %3122 = vmatprep.mubr.bf16.mxu0 %v2005
        %3123 = vmatmul.mubr.bf16.gmra.mxu0 %v2004
        %v3124 = vpop.f32.mrf.mxu0
        %v3125 = vadd.f32 %v2836, %v3124
        %v3126 = vpop.f32.mrf.mxu0
        %v3127 = vpop.f32.mrf.mxu0
        %v3128 = vadd.f32 %v2839, %v3127
        %v3129 = vpop.f32.mrf.mxu0
        %3130 = vmatprep.mubr.bf16.mxu0 %v2013
        %3131 = vmatmul.mubr.bf16.gmra.mxu0 %v2012
        %v3132 = vpop.f32.mrf.mxu0
        %v3133 = vadd.f32 %v2844, %v3132
        %v3134 = vpop.f32.mrf.mxu0
        %v3135 = vpop.f32.mrf.mxu0
        %v3136 = vadd.f32 %v2847, %v3135
        %v3137 = vpop.f32.mrf.mxu0
        %3138 = vmatprep.mubr.bf16.mxu0 %v2021
        %3139 = vmatmul.mubr.bf16.gmra.mxu0 %v2020
        %v3140 = vpop.f32.mrf.mxu0
        %v3141 = vadd.f32 %v2852, %v3140
        %v3142 = vpop.f32.mrf.mxu0
        %v3143 = vpop.f32.mrf.mxu0
        %v3144 = vadd.f32 %v2855, %v3143
        %v3145 = vpop.f32.mrf.mxu0
        %3146 = vmatprep.mubr.bf16.mxu0 %v2029
        %3147 = vmatmul.mubr.bf16.gmra.mxu0 %v2028
        %v3148 = vpop.f32.mrf.mxu0
        %v3149 = vadd.f32 %v2860, %v3148
        %v3150 = vpop.f32.mrf.mxu0
        %v3151 = vpop.f32.mrf.mxu0
        %v3152 = vadd.f32 %v2863, %v3151
        %v3153 = vpop.f32.mrf.mxu0
        %3154 = vmatprep.mubr.bf16.mxu0 %v2037
        %3155 = vmatmul.mubr.bf16.gmra.mxu0 %v2036
        %v3156 = vpop.f32.mrf.mxu0
        %v3157 = vadd.f32 %v2868, %v3156
        %v3158 = vpop.f32.mrf.mxu0
        %v3159 = vpop.f32.mrf.mxu0
        %v3160 = vadd.f32 %v2871, %v3159
        %v3161 = vpop.f32.mrf.mxu0
        %3162 = vmatprep.mubr.bf16.mxu0 %v2045
        %3163 = vmatmul.mubr.bf16.gmra.mxu0 %v2044
        %v3164 = vpop.f32.mrf.mxu0
        %v3165 = vadd.f32 %v2876, %v3164
        %v3166 = vpop.f32.mrf.mxu0
        %v3167 = vpop.f32.mrf.mxu0
        %v3168 = vadd.f32 %v2879, %v3167
        %v3169 = vpop.f32.mrf.mxu0
        %3170 = vdwg.mxu0
        %3171 = vmatprep.subr.bf16.mxu0 0
        %3172 = vmatpush1.bf16.msra.mxu0 %v1015
        %3173 = vmatprep.subr.bf16.mxu0 0
        %3174 = vmatpush1.bf16.msra.mxu0 %v1014
        %3175 = vmatprep.subr.bf16.mxu0 0
        %3176 = vmatpush1.bf16.msra.mxu0 %v1013
        %3177 = vmatprep.subr.bf16.mxu0 0
        %3178 = vmatpush1.bf16.msra.mxu0 %v1012
        %3179 = vmatprep.subr.bf16.mxu0 0
        %3180 = vmatpush1.bf16.msra.mxu0 %v1011
        %3181 = vmatprep.subr.bf16.mxu0 0
        %3182 = vmatpush1.bf16.msra.mxu0 %v1010
        %3183 = vmatprep.subr.bf16.mxu0 0
        %3184 = vmatpush1.bf16.msra.mxu0 %v1009
        %3185 = vmatprep.subr.bf16.mxu0 0
        %3186 = vmatpush1.bf16.msra.mxu0 %v1008
        %3187 = vmatprep.subr.bf16.mxu0 0
        %3188 = vmatpush2.bf16.msra.mxu0 %v1023
        %3189 = vmatprep.subr.bf16.mxu0 0
        %3190 = vmatpush2.bf16.msra.mxu0 %v1022
        %3191 = vmatprep.subr.bf16.mxu0 0
        %3192 = vmatpush2.bf16.msra.mxu0 %v1021
        %3193 = vmatprep.subr.bf16.mxu0 0
        %3194 = vmatpush2.bf16.msra.mxu0 %v1020
        %3195 = vmatprep.subr.bf16.mxu0 0
        %3196 = vmatpush2.bf16.msra.mxu0 %v1019
        %3197 = vmatprep.subr.bf16.mxu0 0
        %3198 = vmatpush2.bf16.msra.mxu0 %v1018
        %3199 = vmatprep.subr.bf16.mxu0 0
        %3200 = vmatpush2.bf16.msra.mxu0 %v1017
        %3201 = vmatprep.subr.bf16.mxu0 0
        %3202 = vmatpush2.bf16.msra.mxu0 %v1016
        %3203 = vmatprep.mubr.bf16.mxu0 %v1799
        %3204 = vmatmul.mubr.bf16.gmra.mxu0 %v1798
        %v3205 = vpop.f32.mrf.mxu0
        %v3206 = vadd.f32 %v2917, %v3205
        %v3207 = vpop.f32.mrf.mxu0
        %v3208 = vpop.f32.mrf.mxu0
        %v3209 = vadd.f32 %v2920, %v3208
        %v3210 = vpop.f32.mrf.mxu0
        %3211 = vmatprep.mubr.bf16.mxu0 %v1807
        %3212 = vmatmul.mubr.bf16.gmra.mxu0 %v1806
        %v3213 = vpop.f32.mrf.mxu0
        %v3214 = vadd.f32 %v2925, %v3213
        %v3215 = vpop.f32.mrf.mxu0
        %v3216 = vpop.f32.mrf.mxu0
        %v3217 = vadd.f32 %v2928, %v3216
        %v3218 = vpop.f32.mrf.mxu0
        %3219 = vmatprep.mubr.bf16.mxu0 %v1815
        %3220 = vmatmul.mubr.bf16.gmra.mxu0 %v1814
        %v3221 = vpop.f32.mrf.mxu0
        %v3222 = vadd.f32 %v2933, %v3221
        %v3223 = vpop.f32.mrf.mxu0
        %v3224 = vpop.f32.mrf.mxu0
        %v3225 = vadd.f32 %v2936, %v3224
        %v3226 = vpop.f32.mrf.mxu0
        %3227 = vmatprep.mubr.bf16.mxu0 %v1823
        %3228 = vmatmul.mubr.bf16.gmra.mxu0 %v1822
        %v3229 = vpop.f32.mrf.mxu0
        %v3230 = vadd.f32 %v2941, %v3229
        %v3231 = vpop.f32.mrf.mxu0
        %v3232 = vpop.f32.mrf.mxu0
        %v3233 = vadd.f32 %v2944, %v3232
        %v3234 = vpop.f32.mrf.mxu0
        %3235 = vmatprep.mubr.bf16.mxu0 %v1831
        %3236 = vmatmul.mubr.bf16.gmra.mxu0 %v1830
        %v3237 = vpop.f32.mrf.mxu0
        %v3238 = vadd.f32 %v2949, %v3237
        %v3239 = vpop.f32.mrf.mxu0
        %v3240 = vpop.f32.mrf.mxu0
        %v3241 = vadd.f32 %v2952, %v3240
        %v3242 = vpop.f32.mrf.mxu0
        %3243 = vmatprep.mubr.bf16.mxu0 %v1839
        %3244 = vmatmul.mubr.bf16.gmra.mxu0 %v1838
        %v3245 = vpop.f32.mrf.mxu0
        %v3246 = vadd.f32 %v2957, %v3245
        %v3247 = vpop.f32.mrf.mxu0
        %v3248 = vpop.f32.mrf.mxu0
        %v3249 = vadd.f32 %v2960, %v3248
        %v3250 = vpop.f32.mrf.mxu0
        %3251 = vmatprep.mubr.bf16.mxu0 %v1847
        %3252 = vmatmul.mubr.bf16.gmra.mxu0 %v1846
        %v3253 = vpop.f32.mrf.mxu0
        %v3254 = vadd.f32 %v2965, %v3253
        %v3255 = vpop.f32.mrf.mxu0
        %v3256 = vpop.f32.mrf.mxu0
        %v3257 = vadd.f32 %v2968, %v3256
        %v3258 = vpop.f32.mrf.mxu0
        %3259 = vmatprep.mubr.bf16.mxu0 %v1855
        %3260 = vmatmul.mubr.bf16.gmra.mxu0 %v1854
        %v3261 = vpop.f32.mrf.mxu0
        %v3262 = vadd.f32 %v2973, %v3261
        %v3263 = vpop.f32.mrf.mxu0
        %v3264 = vpop.f32.mrf.mxu0
        %v3265 = vadd.f32 %v2976, %v3264
        %v3266 = vpop.f32.mrf.mxu0
        %3267 = vmatprep.mubr.bf16.mxu0 %v1863
        %3268 = vmatmul.mubr.bf16.gmra.mxu0 %v1862
        %v3269 = vpop.f32.mrf.mxu0
        %v3270 = vadd.f32 %v2981, %v3269
        %v3271 = vpop.f32.mrf.mxu0
        %v3272 = vpop.f32.mrf.mxu0
        %v3273 = vadd.f32 %v2984, %v3272
        %v3274 = vpop.f32.mrf.mxu0
        %3275 = vmatprep.mubr.bf16.mxu0 %v1871
        %3276 = vmatmul.mubr.bf16.gmra.mxu0 %v1870
        %v3277 = vpop.f32.mrf.mxu0
        %v3278 = vadd.f32 %v2989, %v3277
        %v3279 = vpop.f32.mrf.mxu0
        %v3280 = vpop.f32.mrf.mxu0
        %v3281 = vadd.f32 %v2992, %v3280
        %v3282 = vpop.f32.mrf.mxu0
        %3283 = vmatprep.mubr.bf16.mxu0 %v1879
        %3284 = vmatmul.mubr.bf16.gmra.mxu0 %v1878
        %v3285 = vpop.f32.mrf.mxu0
        %v3286 = vadd.f32 %v2997, %v3285
        %v3287 = vpop.f32.mrf.mxu0
        %v3288 = vpop.f32.mrf.mxu0
        %v3289 = vadd.f32 %v3000, %v3288
        %v3290 = vpop.f32.mrf.mxu0
        %3291 = vmatprep.mubr.bf16.mxu0 %v1887
        %3292 = vmatmul.mubr.bf16.gmra.mxu0 %v1886
        %v3293 = vpop.f32.mrf.mxu0
        %v3294 = vadd.f32 %v3005, %v3293
        %v3295 = vpop.f32.mrf.mxu0
        %v3296 = vpop.f32.mrf.mxu0
        %v3297 = vadd.f32 %v3008, %v3296
        %v3298 = vpop.f32.mrf.mxu0
        %3299 = vmatprep.mubr.bf16.mxu0 %v1895
        %3300 = vmatmul.mubr.bf16.gmra.mxu0 %v1894
        %v3301 = vpop.f32.mrf.mxu0
        %v3302 = vadd.f32 %v3013, %v3301
        %v3303 = vpop.f32.mrf.mxu0
        %v3304 = vpop.f32.mrf.mxu0
        %v3305 = vadd.f32 %v3016, %v3304
        %v3306 = vpop.f32.mrf.mxu0
        %3307 = vmatprep.mubr.bf16.mxu0 %v1903
        %3308 = vmatmul.mubr.bf16.gmra.mxu0 %v1902
        %v3309 = vpop.f32.mrf.mxu0
        %v3310 = vadd.f32 %v3021, %v3309
        %v3311 = vpop.f32.mrf.mxu0
        %v3312 = vpop.f32.mrf.mxu0
        %v3313 = vadd.f32 %v3024, %v3312
        %v3314 = vpop.f32.mrf.mxu0
        %3315 = vmatprep.mubr.bf16.mxu0 %v1911
        %3316 = vmatmul.mubr.bf16.gmra.mxu0 %v1910
        %v3317 = vpop.f32.mrf.mxu0
        %v3318 = vadd.f32 %v3029, %v3317
        %v3319 = vpop.f32.mrf.mxu0
        %v3320 = vpop.f32.mrf.mxu0
        %v3321 = vadd.f32 %v3032, %v3320
        %v3322 = vpop.f32.mrf.mxu0
        %3323 = vmatprep.mubr.bf16.mxu0 %v1919
        %3324 = vmatmul.mubr.bf16.gmra.mxu0 %v1918
        %v3325 = vpop.f32.mrf.mxu0
        %v3326 = vadd.f32 %v3037, %v3325
        %v3327 = vpop.f32.mrf.mxu0
        %v3328 = vpop.f32.mrf.mxu0
        %v3329 = vadd.f32 %v3040, %v3328
        %v3330 = vpop.f32.mrf.mxu0
        %3331 = vmatprep.mubr.bf16.mxu0 %v1927
        %3332 = vmatmul.mubr.bf16.gmra.mxu0 %v1926
        %v3333 = vpop.f32.mrf.mxu0
        %v3334 = vadd.f32 %v3045, %v3333
        %v3335 = vpop.f32.mrf.mxu0
        %v3336 = vpop.f32.mrf.mxu0
        %v3337 = vadd.f32 %v3048, %v3336
        %v3338 = vpop.f32.mrf.mxu0
        %3339 = vmatprep.mubr.bf16.mxu0 %v1935
        %3340 = vmatmul.mubr.bf16.gmra.mxu0 %v1934
        %v3341 = vpop.f32.mrf.mxu0
        %v3342 = vadd.f32 %v3053, %v3341
        %v3343 = vpop.f32.mrf.mxu0
        %v3344 = vpop.f32.mrf.mxu0
        %v3345 = vadd.f32 %v3056, %v3344
        %v3346 = vpop.f32.mrf.mxu0
        %3347 = vmatprep.mubr.bf16.mxu0 %v1943
        %3348 = vmatmul.mubr.bf16.gmra.mxu0 %v1942
        %v3349 = vpop.f32.mrf.mxu0
        %v3350 = vadd.f32 %v3061, %v3349
        %v3351 = vpop.f32.mrf.mxu0
        %v3352 = vpop.f32.mrf.mxu0
        %v3353 = vadd.f32 %v3064, %v3352
        %v3354 = vpop.f32.mrf.mxu0
        %3355 = vmatprep.mubr.bf16.mxu0 %v1951
        %3356 = vmatmul.mubr.bf16.gmra.mxu0 %v1950
        %v3357 = vpop.f32.mrf.mxu0
        %v3358 = vadd.f32 %v3069, %v3357
        %v3359 = vpop.f32.mrf.mxu0
        %v3360 = vpop.f32.mrf.mxu0
        %v3361 = vadd.f32 %v3072, %v3360
        %v3362 = vpop.f32.mrf.mxu0
        %3363 = vmatprep.mubr.bf16.mxu0 %v1959
        %3364 = vmatmul.mubr.bf16.gmra.mxu0 %v1958
        %v3365 = vpop.f32.mrf.mxu0
        %v3366 = vadd.f32 %v3077, %v3365
        %v3367 = vpop.f32.mrf.mxu0
        %v3368 = vpop.f32.mrf.mxu0
        %v3369 = vadd.f32 %v3080, %v3368
        %v3370 = vpop.f32.mrf.mxu0
        %3371 = vmatprep.mubr.bf16.mxu0 %v1967
        %3372 = vmatmul.mubr.bf16.gmra.mxu0 %v1966
        %v3373 = vpop.f32.mrf.mxu0
        %v3374 = vadd.f32 %v3085, %v3373
        %v3375 = vpop.f32.mrf.mxu0
        %v3376 = vpop.f32.mrf.mxu0
        %v3377 = vadd.f32 %v3088, %v3376
        %v3378 = vpop.f32.mrf.mxu0
        %3379 = vmatprep.mubr.bf16.mxu0 %v1975
        %3380 = vmatmul.mubr.bf16.gmra.mxu0 %v1974
        %v3381 = vpop.f32.mrf.mxu0
        %v3382 = vadd.f32 %v3093, %v3381
        %v3383 = vpop.f32.mrf.mxu0
        %v3384 = vpop.f32.mrf.mxu0
        %v3385 = vadd.f32 %v3096, %v3384
        %v3386 = vpop.f32.mrf.mxu0
        %3387 = vmatprep.mubr.bf16.mxu0 %v1983
        %3388 = vmatmul.mubr.bf16.gmra.mxu0 %v1982
        %v3389 = vpop.f32.mrf.mxu0
        %v3390 = vadd.f32 %v3101, %v3389
        %v3391 = vpop.f32.mrf.mxu0
        %v3392 = vpop.f32.mrf.mxu0
        %v3393 = vadd.f32 %v3104, %v3392
        %v3394 = vpop.f32.mrf.mxu0
        %3395 = vmatprep.mubr.bf16.mxu0 %v1991
        %3396 = vmatmul.mubr.bf16.gmra.mxu0 %v1990
        %v3397 = vpop.f32.mrf.mxu0
        %v3398 = vadd.f32 %v3109, %v3397
        %v3399 = vpop.f32.mrf.mxu0
        %v3400 = vpop.f32.mrf.mxu0
        %v3401 = vadd.f32 %v3112, %v3400
        %v3402 = vpop.f32.mrf.mxu0
        %3403 = vmatprep.mubr.bf16.mxu0 %v1999
        %3404 = vmatmul.mubr.bf16.gmra.mxu0 %v1998
        %v3405 = vpop.f32.mrf.mxu0
        %v3406 = vadd.f32 %v3117, %v3405
        %v3407 = vpop.f32.mrf.mxu0
        %v3408 = vpop.f32.mrf.mxu0
        %v3409 = vadd.f32 %v3120, %v3408
        %v3410 = vpop.f32.mrf.mxu0
        %3411 = vmatprep.mubr.bf16.mxu0 %v2007
        %3412 = vmatmul.mubr.bf16.gmra.mxu0 %v2006
        %v3413 = vpop.f32.mrf.mxu0
        %v3414 = vadd.f32 %v3125, %v3413
        %v3415 = vpop.f32.mrf.mxu0
        %v3416 = vpop.f32.mrf.mxu0
        %v3417 = vadd.f32 %v3128, %v3416
        %v3418 = vpop.f32.mrf.mxu0
        %3419 = vmatprep.mubr.bf16.mxu0 %v2015
        %3420 = vmatmul.mubr.bf16.gmra.mxu0 %v2014
        %v3421 = vpop.f32.mrf.mxu0
        %v3422 = vadd.f32 %v3133, %v3421
        %v3423 = vpop.f32.mrf.mxu0
        %v3424 = vpop.f32.mrf.mxu0
        %v3425 = vadd.f32 %v3136, %v3424
        %v3426 = vpop.f32.mrf.mxu0
        %3427 = vmatprep.mubr.bf16.mxu0 %v2023
        %3428 = vmatmul.mubr.bf16.gmra.mxu0 %v2022
        %v3429 = vpop.f32.mrf.mxu0
        %v3430 = vadd.f32 %v3141, %v3429
        %v3431 = vpop.f32.mrf.mxu0
        %v3432 = vpop.f32.mrf.mxu0
        %v3433 = vadd.f32 %v3144, %v3432
        %v3434 = vpop.f32.mrf.mxu0
        %3435 = vmatprep.mubr.bf16.mxu0 %v2031
        %3436 = vmatmul.mubr.bf16.gmra.mxu0 %v2030
        %v3437 = vpop.f32.mrf.mxu0
        %v3438 = vadd.f32 %v3149, %v3437
        %v3439 = vpop.f32.mrf.mxu0
        %v3440 = vpop.f32.mrf.mxu0
        %v3441 = vadd.f32 %v3152, %v3440
        %v3442 = vpop.f32.mrf.mxu0
        %3443 = vmatprep.mubr.bf16.mxu0 %v2039
        %3444 = vmatmul.mubr.bf16.gmra.mxu0 %v2038
        %v3445 = vpop.f32.mrf.mxu0
        %v3446 = vadd.f32 %v3157, %v3445
        %v3447 = vpop.f32.mrf.mxu0
        %v3448 = vpop.f32.mrf.mxu0
        %v3449 = vadd.f32 %v3160, %v3448
        %v3450 = vpop.f32.mrf.mxu0
        %3451 = vmatprep.mubr.bf16.mxu0 %v2047
        %3452 = vmatmul.mubr.bf16.gmra.mxu0 %v2046
        %v3453 = vpop.f32.mrf.mxu0
        %v3454 = vadd.f32 %v3165, %v3453
        %v3455 = vpop.f32.mrf.mxu0
        %v3456 = vpop.f32.mrf.mxu0
        %v3457 = vadd.f32 %v3168, %v3456
        %v3458 = vpop.f32.mrf.mxu0
        %3459 = vdwg.mxu0
        %v3460 = vadd.f32 %v512, %v3206
        %v3461 = vadd.f32 %v513, %v3209
        %v3462 = vadd.f32 %v514, %v3214
        %v3463 = vadd.f32 %v515, %v3217
        %v3464 = vadd.f32 %v516, %v3222
        %v3465 = vadd.f32 %v517, %v3225
        %v3466 = vadd.f32 %v518, %v3230
        %v3467 = vadd.f32 %v519, %v3233
        %v3468 = vadd.f32 %v520, %v3238
        %v3469 = vadd.f32 %v521, %v3241
        %v3470 = vadd.f32 %v522, %v3246
        %v3471 = vadd.f32 %v523, %v3249
        %v3472 = vadd.f32 %v524, %v3254
        %v3473 = vadd.f32 %v525, %v3257
        %v3474 = vadd.f32 %v526, %v3262
        %v3475 = vadd.f32 %v527, %v3265
        %v3476 = vadd.f32 %v528, %v3270
        %v3477 = vadd.f32 %v529, %v3273
        %v3478 = vadd.f32 %v530, %v3278
        %v3479 = vadd.f32 %v531, %v3281
        %v3480 = vadd.f32 %v532, %v3286
        %v3481 = vadd.f32 %v533, %v3289
        %v3482 = vadd.f32 %v534, %v3294
        %v3483 = vadd.f32 %v535, %v3297
        %v3484 = vadd.f32 %v536, %v3302
        %v3485 = vadd.f32 %v537, %v3305
        %v3486 = vadd.f32 %v538, %v3310
        %v3487 = vadd.f32 %v539, %v3313
        %v3488 = vadd.f32 %v540, %v3318
        %v3489 = vadd.f32 %v541, %v3321
        %v3490 = vadd.f32 %v542, %v3326
        %v3491 = vadd.f32 %v543, %v3329
        %v3492 = vadd.f32 %v544, %v3334
        %v3493 = vadd.f32 %v545, %v3337
        %v3494 = vadd.f32 %v546, %v3342
        %v3495 = vadd.f32 %v547, %v3345
        %v3496 = vadd.f32 %v548, %v3350
        %v3497 = vadd.f32 %v549, %v3353
        %v3498 = vadd.f32 %v550, %v3358
        %v3499 = vadd.f32 %v551, %v3361
        %v3500 = vadd.f32 %v552, %v3366
        %v3501 = vadd.f32 %v553, %v3369
        %v3502 = vadd.f32 %v554, %v3374
        %v3503 = vadd.f32 %v555, %v3377
        %v3504 = vadd.f32 %v556, %v3382
        %v3505 = vadd.f32 %v557, %v3385
        %v3506 = vadd.f32 %v558, %v3390
        %v3507 = vadd.f32 %v559, %v3393
        %v3508 = vadd.f32 %v560, %v3398
        %v3509 = vadd.f32 %v561, %v3401
        %v3510 = vadd.f32 %v562, %v3406
        %v3511 = vadd.f32 %v563, %v3409
        %v3512 = vadd.f32 %v564, %v3414
        %v3513 = vadd.f32 %v565, %v3417
        %v3514 = vadd.f32 %v566, %v3422
        %v3515 = vadd.f32 %v567, %v3425
        %v3516 = vadd.f32 %v568, %v3430
        %v3517 = vadd.f32 %v569, %v3433
        %v3518 = vadd.f32 %v570, %v3438
        %v3519 = vadd.f32 %v571, %v3441
        %v3520 = vadd.f32 %v572, %v3446
        %v3521 = vadd.f32 %v573, %v3449
        %v3522 = vadd.f32 %v574, %v3454
        %v3523 = vadd.f32 %v575, %v3457
        %3524 = vst [vmem:[%s306] sm:$0xff] %v3460
        %3525 = vst [vmem:[%s306 + $0x8] sm:$0xff] %v3461
        %3526 = vst [vmem:[%s306 + $0x10] sm:$0xff] %v3462
        %3527 = vst [vmem:[%s306 + $0x18] sm:$0xff] %v3463
        %3528 = vst [vmem:[%s306 + $0x20] sm:$0xff] %v3464
        %3529 = vst [vmem:[%s306 + $0x28] sm:$0xff] %v3465
        %3530 = vst [vmem:[%s306 + $0x30] sm:$0xff] %v3466
        %3531 = vst [vmem:[%s306 + $0x38] sm:$0xff] %v3467
        %3532 = vst [vmem:[%s306 + $0x40] sm:$0xff] %v3468
        %3533 = vst [vmem:[%s306 + $0x48] sm:$0xff] %v3469
        %3534 = vst [vmem:[%s306 + $0x50] sm:$0xff] %v3470
        %3535 = vst [vmem:[%s306 + $0x58] sm:$0xff] %v3471
        %3536 = vst [vmem:[%s306 + $0x60] sm:$0xff] %v3472
        %3537 = vst [vmem:[%s306 + $0x68] sm:$0xff] %v3473
        %3538 = vst [vmem:[%s306 + $0x70] sm:$0xff] %v3474
        %3539 = vst [vmem:[%s306 + $0x78] sm:$0xff] %v3475
        %3540 = vst [vmem:[%s306 + $0x80] sm:$0xff] %v3476
        %3541 = vst [vmem:[%s306 + $0x88] sm:$0xff] %v3477
        %3542 = vst [vmem:[%s306 + $0x90] sm:$0xff] %v3478
        %3543 = vst [vmem:[%s306 + $0x98] sm:$0xff] %v3479
        %3544 = vst [vmem:[%s306 + $0xa0] sm:$0xff] %v3480
        %3545 = vst [vmem:[%s306 + $0xa8] sm:$0xff] %v3481
        %3546 = vst [vmem:[%s306 + $0xb0] sm:$0xff] %v3482
        %3547 = vst [vmem:[%s306 + $0xb8] sm:$0xff] %v3483
        %3548 = vst [vmem:[%s306 + $0xc0] sm:$0xff] %v3484
        %3549 = vst [vmem:[%s306 + $0xc8] sm:$0xff] %v3485
        %3550 = vst [vmem:[%s306 + $0xd0] sm:$0xff] %v3486
        %3551 = vst [vmem:[%s306 + $0xd8] sm:$0xff] %v3487
        %3552 = vst [vmem:[%s306 + $0xe0] sm:$0xff] %v3488
        %3553 = vst [vmem:[%s306 + $0xe8] sm:$0xff] %v3489
        %3554 = vst [vmem:[%s306 + $0xf0] sm:$0xff] %v3490
        %3555 = vst [vmem:[%s306 + $0xf8] sm:$0xff] %v3491
        %3556 = vst [vmem:[%s306 + $0x100] sm:$0xff] %v3492
        %3557 = vst [vmem:[%s306 + $0x108] sm:$0xff] %v3493
        %3558 = vst [vmem:[%s306 + $0x110] sm:$0xff] %v3494
        %3559 = vst [vmem:[%s306 + $0x118] sm:$0xff] %v3495
        %3560 = vst [vmem:[%s306 + $0x120] sm:$0xff] %v3496
        %3561 = vst [vmem:[%s306 + $0x128] sm:$0xff] %v3497
        %3562 = vst [vmem:[%s306 + $0x130] sm:$0xff] %v3498
        %3563 = vst [vmem:[%s306 + $0x138] sm:$0xff] %v3499
        %3564 = vst [vmem:[%s306 + $0x140] sm:$0xff] %v3500
        %3565 = vst [vmem:[%s306 + $0x148] sm:$0xff] %v3501
        %3566 = vst [vmem:[%s306 + $0x150] sm:$0xff] %v3502
        %3567 = vst [vmem:[%s306 + $0x158] sm:$0xff] %v3503
        %3568 = vst [vmem:[%s306 + $0x160] sm:$0xff] %v3504
        %3569 = vst [vmem:[%s306 + $0x168] sm:$0xff] %v3505
        %3570 = vst [vmem:[%s306 + $0x170] sm:$0xff] %v3506
        %3571 = vst [vmem:[%s306 + $0x178] sm:$0xff] %v3507
        %3572 = vst [vmem:[%s306 + $0x180] sm:$0xff] %v3508
        %3573 = vst [vmem:[%s306 + $0x188] sm:$0xff] %v3509
        %3574 = vst [vmem:[%s306 + $0x190] sm:$0xff] %v3510
        %3575 = vst [vmem:[%s306 + $0x198] sm:$0xff] %v3511
        %3576 = vst [vmem:[%s306 + $0x1a0] sm:$0xff] %v3512
        %3577 = vst [vmem:[%s306 + $0x1a8] sm:$0xff] %v3513
        %3578 = vst [vmem:[%s306 + $0x1b0] sm:$0xff] %v3514
        %3579 = vst [vmem:[%s306 + $0x1b8] sm:$0xff] %v3515
        %3580 = vst [vmem:[%s306 + $0x1c0] sm:$0xff] %v3516
        %3581 = vst [vmem:[%s306 + $0x1c8] sm:$0xff] %v3517
        %3582 = vst [vmem:[%s306 + $0x1d0] sm:$0xff] %v3518
        %3583 = vst [vmem:[%s306 + $0x1d8] sm:$0xff] %v3519
        %3584 = vst [vmem:[%s306 + $0x1e0] sm:$0xff] %v3520
        %3585 = vst [vmem:[%s306 + $0x1e8] sm:$0xff] %v3521
        %3586 = vst [vmem:[%s306 + $0x1f0] sm:$0xff] %v3522
        %3587 = vst [vmem:[%s306 + $0x1f8] sm:$0xff] %v3523
        // Predicated region
        $region57: #{tpu_custom_call.1} parent=35 // pred_check
          %p3588 = pneg %p444
        $region58: #{tpu_custom_call.1} parent=35 // pred_check_branch
          %3590 = sbr.rel (%p3588) target = $region60
        $region59: #{tpu_custom_call.1} parent=35 // pred_region
          %v3591 = vld [vmem:[%s273] sm:$0xff]
          %v3592 = vld [vmem:[%s273 + $0x8] sm:$0xff]
          %v3593 = vld [vmem:[%s273 + $0x10] sm:$0xff]
          %v3594 = vld [vmem:[%s273 + $0x18] sm:$0xff]
          %v3595 = vld [vmem:[%s273 + $0x20] sm:$0xff]
          %v3596 = vld [vmem:[%s273 + $0x28] sm:$0xff]
          %v3597 = vld [vmem:[%s273 + $0x30] sm:$0xff]
          %v3598 = vld [vmem:[%s273 + $0x38] sm:$0xff]
          %v3599 = vld [vmem:[%s273 + $0x40] sm:$0xff]
          %v3600 = vld [vmem:[%s273 + $0x48] sm:$0xff]
          %v3601 = vld [vmem:[%s273 + $0x50] sm:$0xff]
          %v3602 = vld [vmem:[%s273 + $0x58] sm:$0xff]
          %v3603 = vld [vmem:[%s273 + $0x60] sm:$0xff]
          %v3604 = vld [vmem:[%s273 + $0x68] sm:$0xff]
          %v3605 = vld [vmem:[%s273 + $0x70] sm:$0xff]
          %v3606 = vld [vmem:[%s273 + $0x78] sm:$0xff]
          %v3607 = vld [vmem:[%s273 + $0x80] sm:$0xff]
          %v3608 = vld [vmem:[%s273 + $0x88] sm:$0xff]
          %v3609 = vld [vmem:[%s273 + $0x90] sm:$0xff]
          %v3610 = vld [vmem:[%s273 + $0x98] sm:$0xff]
          %v3611 = vld [vmem:[%s273 + $0xa0] sm:$0xff]
          %v3612 = vld [vmem:[%s273 + $0xa8] sm:$0xff]
          %v3613 = vld [vmem:[%s273 + $0xb0] sm:$0xff]
          %v3614 = vld [vmem:[%s273 + $0xb8] sm:$0xff]
          %v3615 = vld [vmem:[%s273 + $0xc0] sm:$0xff]
          %v3616 = vld [vmem:[%s273 + $0xc8] sm:$0xff]
          %v3617 = vld [vmem:[%s273 + $0xd0] sm:$0xff]
          %v3618 = vld [vmem:[%s273 + $0xd8] sm:$0xff]
          %v3619 = vld [vmem:[%s273 + $0xe0] sm:$0xff]
          %v3620 = vld [vmem:[%s273 + $0xe8] sm:$0xff]
          %v3621 = vld [vmem:[%s273 + $0xf0] sm:$0xff]
          %v3622 = vld [vmem:[%s273 + $0xf8] sm:$0xff]
          %v3623 = vld [vmem:[%s273 + $0x100] sm:$0xff]
          %v3624 = vld [vmem:[%s273 + $0x108] sm:$0xff]
          %v3625 = vld [vmem:[%s273 + $0x110] sm:$0xff]
          %v3626 = vld [vmem:[%s273 + $0x118] sm:$0xff]
          %v3627 = vld [vmem:[%s273 + $0x120] sm:$0xff]
          %v3628 = vld [vmem:[%s273 + $0x128] sm:$0xff]
          %v3629 = vld [vmem:[%s273 + $0x130] sm:$0xff]
          %v3630 = vld [vmem:[%s273 + $0x138] sm:$0xff]
          %v3631 = vld [vmem:[%s273 + $0x140] sm:$0xff]
          %v3632 = vld [vmem:[%s273 + $0x148] sm:$0xff]
          %v3633 = vld [vmem:[%s273 + $0x150] sm:$0xff]
          %v3634 = vld [vmem:[%s273 + $0x158] sm:$0xff]
          %v3635 = vld [vmem:[%s273 + $0x160] sm:$0xff]
          %v3636 = vld [vmem:[%s273 + $0x168] sm:$0xff]
          %v3637 = vld [vmem:[%s273 + $0x170] sm:$0xff]
          %v3638 = vld [vmem:[%s273 + $0x178] sm:$0xff]
          %v3639 = vld [vmem:[%s273 + $0x180] sm:$0xff]
          %v3640 = vld [vmem:[%s273 + $0x188] sm:$0xff]
          %v3641 = vld [vmem:[%s273 + $0x190] sm:$0xff]
          %v3642 = vld [vmem:[%s273 + $0x198] sm:$0xff]
          %v3643 = vld [vmem:[%s273 + $0x1a0] sm:$0xff]
          %v3644 = vld [vmem:[%s273 + $0x1a8] sm:$0xff]
          %v3645 = vld [vmem:[%s273 + $0x1b0] sm:$0xff]
          %v3646 = vld [vmem:[%s273 + $0x1b8] sm:$0xff]
          %v3647 = vld [vmem:[%s273 + $0x1c0] sm:$0xff]
          %v3648 = vld [vmem:[%s273 + $0x1c8] sm:$0xff]
          %v3649 = vld [vmem:[%s273 + $0x1d0] sm:$0xff]
          %v3650 = vld [vmem:[%s273 + $0x1d8] sm:$0xff]
          %v3651 = vld [vmem:[%s273 + $0x1e0] sm:$0xff]
          %v3652 = vld [vmem:[%s273 + $0x1e8] sm:$0xff]
          %v3653 = vld [vmem:[%s273 + $0x1f0] sm:$0xff]
          %v3654 = vld [vmem:[%s273 + $0x1f8] sm:$0xff]
          %v3655 = vpack.c.bf16 %v3592, %v3591
          %v3656 = vpack.c.bf16 %v3594, %v3593
          %v3657 = vpack.c.bf16 %v3596, %v3595
          %v3658 = vpack.c.bf16 %v3598, %v3597
          %v3659 = vpack.c.bf16 %v3600, %v3599
          %v3660 = vpack.c.bf16 %v3602, %v3601
          %v3661 = vpack.c.bf16 %v3604, %v3603
          %v3662 = vpack.c.bf16 %v3606, %v3605
          %v3663 = vpack.c.bf16 %v3608, %v3607
          %v3664 = vpack.c.bf16 %v3610, %v3609
          %v3665 = vpack.c.bf16 %v3612, %v3611
          %v3666 = vpack.c.bf16 %v3614, %v3613
          %v3667 = vpack.c.bf16 %v3616, %v3615
          %v3668 = vpack.c.bf16 %v3618, %v3617
          %v3669 = vpack.c.bf16 %v3620, %v3619
          %v3670 = vpack.c.bf16 %v3622, %v3621
          %v3671 = vpack.c.bf16 %v3624, %v3623
          %v3672 = vpack.c.bf16 %v3626, %v3625
          %v3673 = vpack.c.bf16 %v3628, %v3627
          %v3674 = vpack.c.bf16 %v3630, %v3629
          %v3675 = vpack.c.bf16 %v3632, %v3631
          %v3676 = vpack.c.bf16 %v3634, %v3633
          %v3677 = vpack.c.bf16 %v3636, %v3635
          %v3678 = vpack.c.bf16 %v3638, %v3637
          %v3679 = vpack.c.bf16 %v3640, %v3639
          %v3680 = vpack.c.bf16 %v3642, %v3641
          %v3681 = vpack.c.bf16 %v3644, %v3643
          %v3682 = vpack.c.bf16 %v3646, %v3645
          %v3683 = vpack.c.bf16 %v3648, %v3647
          %v3684 = vpack.c.bf16 %v3650, %v3649
          %v3685 = vpack.c.bf16 %v3652, %v3651
          %v3686 = vpack.c.bf16 %v3654, %v3653
          %v3687 = vld [vmem:[#allocation8] sm:$0xff]
          %v3688 = vld [vmem:[#allocation8 + $0x8] sm:$0xff]
          %v3689 = vld [vmem:[#allocation8 + $0x10] sm:$0xff]
          %v3690 = vld [vmem:[#allocation8 + $0x18] sm:$0xff]
          %v3691 = vld [vmem:[#allocation8 + $0x20] sm:$0xff]
          %v3692 = vld [vmem:[#allocation8 + $0x28] sm:$0xff]
          %v3693 = vld [vmem:[#allocation8 + $0x30] sm:$0xff]
          %v3694 = vld [vmem:[#allocation8 + $0x38] sm:$0xff]
          %v3695 = vld [vmem:[#allocation8 + $0x40] sm:$0xff]
          %v3696 = vld [vmem:[#allocation8 + $0x48] sm:$0xff]
          %v3697 = vld [vmem:[#allocation8 + $0x50] sm:$0xff]
          %v3698 = vld [vmem:[#allocation8 + $0x58] sm:$0xff]
          %v3699 = vld [vmem:[#allocation8 + $0x60] sm:$0xff]
          %v3700 = vld [vmem:[#allocation8 + $0x68] sm:$0xff]
          %v3701 = vld [vmem:[#allocation8 + $0x70] sm:$0xff]
          %v3702 = vld [vmem:[#allocation8 + $0x78] sm:$0xff]
          %v3703 = vld [vmem:[#allocation8 + $0x80] sm:$0xff]
          %v3704 = vld [vmem:[#allocation8 + $0x88] sm:$0xff]
          %v3705 = vld [vmem:[#allocation8 + $0x90] sm:$0xff]
          %v3706 = vld [vmem:[#allocation8 + $0x98] sm:$0xff]
          %v3707 = vld [vmem:[#allocation8 + $0xa0] sm:$0xff]
          %v3708 = vld [vmem:[#allocation8 + $0xa8] sm:$0xff]
          %v3709 = vld [vmem:[#allocation8 + $0xb0] sm:$0xff]
          %v3710 = vld [vmem:[#allocation8 + $0xb8] sm:$0xff]
          %v3711 = vld [vmem:[#allocation8 + $0xc0] sm:$0xff]
          %v3712 = vld [vmem:[#allocation8 + $0xc8] sm:$0xff]
          %v3713 = vld [vmem:[#allocation8 + $0xd0] sm:$0xff]
          %v3714 = vld [vmem:[#allocation8 + $0xd8] sm:$0xff]
          %v3715 = vld [vmem:[#allocation8 + $0xe0] sm:$0xff]
          %v3716 = vld [vmem:[#allocation8 + $0xe8] sm:$0xff]
          %v3717 = vld [vmem:[#allocation8 + $0xf0] sm:$0xff]
          %v3718 = vld [vmem:[#allocation8 + $0xf8] sm:$0xff]
          %v3719 = vpack.c.bf16 %v3689, %v3687
          %v3720 = vpack.c.bf16 %v3690, %v3688
          %v3721 = vpack.c.bf16 %v3693, %v3691
          %v3722 = vpack.c.bf16 %v3694, %v3692
          %v3723 = vpack.c.bf16 %v3697, %v3695
          %v3724 = vpack.c.bf16 %v3698, %v3696
          %v3725 = vpack.c.bf16 %v3701, %v3699
          %v3726 = vpack.c.bf16 %v3702, %v3700
          %v3727 = vpack.c.bf16 %v3705, %v3703
          %v3728 = vpack.c.bf16 %v3706, %v3704
          %v3729 = vpack.c.bf16 %v3709, %v3707
          %v3730 = vpack.c.bf16 %v3710, %v3708
          %v3731 = vpack.c.bf16 %v3713, %v3711
          %v3732 = vpack.c.bf16 %v3714, %v3712
          %v3733 = vpack.c.bf16 %v3717, %v3715
          %v3734 = vpack.c.bf16 %v3718, %v3716
          %3735 = vmatprep.subr.bf16.mxu0 %v3734
          %3736 = vmatpush1.bf16.msra.mxu0 %v3733
          %3737 = vmatprep.subr.bf16.mxu0 %v3732
          %3738 = vmatpush1.bf16.msra.mxu0 %v3731
          %3739 = vmatprep.subr.bf16.mxu0 %v3730
          %3740 = vmatpush1.bf16.msra.mxu0 %v3729
          %3741 = vmatprep.subr.bf16.mxu0 %v3728
          %3742 = vmatpush1.bf16.msra.mxu0 %v3727
          %3743 = vmatprep.subr.bf16.mxu0 %v3726
          %3744 = vmatpush1.bf16.msra.mxu0 %v3725
          %3745 = vmatprep.subr.bf16.mxu0 %v3724
          %3746 = vmatpush1.bf16.msra.mxu0 %v3723
          %3747 = vmatprep.subr.bf16.mxu0 %v3722
          %3748 = vmatpush1.bf16.msra.mxu0 %v3721
          %3749 = vmatprep.subr.bf16.mxu0 %v3720
          %3750 = vmatpush1.bf16.msra.mxu0 %v3719
          %3751 = vmatprep.subr.bf16.mxu0 0
          %3752 = vmatpush2.bf16.msra.mxu0 0
          %3753 = vmatprep.subr.bf16.mxu0 0
          %3754 = vmatpush2.bf16.msra.mxu0 0
          %3755 = vmatprep.subr.bf16.mxu0 0
          %3756 = vmatpush2.bf16.msra.mxu0 0
          %3757 = vmatprep.subr.bf16.mxu0 0
          %3758 = vmatpush2.bf16.msra.mxu0 0
          %3759 = vmatprep.subr.bf16.mxu0 0
          %3760 = vmatpush2.bf16.msra.mxu0 0
          %3761 = vmatprep.subr.bf16.mxu0 0
          %3762 = vmatpush2.bf16.msra.mxu0 0
          %3763 = vmatprep.subr.bf16.mxu0 0
          %3764 = vmatpush2.bf16.msra.mxu0 0
          %3765 = vmatprep.subr.bf16.mxu0 0
          %3766 = vmatpush2.bf16.msra.mxu0 0
          %3767 = vmatprep.mubr.bf16.mxu0 0
          %3768 = vmatmul.mubr.bf16.gmra.mxu0 %v3655
          %v3769 = vpop.f32.mrf.mxu0
          %v3770 = vadd.f32 0.0, %v3769
          %v3771 = vpop.f32.mrf.mxu0
          %v3772 = vadd.f32 0.0, %v3771
          %v3773 = vpop.f32.mrf.mxu0
          %v3774 = vadd.f32 0.0, %v3773
          %v3775 = vpop.f32.mrf.mxu0
          %v3776 = vadd.f32 0.0, %v3775
          %3777 = vmatprep.mubr.bf16.mxu0 0
          %3778 = vmatmul.mubr.bf16.gmra.mxu0 %v3656
          %v3779 = vpop.f32.mrf.mxu0
          %v3780 = vadd.f32 0.0, %v3779
          %v3781 = vpop.f32.mrf.mxu0
          %v3782 = vadd.f32 0.0, %v3781
          %v3783 = vpop.f32.mrf.mxu0
          %v3784 = vadd.f32 0.0, %v3783
          %v3785 = vpop.f32.mrf.mxu0
          %v3786 = vadd.f32 0.0, %v3785
          %3787 = vmatprep.mubr.bf16.mxu0 0
          %3788 = vmatmul.mubr.bf16.gmra.mxu0 %v3657
          %v3789 = vpop.f32.mrf.mxu0
          %v3790 = vadd.f32 0.0, %v3789
          %v3791 = vpop.f32.mrf.mxu0
          %v3792 = vadd.f32 0.0, %v3791
          %v3793 = vpop.f32.mrf.mxu0
          %v3794 = vadd.f32 0.0, %v3793
          %v3795 = vpop.f32.mrf.mxu0
          %v3796 = vadd.f32 0.0, %v3795
          %3797 = vmatprep.mubr.bf16.mxu0 0
          %3798 = vmatmul.mubr.bf16.gmra.mxu0 %v3658
          %v3799 = vpop.f32.mrf.mxu0
          %v3800 = vadd.f32 0.0, %v3799
          %v3801 = vpop.f32.mrf.mxu0
          %v3802 = vadd.f32 0.0, %v3801
          %v3803 = vpop.f32.mrf.mxu0
          %v3804 = vadd.f32 0.0, %v3803
          %v3805 = vpop.f32.mrf.mxu0
          %v3806 = vadd.f32 0.0, %v3805
          %3807 = vmatprep.mubr.bf16.mxu0 0
          %3808 = vmatmul.mubr.bf16.gmra.mxu0 %v3659
          %v3809 = vpop.f32.mrf.mxu0
          %v3810 = vadd.f32 0.0, %v3809
          %v3811 = vpop.f32.mrf.mxu0
          %v3812 = vadd.f32 0.0, %v3811
          %v3813 = vpop.f32.mrf.mxu0
          %v3814 = vadd.f32 0.0, %v3813
          %v3815 = vpop.f32.mrf.mxu0
          %v3816 = vadd.f32 0.0, %v3815
          %3817 = vmatprep.mubr.bf16.mxu0 0
          %3818 = vmatmul.mubr.bf16.gmra.mxu0 %v3660
          %v3819 = vpop.f32.mrf.mxu0
          %v3820 = vadd.f32 0.0, %v3819
          %v3821 = vpop.f32.mrf.mxu0
          %v3822 = vadd.f32 0.0, %v3821
          %v3823 = vpop.f32.mrf.mxu0
          %v3824 = vadd.f32 0.0, %v3823
          %v3825 = vpop.f32.mrf.mxu0
          %v3826 = vadd.f32 0.0, %v3825
          %3827 = vmatprep.mubr.bf16.mxu0 0
          %3828 = vmatmul.mubr.bf16.gmra.mxu0 %v3661
          %v3829 = vpop.f32.mrf.mxu0
          %v3830 = vadd.f32 0.0, %v3829
          %v3831 = vpop.f32.mrf.mxu0
          %v3832 = vadd.f32 0.0, %v3831
          %v3833 = vpop.f32.mrf.mxu0
          %v3834 = vadd.f32 0.0, %v3833
          %v3835 = vpop.f32.mrf.mxu0
          %v3836 = vadd.f32 0.0, %v3835
          %3837 = vmatprep.mubr.bf16.mxu0 0
          %3838 = vmatmul.mubr.bf16.gmra.mxu0 %v3662
          %v3839 = vpop.f32.mrf.mxu0
          %v3840 = vadd.f32 0.0, %v3839
          %v3841 = vpop.f32.mrf.mxu0
          %v3842 = vadd.f32 0.0, %v3841
          %v3843 = vpop.f32.mrf.mxu0
          %v3844 = vadd.f32 0.0, %v3843
          %v3845 = vpop.f32.mrf.mxu0
          %v3846 = vadd.f32 0.0, %v3845
          %3847 = vmatprep.mubr.bf16.mxu0 0
          %3848 = vmatmul.mubr.bf16.gmra.mxu0 %v3663
          %v3849 = vpop.f32.mrf.mxu0
          %v3850 = vadd.f32 0.0, %v3849
          %v3851 = vpop.f32.mrf.mxu0
          %v3852 = vadd.f32 0.0, %v3851
          %v3853 = vpop.f32.mrf.mxu0
          %v3854 = vadd.f32 0.0, %v3853
          %v3855 = vpop.f32.mrf.mxu0
          %v3856 = vadd.f32 0.0, %v3855
          %3857 = vmatprep.mubr.bf16.mxu0 0
          %3858 = vmatmul.mubr.bf16.gmra.mxu0 %v3664
          %v3859 = vpop.f32.mrf.mxu0
          %v3860 = vadd.f32 0.0, %v3859
          %v3861 = vpop.f32.mrf.mxu0
          %v3862 = vadd.f32 0.0, %v3861
          %v3863 = vpop.f32.mrf.mxu0
          %v3864 = vadd.f32 0.0, %v3863
          %v3865 = vpop.f32.mrf.mxu0
          %v3866 = vadd.f32 0.0, %v3865
          %3867 = vmatprep.mubr.bf16.mxu0 0
          %3868 = vmatmul.mubr.bf16.gmra.mxu0 %v3665
          %v3869 = vpop.f32.mrf.mxu0
          %v3870 = vadd.f32 0.0, %v3869
          %v3871 = vpop.f32.mrf.mxu0
          %v3872 = vadd.f32 0.0, %v3871
          %v3873 = vpop.f32.mrf.mxu0
          %v3874 = vadd.f32 0.0, %v3873
          %v3875 = vpop.f32.mrf.mxu0
          %v3876 = vadd.f32 0.0, %v3875
          %3877 = vmatprep.mubr.bf16.mxu0 0
          %3878 = vmatmul.mubr.bf16.gmra.mxu0 %v3666
          %v3879 = vpop.f32.mrf.mxu0
          %v3880 = vadd.f32 0.0, %v3879
          %v3881 = vpop.f32.mrf.mxu0
          %v3882 = vadd.f32 0.0, %v3881
          %v3883 = vpop.f32.mrf.mxu0
          %v3884 = vadd.f32 0.0, %v3883
          %v3885 = vpop.f32.mrf.mxu0
          %v3886 = vadd.f32 0.0, %v3885
          %3887 = vmatprep.mubr.bf16.mxu0 0
          %3888 = vmatmul.mubr.bf16.gmra.mxu0 %v3667
          %v3889 = vpop.f32.mrf.mxu0
          %v3890 = vadd.f32 0.0, %v3889
          %v3891 = vpop.f32.mrf.mxu0
          %v3892 = vadd.f32 0.0, %v3891
          %v3893 = vpop.f32.mrf.mxu0
          %v3894 = vadd.f32 0.0, %v3893
          %v3895 = vpop.f32.mrf.mxu0
          %v3896 = vadd.f32 0.0, %v3895
          %3897 = vmatprep.mubr.bf16.mxu0 0
          %3898 = vmatmul.mubr.bf16.gmra.mxu0 %v3668
          %v3899 = vpop.f32.mrf.mxu0
          %v3900 = vadd.f32 0.0, %v3899
          %v3901 = vpop.f32.mrf.mxu0
          %v3902 = vadd.f32 0.0, %v3901
          %v3903 = vpop.f32.mrf.mxu0
          %v3904 = vadd.f32 0.0, %v3903
          %v3905 = vpop.f32.mrf.mxu0
          %v3906 = vadd.f32 0.0, %v3905
          %3907 = vmatprep.mubr.bf16.mxu0 0
          %3908 = vmatmul.mubr.bf16.gmra.mxu0 %v3669
          %v3909 = vpop.f32.mrf.mxu0
          %v3910 = vadd.f32 0.0, %v3909
          %v3911 = vpop.f32.mrf.mxu0
          %v3912 = vadd.f32 0.0, %v3911
          %v3913 = vpop.f32.mrf.mxu0
          %v3914 = vadd.f32 0.0, %v3913
          %v3915 = vpop.f32.mrf.mxu0
          %v3916 = vadd.f32 0.0, %v3915
          %3917 = vmatprep.mubr.bf16.mxu0 0
          %3918 = vmatmul.mubr.bf16.gmra.mxu0 %v3670
          %v3919 = vpop.f32.mrf.mxu0
          %v3920 = vadd.f32 0.0, %v3919
          %v3921 = vpop.f32.mrf.mxu0
          %v3922 = vadd.f32 0.0, %v3921
          %v3923 = vpop.f32.mrf.mxu0
          %v3924 = vadd.f32 0.0, %v3923
          %v3925 = vpop.f32.mrf.mxu0
          %v3926 = vadd.f32 0.0, %v3925
          %3927 = vmatprep.mubr.bf16.mxu0 0
          %3928 = vmatmul.mubr.bf16.gmra.mxu0 %v3671
          %v3929 = vpop.f32.mrf.mxu0
          %v3930 = vadd.f32 0.0, %v3929
          %v3931 = vpop.f32.mrf.mxu0
          %v3932 = vadd.f32 0.0, %v3931
          %v3933 = vpop.f32.mrf.mxu0
          %v3934 = vadd.f32 0.0, %v3933
          %v3935 = vpop.f32.mrf.mxu0
          %v3936 = vadd.f32 0.0, %v3935
          %3937 = vmatprep.mubr.bf16.mxu0 0
          %3938 = vmatmul.mubr.bf16.gmra.mxu0 %v3672
          %v3939 = vpop.f32.mrf.mxu0
          %v3940 = vadd.f32 0.0, %v3939
          %v3941 = vpop.f32.mrf.mxu0
          %v3942 = vadd.f32 0.0, %v3941
          %v3943 = vpop.f32.mrf.mxu0
          %v3944 = vadd.f32 0.0, %v3943
          %v3945 = vpop.f32.mrf.mxu0
          %v3946 = vadd.f32 0.0, %v3945
          %3947 = vmatprep.mubr.bf16.mxu0 0
          %3948 = vmatmul.mubr.bf16.gmra.mxu0 %v3673
          %v3949 = vpop.f32.mrf.mxu0
          %v3950 = vadd.f32 0.0, %v3949
          %v3951 = vpop.f32.mrf.mxu0
          %v3952 = vadd.f32 0.0, %v3951
          %v3953 = vpop.f32.mrf.mxu0
          %v3954 = vadd.f32 0.0, %v3953
          %v3955 = vpop.f32.mrf.mxu0
          %v3956 = vadd.f32 0.0, %v3955
          %3957 = vmatprep.mubr.bf16.mxu0 0
          %3958 = vmatmul.mubr.bf16.gmra.mxu0 %v3674
          %v3959 = vpop.f32.mrf.mxu0
          %v3960 = vadd.f32 0.0, %v3959
          %v3961 = vpop.f32.mrf.mxu0
          %v3962 = vadd.f32 0.0, %v3961
          %v3963 = vpop.f32.mrf.mxu0
          %v3964 = vadd.f32 0.0, %v3963
          %v3965 = vpop.f32.mrf.mxu0
          %v3966 = vadd.f32 0.0, %v3965
          %3967 = vmatprep.mubr.bf16.mxu0 0
          %3968 = vmatmul.mubr.bf16.gmra.mxu0 %v3675
          %v3969 = vpop.f32.mrf.mxu0
          %v3970 = vadd.f32 0.0, %v3969
          %v3971 = vpop.f32.mrf.mxu0
          %v3972 = vadd.f32 0.0, %v3971
          %v3973 = vpop.f32.mrf.mxu0
          %v3974 = vadd.f32 0.0, %v3973
          %v3975 = vpop.f32.mrf.mxu0
          %v3976 = vadd.f32 0.0, %v3975
          %3977 = vmatprep.mubr.bf16.mxu0 0
          %3978 = vmatmul.mubr.bf16.gmra.mxu0 %v3676
          %v3979 = vpop.f32.mrf.mxu0
          %v3980 = vadd.f32 0.0, %v3979
          %v3981 = vpop.f32.mrf.mxu0
          %v3982 = vadd.f32 0.0, %v3981
          %v3983 = vpop.f32.mrf.mxu0
          %v3984 = vadd.f32 0.0, %v3983
          %v3985 = vpop.f32.mrf.mxu0
          %v3986 = vadd.f32 0.0, %v3985
          %3987 = vmatprep.mubr.bf16.mxu0 0
          %3988 = vmatmul.mubr.bf16.gmra.mxu0 %v3677
          %v3989 = vpop.f32.mrf.mxu0
          %v3990 = vadd.f32 0.0, %v3989
          %v3991 = vpop.f32.mrf.mxu0
          %v3992 = vadd.f32 0.0, %v3991
          %v3993 = vpop.f32.mrf.mxu0
          %v3994 = vadd.f32 0.0, %v3993
          %v3995 = vpop.f32.mrf.mxu0
          %v3996 = vadd.f32 0.0, %v3995
          %3997 = vmatprep.mubr.bf16.mxu0 0
          %3998 = vmatmul.mubr.bf16.gmra.mxu0 %v3678
          %v3999 = vpop.f32.mrf.mxu0
          %v4000 = vadd.f32 0.0, %v3999
          %v4001 = vpop.f32.mrf.mxu0
          %v4002 = vadd.f32 0.0, %v4001
          %v4003 = vpop.f32.mrf.mxu0
          %v4004 = vadd.f32 0.0, %v4003
          %v4005 = vpop.f32.mrf.mxu0
          %v4006 = vadd.f32 0.0, %v4005
          %4007 = vmatprep.mubr.bf16.mxu0 0
          %4008 = vmatmul.mubr.bf16.gmra.mxu0 %v3679
          %v4009 = vpop.f32.mrf.mxu0
          %v4010 = vadd.f32 0.0, %v4009
          %v4011 = vpop.f32.mrf.mxu0
          %v4012 = vadd.f32 0.0, %v4011
          %v4013 = vpop.f32.mrf.mxu0
          %v4014 = vadd.f32 0.0, %v4013
          %v4015 = vpop.f32.mrf.mxu0
          %v4016 = vadd.f32 0.0, %v4015
          %4017 = vmatprep.mubr.bf16.mxu0 0
          %4018 = vmatmul.mubr.bf16.gmra.mxu0 %v3680
          %v4019 = vpop.f32.mrf.mxu0
          %v4020 = vadd.f32 0.0, %v4019
          %v4021 = vpop.f32.mrf.mxu0
          %v4022 = vadd.f32 0.0, %v4021
          %v4023 = vpop.f32.mrf.mxu0
          %v4024 = vadd.f32 0.0, %v4023
          %v4025 = vpop.f32.mrf.mxu0
          %v4026 = vadd.f32 0.0, %v4025
          %4027 = vmatprep.mubr.bf16.mxu0 0
          %4028 = vmatmul.mubr.bf16.gmra.mxu0 %v3681
          %v4029 = vpop.f32.mrf.mxu0
          %v4030 = vadd.f32 0.0, %v4029
          %v4031 = vpop.f32.mrf.mxu0
          %v4032 = vadd.f32 0.0, %v4031
          %v4033 = vpop.f32.mrf.mxu0
          %v4034 = vadd.f32 0.0, %v4033
          %v4035 = vpop.f32.mrf.mxu0
          %v4036 = vadd.f32 0.0, %v4035
          %4037 = vmatprep.mubr.bf16.mxu0 0
          %4038 = vmatmul.mubr.bf16.gmra.mxu0 %v3682
          %v4039 = vpop.f32.mrf.mxu0
          %v4040 = vadd.f32 0.0, %v4039
          %v4041 = vpop.f32.mrf.mxu0
          %v4042 = vadd.f32 0.0, %v4041
          %v4043 = vpop.f32.mrf.mxu0
          %v4044 = vadd.f32 0.0, %v4043
          %v4045 = vpop.f32.mrf.mxu0
          %v4046 = vadd.f32 0.0, %v4045
          %4047 = vmatprep.mubr.bf16.mxu0 0
          %4048 = vmatmul.mubr.bf16.gmra.mxu0 %v3683
          %v4049 = vpop.f32.mrf.mxu0
          %v4050 = vadd.f32 0.0, %v4049
          %v4051 = vpop.f32.mrf.mxu0
          %v4052 = vadd.f32 0.0, %v4051
          %v4053 = vpop.f32.mrf.mxu0
          %v4054 = vadd.f32 0.0, %v4053
          %v4055 = vpop.f32.mrf.mxu0
          %v4056 = vadd.f32 0.0, %v4055
          %4057 = vmatprep.mubr.bf16.mxu0 0
          %4058 = vmatmul.mubr.bf16.gmra.mxu0 %v3684
          %v4059 = vpop.f32.mrf.mxu0
          %v4060 = vadd.f32 0.0, %v4059
          %v4061 = vpop.f32.mrf.mxu0
          %v4062 = vadd.f32 0.0, %v4061
          %v4063 = vpop.f32.mrf.mxu0
          %v4064 = vadd.f32 0.0, %v4063
          %v4065 = vpop.f32.mrf.mxu0
          %v4066 = vadd.f32 0.0, %v4065
          %4067 = vmatprep.mubr.bf16.mxu0 0
          %4068 = vmatmul.mubr.bf16.gmra.mxu0 %v3685
          %v4069 = vpop.f32.mrf.mxu0
          %v4070 = vadd.f32 0.0, %v4069
          %v4071 = vpop.f32.mrf.mxu0
          %v4072 = vadd.f32 0.0, %v4071
          %v4073 = vpop.f32.mrf.mxu0
          %v4074 = vadd.f32 0.0, %v4073
          %v4075 = vpop.f32.mrf.mxu0
          %v4076 = vadd.f32 0.0, %v4075
          %4077 = vmatprep.mubr.bf16.mxu0 0
          %4078 = vmatmul.mubr.bf16.gmra.mxu0 %v3686
          %v4079 = vpop.f32.mrf.mxu0
          %v4080 = vadd.f32 0.0, %v4079
          %v4081 = vpop.f32.mrf.mxu0
          %v4082 = vadd.f32 0.0, %v4081
          %v4083 = vpop.f32.mrf.mxu0
          %v4084 = vadd.f32 0.0, %v4083
          %v4085 = vpop.f32.mrf.mxu0
          %v4086 = vadd.f32 0.0, %v4085
          %4087 = vdwg.mxu0
          %vm4088 = vcmp.lt.s32.totalorder %v380, 8
          %vm4089 = vcmp.lt.s32.totalorder %v381, 8
          %vm4090 = vcmp.lt.s32.totalorder %v382, 8
          %vm4091 = vcmp.lt.s32.totalorder %v383, 8
          %vm4092 = vcmp.lt.s32.totalorder %v384, 8
          %vm4093 = vcmp.lt.s32.totalorder %v385, 8
          %vm4094 = vcmp.lt.s32.totalorder %v386, 8
          %vm4095 = vcmp.lt.s32.totalorder %v387, 8
          %vm4096 = vcmp.lt.s32.totalorder %v388, 8
          %vm4097 = vcmp.lt.s32.totalorder %v389, 8
          %vm4098 = vcmp.lt.s32.totalorder %v390, 8
          %vm4099 = vcmp.lt.s32.totalorder %v391, 8
          %vm4100 = vcmp.lt.s32.totalorder %v392, 8
          %vm4101 = vcmp.lt.s32.totalorder %v393, 8
          %vm4102 = vcmp.lt.s32.totalorder %v394, 8
          %vm4103 = vcmp.lt.s32.totalorder %v395, 8
          %vm4104 = vcmp.lt.s32.totalorder %v396, 8
          %vm4105 = vcmp.lt.s32.totalorder %v397, 8
          %vm4106 = vcmp.lt.s32.totalorder %v398, 8
          %vm4107 = vcmp.lt.s32.totalorder %v399, 8
          %vm4108 = vcmp.lt.s32.totalorder %v400, 8
          %vm4109 = vcmp.lt.s32.totalorder %v401, 8
          %vm4110 = vcmp.lt.s32.totalorder %v402, 8
          %vm4111 = vcmp.lt.s32.totalorder %v403, 8
          %vm4112 = vcmp.lt.s32.totalorder %v404, 8
          %vm4113 = vcmp.lt.s32.totalorder %v405, 8
          %vm4114 = vcmp.lt.s32.totalorder %v406, 8
          %vm4115 = vcmp.lt.s32.totalorder %v407, 8
          %vm4116 = vcmp.lt.s32.totalorder %v408, 8
          %vm4117 = vcmp.lt.s32.totalorder %v409, 8
          %vm4118 = vcmp.lt.s32.totalorder %v410, 8
          %vm4119 = vcmp.lt.s32.totalorder %v411, 8
          %vm4120 = vcmp.lt.s32.totalorder %v412, 8
          %vm4121 = vcmp.lt.s32.totalorder %v413, 8
          %vm4122 = vcmp.lt.s32.totalorder %v414, 8
          %vm4123 = vcmp.lt.s32.totalorder %v415, 8
          %vm4124 = vcmp.lt.s32.totalorder %v416, 8
          %vm4125 = vcmp.lt.s32.totalorder %v417, 8
          %vm4126 = vcmp.lt.s32.totalorder %v418, 8
          %vm4127 = vcmp.lt.s32.totalorder %v419, 8
          %vm4128 = vcmp.lt.s32.totalorder %v420, 8
          %vm4129 = vcmp.lt.s32.totalorder %v421, 8
          %vm4130 = vcmp.lt.s32.totalorder %v422, 8
          %vm4131 = vcmp.lt.s32.totalorder %v423, 8
          %vm4132 = vcmp.lt.s32.totalorder %v424, 8
          %vm4133 = vcmp.lt.s32.totalorder %v425, 8
          %vm4134 = vcmp.lt.s32.totalorder %v426, 8
          %vm4135 = vcmp.lt.s32.totalorder %v427, 8
          %vm4136 = vcmp.lt.s32.totalorder %v428, 8
          %vm4137 = vcmp.lt.s32.totalorder %v429, 8
          %vm4138 = vcmp.lt.s32.totalorder %v430, 8
          %vm4139 = vcmp.lt.s32.totalorder %v431, 8
          %vm4140 = vcmp.lt.s32.totalorder %v432, 8
          %vm4141 = vcmp.lt.s32.totalorder %v433, 8
          %vm4142 = vcmp.lt.s32.totalorder %v434, 8
          %vm4143 = vcmp.lt.s32.totalorder %v435, 8
          %vm4144 = vcmp.lt.s32.totalorder %v436, 8
          %vm4145 = vcmp.lt.s32.totalorder %v437, 8
          %vm4146 = vcmp.lt.s32.totalorder %v438, 8
          %vm4147 = vcmp.lt.s32.totalorder %v439, 8
          %vm4148 = vcmp.lt.s32.totalorder %v440, 8
          %vm4149 = vcmp.lt.s32.totalorder %v441, 8
          %vm4150 = vcmp.lt.s32.totalorder %v442, 8
          %vm4151 = vcmp.lt.s32.totalorder %v443, 8
          %4152 = vmax.xlane.f32.xlu0 %v3770
          %v4153 = vpop.xlane.xlu0 %4152
          %4154 = vmax.xlane.f32.xlu0 %v3774
          %v4155 = vpop.xlane.xlu0 %4154
          %4156 = vmax.xlane.f32.xlu0 %v3780
          %v4157 = vpop.xlane.xlu0 %4156
          %4158 = vmax.xlane.f32.xlu0 %v3784
          %v4159 = vpop.xlane.xlu0 %4158
          %4160 = vmax.xlane.f32.xlu0 %v3790
          %v4161 = vpop.xlane.xlu0 %4160
          %4162 = vmax.xlane.f32.xlu0 %v3794
          %v4163 = vpop.xlane.xlu0 %4162
          %4164 = vmax.xlane.f32.xlu0 %v3800
          %v4165 = vpop.xlane.xlu0 %4164
          %4166 = vmax.xlane.f32.xlu0 %v3804
          %v4167 = vpop.xlane.xlu0 %4166
          %4168 = vmax.xlane.f32.xlu0 %v3810
          %v4169 = vpop.xlane.xlu0 %4168
          %4170 = vmax.xlane.f32.xlu0 %v3814
          %v4171 = vpop.xlane.xlu0 %4170
          %4172 = vmax.xlane.f32.xlu0 %v3820
          %v4173 = vpop.xlane.xlu0 %4172
          %4174 = vmax.xlane.f32.xlu0 %v3824
          %v4175 = vpop.xlane.xlu0 %4174
          %4176 = vmax.xlane.f32.xlu0 %v3830
          %v4177 = vpop.xlane.xlu0 %4176
          %4178 = vmax.xlane.f32.xlu0 %v3834
          %v4179 = vpop.xlane.xlu0 %4178
          %4180 = vmax.xlane.f32.xlu0 %v3840
          %v4181 = vpop.xlane.xlu0 %4180
          %4182 = vmax.xlane.f32.xlu0 %v3844
          %v4183 = vpop.xlane.xlu0 %4182
          %4184 = vmax.xlane.f32.xlu0 %v3850
          %v4185 = vpop.xlane.xlu0 %4184
          %4186 = vmax.xlane.f32.xlu0 %v3854
          %v4187 = vpop.xlane.xlu0 %4186
          %4188 = vmax.xlane.f32.xlu0 %v3860
          %v4189 = vpop.xlane.xlu0 %4188
          %4190 = vmax.xlane.f32.xlu0 %v3864
          %v4191 = vpop.xlane.xlu0 %4190
          %4192 = vmax.xlane.f32.xlu0 %v3870
          %v4193 = vpop.xlane.xlu0 %4192
          %4194 = vmax.xlane.f32.xlu0 %v3874
          %v4195 = vpop.xlane.xlu0 %4194
          %4196 = vmax.xlane.f32.xlu0 %v3880
          %v4197 = vpop.xlane.xlu0 %4196
          %4198 = vmax.xlane.f32.xlu0 %v3884
          %v4199 = vpop.xlane.xlu0 %4198
          %4200 = vmax.xlane.f32.xlu0 %v3890
          %v4201 = vpop.xlane.xlu0 %4200
          %4202 = vmax.xlane.f32.xlu0 %v3894
          %v4203 = vpop.xlane.xlu0 %4202
          %4204 = vmax.xlane.f32.xlu0 %v3900
          %v4205 = vpop.xlane.xlu0 %4204
          %4206 = vmax.xlane.f32.xlu0 %v3904
          %v4207 = vpop.xlane.xlu0 %4206
          %4208 = vmax.xlane.f32.xlu0 %v3910
          %v4209 = vpop.xlane.xlu0 %4208
          %4210 = vmax.xlane.f32.xlu0 %v3914
          %v4211 = vpop.xlane.xlu0 %4210
          %4212 = vmax.xlane.f32.xlu0 %v3920
          %v4213 = vpop.xlane.xlu0 %4212
          %4214 = vmax.xlane.f32.xlu0 %v3924
          %v4215 = vpop.xlane.xlu0 %4214
          %4216 = vmax.xlane.f32.xlu0 %v3930
          %v4217 = vpop.xlane.xlu0 %4216
          %4218 = vmax.xlane.f32.xlu0 %v3934
          %v4219 = vpop.xlane.xlu0 %4218
          %4220 = vmax.xlane.f32.xlu0 %v3940
          %v4221 = vpop.xlane.xlu0 %4220
          %4222 = vmax.xlane.f32.xlu0 %v3944
          %v4223 = vpop.xlane.xlu0 %4222
          %4224 = vmax.xlane.f32.xlu0 %v3950
          %v4225 = vpop.xlane.xlu0 %4224
          %4226 = vmax.xlane.f32.xlu0 %v3954
          %v4227 = vpop.xlane.xlu0 %4226
          %4228 = vmax.xlane.f32.xlu0 %v3960
          %v4229 = vpop.xlane.xlu0 %4228
          %4230 = vmax.xlane.f32.xlu0 %v3964
          %v4231 = vpop.xlane.xlu0 %4230
          %4232 = vmax.xlane.f32.xlu0 %v3970
          %v4233 = vpop.xlane.xlu0 %4232
          %4234 = vmax.xlane.f32.xlu0 %v3974
          %v4235 = vpop.xlane.xlu0 %4234
          %4236 = vmax.xlane.f32.xlu0 %v3980
          %v4237 = vpop.xlane.xlu0 %4236
          %4238 = vmax.xlane.f32.xlu0 %v3984
          %v4239 = vpop.xlane.xlu0 %4238
          %4240 = vmax.xlane.f32.xlu0 %v3990
          %v4241 = vpop.xlane.xlu0 %4240
          %4242 = vmax.xlane.f32.xlu0 %v3994
          %v4243 = vpop.xlane.xlu0 %4242
          %4244 = vmax.xlane.f32.xlu0 %v4000
          %v4245 = vpop.xlane.xlu0 %4244
          %4246 = vmax.xlane.f32.xlu0 %v4004
          %v4247 = vpop.xlane.xlu0 %4246
          %4248 = vmax.xlane.f32.xlu0 %v4010
          %v4249 = vpop.xlane.xlu0 %4248
          %4250 = vmax.xlane.f32.xlu0 %v4014
          %v4251 = vpop.xlane.xlu0 %4250
          %4252 = vmax.xlane.f32.xlu0 %v4020
          %v4253 = vpop.xlane.xlu0 %4252
          %4254 = vmax.xlane.f32.xlu0 %v4024
          %v4255 = vpop.xlane.xlu0 %4254
          %4256 = vmax.xlane.f32.xlu0 %v4030
          %v4257 = vpop.xlane.xlu0 %4256
          %4258 = vmax.xlane.f32.xlu0 %v4034
          %v4259 = vpop.xlane.xlu0 %4258
          %4260 = vmax.xlane.f32.xlu0 %v4040
          %v4261 = vpop.xlane.xlu0 %4260
          %4262 = vmax.xlane.f32.xlu0 %v4044
          %v4263 = vpop.xlane.xlu0 %4262
          %4264 = vmax.xlane.f32.xlu0 %v4050
          %v4265 = vpop.xlane.xlu0 %4264
          %4266 = vmax.xlane.f32.xlu0 %v4054
          %v4267 = vpop.xlane.xlu0 %4266
          %4268 = vmax.xlane.f32.xlu0 %v4060
          %v4269 = vpop.xlane.xlu0 %4268
          %4270 = vmax.xlane.f32.xlu0 %v4064
          %v4271 = vpop.xlane.xlu0 %4270
          %4272 = vmax.xlane.f32.xlu0 %v4070
          %v4273 = vpop.xlane.xlu0 %4272
          %4274 = vmax.xlane.f32.xlu0 %v4074
          %v4275 = vpop.xlane.xlu0 %4274
          %4276 = vmax.xlane.f32.xlu0 %v4080
          %v4277 = vpop.xlane.xlu0 %4276
          %4278 = vmax.xlane.f32.xlu0 %v4084
          %v4279 = vpop.xlane.xlu0 %4278
          %v4280 = vsub.f32 %v3770, %v4153
          %v4281 = vsub.f32 %v3774, %v4155
          %v4282 = vsub.f32 %v3780, %v4157
          %v4283 = vsub.f32 %v3784, %v4159
          %v4284 = vsub.f32 %v3790, %v4161
          %v4285 = vsub.f32 %v3794, %v4163
          %v4286 = vsub.f32 %v3800, %v4165
          %v4287 = vsub.f32 %v3804, %v4167
          %v4288 = vsub.f32 %v3810, %v4169
          %v4289 = vsub.f32 %v3814, %v4171
          %v4290 = vsub.f32 %v3820, %v4173
          %v4291 = vsub.f32 %v3824, %v4175
          %v4292 = vsub.f32 %v3830, %v4177
          %v4293 = vsub.f32 %v3834, %v4179
          %v4294 = vsub.f32 %v3840, %v4181
          %v4295 = vsub.f32 %v3844, %v4183
          %v4296 = vsub.f32 %v3850, %v4185
          %v4297 = vsub.f32 %v3854, %v4187
          %v4298 = vsub.f32 %v3860, %v4189
          %v4299 = vsub.f32 %v3864, %v4191
          %v4300 = vsub.f32 %v3870, %v4193
          %v4301 = vsub.f32 %v3874, %v4195
          %v4302 = vsub.f32 %v3880, %v4197
          %v4303 = vsub.f32 %v3884, %v4199
          %v4304 = vsub.f32 %v3890, %v4201
          %v4305 = vsub.f32 %v3894, %v4203
          %v4306 = vsub.f32 %v3900, %v4205
          %v4307 = vsub.f32 %v3904, %v4207
          %v4308 = vsub.f32 %v3910, %v4209
          %v4309 = vsub.f32 %v3914, %v4211
          %v4310 = vsub.f32 %v3920, %v4213
          %v4311 = vsub.f32 %v3924, %v4215
          %v4312 = vsub.f32 %v3930, %v4217
          %v4313 = vsub.f32 %v3934, %v4219
          %v4314 = vsub.f32 %v3940, %v4221
          %v4315 = vsub.f32 %v3944, %v4223
          %v4316 = vsub.f32 %v3950, %v4225
          %v4317 = vsub.f32 %v3954, %v4227
          %v4318 = vsub.f32 %v3960, %v4229
          %v4319 = vsub.f32 %v3964, %v4231
          %v4320 = vsub.f32 %v3970, %v4233
          %v4321 = vsub.f32 %v3974, %v4235
          %v4322 = vsub.f32 %v3980, %v4237
          %v4323 = vsub.f32 %v3984, %v4239
          %v4324 = vsub.f32 %v3990, %v4241
          %v4325 = vsub.f32 %v3994, %v4243
          %v4326 = vsub.f32 %v4000, %v4245
          %v4327 = vsub.f32 %v4004, %v4247
          %v4328 = vsub.f32 %v4010, %v4249
          %v4329 = vsub.f32 %v4014, %v4251
          %v4330 = vsub.f32 %v4020, %v4253
          %v4331 = vsub.f32 %v4024, %v4255
          %v4332 = vsub.f32 %v4030, %v4257
          %v4333 = vsub.f32 %v4034, %v4259
          %v4334 = vsub.f32 %v4040, %v4261
          %v4335 = vsub.f32 %v4044, %v4263
          %v4336 = vsub.f32 %v4050, %v4265
          %v4337 = vsub.f32 %v4054, %v4267
          %v4338 = vsub.f32 %v4060, %v4269
          %v4339 = vsub.f32 %v4064, %v4271
          %v4340 = vsub.f32 %v4070, %v4273
          %v4341 = vsub.f32 %v4074, %v4275
          %v4342 = vsub.f32 %v4080, %v4277
          %v4343 = vsub.f32 %v4084, %v4279
          %v4344 = vmul.f32 %v4280, 1.442695
          %v4345 = vpow.pop %v4344
          %v4346 = vmul.f32 %v4281, 1.442695
          %v4347 = vpow.pop %v4346
          %v4348 = vmul.f32 %v4282, 1.442695
          %v4349 = vpow.pop %v4348
          %v4350 = vmul.f32 %v4283, 1.442695
          %v4351 = vpow.pop %v4350
          %v4352 = vmul.f32 %v4284, 1.442695
          %v4353 = vpow.pop %v4352
          %v4354 = vmul.f32 %v4285, 1.442695
          %v4355 = vpow.pop %v4354
          %v4356 = vmul.f32 %v4286, 1.442695
          %v4357 = vpow.pop %v4356
          %v4358 = vmul.f32 %v4287, 1.442695
          %v4359 = vpow.pop %v4358
          %v4360 = vmul.f32 %v4288, 1.442695
          %v4361 = vpow.pop %v4360
          %v4362 = vmul.f32 %v4289, 1.442695
          %v4363 = vpow.pop %v4362
          %v4364 = vmul.f32 %v4290, 1.442695
          %v4365 = vpow.pop %v4364
          %v4366 = vmul.f32 %v4291, 1.442695
          %v4367 = vpow.pop %v4366
          %v4368 = vmul.f32 %v4292, 1.442695
          %v4369 = vpow.pop %v4368
          %v4370 = vmul.f32 %v4293, 1.442695
          %v4371 = vpow.pop %v4370
          %v4372 = vmul.f32 %v4294, 1.442695
          %v4373 = vpow.pop %v4372
          %v4374 = vmul.f32 %v4295, 1.442695
          %v4375 = vpow.pop %v4374
          %v4376 = vmul.f32 %v4296, 1.442695
          %v4377 = vpow.pop %v4376
          %v4378 = vmul.f32 %v4297, 1.442695
          %v4379 = vpow.pop %v4378
          %v4380 = vmul.f32 %v4298, 1.442695
          %v4381 = vpow.pop %v4380
          %v4382 = vmul.f32 %v4299, 1.442695
          %v4383 = vpow.pop %v4382
          %v4384 = vmul.f32 %v4300, 1.442695
          %v4385 = vpow.pop %v4384
          %v4386 = vmul.f32 %v4301, 1.442695
          %v4387 = vpow.pop %v4386
          %v4388 = vmul.f32 %v4302, 1.442695
          %v4389 = vpow.pop %v4388
          %v4390 = vmul.f32 %v4303, 1.442695
          %v4391 = vpow.pop %v4390
          %v4392 = vmul.f32 %v4304, 1.442695
          %v4393 = vpow.pop %v4392
          %v4394 = vmul.f32 %v4305, 1.442695
          %v4395 = vpow.pop %v4394
          %v4396 = vmul.f32 %v4306, 1.442695
          %v4397 = vpow.pop %v4396
          %v4398 = vmul.f32 %v4307, 1.442695
          %v4399 = vpow.pop %v4398
          %v4400 = vmul.f32 %v4308, 1.442695
          %v4401 = vpow.pop %v4400
          %v4402 = vmul.f32 %v4309, 1.442695
          %v4403 = vpow.pop %v4402
          %v4404 = vmul.f32 %v4310, 1.442695
          %v4405 = vpow.pop %v4404
          %v4406 = vmul.f32 %v4311, 1.442695
          %v4407 = vpow.pop %v4406
          %v4408 = vmul.f32 %v4312, 1.442695
          %v4409 = vpow.pop %v4408
          %v4410 = vmul.f32 %v4313, 1.442695
          %v4411 = vpow.pop %v4410
          %v4412 = vmul.f32 %v4314, 1.442695
          %v4413 = vpow.pop %v4412
          %v4414 = vmul.f32 %v4315, 1.442695
          %v4415 = vpow.pop %v4414
          %v4416 = vmul.f32 %v4316, 1.442695
          %v4417 = vpow.pop %v4416
          %v4418 = vmul.f32 %v4317, 1.442695
          %v4419 = vpow.pop %v4418
          %v4420 = vmul.f32 %v4318, 1.442695
          %v4421 = vpow.pop %v4420
          %v4422 = vmul.f32 %v4319, 1.442695
          %v4423 = vpow.pop %v4422
          %v4424 = vmul.f32 %v4320, 1.442695
          %v4425 = vpow.pop %v4424
          %v4426 = vmul.f32 %v4321, 1.442695
          %v4427 = vpow.pop %v4426
          %v4428 = vmul.f32 %v4322, 1.442695
          %v4429 = vpow.pop %v4428
          %v4430 = vmul.f32 %v4323, 1.442695
          %v4431 = vpow.pop %v4430
          %v4432 = vmul.f32 %v4324, 1.442695
          %v4433 = vpow.pop %v4432
          %v4434 = vmul.f32 %v4325, 1.442695
          %v4435 = vpow.pop %v4434
          %v4436 = vmul.f32 %v4326, 1.442695
          %v4437 = vpow.pop %v4436
          %v4438 = vmul.f32 %v4327, 1.442695
          %v4439 = vpow.pop %v4438
          %v4440 = vmul.f32 %v4328, 1.442695
          %v4441 = vpow.pop %v4440
          %v4442 = vmul.f32 %v4329, 1.442695
          %v4443 = vpow.pop %v4442
          %v4444 = vmul.f32 %v4330, 1.442695
          %v4445 = vpow.pop %v4444
          %v4446 = vmul.f32 %v4331, 1.442695
          %v4447 = vpow.pop %v4446
          %v4448 = vmul.f32 %v4332, 1.442695
          %v4449 = vpow.pop %v4448
          %v4450 = vmul.f32 %v4333, 1.442695
          %v4451 = vpow.pop %v4450
          %v4452 = vmul.f32 %v4334, 1.442695
          %v4453 = vpow.pop %v4452
          %v4454 = vmul.f32 %v4335, 1.442695
          %v4455 = vpow.pop %v4454
          %v4456 = vmul.f32 %v4336, 1.442695
          %v4457 = vpow.pop %v4456
          %v4458 = vmul.f32 %v4337, 1.442695
          %v4459 = vpow.pop %v4458
          %v4460 = vmul.f32 %v4338, 1.442695
          %v4461 = vpow.pop %v4460
          %v4462 = vmul.f32 %v4339, 1.442695
          %v4463 = vpow.pop %v4462
          %v4464 = vmul.f32 %v4340, 1.442695
          %v4465 = vpow.pop %v4464
          %v4466 = vmul.f32 %v4341, 1.442695
          %v4467 = vpow.pop %v4466
          %v4468 = vmul.f32 %v4342, 1.442695
          %v4469 = vpow.pop %v4468
          %v4470 = vmul.f32 %v4343, 1.442695
          %v4471 = vpow.pop %v4470
          %4472 = vadd.xlane.f32.xlu0 %v4345
          %v4473 = vpop.xlane.xlu0 %4472
          %4474 = vadd.xlane.f32.xlu0 %v4347
          %v4475 = vpop.xlane.xlu0 %4474
          %4476 = vadd.xlane.f32.xlu0 %v4349
          %v4477 = vpop.xlane.xlu0 %4476
          %4478 = vadd.xlane.f32.xlu0 %v4351
          %v4479 = vpop.xlane.xlu0 %4478
          %4480 = vadd.xlane.f32.xlu0 %v4353
          %v4481 = vpop.xlane.xlu0 %4480
          %4482 = vadd.xlane.f32.xlu0 %v4355
          %v4483 = vpop.xlane.xlu0 %4482
          %4484 = vadd.xlane.f32.xlu0 %v4357
          %v4485 = vpop.xlane.xlu0 %4484
          %4486 = vadd.xlane.f32.xlu0 %v4359
          %v4487 = vpop.xlane.xlu0 %4486
          %4488 = vadd.xlane.f32.xlu0 %v4361
          %v4489 = vpop.xlane.xlu0 %4488
          %4490 = vadd.xlane.f32.xlu0 %v4363
          %v4491 = vpop.xlane.xlu0 %4490
          %4492 = vadd.xlane.f32.xlu0 %v4365
          %v4493 = vpop.xlane.xlu0 %4492
          %4494 = vadd.xlane.f32.xlu0 %v4367
          %v4495 = vpop.xlane.xlu0 %4494
          %4496 = vadd.xlane.f32.xlu0 %v4369
          %v4497 = vpop.xlane.xlu0 %4496
          %4498 = vadd.xlane.f32.xlu0 %v4371
          %v4499 = vpop.xlane.xlu0 %4498
          %4500 = vadd.xlane.f32.xlu0 %v4373
          %v4501 = vpop.xlane.xlu0 %4500
          %4502 = vadd.xlane.f32.xlu0 %v4375
          %v4503 = vpop.xlane.xlu0 %4502
          %4504 = vadd.xlane.f32.xlu0 %v4377
          %v4505 = vpop.xlane.xlu0 %4504
          %4506 = vadd.xlane.f32.xlu0 %v4379
          %v4507 = vpop.xlane.xlu0 %4506
          %4508 = vadd.xlane.f32.xlu0 %v4381
          %v4509 = vpop.xlane.xlu0 %4508
          %4510 = vadd.xlane.f32.xlu0 %v4383
          %v4511 = vpop.xlane.xlu0 %4510
          %4512 = vadd.xlane.f32.xlu0 %v4385
          %v4513 = vpop.xlane.xlu0 %4512
          %4514 = vadd.xlane.f32.xlu0 %v4387
          %v4515 = vpop.xlane.xlu0 %4514
          %4516 = vadd.xlane.f32.xlu0 %v4389
          %v4517 = vpop.xlane.xlu0 %4516
          %4518 = vadd.xlane.f32.xlu0 %v4391
          %v4519 = vpop.xlane.xlu0 %4518
          %4520 = vadd.xlane.f32.xlu0 %v4393
          %v4521 = vpop.xlane.xlu0 %4520
          %4522 = vadd.xlane.f32.xlu0 %v4395
          %v4523 = vpop.xlane.xlu0 %4522
          %4524 = vadd.xlane.f32.xlu0 %v4397
          %v4525 = vpop.xlane.xlu0 %4524
          %4526 = vadd.xlane.f32.xlu0 %v4399
          %v4527 = vpop.xlane.xlu0 %4526
          %4528 = vadd.xlane.f32.xlu0 %v4401
          %v4529 = vpop.xlane.xlu0 %4528
          %4530 = vadd.xlane.f32.xlu0 %v4403
          %v4531 = vpop.xlane.xlu0 %4530
          %4532 = vadd.xlane.f32.xlu0 %v4405
          %v4533 = vpop.xlane.xlu0 %4532
          %4534 = vadd.xlane.f32.xlu0 %v4407
          %v4535 = vpop.xlane.xlu0 %4534
          %4536 = vadd.xlane.f32.xlu0 %v4409
          %v4537 = vpop.xlane.xlu0 %4536
          %4538 = vadd.xlane.f32.xlu0 %v4411
          %v4539 = vpop.xlane.xlu0 %4538
          %4540 = vadd.xlane.f32.xlu0 %v4413
          %v4541 = vpop.xlane.xlu0 %4540
          %4542 = vadd.xlane.f32.xlu0 %v4415
          %v4543 = vpop.xlane.xlu0 %4542
          %4544 = vadd.xlane.f32.xlu0 %v4417
          %v4545 = vpop.xlane.xlu0 %4544
          %4546 = vadd.xlane.f32.xlu0 %v4419
          %v4547 = vpop.xlane.xlu0 %4546
          %4548 = vadd.xlane.f32.xlu0 %v4421
          %v4549 = vpop.xlane.xlu0 %4548
          %4550 = vadd.xlane.f32.xlu0 %v4423
          %v4551 = vpop.xlane.xlu0 %4550
          %4552 = vadd.xlane.f32.xlu0 %v4425
          %v4553 = vpop.xlane.xlu0 %4552
          %4554 = vadd.xlane.f32.xlu0 %v4427
          %v4555 = vpop.xlane.xlu0 %4554
          %4556 = vadd.xlane.f32.xlu0 %v4429
          %v4557 = vpop.xlane.xlu0 %4556
          %4558 = vadd.xlane.f32.xlu0 %v4431
          %v4559 = vpop.xlane.xlu0 %4558
          %4560 = vadd.xlane.f32.xlu0 %v4433
          %v4561 = vpop.xlane.xlu0 %4560
          %4562 = vadd.xlane.f32.xlu0 %v4435
          %v4563 = vpop.xlane.xlu0 %4562
          %4564 = vadd.xlane.f32.xlu0 %v4437
          %v4565 = vpop.xlane.xlu0 %4564
          %4566 = vadd.xlane.f32.xlu0 %v4439
          %v4567 = vpop.xlane.xlu0 %4566
          %4568 = vadd.xlane.f32.xlu0 %v4441
          %v4569 = vpop.xlane.xlu0 %4568
          %4570 = vadd.xlane.f32.xlu0 %v4443
          %v4571 = vpop.xlane.xlu0 %4570
          %4572 = vadd.xlane.f32.xlu0 %v4445
          %v4573 = vpop.xlane.xlu0 %4572
          %4574 = vadd.xlane.f32.xlu0 %v4447
          %v4575 = vpop.xlane.xlu0 %4574
          %4576 = vadd.xlane.f32.xlu0 %v4449
          %v4577 = vpop.xlane.xlu0 %4576
          %4578 = vadd.xlane.f32.xlu0 %v4451
          %v4579 = vpop.xlane.xlu0 %4578
          %4580 = vadd.xlane.f32.xlu0 %v4453
          %v4581 = vpop.xlane.xlu0 %4580
          %4582 = vadd.xlane.f32.xlu0 %v4455
          %v4583 = vpop.xlane.xlu0 %4582
          %4584 = vadd.xlane.f32.xlu0 %v4457
          %v4585 = vpop.xlane.xlu0 %4584
          %4586 = vadd.xlane.f32.xlu0 %v4459
          %v4587 = vpop.xlane.xlu0 %4586
          %4588 = vadd.xlane.f32.xlu0 %v4461
          %v4589 = vpop.xlane.xlu0 %4588
          %4590 = vadd.xlane.f32.xlu0 %v4463
          %v4591 = vpop.xlane.xlu0 %4590
          %4592 = vadd.xlane.f32.xlu0 %v4465
          %v4593 = vpop.xlane.xlu0 %4592
          %4594 = vadd.xlane.f32.xlu0 %v4467
          %v4595 = vpop.xlane.xlu0 %4594
          %4596 = vadd.xlane.f32.xlu0 %v4469
          %v4597 = vpop.xlane.xlu0 %4596
          %4598 = vadd.xlane.f32.xlu0 %v4471
          %v4599 = vpop.xlane.xlu0 %4598
          %v4600 = vrcp.pop %v4473
          %v4601 = vmul.f32 %v4345, %v4600
          %v4602 = vrcp.pop %v4475
          %v4603 = vmul.f32 %v4347, %v4602
          %v4604 = vrcp.pop %v4477
          %v4605 = vmul.f32 %v4349, %v4604
          %v4606 = vrcp.pop %v4479
          %v4607 = vmul.f32 %v4351, %v4606
          %v4608 = vrcp.pop %v4481
          %v4609 = vmul.f32 %v4353, %v4608
          %v4610 = vrcp.pop %v4483
          %v4611 = vmul.f32 %v4355, %v4610
          %v4612 = vrcp.pop %v4485
          %v4613 = vmul.f32 %v4357, %v4612
          %v4614 = vrcp.pop %v4487
          %v4615 = vmul.f32 %v4359, %v4614
          %v4616 = vrcp.pop %v4489
          %v4617 = vmul.f32 %v4361, %v4616
          %v4618 = vrcp.pop %v4491
          %v4619 = vmul.f32 %v4363, %v4618
          %v4620 = vrcp.pop %v4493
          %v4621 = vmul.f32 %v4365, %v4620
          %v4622 = vrcp.pop %v4495
          %v4623 = vmul.f32 %v4367, %v4622
          %v4624 = vrcp.pop %v4497
          %v4625 = vmul.f32 %v4369, %v4624
          %v4626 = vrcp.pop %v4499
          %v4627 = vmul.f32 %v4371, %v4626
          %v4628 = vrcp.pop %v4501
          %v4629 = vmul.f32 %v4373, %v4628
          %v4630 = vrcp.pop %v4503
          %v4631 = vmul.f32 %v4375, %v4630
          %v4632 = vrcp.pop %v4505
          %v4633 = vmul.f32 %v4377, %v4632
          %v4634 = vrcp.pop %v4507
          %v4635 = vmul.f32 %v4379, %v4634
          %v4636 = vrcp.pop %v4509
          %v4637 = vmul.f32 %v4381, %v4636
          %v4638 = vrcp.pop %v4511
          %v4639 = vmul.f32 %v4383, %v4638
          %v4640 = vrcp.pop %v4513
          %v4641 = vmul.f32 %v4385, %v4640
          %v4642 = vrcp.pop %v4515
          %v4643 = vmul.f32 %v4387, %v4642
          %v4644 = vrcp.pop %v4517
          %v4645 = vmul.f32 %v4389, %v4644
          %v4646 = vrcp.pop %v4519
          %v4647 = vmul.f32 %v4391, %v4646
          %v4648 = vrcp.pop %v4521
          %v4649 = vmul.f32 %v4393, %v4648
          %v4650 = vrcp.pop %v4523
          %v4651 = vmul.f32 %v4395, %v4650
          %v4652 = vrcp.pop %v4525
          %v4653 = vmul.f32 %v4397, %v4652
          %v4654 = vrcp.pop %v4527
          %v4655 = vmul.f32 %v4399, %v4654
          %v4656 = vrcp.pop %v4529
          %v4657 = vmul.f32 %v4401, %v4656
          %v4658 = vrcp.pop %v4531
          %v4659 = vmul.f32 %v4403, %v4658
          %v4660 = vrcp.pop %v4533
          %v4661 = vmul.f32 %v4405, %v4660
          %v4662 = vrcp.pop %v4535
          %v4663 = vmul.f32 %v4407, %v4662
          %v4664 = vrcp.pop %v4537
          %v4665 = vmul.f32 %v4409, %v4664
          %v4666 = vrcp.pop %v4539
          %v4667 = vmul.f32 %v4411, %v4666
          %v4668 = vrcp.pop %v4541
          %v4669 = vmul.f32 %v4413, %v4668
          %v4670 = vrcp.pop %v4543
          %v4671 = vmul.f32 %v4415, %v4670
          %v4672 = vrcp.pop %v4545
          %v4673 = vmul.f32 %v4417, %v4672
          %v4674 = vrcp.pop %v4547
          %v4675 = vmul.f32 %v4419, %v4674
          %v4676 = vrcp.pop %v4549
          %v4677 = vmul.f32 %v4421, %v4676
          %v4678 = vrcp.pop %v4551
          %v4679 = vmul.f32 %v4423, %v4678
          %v4680 = vrcp.pop %v4553
          %v4681 = vmul.f32 %v4425, %v4680
          %v4682 = vrcp.pop %v4555
          %v4683 = vmul.f32 %v4427, %v4682
          %v4684 = vrcp.pop %v4557
          %v4685 = vmul.f32 %v4429, %v4684
          %v4686 = vrcp.pop %v4559
          %v4687 = vmul.f32 %v4431, %v4686
          %v4688 = vrcp.pop %v4561
          %v4689 = vmul.f32 %v4433, %v4688
          %v4690 = vrcp.pop %v4563
          %v4691 = vmul.f32 %v4435, %v4690
          %v4692 = vrcp.pop %v4565
          %v4693 = vmul.f32 %v4437, %v4692
          %v4694 = vrcp.pop %v4567
          %v4695 = vmul.f32 %v4439, %v4694
          %v4696 = vrcp.pop %v4569
          %v4697 = vmul.f32 %v4441, %v4696
          %v4698 = vrcp.pop %v4571
          %v4699 = vmul.f32 %v4443, %v4698
          %v4700 = vrcp.pop %v4573
          %v4701 = vmul.f32 %v4445, %v4700
          %v4702 = vrcp.pop %v4575
          %v4703 = vmul.f32 %v4447, %v4702
          %v4704 = vrcp.pop %v4577
          %v4705 = vmul.f32 %v4449, %v4704
          %v4706 = vrcp.pop %v4579
          %v4707 = vmul.f32 %v4451, %v4706
          %v4708 = vrcp.pop %v4581
          %v4709 = vmul.f32 %v4453, %v4708
          %v4710 = vrcp.pop %v4583
          %v4711 = vmul.f32 %v4455, %v4710
          %v4712 = vrcp.pop %v4585
          %v4713 = vmul.f32 %v4457, %v4712
          %v4714 = vrcp.pop %v4587
          %v4715 = vmul.f32 %v4459, %v4714
          %v4716 = vrcp.pop %v4589
          %v4717 = vmul.f32 %v4461, %v4716
          %v4718 = vrcp.pop %v4591
          %v4719 = vmul.f32 %v4463, %v4718
          %v4720 = vrcp.pop %v4593
          %v4721 = vmul.f32 %v4465, %v4720
          %v4722 = vrcp.pop %v4595
          %v4723 = vmul.f32 %v4467, %v4722
          %v4724 = vrcp.pop %v4597
          %v4725 = vmul.f32 %v4469, %v4724
          %v4726 = vrcp.pop %v4599
          %v4727 = vmul.f32 %v4471, %v4726
          %v4728 = vsel %vm4088, 1, 0
          %v4729 = vsel %vm4089, 1, 0
          %v4730 = vsel %vm4090, 1, 0
          %v4731 = vsel %vm4091, 1, 0
          %v4732 = vsel %vm4092, 1, 0
          %v4733 = vsel %vm4093, 1, 0
          %v4734 = vsel %vm4094, 1, 0
          %v4735 = vsel %vm4095, 1, 0
          %v4736 = vsel %vm4096, 1, 0
          %v4737 = vsel %vm4097, 1, 0
          %v4738 = vsel %vm4098, 1, 0
          %v4739 = vsel %vm4099, 1, 0
          %v4740 = vsel %vm4100, 1, 0
          %v4741 = vsel %vm4101, 1, 0
          %v4742 = vsel %vm4102, 1, 0
          %v4743 = vsel %vm4103, 1, 0
          %v4744 = vsel %vm4104, 1, 0
          %v4745 = vsel %vm4105, 1, 0
          %v4746 = vsel %vm4106, 1, 0
          %v4747 = vsel %vm4107, 1, 0
          %v4748 = vsel %vm4108, 1, 0
          %v4749 = vsel %vm4109, 1, 0
          %v4750 = vsel %vm4110, 1, 0
          %v4751 = vsel %vm4111, 1, 0
          %v4752 = vsel %vm4112, 1, 0
          %v4753 = vsel %vm4113, 1, 0
          %v4754 = vsel %vm4114, 1, 0
          %v4755 = vsel %vm4115, 1, 0
          %v4756 = vsel %vm4116, 1, 0
          %v4757 = vsel %vm4117, 1, 0
          %v4758 = vsel %vm4118, 1, 0
          %v4759 = vsel %vm4119, 1, 0
          %v4760 = vsel %vm4120, 1, 0
          %v4761 = vsel %vm4121, 1, 0
          %v4762 = vsel %vm4122, 1, 0
          %v4763 = vsel %vm4123, 1, 0
          %v4764 = vsel %vm4124, 1, 0
          %v4765 = vsel %vm4125, 1, 0
          %v4766 = vsel %vm4126, 1, 0
          %v4767 = vsel %vm4127, 1, 0
          %v4768 = vsel %vm4128, 1, 0
          %v4769 = vsel %vm4129, 1, 0
          %v4770 = vsel %vm4130, 1, 0
          %v4771 = vsel %vm4131, 1, 0
          %v4772 = vsel %vm4132, 1, 0
          %v4773 = vsel %vm4133, 1, 0
          %v4774 = vsel %vm4134, 1, 0
          %v4775 = vsel %vm4135, 1, 0
          %v4776 = vsel %vm4136, 1, 0
          %v4777 = vsel %vm4137, 1, 0
          %v4778 = vsel %vm4138, 1, 0
          %v4779 = vsel %vm4139, 1, 0
          %v4780 = vsel %vm4140, 1, 0
          %v4781 = vsel %vm4141, 1, 0
          %v4782 = vsel %vm4142, 1, 0
          %v4783 = vsel %vm4143, 1, 0
          %v4784 = vsel %vm4144, 1, 0
          %v4785 = vsel %vm4145, 1, 0
          %v4786 = vsel %vm4146, 1, 0
          %v4787 = vsel %vm4147, 1, 0
          %v4788 = vsel %vm4148, 1, 0
          %v4789 = vsel %vm4149, 1, 0
          %v4790 = vsel %vm4150, 1, 0
          %v4791 = vsel %vm4151, 1, 0
          %vm4792 = vcmp.eq.s32.totalorder %v4728, 1
          %vm4793 = vcmp.eq.s32.totalorder %v4729, 1
          %vm4794 = vcmp.eq.s32.totalorder %v4730, 1
          %vm4795 = vcmp.eq.s32.totalorder %v4731, 1
          %vm4796 = vcmp.eq.s32.totalorder %v4732, 1
          %vm4797 = vcmp.eq.s32.totalorder %v4733, 1
          %vm4798 = vcmp.eq.s32.totalorder %v4734, 1
          %vm4799 = vcmp.eq.s32.totalorder %v4735, 1
          %vm4800 = vcmp.eq.s32.totalorder %v4736, 1
          %vm4801 = vcmp.eq.s32.totalorder %v4737, 1
          %vm4802 = vcmp.eq.s32.totalorder %v4738, 1
          %vm4803 = vcmp.eq.s32.totalorder %v4739, 1
          %vm4804 = vcmp.eq.s32.totalorder %v4740, 1
          %vm4805 = vcmp.eq.s32.totalorder %v4741, 1
          %vm4806 = vcmp.eq.s32.totalorder %v4742, 1
          %vm4807 = vcmp.eq.s32.totalorder %v4743, 1
          %vm4808 = vcmp.eq.s32.totalorder %v4744, 1
          %vm4809 = vcmp.eq.s32.totalorder %v4745, 1
          %vm4810 = vcmp.eq.s32.totalorder %v4746, 1
          %vm4811 = vcmp.eq.s32.totalorder %v4747, 1
          %vm4812 = vcmp.eq.s32.totalorder %v4748, 1
          %vm4813 = vcmp.eq.s32.totalorder %v4749, 1
          %vm4814 = vcmp.eq.s32.totalorder %v4750, 1
          %vm4815 = vcmp.eq.s32.totalorder %v4751, 1
          %vm4816 = vcmp.eq.s32.totalorder %v4752, 1
          %vm4817 = vcmp.eq.s32.totalorder %v4753, 1
          %vm4818 = vcmp.eq.s32.totalorder %v4754, 1
          %vm4819 = vcmp.eq.s32.totalorder %v4755, 1
          %vm4820 = vcmp.eq.s32.totalorder %v4756, 1
          %vm4821 = vcmp.eq.s32.totalorder %v4757, 1
          %vm4822 = vcmp.eq.s32.totalorder %v4758, 1
          %vm4823 = vcmp.eq.s32.totalorder %v4759, 1
          %vm4824 = vcmp.eq.s32.totalorder %v4760, 1
          %vm4825 = vcmp.eq.s32.totalorder %v4761, 1
          %vm4826 = vcmp.eq.s32.totalorder %v4762, 1
          %vm4827 = vcmp.eq.s32.totalorder %v4763, 1
          %vm4828 = vcmp.eq.s32.totalorder %v4764, 1
          %vm4829 = vcmp.eq.s32.totalorder %v4765, 1
          %vm4830 = vcmp.eq.s32.totalorder %v4766, 1
          %vm4831 = vcmp.eq.s32.totalorder %v4767, 1
          %vm4832 = vcmp.eq.s32.totalorder %v4768, 1
          %vm4833 = vcmp.eq.s32.totalorder %v4769, 1
          %vm4834 = vcmp.eq.s32.totalorder %v4770, 1
          %vm4835 = vcmp.eq.s32.totalorder %v4771, 1
          %vm4836 = vcmp.eq.s32.totalorder %v4772, 1
          %vm4837 = vcmp.eq.s32.totalorder %v4773, 1
          %vm4838 = vcmp.eq.s32.totalorder %v4774, 1
          %vm4839 = vcmp.eq.s32.totalorder %v4775, 1
          %vm4840 = vcmp.eq.s32.totalorder %v4776, 1
          %vm4841 = vcmp.eq.s32.totalorder %v4777, 1
          %vm4842 = vcmp.eq.s32.totalorder %v4778, 1
          %vm4843 = vcmp.eq.s32.totalorder %v4779, 1
          %vm4844 = vcmp.eq.s32.totalorder %v4780, 1
          %vm4845 = vcmp.eq.s32.totalorder %v4781, 1
          %vm4846 = vcmp.eq.s32.totalorder %v4782, 1
          %vm4847 = vcmp.eq.s32.totalorder %v4783, 1
          %vm4848 = vcmp.eq.s32.totalorder %v4784, 1
          %vm4849 = vcmp.eq.s32.totalorder %v4785, 1
          %vm4850 = vcmp.eq.s32.totalorder %v4786, 1
          %vm4851 = vcmp.eq.s32.totalorder %v4787, 1
          %vm4852 = vcmp.eq.s32.totalorder %v4788, 1
          %vm4853 = vcmp.eq.s32.totalorder %v4789, 1
          %vm4854 = vcmp.eq.s32.totalorder %v4790, 1
          %vm4855 = vcmp.eq.s32.totalorder %v4791, 1
          %v4856 = vsel %vm4792, %v4601, 0.0
          %v4857 = vsel %vm4793, %v4603, 0.0
          %v4858 = vsel %vm4794, %v4605, 0.0
          %v4859 = vsel %vm4795, %v4607, 0.0
          %v4860 = vsel %vm4796, %v4609, 0.0
          %v4861 = vsel %vm4797, %v4611, 0.0
          %v4862 = vsel %vm4798, %v4613, 0.0
          %v4863 = vsel %vm4799, %v4615, 0.0
          %v4864 = vsel %vm4800, %v4617, 0.0
          %v4865 = vsel %vm4801, %v4619, 0.0
          %v4866 = vsel %vm4802, %v4621, 0.0
          %v4867 = vsel %vm4803, %v4623, 0.0
          %v4868 = vsel %vm4804, %v4625, 0.0
          %v4869 = vsel %vm4805, %v4627, 0.0
          %v4870 = vsel %vm4806, %v4629, 0.0
          %v4871 = vsel %vm4807, %v4631, 0.0
          %v4872 = vsel %vm4808, %v4633, 0.0
          %v4873 = vsel %vm4809, %v4635, 0.0
          %v4874 = vsel %vm4810, %v4637, 0.0
          %v4875 = vsel %vm4811, %v4639, 0.0
          %v4876 = vsel %vm4812, %v4641, 0.0
          %v4877 = vsel %vm4813, %v4643, 0.0
          %v4878 = vsel %vm4814, %v4645, 0.0
          %v4879 = vsel %vm4815, %v4647, 0.0
          %v4880 = vsel %vm4816, %v4649, 0.0
          %v4881 = vsel %vm4817, %v4651, 0.0
          %v4882 = vsel %vm4818, %v4653, 0.0
          %v4883 = vsel %vm4819, %v4655, 0.0
          %v4884 = vsel %vm4820, %v4657, 0.0
          %v4885 = vsel %vm4821, %v4659, 0.0
          %v4886 = vsel %vm4822, %v4661, 0.0
          %v4887 = vsel %vm4823, %v4663, 0.0
          %v4888 = vsel %vm4824, %v4665, 0.0
          %v4889 = vsel %vm4825, %v4667, 0.0
          %v4890 = vsel %vm4826, %v4669, 0.0
          %v4891 = vsel %vm4827, %v4671, 0.0
          %v4892 = vsel %vm4828, %v4673, 0.0
          %v4893 = vsel %vm4829, %v4675, 0.0
          %v4894 = vsel %vm4830, %v4677, 0.0
          %v4895 = vsel %vm4831, %v4679, 0.0
          %v4896 = vsel %vm4832, %v4681, 0.0
          %v4897 = vsel %vm4833, %v4683, 0.0
          %v4898 = vsel %vm4834, %v4685, 0.0
          %v4899 = vsel %vm4835, %v4687, 0.0
          %v4900 = vsel %vm4836, %v4689, 0.0
          %v4901 = vsel %vm4837, %v4691, 0.0
          %v4902 = vsel %vm4838, %v4693, 0.0
          %v4903 = vsel %vm4839, %v4695, 0.0
          %v4904 = vsel %vm4840, %v4697, 0.0
          %v4905 = vsel %vm4841, %v4699, 0.0
          %v4906 = vsel %vm4842, %v4701, 0.0
          %v4907 = vsel %vm4843, %v4703, 0.0
          %v4908 = vsel %vm4844, %v4705, 0.0
          %v4909 = vsel %vm4845, %v4707, 0.0
          %v4910 = vsel %vm4846, %v4709, 0.0
          %v4911 = vsel %vm4847, %v4711, 0.0
          %v4912 = vsel %vm4848, %v4713, 0.0
          %v4913 = vsel %vm4849, %v4715, 0.0
          %v4914 = vsel %vm4850, %v4717, 0.0
          %v4915 = vsel %vm4851, %v4719, 0.0
          %v4916 = vsel %vm4852, %v4721, 0.0
          %v4917 = vsel %vm4853, %v4723, 0.0
          %v4918 = vsel %vm4854, %v4725, 0.0
          %v4919 = vsel %vm4855, %v4727, 0.0
          %4920 = vmax.xlane.f32.xlu0 %v3772
          %v4921 = vpop.xlane.xlu0 %4920
          %4922 = vmax.xlane.f32.xlu0 %v3776
          %v4923 = vpop.xlane.xlu0 %4922
          %4924 = vmax.xlane.f32.xlu0 %v3782
          %v4925 = vpop.xlane.xlu0 %4924
          %4926 = vmax.xlane.f32.xlu0 %v3786
          %v4927 = vpop.xlane.xlu0 %4926
          %4928 = vmax.xlane.f32.xlu0 %v3792
          %v4929 = vpop.xlane.xlu0 %4928
          %4930 = vmax.xlane.f32.xlu0 %v3796
          %v4931 = vpop.xlane.xlu0 %4930
          %4932 = vmax.xlane.f32.xlu0 %v3802
          %v4933 = vpop.xlane.xlu0 %4932
          %4934 = vmax.xlane.f32.xlu0 %v3806
          %v4935 = vpop.xlane.xlu0 %4934
          %4936 = vmax.xlane.f32.xlu0 %v3812
          %v4937 = vpop.xlane.xlu0 %4936
          %4938 = vmax.xlane.f32.xlu0 %v3816
          %v4939 = vpop.xlane.xlu0 %4938
          %4940 = vmax.xlane.f32.xlu0 %v3822
          %v4941 = vpop.xlane.xlu0 %4940
          %4942 = vmax.xlane.f32.xlu0 %v3826
          %v4943 = vpop.xlane.xlu0 %4942
          %4944 = vmax.xlane.f32.xlu0 %v3832
          %v4945 = vpop.xlane.xlu0 %4944
          %4946 = vmax.xlane.f32.xlu0 %v3836
          %v4947 = vpop.xlane.xlu0 %4946
          %4948 = vmax.xlane.f32.xlu0 %v3842
          %v4949 = vpop.xlane.xlu0 %4948
          %4950 = vmax.xlane.f32.xlu0 %v3846
          %v4951 = vpop.xlane.xlu0 %4950
          %4952 = vmax.xlane.f32.xlu0 %v3852
          %v4953 = vpop.xlane.xlu0 %4952
          %4954 = vmax.xlane.f32.xlu0 %v3856
          %v4955 = vpop.xlane.xlu0 %4954
          %4956 = vmax.xlane.f32.xlu0 %v3862
          %v4957 = vpop.xlane.xlu0 %4956
          %4958 = vmax.xlane.f32.xlu0 %v3866
          %v4959 = vpop.xlane.xlu0 %4958
          %4960 = vmax.xlane.f32.xlu0 %v3872
          %v4961 = vpop.xlane.xlu0 %4960
          %4962 = vmax.xlane.f32.xlu0 %v3876
          %v4963 = vpop.xlane.xlu0 %4962
          %4964 = vmax.xlane.f32.xlu0 %v3882
          %v4965 = vpop.xlane.xlu0 %4964
          %4966 = vmax.xlane.f32.xlu0 %v3886
          %v4967 = vpop.xlane.xlu0 %4966
          %4968 = vmax.xlane.f32.xlu0 %v3892
          %v4969 = vpop.xlane.xlu0 %4968
          %4970 = vmax.xlane.f32.xlu0 %v3896
          %v4971 = vpop.xlane.xlu0 %4970
          %4972 = vmax.xlane.f32.xlu0 %v3902
          %v4973 = vpop.xlane.xlu0 %4972
          %4974 = vmax.xlane.f32.xlu0 %v3906
          %v4975 = vpop.xlane.xlu0 %4974
          %4976 = vmax.xlane.f32.xlu0 %v3912
          %v4977 = vpop.xlane.xlu0 %4976
          %4978 = vmax.xlane.f32.xlu0 %v3916
          %v4979 = vpop.xlane.xlu0 %4978
          %4980 = vmax.xlane.f32.xlu0 %v3922
          %v4981 = vpop.xlane.xlu0 %4980
          %4982 = vmax.xlane.f32.xlu0 %v3926
          %v4983 = vpop.xlane.xlu0 %4982
          %4984 = vmax.xlane.f32.xlu0 %v3932
          %v4985 = vpop.xlane.xlu0 %4984
          %4986 = vmax.xlane.f32.xlu0 %v3936
          %v4987 = vpop.xlane.xlu0 %4986
          %4988 = vmax.xlane.f32.xlu0 %v3942
          %v4989 = vpop.xlane.xlu0 %4988
          %4990 = vmax.xlane.f32.xlu0 %v3946
          %v4991 = vpop.xlane.xlu0 %4990
          %4992 = vmax.xlane.f32.xlu0 %v3952
          %v4993 = vpop.xlane.xlu0 %4992
          %4994 = vmax.xlane.f32.xlu0 %v3956
          %v4995 = vpop.xlane.xlu0 %4994
          %4996 = vmax.xlane.f32.xlu0 %v3962
          %v4997 = vpop.xlane.xlu0 %4996
          %4998 = vmax.xlane.f32.xlu0 %v3966
          %v4999 = vpop.xlane.xlu0 %4998
          %5000 = vmax.xlane.f32.xlu0 %v3972
          %v5001 = vpop.xlane.xlu0 %5000
          %5002 = vmax.xlane.f32.xlu0 %v3976
          %v5003 = vpop.xlane.xlu0 %5002
          %5004 = vmax.xlane.f32.xlu0 %v3982
          %v5005 = vpop.xlane.xlu0 %5004
          %5006 = vmax.xlane.f32.xlu0 %v3986
          %v5007 = vpop.xlane.xlu0 %5006
          %5008 = vmax.xlane.f32.xlu0 %v3992
          %v5009 = vpop.xlane.xlu0 %5008
          %5010 = vmax.xlane.f32.xlu0 %v3996
          %v5011 = vpop.xlane.xlu0 %5010
          %5012 = vmax.xlane.f32.xlu0 %v4002
          %v5013 = vpop.xlane.xlu0 %5012
          %5014 = vmax.xlane.f32.xlu0 %v4006
          %v5015 = vpop.xlane.xlu0 %5014
          %5016 = vmax.xlane.f32.xlu0 %v4012
          %v5017 = vpop.xlane.xlu0 %5016
          %5018 = vmax.xlane.f32.xlu0 %v4016
          %v5019 = vpop.xlane.xlu0 %5018
          %5020 = vmax.xlane.f32.xlu0 %v4022
          %v5021 = vpop.xlane.xlu0 %5020
          %5022 = vmax.xlane.f32.xlu0 %v4026
          %v5023 = vpop.xlane.xlu0 %5022
          %5024 = vmax.xlane.f32.xlu0 %v4032
          %v5025 = vpop.xlane.xlu0 %5024
          %5026 = vmax.xlane.f32.xlu0 %v4036
          %v5027 = vpop.xlane.xlu0 %5026
          %5028 = vmax.xlane.f32.xlu0 %v4042
          %v5029 = vpop.xlane.xlu0 %5028
          %5030 = vmax.xlane.f32.xlu0 %v4046
          %v5031 = vpop.xlane.xlu0 %5030
          %5032 = vmax.xlane.f32.xlu0 %v4052
          %v5033 = vpop.xlane.xlu0 %5032
          %5034 = vmax.xlane.f32.xlu0 %v4056
          %v5035 = vpop.xlane.xlu0 %5034
          %5036 = vmax.xlane.f32.xlu0 %v4062
          %v5037 = vpop.xlane.xlu0 %5036
          %5038 = vmax.xlane.f32.xlu0 %v4066
          %v5039 = vpop.xlane.xlu0 %5038
          %5040 = vmax.xlane.f32.xlu0 %v4072
          %v5041 = vpop.xlane.xlu0 %5040
          %5042 = vmax.xlane.f32.xlu0 %v4076
          %v5043 = vpop.xlane.xlu0 %5042
          %5044 = vmax.xlane.f32.xlu0 %v4082
          %v5045 = vpop.xlane.xlu0 %5044
          %5046 = vmax.xlane.f32.xlu0 %v4086
          %v5047 = vpop.xlane.xlu0 %5046
          %v5048 = vsub.f32 %v3772, %v4921
          %v5049 = vsub.f32 %v3776, %v4923
          %v5050 = vsub.f32 %v3782, %v4925
          %v5051 = vsub.f32 %v3786, %v4927
          %v5052 = vsub.f32 %v3792, %v4929
          %v5053 = vsub.f32 %v3796, %v4931
          %v5054 = vsub.f32 %v3802, %v4933
          %v5055 = vsub.f32 %v3806, %v4935
          %v5056 = vsub.f32 %v3812, %v4937
          %v5057 = vsub.f32 %v3816, %v4939
          %v5058 = vsub.f32 %v3822, %v4941
          %v5059 = vsub.f32 %v3826, %v4943
          %v5060 = vsub.f32 %v3832, %v4945
          %v5061 = vsub.f32 %v3836, %v4947
          %v5062 = vsub.f32 %v3842, %v4949
          %v5063 = vsub.f32 %v3846, %v4951
          %v5064 = vsub.f32 %v3852, %v4953
          %v5065 = vsub.f32 %v3856, %v4955
          %v5066 = vsub.f32 %v3862, %v4957
          %v5067 = vsub.f32 %v3866, %v4959
          %v5068 = vsub.f32 %v3872, %v4961
          %v5069 = vsub.f32 %v3876, %v4963
          %v5070 = vsub.f32 %v3882, %v4965
          %v5071 = vsub.f32 %v3886, %v4967
          %v5072 = vsub.f32 %v3892, %v4969
          %v5073 = vsub.f32 %v3896, %v4971
          %v5074 = vsub.f32 %v3902, %v4973
          %v5075 = vsub.f32 %v3906, %v4975
          %v5076 = vsub.f32 %v3912, %v4977
          %v5077 = vsub.f32 %v3916, %v4979
          %v5078 = vsub.f32 %v3922, %v4981
          %v5079 = vsub.f32 %v3926, %v4983
          %v5080 = vsub.f32 %v3932, %v4985
          %v5081 = vsub.f32 %v3936, %v4987
          %v5082 = vsub.f32 %v3942, %v4989
          %v5083 = vsub.f32 %v3946, %v4991
          %v5084 = vsub.f32 %v3952, %v4993
          %v5085 = vsub.f32 %v3956, %v4995
          %v5086 = vsub.f32 %v3962, %v4997
          %v5087 = vsub.f32 %v3966, %v4999
          %v5088 = vsub.f32 %v3972, %v5001
          %v5089 = vsub.f32 %v3976, %v5003
          %v5090 = vsub.f32 %v3982, %v5005
          %v5091 = vsub.f32 %v3986, %v5007
          %v5092 = vsub.f32 %v3992, %v5009
          %v5093 = vsub.f32 %v3996, %v5011
          %v5094 = vsub.f32 %v4002, %v5013
          %v5095 = vsub.f32 %v4006, %v5015
          %v5096 = vsub.f32 %v4012, %v5017
          %v5097 = vsub.f32 %v4016, %v5019
          %v5098 = vsub.f32 %v4022, %v5021
          %v5099 = vsub.f32 %v4026, %v5023
          %v5100 = vsub.f32 %v4032, %v5025
          %v5101 = vsub.f32 %v4036, %v5027
          %v5102 = vsub.f32 %v4042, %v5029
          %v5103 = vsub.f32 %v4046, %v5031
          %v5104 = vsub.f32 %v4052, %v5033
          %v5105 = vsub.f32 %v4056, %v5035
          %v5106 = vsub.f32 %v4062, %v5037
          %v5107 = vsub.f32 %v4066, %v5039
          %v5108 = vsub.f32 %v4072, %v5041
          %v5109 = vsub.f32 %v4076, %v5043
          %v5110 = vsub.f32 %v4082, %v5045
          %v5111 = vsub.f32 %v4086, %v5047
          %v5112 = vmul.f32 %v5048, 1.442695
          %v5113 = vpow.pop %v5112
          %v5114 = vmul.f32 %v5049, 1.442695
          %v5115 = vpow.pop %v5114
          %v5116 = vmul.f32 %v5050, 1.442695
          %v5117 = vpow.pop %v5116
          %v5118 = vmul.f32 %v5051, 1.442695
          %v5119 = vpow.pop %v5118
          %v5120 = vmul.f32 %v5052, 1.442695
          %v5121 = vpow.pop %v5120
          %v5122 = vmul.f32 %v5053, 1.442695
          %v5123 = vpow.pop %v5122
          %v5124 = vmul.f32 %v5054, 1.442695
          %v5125 = vpow.pop %v5124
          %v5126 = vmul.f32 %v5055, 1.442695
          %v5127 = vpow.pop %v5126
          %v5128 = vmul.f32 %v5056, 1.442695
          %v5129 = vpow.pop %v5128
          %v5130 = vmul.f32 %v5057, 1.442695
          %v5131 = vpow.pop %v5130
          %v5132 = vmul.f32 %v5058, 1.442695
          %v5133 = vpow.pop %v5132
          %v5134 = vmul.f32 %v5059, 1.442695
          %v5135 = vpow.pop %v5134
          %v5136 = vmul.f32 %v5060, 1.442695
          %v5137 = vpow.pop %v5136
          %v5138 = vmul.f32 %v5061, 1.442695
          %v5139 = vpow.pop %v5138
          %v5140 = vmul.f32 %v5062, 1.442695
          %v5141 = vpow.pop %v5140
          %v5142 = vmul.f32 %v5063, 1.442695
          %v5143 = vpow.pop %v5142
          %v5144 = vmul.f32 %v5064, 1.442695
          %v5145 = vpow.pop %v5144
          %v5146 = vmul.f32 %v5065, 1.442695
          %v5147 = vpow.pop %v5146
          %v5148 = vmul.f32 %v5066, 1.442695
          %v5149 = vpow.pop %v5148
          %v5150 = vmul.f32 %v5067, 1.442695
          %v5151 = vpow.pop %v5150
          %v5152 = vmul.f32 %v5068, 1.442695
          %v5153 = vpow.pop %v5152
          %v5154 = vmul.f32 %v5069, 1.442695
          %v5155 = vpow.pop %v5154
          %v5156 = vmul.f32 %v5070, 1.442695
          %v5157 = vpow.pop %v5156
          %v5158 = vmul.f32 %v5071, 1.442695
          %v5159 = vpow.pop %v5158
          %v5160 = vmul.f32 %v5072, 1.442695
          %v5161 = vpow.pop %v5160
          %v5162 = vmul.f32 %v5073, 1.442695
          %v5163 = vpow.pop %v5162
          %v5164 = vmul.f32 %v5074, 1.442695
          %v5165 = vpow.pop %v5164
          %v5166 = vmul.f32 %v5075, 1.442695
          %v5167 = vpow.pop %v5166
          %v5168 = vmul.f32 %v5076, 1.442695
          %v5169 = vpow.pop %v5168
          %v5170 = vmul.f32 %v5077, 1.442695
          %v5171 = vpow.pop %v5170
          %v5172 = vmul.f32 %v5078, 1.442695
          %v5173 = vpow.pop %v5172
          %v5174 = vmul.f32 %v5079, 1.442695
          %v5175 = vpow.pop %v5174
          %v5176 = vmul.f32 %v5080, 1.442695
          %v5177 = vpow.pop %v5176
          %v5178 = vmul.f32 %v5081, 1.442695
          %v5179 = vpow.pop %v5178
          %v5180 = vmul.f32 %v5082, 1.442695
          %v5181 = vpow.pop %v5180
          %v5182 = vmul.f32 %v5083, 1.442695
          %v5183 = vpow.pop %v5182
          %v5184 = vmul.f32 %v5084, 1.442695
          %v5185 = vpow.pop %v5184
          %v5186 = vmul.f32 %v5085, 1.442695
          %v5187 = vpow.pop %v5186
          %v5188 = vmul.f32 %v5086, 1.442695
          %v5189 = vpow.pop %v5188
          %v5190 = vmul.f32 %v5087, 1.442695
          %v5191 = vpow.pop %v5190
          %v5192 = vmul.f32 %v5088, 1.442695
          %v5193 = vpow.pop %v5192
          %v5194 = vmul.f32 %v5089, 1.442695
          %v5195 = vpow.pop %v5194
          %v5196 = vmul.f32 %v5090, 1.442695
          %v5197 = vpow.pop %v5196
          %v5198 = vmul.f32 %v5091, 1.442695
          %v5199 = vpow.pop %v5198
          %v5200 = vmul.f32 %v5092, 1.442695
          %v5201 = vpow.pop %v5200
          %v5202 = vmul.f32 %v5093, 1.442695
          %v5203 = vpow.pop %v5202
          %v5204 = vmul.f32 %v5094, 1.442695
          %v5205 = vpow.pop %v5204
          %v5206 = vmul.f32 %v5095, 1.442695
          %v5207 = vpow.pop %v5206
          %v5208 = vmul.f32 %v5096, 1.442695
          %v5209 = vpow.pop %v5208
          %v5210 = vmul.f32 %v5097, 1.442695
          %v5211 = vpow.pop %v5210
          %v5212 = vmul.f32 %v5098, 1.442695
          %v5213 = vpow.pop %v5212
          %v5214 = vmul.f32 %v5099, 1.442695
          %v5215 = vpow.pop %v5214
          %v5216 = vmul.f32 %v5100, 1.442695
          %v5217 = vpow.pop %v5216
          %v5218 = vmul.f32 %v5101, 1.442695
          %v5219 = vpow.pop %v5218
          %v5220 = vmul.f32 %v5102, 1.442695
          %v5221 = vpow.pop %v5220
          %v5222 = vmul.f32 %v5103, 1.442695
          %v5223 = vpow.pop %v5222
          %v5224 = vmul.f32 %v5104, 1.442695
          %v5225 = vpow.pop %v5224
          %v5226 = vmul.f32 %v5105, 1.442695
          %v5227 = vpow.pop %v5226
          %v5228 = vmul.f32 %v5106, 1.442695
          %v5229 = vpow.pop %v5228
          %v5230 = vmul.f32 %v5107, 1.442695
          %v5231 = vpow.pop %v5230
          %v5232 = vmul.f32 %v5108, 1.442695
          %v5233 = vpow.pop %v5232
          %v5234 = vmul.f32 %v5109, 1.442695
          %v5235 = vpow.pop %v5234
          %v5236 = vmul.f32 %v5110, 1.442695
          %v5237 = vpow.pop %v5236
          %v5238 = vmul.f32 %v5111, 1.442695
          %v5239 = vpow.pop %v5238
          %5240 = vadd.xlane.f32.xlu0 %v5113
          %v5241 = vpop.xlane.xlu0 %5240
          %5242 = vadd.xlane.f32.xlu0 %v5115
          %v5243 = vpop.xlane.xlu0 %5242
          %5244 = vadd.xlane.f32.xlu0 %v5117
          %v5245 = vpop.xlane.xlu0 %5244
          %5246 = vadd.xlane.f32.xlu0 %v5119
          %v5247 = vpop.xlane.xlu0 %5246
          %5248 = vadd.xlane.f32.xlu0 %v5121
          %v5249 = vpop.xlane.xlu0 %5248
          %5250 = vadd.xlane.f32.xlu0 %v5123
          %v5251 = vpop.xlane.xlu0 %5250
          %5252 = vadd.xlane.f32.xlu0 %v5125
          %v5253 = vpop.xlane.xlu0 %5252
          %5254 = vadd.xlane.f32.xlu0 %v5127
          %v5255 = vpop.xlane.xlu0 %5254
          %5256 = vadd.xlane.f32.xlu0 %v5129
          %v5257 = vpop.xlane.xlu0 %5256
          %5258 = vadd.xlane.f32.xlu0 %v5131
          %v5259 = vpop.xlane.xlu0 %5258
          %5260 = vadd.xlane.f32.xlu0 %v5133
          %v5261 = vpop.xlane.xlu0 %5260
          %5262 = vadd.xlane.f32.xlu0 %v5135
          %v5263 = vpop.xlane.xlu0 %5262
          %5264 = vadd.xlane.f32.xlu0 %v5137
          %v5265 = vpop.xlane.xlu0 %5264
          %5266 = vadd.xlane.f32.xlu0 %v5139
          %v5267 = vpop.xlane.xlu0 %5266
          %5268 = vadd.xlane.f32.xlu0 %v5141
          %v5269 = vpop.xlane.xlu0 %5268
          %5270 = vadd.xlane.f32.xlu0 %v5143
          %v5271 = vpop.xlane.xlu0 %5270
          %5272 = vadd.xlane.f32.xlu0 %v5145
          %v5273 = vpop.xlane.xlu0 %5272
          %5274 = vadd.xlane.f32.xlu0 %v5147
          %v5275 = vpop.xlane.xlu0 %5274
          %5276 = vadd.xlane.f32.xlu0 %v5149
          %v5277 = vpop.xlane.xlu0 %5276
          %5278 = vadd.xlane.f32.xlu0 %v5151
          %v5279 = vpop.xlane.xlu0 %5278
          %5280 = vadd.xlane.f32.xlu0 %v5153
          %v5281 = vpop.xlane.xlu0 %5280
          %5282 = vadd.xlane.f32.xlu0 %v5155
          %v5283 = vpop.xlane.xlu0 %5282
          %5284 = vadd.xlane.f32.xlu0 %v5157
          %v5285 = vpop.xlane.xlu0 %5284
          %5286 = vadd.xlane.f32.xlu0 %v5159
          %v5287 = vpop.xlane.xlu0 %5286
          %5288 = vadd.xlane.f32.xlu0 %v5161
          %v5289 = vpop.xlane.xlu0 %5288
          %5290 = vadd.xlane.f32.xlu0 %v5163
          %v5291 = vpop.xlane.xlu0 %5290
          %5292 = vadd.xlane.f32.xlu0 %v5165
          %v5293 = vpop.xlane.xlu0 %5292
          %5294 = vadd.xlane.f32.xlu0 %v5167
          %v5295 = vpop.xlane.xlu0 %5294
          %5296 = vadd.xlane.f32.xlu0 %v5169
          %v5297 = vpop.xlane.xlu0 %5296
          %5298 = vadd.xlane.f32.xlu0 %v5171
          %v5299 = vpop.xlane.xlu0 %5298
          %5300 = vadd.xlane.f32.xlu0 %v5173
          %v5301 = vpop.xlane.xlu0 %5300
          %5302 = vadd.xlane.f32.xlu0 %v5175
          %v5303 = vpop.xlane.xlu0 %5302
          %5304 = vadd.xlane.f32.xlu0 %v5177
          %v5305 = vpop.xlane.xlu0 %5304
          %5306 = vadd.xlane.f32.xlu0 %v5179
          %v5307 = vpop.xlane.xlu0 %5306
          %5308 = vadd.xlane.f32.xlu0 %v5181
          %v5309 = vpop.xlane.xlu0 %5308
          %5310 = vadd.xlane.f32.xlu0 %v5183
          %v5311 = vpop.xlane.xlu0 %5310
          %5312 = vadd.xlane.f32.xlu0 %v5185
          %v5313 = vpop.xlane.xlu0 %5312
          %5314 = vadd.xlane.f32.xlu0 %v5187
          %v5315 = vpop.xlane.xlu0 %5314
          %5316 = vadd.xlane.f32.xlu0 %v5189
          %v5317 = vpop.xlane.xlu0 %5316
          %5318 = vadd.xlane.f32.xlu0 %v5191
          %v5319 = vpop.xlane.xlu0 %5318
          %5320 = vadd.xlane.f32.xlu0 %v5193
          %v5321 = vpop.xlane.xlu0 %5320
          %5322 = vadd.xlane.f32.xlu0 %v5195
          %v5323 = vpop.xlane.xlu0 %5322
          %5324 = vadd.xlane.f32.xlu0 %v5197
          %v5325 = vpop.xlane.xlu0 %5324
          %5326 = vadd.xlane.f32.xlu0 %v5199
          %v5327 = vpop.xlane.xlu0 %5326
          %5328 = vadd.xlane.f32.xlu0 %v5201
          %v5329 = vpop.xlane.xlu0 %5328
          %5330 = vadd.xlane.f32.xlu0 %v5203
          %v5331 = vpop.xlane.xlu0 %5330
          %5332 = vadd.xlane.f32.xlu0 %v5205
          %v5333 = vpop.xlane.xlu0 %5332
          %5334 = vadd.xlane.f32.xlu0 %v5207
          %v5335 = vpop.xlane.xlu0 %5334
          %5336 = vadd.xlane.f32.xlu0 %v5209
          %v5337 = vpop.xlane.xlu0 %5336
          %5338 = vadd.xlane.f32.xlu0 %v5211
          %v5339 = vpop.xlane.xlu0 %5338
          %5340 = vadd.xlane.f32.xlu0 %v5213
          %v5341 = vpop.xlane.xlu0 %5340
          %5342 = vadd.xlane.f32.xlu0 %v5215
          %v5343 = vpop.xlane.xlu0 %5342
          %5344 = vadd.xlane.f32.xlu0 %v5217
          %v5345 = vpop.xlane.xlu0 %5344
          %5346 = vadd.xlane.f32.xlu0 %v5219
          %v5347 = vpop.xlane.xlu0 %5346
          %5348 = vadd.xlane.f32.xlu0 %v5221
          %v5349 = vpop.xlane.xlu0 %5348
          %5350 = vadd.xlane.f32.xlu0 %v5223
          %v5351 = vpop.xlane.xlu0 %5350
          %5352 = vadd.xlane.f32.xlu0 %v5225
          %v5353 = vpop.xlane.xlu0 %5352
          %5354 = vadd.xlane.f32.xlu0 %v5227
          %v5355 = vpop.xlane.xlu0 %5354
          %5356 = vadd.xlane.f32.xlu0 %v5229
          %v5357 = vpop.xlane.xlu0 %5356
          %5358 = vadd.xlane.f32.xlu0 %v5231
          %v5359 = vpop.xlane.xlu0 %5358
          %5360 = vadd.xlane.f32.xlu0 %v5233
          %v5361 = vpop.xlane.xlu0 %5360
          %5362 = vadd.xlane.f32.xlu0 %v5235
          %v5363 = vpop.xlane.xlu0 %5362
          %5364 = vadd.xlane.f32.xlu0 %v5237
          %v5365 = vpop.xlane.xlu0 %5364
          %5366 = vadd.xlane.f32.xlu0 %v5239
          %v5367 = vpop.xlane.xlu0 %5366
          %v5368 = vrcp.pop %v5241
          %v5369 = vmul.f32 %v5113, %v5368
          %v5370 = vrcp.pop %v5243
          %v5371 = vmul.f32 %v5115, %v5370
          %v5372 = vrcp.pop %v5245
          %v5373 = vmul.f32 %v5117, %v5372
          %v5374 = vrcp.pop %v5247
          %v5375 = vmul.f32 %v5119, %v5374
          %v5376 = vrcp.pop %v5249
          %v5377 = vmul.f32 %v5121, %v5376
          %v5378 = vrcp.pop %v5251
          %v5379 = vmul.f32 %v5123, %v5378
          %v5380 = vrcp.pop %v5253
          %v5381 = vmul.f32 %v5125, %v5380
          %v5382 = vrcp.pop %v5255
          %v5383 = vmul.f32 %v5127, %v5382
          %v5384 = vrcp.pop %v5257
          %v5385 = vmul.f32 %v5129, %v5384
          %v5386 = vrcp.pop %v5259
          %v5387 = vmul.f32 %v5131, %v5386
          %v5388 = vrcp.pop %v5261
          %v5389 = vmul.f32 %v5133, %v5388
          %v5390 = vrcp.pop %v5263
          %v5391 = vmul.f32 %v5135, %v5390
          %v5392 = vrcp.pop %v5265
          %v5393 = vmul.f32 %v5137, %v5392
          %v5394 = vrcp.pop %v5267
          %v5395 = vmul.f32 %v5139, %v5394
          %v5396 = vrcp.pop %v5269
          %v5397 = vmul.f32 %v5141, %v5396
          %v5398 = vrcp.pop %v5271
          %v5399 = vmul.f32 %v5143, %v5398
          %v5400 = vrcp.pop %v5273
          %v5401 = vmul.f32 %v5145, %v5400
          %v5402 = vrcp.pop %v5275
          %v5403 = vmul.f32 %v5147, %v5402
          %v5404 = vrcp.pop %v5277
          %v5405 = vmul.f32 %v5149, %v5404
          %v5406 = vrcp.pop %v5279
          %v5407 = vmul.f32 %v5151, %v5406
          %v5408 = vrcp.pop %v5281
          %v5409 = vmul.f32 %v5153, %v5408
          %v5410 = vrcp.pop %v5283
          %v5411 = vmul.f32 %v5155, %v5410
          %v5412 = vrcp.pop %v5285
          %v5413 = vmul.f32 %v5157, %v5412
          %v5414 = vrcp.pop %v5287
          %v5415 = vmul.f32 %v5159, %v5414
          %v5416 = vrcp.pop %v5289
          %v5417 = vmul.f32 %v5161, %v5416
          %v5418 = vrcp.pop %v5291
          %v5419 = vmul.f32 %v5163, %v5418
          %v5420 = vrcp.pop %v5293
          %v5421 = vmul.f32 %v5165, %v5420
          %v5422 = vrcp.pop %v5295
          %v5423 = vmul.f32 %v5167, %v5422
          %v5424 = vrcp.pop %v5297
          %v5425 = vmul.f32 %v5169, %v5424
          %v5426 = vrcp.pop %v5299
          %v5427 = vmul.f32 %v5171, %v5426
          %v5428 = vrcp.pop %v5301
          %v5429 = vmul.f32 %v5173, %v5428
          %v5430 = vrcp.pop %v5303
          %v5431 = vmul.f32 %v5175, %v5430
          %v5432 = vrcp.pop %v5305
          %v5433 = vmul.f32 %v5177, %v5432
          %v5434 = vrcp.pop %v5307
          %v5435 = vmul.f32 %v5179, %v5434
          %v5436 = vrcp.pop %v5309
          %v5437 = vmul.f32 %v5181, %v5436
          %v5438 = vrcp.pop %v5311
          %v5439 = vmul.f32 %v5183, %v5438
          %v5440 = vrcp.pop %v5313
          %v5441 = vmul.f32 %v5185, %v5440
          %v5442 = vrcp.pop %v5315
          %v5443 = vmul.f32 %v5187, %v5442
          %v5444 = vrcp.pop %v5317
          %v5445 = vmul.f32 %v5189, %v5444
          %v5446 = vrcp.pop %v5319
          %v5447 = vmul.f32 %v5191, %v5446
          %v5448 = vrcp.pop %v5321
          %v5449 = vmul.f32 %v5193, %v5448
          %v5450 = vrcp.pop %v5323
          %v5451 = vmul.f32 %v5195, %v5450
          %v5452 = vrcp.pop %v5325
          %v5453 = vmul.f32 %v5197, %v5452
          %v5454 = vrcp.pop %v5327
          %v5455 = vmul.f32 %v5199, %v5454
          %v5456 = vrcp.pop %v5329
          %v5457 = vmul.f32 %v5201, %v5456
          %v5458 = vrcp.pop %v5331
          %v5459 = vmul.f32 %v5203, %v5458
          %v5460 = vrcp.pop %v5333
          %v5461 = vmul.f32 %v5205, %v5460
          %v5462 = vrcp.pop %v5335
          %v5463 = vmul.f32 %v5207, %v5462
          %v5464 = vrcp.pop %v5337
          %v5465 = vmul.f32 %v5209, %v5464
          %v5466 = vrcp.pop %v5339
          %v5467 = vmul.f32 %v5211, %v5466
          %v5468 = vrcp.pop %v5341
          %v5469 = vmul.f32 %v5213, %v5468
          %v5470 = vrcp.pop %v5343
          %v5471 = vmul.f32 %v5215, %v5470
          %v5472 = vrcp.pop %v5345
          %v5473 = vmul.f32 %v5217, %v5472
          %v5474 = vrcp.pop %v5347
          %v5475 = vmul.f32 %v5219, %v5474
          %v5476 = vrcp.pop %v5349
          %v5477 = vmul.f32 %v5221, %v5476
          %v5478 = vrcp.pop %v5351
          %v5479 = vmul.f32 %v5223, %v5478
          %v5480 = vrcp.pop %v5353
          %v5481 = vmul.f32 %v5225, %v5480
          %v5482 = vrcp.pop %v5355
          %v5483 = vmul.f32 %v5227, %v5482
          %v5484 = vrcp.pop %v5357
          %v5485 = vmul.f32 %v5229, %v5484
          %v5486 = vrcp.pop %v5359
          %v5487 = vmul.f32 %v5231, %v5486
          %v5488 = vrcp.pop %v5361
          %v5489 = vmul.f32 %v5233, %v5488
          %v5490 = vrcp.pop %v5363
          %v5491 = vmul.f32 %v5235, %v5490
          %v5492 = vrcp.pop %v5365
          %v5493 = vmul.f32 %v5237, %v5492
          %v5494 = vrcp.pop %v5367
          %v5495 = vmul.f32 %v5239, %v5494
          %v5496 = vsel %vm4792, 0.0, %v5369
          %v5497 = vsel %vm4793, 0.0, %v5371
          %v5498 = vsel %vm4794, 0.0, %v5373
          %v5499 = vsel %vm4795, 0.0, %v5375
          %v5500 = vsel %vm4796, 0.0, %v5377
          %v5501 = vsel %vm4797, 0.0, %v5379
          %v5502 = vsel %vm4798, 0.0, %v5381
          %v5503 = vsel %vm4799, 0.0, %v5383
          %v5504 = vsel %vm4800, 0.0, %v5385
          %v5505 = vsel %vm4801, 0.0, %v5387
          %v5506 = vsel %vm4802, 0.0, %v5389
          %v5507 = vsel %vm4803, 0.0, %v5391
          %v5508 = vsel %vm4804, 0.0, %v5393
          %v5509 = vsel %vm4805, 0.0, %v5395
          %v5510 = vsel %vm4806, 0.0, %v5397
          %v5511 = vsel %vm4807, 0.0, %v5399
          %v5512 = vsel %vm4808, 0.0, %v5401
          %v5513 = vsel %vm4809, 0.0, %v5403
          %v5514 = vsel %vm4810, 0.0, %v5405
          %v5515 = vsel %vm4811, 0.0, %v5407
          %v5516 = vsel %vm4812, 0.0, %v5409
          %v5517 = vsel %vm4813, 0.0, %v5411
          %v5518 = vsel %vm4814, 0.0, %v5413
          %v5519 = vsel %vm4815, 0.0, %v5415
          %v5520 = vsel %vm4816, 0.0, %v5417
          %v5521 = vsel %vm4817, 0.0, %v5419
          %v5522 = vsel %vm4818, 0.0, %v5421
          %v5523 = vsel %vm4819, 0.0, %v5423
          %v5524 = vsel %vm4820, 0.0, %v5425
          %v5525 = vsel %vm4821, 0.0, %v5427
          %v5526 = vsel %vm4822, 0.0, %v5429
          %v5527 = vsel %vm4823, 0.0, %v5431
          %v5528 = vsel %vm4824, 0.0, %v5433
          %v5529 = vsel %vm4825, 0.0, %v5435
          %v5530 = vsel %vm4826, 0.0, %v5437
          %v5531 = vsel %vm4827, 0.0, %v5439
          %v5532 = vsel %vm4828, 0.0, %v5441
          %v5533 = vsel %vm4829, 0.0, %v5443
          %v5534 = vsel %vm4830, 0.0, %v5445
          %v5535 = vsel %vm4831, 0.0, %v5447
          %v5536 = vsel %vm4832, 0.0, %v5449
          %v5537 = vsel %vm4833, 0.0, %v5451
          %v5538 = vsel %vm4834, 0.0, %v5453
          %v5539 = vsel %vm4835, 0.0, %v5455
          %v5540 = vsel %vm4836, 0.0, %v5457
          %v5541 = vsel %vm4837, 0.0, %v5459
          %v5542 = vsel %vm4838, 0.0, %v5461
          %v5543 = vsel %vm4839, 0.0, %v5463
          %v5544 = vsel %vm4840, 0.0, %v5465
          %v5545 = vsel %vm4841, 0.0, %v5467
          %v5546 = vsel %vm4842, 0.0, %v5469
          %v5547 = vsel %vm4843, 0.0, %v5471
          %v5548 = vsel %vm4844, 0.0, %v5473
          %v5549 = vsel %vm4845, 0.0, %v5475
          %v5550 = vsel %vm4846, 0.0, %v5477
          %v5551 = vsel %vm4847, 0.0, %v5479
          %v5552 = vsel %vm4848, 0.0, %v5481
          %v5553 = vsel %vm4849, 0.0, %v5483
          %v5554 = vsel %vm4850, 0.0, %v5485
          %v5555 = vsel %vm4851, 0.0, %v5487
          %v5556 = vsel %vm4852, 0.0, %v5489
          %v5557 = vsel %vm4853, 0.0, %v5491
          %v5558 = vsel %vm4854, 0.0, %v5493
          %v5559 = vsel %vm4855, 0.0, %v5495
          %v5560 = vpack.c.bf16 %v4857, %v4856
          %v5561 = vpack.c.bf16 %v4859, %v4858
          %v5562 = vpack.c.bf16 %v4861, %v4860
          %v5563 = vpack.c.bf16 %v4863, %v4862
          %v5564 = vpack.c.bf16 %v4865, %v4864
          %v5565 = vpack.c.bf16 %v4867, %v4866
          %v5566 = vpack.c.bf16 %v4869, %v4868
          %v5567 = vpack.c.bf16 %v4871, %v4870
          %v5568 = vpack.c.bf16 %v4873, %v4872
          %v5569 = vpack.c.bf16 %v4875, %v4874
          %v5570 = vpack.c.bf16 %v4877, %v4876
          %v5571 = vpack.c.bf16 %v4879, %v4878
          %v5572 = vpack.c.bf16 %v4881, %v4880
          %v5573 = vpack.c.bf16 %v4883, %v4882
          %v5574 = vpack.c.bf16 %v4885, %v4884
          %v5575 = vpack.c.bf16 %v4887, %v4886
          %v5576 = vpack.c.bf16 %v4889, %v4888
          %v5577 = vpack.c.bf16 %v4891, %v4890
          %v5578 = vpack.c.bf16 %v4893, %v4892
          %v5579 = vpack.c.bf16 %v4895, %v4894
          %v5580 = vpack.c.bf16 %v4897, %v4896
          %v5581 = vpack.c.bf16 %v4899, %v4898
          %v5582 = vpack.c.bf16 %v4901, %v4900
          %v5583 = vpack.c.bf16 %v4903, %v4902
          %v5584 = vpack.c.bf16 %v4905, %v4904
          %v5585 = vpack.c.bf16 %v4907, %v4906
          %v5586 = vpack.c.bf16 %v4909, %v4908
          %v5587 = vpack.c.bf16 %v4911, %v4910
          %v5588 = vpack.c.bf16 %v4913, %v4912
          %v5589 = vpack.c.bf16 %v4915, %v4914
          %v5590 = vpack.c.bf16 %v4917, %v4916
          %v5591 = vpack.c.bf16 %v4919, %v4918
          %v5592 = vpack.c.bf16 %v5497, %v5496
          %v5593 = vpack.c.bf16 %v5499, %v5498
          %v5594 = vpack.c.bf16 %v5501, %v5500
          %v5595 = vpack.c.bf16 %v5503, %v5502
          %v5596 = vpack.c.bf16 %v5505, %v5504
          %v5597 = vpack.c.bf16 %v5507, %v5506
          %v5598 = vpack.c.bf16 %v5509, %v5508
          %v5599 = vpack.c.bf16 %v5511, %v5510
          %v5600 = vpack.c.bf16 %v5513, %v5512
          %v5601 = vpack.c.bf16 %v5515, %v5514
          %v5602 = vpack.c.bf16 %v5517, %v5516
          %v5603 = vpack.c.bf16 %v5519, %v5518
          %v5604 = vpack.c.bf16 %v5521, %v5520
          %v5605 = vpack.c.bf16 %v5523, %v5522
          %v5606 = vpack.c.bf16 %v5525, %v5524
          %v5607 = vpack.c.bf16 %v5527, %v5526
          %v5608 = vpack.c.bf16 %v5529, %v5528
          %v5609 = vpack.c.bf16 %v5531, %v5530
          %v5610 = vpack.c.bf16 %v5533, %v5532
          %v5611 = vpack.c.bf16 %v5535, %v5534
          %v5612 = vpack.c.bf16 %v5537, %v5536
          %v5613 = vpack.c.bf16 %v5539, %v5538
          %v5614 = vpack.c.bf16 %v5541, %v5540
          %v5615 = vpack.c.bf16 %v5543, %v5542
          %v5616 = vpack.c.bf16 %v5545, %v5544
          %v5617 = vpack.c.bf16 %v5547, %v5546
          %v5618 = vpack.c.bf16 %v5549, %v5548
          %v5619 = vpack.c.bf16 %v5551, %v5550
          %v5620 = vpack.c.bf16 %v5553, %v5552
          %v5621 = vpack.c.bf16 %v5555, %v5554
          %v5622 = vpack.c.bf16 %v5557, %v5556
          %v5623 = vpack.c.bf16 %v5559, %v5558
          %5624 = vmatprep.subr.bf16.mxu0 0
          %5625 = vmatpush1.bf16.xpose.msra.mxu0 %v3734
          %5626 = vmatprep.subr.bf16.mxu0 0
          %5627 = vmatpush1.bf16.xpose.msra.mxu0 %v3732
          %5628 = vmatprep.subr.bf16.mxu0 0
          %5629 = vmatpush1.bf16.xpose.msra.mxu0 %v3730
          %5630 = vmatprep.subr.bf16.mxu0 0
          %5631 = vmatpush1.bf16.xpose.msra.mxu0 %v3728
          %5632 = vmatprep.subr.bf16.mxu0 0
          %5633 = vmatpush1.bf16.xpose.msra.mxu0 %v3726
          %5634 = vmatprep.subr.bf16.mxu0 0
          %5635 = vmatpush1.bf16.xpose.msra.mxu0 %v3724
          %5636 = vmatprep.subr.bf16.mxu0 0
          %5637 = vmatpush1.bf16.xpose.msra.mxu0 %v3722
          %5638 = vmatprep.subr.bf16.mxu0 0
          %5639 = vmatpush1.bf16.xpose.msra.mxu0 %v3720
          %5640 = vmatprep.subr.bf16.mxu0 0
          %5641 = vmatpush2.bf16.xpose.msra.mxu0 0
          %5642 = vmatprep.subr.bf16.mxu0 0
          %5643 = vmatpush2.bf16.xpose.msra.mxu0 0
          %5644 = vmatprep.subr.bf16.mxu0 0
          %5645 = vmatpush2.bf16.xpose.msra.mxu0 0
          %5646 = vmatprep.subr.bf16.mxu0 0
          %5647 = vmatpush2.bf16.xpose.msra.mxu0 0
          %5648 = vmatprep.subr.bf16.mxu0 0
          %5649 = vmatpush2.bf16.xpose.msra.mxu0 0
          %5650 = vmatprep.subr.bf16.mxu0 0
          %5651 = vmatpush2.bf16.xpose.msra.mxu0 0
          %5652 = vmatprep.subr.bf16.mxu0 0
          %5653 = vmatpush2.bf16.xpose.msra.mxu0 0
          %5654 = vmatprep.subr.bf16.mxu0 0
          %5655 = vmatpush2.bf16.xpose.msra.mxu0 0
          %5656 = vmatprep.mubr.bf16.mxu0 0
          %5657 = vmatmul.mubr.bf16.gmra.mxu0 %v5592
          %v5658 = vpop.f32.mrf.mxu0
          %v5659 = vadd.f32 0.0, %v5658
          %v5660 = vpop.f32.mrf.mxu0
          %v5661 = vpop.f32.mrf.mxu0
          %v5662 = vadd.f32 0.0, %v5661
          %v5663 = vpop.f32.mrf.mxu0
          %5664 = vmatprep.mubr.bf16.mxu0 0
          %5665 = vmatmul.mubr.bf16.gmra.mxu0 %v5593
          %v5666 = vpop.f32.mrf.mxu0
          %v5667 = vadd.f32 0.0, %v5666
          %v5668 = vpop.f32.mrf.mxu0
          %v5669 = vpop.f32.mrf.mxu0
          %v5670 = vadd.f32 0.0, %v5669
          %v5671 = vpop.f32.mrf.mxu0
          %5672 = vmatprep.mubr.bf16.mxu0 0
          %5673 = vmatmul.mubr.bf16.gmra.mxu0 %v5594
          %v5674 = vpop.f32.mrf.mxu0
          %v5675 = vadd.f32 0.0, %v5674
          %v5676 = vpop.f32.mrf.mxu0
          %v5677 = vpop.f32.mrf.mxu0
          %v5678 = vadd.f32 0.0, %v5677
          %v5679 = vpop.f32.mrf.mxu0
          %5680 = vmatprep.mubr.bf16.mxu0 0
          %5681 = vmatmul.mubr.bf16.gmra.mxu0 %v5595
          %v5682 = vpop.f32.mrf.mxu0
          %v5683 = vadd.f32 0.0, %v5682
          %v5684 = vpop.f32.mrf.mxu0
          %v5685 = vpop.f32.mrf.mxu0
          %v5686 = vadd.f32 0.0, %v5685
          %v5687 = vpop.f32.mrf.mxu0
          %5688 = vmatprep.mubr.bf16.mxu0 0
          %5689 = vmatmul.mubr.bf16.gmra.mxu0 %v5596
          %v5690 = vpop.f32.mrf.mxu0
          %v5691 = vadd.f32 0.0, %v5690
          %v5692 = vpop.f32.mrf.mxu0
          %v5693 = vpop.f32.mrf.mxu0
          %v5694 = vadd.f32 0.0, %v5693
          %v5695 = vpop.f32.mrf.mxu0
          %5696 = vmatprep.mubr.bf16.mxu0 0
          %5697 = vmatmul.mubr.bf16.gmra.mxu0 %v5597
          %v5698 = vpop.f32.mrf.mxu0
          %v5699 = vadd.f32 0.0, %v5698
          %v5700 = vpop.f32.mrf.mxu0
          %v5701 = vpop.f32.mrf.mxu0
          %v5702 = vadd.f32 0.0, %v5701
          %v5703 = vpop.f32.mrf.mxu0
          %5704 = vmatprep.mubr.bf16.mxu0 0
          %5705 = vmatmul.mubr.bf16.gmra.mxu0 %v5598
          %v5706 = vpop.f32.mrf.mxu0
          %v5707 = vadd.f32 0.0, %v5706
          %v5708 = vpop.f32.mrf.mxu0
          %v5709 = vpop.f32.mrf.mxu0
          %v5710 = vadd.f32 0.0, %v5709
          %v5711 = vpop.f32.mrf.mxu0
          %5712 = vmatprep.mubr.bf16.mxu0 0
          %5713 = vmatmul.mubr.bf16.gmra.mxu0 %v5599
          %v5714 = vpop.f32.mrf.mxu0
          %v5715 = vadd.f32 0.0, %v5714
          %v5716 = vpop.f32.mrf.mxu0
          %v5717 = vpop.f32.mrf.mxu0
          %v5718 = vadd.f32 0.0, %v5717
          %v5719 = vpop.f32.mrf.mxu0
          %5720 = vmatprep.mubr.bf16.mxu0 0
          %5721 = vmatmul.mubr.bf16.gmra.mxu0 %v5600
          %v5722 = vpop.f32.mrf.mxu0
          %v5723 = vadd.f32 0.0, %v5722
          %v5724 = vpop.f32.mrf.mxu0
          %v5725 = vpop.f32.mrf.mxu0
          %v5726 = vadd.f32 0.0, %v5725
          %v5727 = vpop.f32.mrf.mxu0
          %5728 = vmatprep.mubr.bf16.mxu0 0
          %5729 = vmatmul.mubr.bf16.gmra.mxu0 %v5601
          %v5730 = vpop.f32.mrf.mxu0
          %v5731 = vadd.f32 0.0, %v5730
          %v5732 = vpop.f32.mrf.mxu0
          %v5733 = vpop.f32.mrf.mxu0
          %v5734 = vadd.f32 0.0, %v5733
          %v5735 = vpop.f32.mrf.mxu0
          %5736 = vmatprep.mubr.bf16.mxu0 0
          %5737 = vmatmul.mubr.bf16.gmra.mxu0 %v5602
          %v5738 = vpop.f32.mrf.mxu0
          %v5739 = vadd.f32 0.0, %v5738
          %v5740 = vpop.f32.mrf.mxu0
          %v5741 = vpop.f32.mrf.mxu0
          %v5742 = vadd.f32 0.0, %v5741
          %v5743 = vpop.f32.mrf.mxu0
          %5744 = vmatprep.mubr.bf16.mxu0 0
          %5745 = vmatmul.mubr.bf16.gmra.mxu0 %v5603
          %v5746 = vpop.f32.mrf.mxu0
          %v5747 = vadd.f32 0.0, %v5746
          %v5748 = vpop.f32.mrf.mxu0
          %v5749 = vpop.f32.mrf.mxu0
          %v5750 = vadd.f32 0.0, %v5749
          %v5751 = vpop.f32.mrf.mxu0
          %5752 = vmatprep.mubr.bf16.mxu0 0
          %5753 = vmatmul.mubr.bf16.gmra.mxu0 %v5604
          %v5754 = vpop.f32.mrf.mxu0
          %v5755 = vadd.f32 0.0, %v5754
          %v5756 = vpop.f32.mrf.mxu0
          %v5757 = vpop.f32.mrf.mxu0
          %v5758 = vadd.f32 0.0, %v5757
          %v5759 = vpop.f32.mrf.mxu0
          %5760 = vmatprep.mubr.bf16.mxu0 0
          %5761 = vmatmul.mubr.bf16.gmra.mxu0 %v5605
          %v5762 = vpop.f32.mrf.mxu0
          %v5763 = vadd.f32 0.0, %v5762
          %v5764 = vpop.f32.mrf.mxu0
          %v5765 = vpop.f32.mrf.mxu0
          %v5766 = vadd.f32 0.0, %v5765
          %v5767 = vpop.f32.mrf.mxu0
          %5768 = vmatprep.mubr.bf16.mxu0 0
          %5769 = vmatmul.mubr.bf16.gmra.mxu0 %v5606
          %v5770 = vpop.f32.mrf.mxu0
          %v5771 = vadd.f32 0.0, %v5770
          %v5772 = vpop.f32.mrf.mxu0
          %v5773 = vpop.f32.mrf.mxu0
          %v5774 = vadd.f32 0.0, %v5773
          %v5775 = vpop.f32.mrf.mxu0
          %5776 = vmatprep.mubr.bf16.mxu0 0
          %5777 = vmatmul.mubr.bf16.gmra.mxu0 %v5607
          %v5778 = vpop.f32.mrf.mxu0
          %v5779 = vadd.f32 0.0, %v5778
          %v5780 = vpop.f32.mrf.mxu0
          %v5781 = vpop.f32.mrf.mxu0
          %v5782 = vadd.f32 0.0, %v5781
          %v5783 = vpop.f32.mrf.mxu0
          %5784 = vmatprep.mubr.bf16.mxu0 0
          %5785 = vmatmul.mubr.bf16.gmra.mxu0 %v5608
          %v5786 = vpop.f32.mrf.mxu0
          %v5787 = vadd.f32 0.0, %v5786
          %v5788 = vpop.f32.mrf.mxu0
          %v5789 = vpop.f32.mrf.mxu0
          %v5790 = vadd.f32 0.0, %v5789
          %v5791 = vpop.f32.mrf.mxu0
          %5792 = vmatprep.mubr.bf16.mxu0 0
          %5793 = vmatmul.mubr.bf16.gmra.mxu0 %v5609
          %v5794 = vpop.f32.mrf.mxu0
          %v5795 = vadd.f32 0.0, %v5794
          %v5796 = vpop.f32.mrf.mxu0
          %v5797 = vpop.f32.mrf.mxu0
          %v5798 = vadd.f32 0.0, %v5797
          %v5799 = vpop.f32.mrf.mxu0
          %5800 = vmatprep.mubr.bf16.mxu0 0
          %5801 = vmatmul.mubr.bf16.gmra.mxu0 %v5610
          %v5802 = vpop.f32.mrf.mxu0
          %v5803 = vadd.f32 0.0, %v5802
          %v5804 = vpop.f32.mrf.mxu0
          %v5805 = vpop.f32.mrf.mxu0
          %v5806 = vadd.f32 0.0, %v5805
          %v5807 = vpop.f32.mrf.mxu0
          %5808 = vmatprep.mubr.bf16.mxu0 0
          %5809 = vmatmul.mubr.bf16.gmra.mxu0 %v5611
          %v5810 = vpop.f32.mrf.mxu0
          %v5811 = vadd.f32 0.0, %v5810
          %v5812 = vpop.f32.mrf.mxu0
          %v5813 = vpop.f32.mrf.mxu0
          %v5814 = vadd.f32 0.0, %v5813
          %v5815 = vpop.f32.mrf.mxu0
          %5816 = vmatprep.mubr.bf16.mxu0 0
          %5817 = vmatmul.mubr.bf16.gmra.mxu0 %v5612
          %v5818 = vpop.f32.mrf.mxu0
          %v5819 = vadd.f32 0.0, %v5818
          %v5820 = vpop.f32.mrf.mxu0
          %v5821 = vpop.f32.mrf.mxu0
          %v5822 = vadd.f32 0.0, %v5821
          %v5823 = vpop.f32.mrf.mxu0
          %5824 = vmatprep.mubr.bf16.mxu0 0
          %5825 = vmatmul.mubr.bf16.gmra.mxu0 %v5613
          %v5826 = vpop.f32.mrf.mxu0
          %v5827 = vadd.f32 0.0, %v5826
          %v5828 = vpop.f32.mrf.mxu0
          %v5829 = vpop.f32.mrf.mxu0
          %v5830 = vadd.f32 0.0, %v5829
          %v5831 = vpop.f32.mrf.mxu0
          %5832 = vmatprep.mubr.bf16.mxu0 0
          %5833 = vmatmul.mubr.bf16.gmra.mxu0 %v5614
          %v5834 = vpop.f32.mrf.mxu0
          %v5835 = vadd.f32 0.0, %v5834
          %v5836 = vpop.f32.mrf.mxu0
          %v5837 = vpop.f32.mrf.mxu0
          %v5838 = vadd.f32 0.0, %v5837
          %v5839 = vpop.f32.mrf.mxu0
          %5840 = vmatprep.mubr.bf16.mxu0 0
          %5841 = vmatmul.mubr.bf16.gmra.mxu0 %v5615
          %v5842 = vpop.f32.mrf.mxu0
          %v5843 = vadd.f32 0.0, %v5842
          %v5844 = vpop.f32.mrf.mxu0
          %v5845 = vpop.f32.mrf.mxu0
          %v5846 = vadd.f32 0.0, %v5845
          %v5847 = vpop.f32.mrf.mxu0
          %5848 = vmatprep.mubr.bf16.mxu0 0
          %5849 = vmatmul.mubr.bf16.gmra.mxu0 %v5616
          %v5850 = vpop.f32.mrf.mxu0
          %v5851 = vadd.f32 0.0, %v5850
          %v5852 = vpop.f32.mrf.mxu0
          %v5853 = vpop.f32.mrf.mxu0
          %v5854 = vadd.f32 0.0, %v5853
          %v5855 = vpop.f32.mrf.mxu0
          %5856 = vmatprep.mubr.bf16.mxu0 0
          %5857 = vmatmul.mubr.bf16.gmra.mxu0 %v5617
          %v5858 = vpop.f32.mrf.mxu0
          %v5859 = vadd.f32 0.0, %v5858
          %v5860 = vpop.f32.mrf.mxu0
          %v5861 = vpop.f32.mrf.mxu0
          %v5862 = vadd.f32 0.0, %v5861
          %v5863 = vpop.f32.mrf.mxu0
          %5864 = vmatprep.mubr.bf16.mxu0 0
          %5865 = vmatmul.mubr.bf16.gmra.mxu0 %v5618
          %v5866 = vpop.f32.mrf.mxu0
          %v5867 = vadd.f32 0.0, %v5866
          %v5868 = vpop.f32.mrf.mxu0
          %v5869 = vpop.f32.mrf.mxu0
          %v5870 = vadd.f32 0.0, %v5869
          %v5871 = vpop.f32.mrf.mxu0
          %5872 = vmatprep.mubr.bf16.mxu0 0
          %5873 = vmatmul.mubr.bf16.gmra.mxu0 %v5619
          %v5874 = vpop.f32.mrf.mxu0
          %v5875 = vadd.f32 0.0, %v5874
          %v5876 = vpop.f32.mrf.mxu0
          %v5877 = vpop.f32.mrf.mxu0
          %v5878 = vadd.f32 0.0, %v5877
          %v5879 = vpop.f32.mrf.mxu0
          %5880 = vmatprep.mubr.bf16.mxu0 0
          %5881 = vmatmul.mubr.bf16.gmra.mxu0 %v5620
          %v5882 = vpop.f32.mrf.mxu0
          %v5883 = vadd.f32 0.0, %v5882
          %v5884 = vpop.f32.mrf.mxu0
          %v5885 = vpop.f32.mrf.mxu0
          %v5886 = vadd.f32 0.0, %v5885
          %v5887 = vpop.f32.mrf.mxu0
          %5888 = vmatprep.mubr.bf16.mxu0 0
          %5889 = vmatmul.mubr.bf16.gmra.mxu0 %v5621
          %v5890 = vpop.f32.mrf.mxu0
          %v5891 = vadd.f32 0.0, %v5890
          %v5892 = vpop.f32.mrf.mxu0
          %v5893 = vpop.f32.mrf.mxu0
          %v5894 = vadd.f32 0.0, %v5893
          %v5895 = vpop.f32.mrf.mxu0
          %5896 = vmatprep.mubr.bf16.mxu0 0
          %5897 = vmatmul.mubr.bf16.gmra.mxu0 %v5622
          %v5898 = vpop.f32.mrf.mxu0
          %v5899 = vadd.f32 0.0, %v5898
          %v5900 = vpop.f32.mrf.mxu0
          %v5901 = vpop.f32.mrf.mxu0
          %v5902 = vadd.f32 0.0, %v5901
          %v5903 = vpop.f32.mrf.mxu0
          %5904 = vmatprep.mubr.bf16.mxu0 0
          %5905 = vmatmul.mubr.bf16.gmra.mxu0 %v5623
          %v5906 = vpop.f32.mrf.mxu0
          %v5907 = vadd.f32 0.0, %v5906
          %v5908 = vpop.f32.mrf.mxu0
          %v5909 = vpop.f32.mrf.mxu0
          %v5910 = vadd.f32 0.0, %v5909
          %v5911 = vpop.f32.mrf.mxu0
          %5912 = vdwg.mxu0
          %5913 = vmatprep.subr.bf16.mxu0 0
          %5914 = vmatpush1.bf16.xpose.msra.mxu0 %v3733
          %5915 = vmatprep.subr.bf16.mxu0 0
          %5916 = vmatpush1.bf16.xpose.msra.mxu0 %v3731
          %5917 = vmatprep.subr.bf16.mxu0 0
          %5918 = vmatpush1.bf16.xpose.msra.mxu0 %v3729
          %5919 = vmatprep.subr.bf16.mxu0 0
          %5920 = vmatpush1.bf16.xpose.msra.mxu0 %v3727
          %5921 = vmatprep.subr.bf16.mxu0 0
          %5922 = vmatpush1.bf16.xpose.msra.mxu0 %v3725
          %5923 = vmatprep.subr.bf16.mxu0 0
          %5924 = vmatpush1.bf16.xpose.msra.mxu0 %v3723
          %5925 = vmatprep.subr.bf16.mxu0 0
          %5926 = vmatpush1.bf16.xpose.msra.mxu0 %v3721
          %5927 = vmatprep.subr.bf16.mxu0 0
          %5928 = vmatpush1.bf16.xpose.msra.mxu0 %v3719
          %5929 = vmatprep.subr.bf16.mxu0 0
          %5930 = vmatpush2.bf16.xpose.msra.mxu0 0
          %5931 = vmatprep.subr.bf16.mxu0 0
          %5932 = vmatpush2.bf16.xpose.msra.mxu0 0
          %5933 = vmatprep.subr.bf16.mxu0 0
          %5934 = vmatpush2.bf16.xpose.msra.mxu0 0
          %5935 = vmatprep.subr.bf16.mxu0 0
          %5936 = vmatpush2.bf16.xpose.msra.mxu0 0
          %5937 = vmatprep.subr.bf16.mxu0 0
          %5938 = vmatpush2.bf16.xpose.msra.mxu0 0
          %5939 = vmatprep.subr.bf16.mxu0 0
          %5940 = vmatpush2.bf16.xpose.msra.mxu0 0
          %5941 = vmatprep.subr.bf16.mxu0 0
          %5942 = vmatpush2.bf16.xpose.msra.mxu0 0
          %5943 = vmatprep.subr.bf16.mxu0 0
          %5944 = vmatpush2.bf16.xpose.msra.mxu0 0
          %5945 = vmatprep.mubr.bf16.mxu0 0
          %5946 = vmatmul.mubr.bf16.gmra.mxu0 %v5560
          %v5947 = vpop.f32.mrf.mxu0
          %v5948 = vadd.f32 %v5659, %v5947
          %v5949 = vpop.f32.mrf.mxu0
          %v5950 = vpop.f32.mrf.mxu0
          %v5951 = vadd.f32 %v5662, %v5950
          %v5952 = vpop.f32.mrf.mxu0
          %5953 = vmatprep.mubr.bf16.mxu0 0
          %5954 = vmatmul.mubr.bf16.gmra.mxu0 %v5561
          %v5955 = vpop.f32.mrf.mxu0
          %v5956 = vadd.f32 %v5667, %v5955
          %v5957 = vpop.f32.mrf.mxu0
          %v5958 = vpop.f32.mrf.mxu0
          %v5959 = vadd.f32 %v5670, %v5958
          %v5960 = vpop.f32.mrf.mxu0
          %5961 = vmatprep.mubr.bf16.mxu0 0
          %5962 = vmatmul.mubr.bf16.gmra.mxu0 %v5562
          %v5963 = vpop.f32.mrf.mxu0
          %v5964 = vadd.f32 %v5675, %v5963
          %v5965 = vpop.f32.mrf.mxu0
          %v5966 = vpop.f32.mrf.mxu0
          %v5967 = vadd.f32 %v5678, %v5966
          %v5968 = vpop.f32.mrf.mxu0
          %5969 = vmatprep.mubr.bf16.mxu0 0
          %5970 = vmatmul.mubr.bf16.gmra.mxu0 %v5563
          %v5971 = vpop.f32.mrf.mxu0
          %v5972 = vadd.f32 %v5683, %v5971
          %v5973 = vpop.f32.mrf.mxu0
          %v5974 = vpop.f32.mrf.mxu0
          %v5975 = vadd.f32 %v5686, %v5974
          %v5976 = vpop.f32.mrf.mxu0
          %5977 = vmatprep.mubr.bf16.mxu0 0
          %5978 = vmatmul.mubr.bf16.gmra.mxu0 %v5564
          %v5979 = vpop.f32.mrf.mxu0
          %v5980 = vadd.f32 %v5691, %v5979
          %v5981 = vpop.f32.mrf.mxu0
          %v5982 = vpop.f32.mrf.mxu0
          %v5983 = vadd.f32 %v5694, %v5982
          %v5984 = vpop.f32.mrf.mxu0
          %5985 = vmatprep.mubr.bf16.mxu0 0
          %5986 = vmatmul.mubr.bf16.gmra.mxu0 %v5565
          %v5987 = vpop.f32.mrf.mxu0
          %v5988 = vadd.f32 %v5699, %v5987
          %v5989 = vpop.f32.mrf.mxu0
          %v5990 = vpop.f32.mrf.mxu0
          %v5991 = vadd.f32 %v5702, %v5990
          %v5992 = vpop.f32.mrf.mxu0
          %5993 = vmatprep.mubr.bf16.mxu0 0
          %5994 = vmatmul.mubr.bf16.gmra.mxu0 %v5566
          %v5995 = vpop.f32.mrf.mxu0
          %v5996 = vadd.f32 %v5707, %v5995
          %v5997 = vpop.f32.mrf.mxu0
          %v5998 = vpop.f32.mrf.mxu0
          %v5999 = vadd.f32 %v5710, %v5998
          %v6000 = vpop.f32.mrf.mxu0
          %6001 = vmatprep.mubr.bf16.mxu0 0
          %6002 = vmatmul.mubr.bf16.gmra.mxu0 %v5567
          %v6003 = vpop.f32.mrf.mxu0
          %v6004 = vadd.f32 %v5715, %v6003
          %v6005 = vpop.f32.mrf.mxu0
          %v6006 = vpop.f32.mrf.mxu0
          %v6007 = vadd.f32 %v5718, %v6006
          %v6008 = vpop.f32.mrf.mxu0
          %6009 = vmatprep.mubr.bf16.mxu0 0
          %6010 = vmatmul.mubr.bf16.gmra.mxu0 %v5568
          %v6011 = vpop.f32.mrf.mxu0
          %v6012 = vadd.f32 %v5723, %v6011
          %v6013 = vpop.f32.mrf.mxu0
          %v6014 = vpop.f32.mrf.mxu0
          %v6015 = vadd.f32 %v5726, %v6014
          %v6016 = vpop.f32.mrf.mxu0
          %6017 = vmatprep.mubr.bf16.mxu0 0
          %6018 = vmatmul.mubr.bf16.gmra.mxu0 %v5569
          %v6019 = vpop.f32.mrf.mxu0
          %v6020 = vadd.f32 %v5731, %v6019
          %v6021 = vpop.f32.mrf.mxu0
          %v6022 = vpop.f32.mrf.mxu0
          %v6023 = vadd.f32 %v5734, %v6022
          %v6024 = vpop.f32.mrf.mxu0
          %6025 = vmatprep.mubr.bf16.mxu0 0
          %6026 = vmatmul.mubr.bf16.gmra.mxu0 %v5570
          %v6027 = vpop.f32.mrf.mxu0
          %v6028 = vadd.f32 %v5739, %v6027
          %v6029 = vpop.f32.mrf.mxu0
          %v6030 = vpop.f32.mrf.mxu0
          %v6031 = vadd.f32 %v5742, %v6030
          %v6032 = vpop.f32.mrf.mxu0
          %6033 = vmatprep.mubr.bf16.mxu0 0
          %6034 = vmatmul.mubr.bf16.gmra.mxu0 %v5571
          %v6035 = vpop.f32.mrf.mxu0
          %v6036 = vadd.f32 %v5747, %v6035
          %v6037 = vpop.f32.mrf.mxu0
          %v6038 = vpop.f32.mrf.mxu0
          %v6039 = vadd.f32 %v5750, %v6038
          %v6040 = vpop.f32.mrf.mxu0
          %6041 = vmatprep.mubr.bf16.mxu0 0
          %6042 = vmatmul.mubr.bf16.gmra.mxu0 %v5572
          %v6043 = vpop.f32.mrf.mxu0
          %v6044 = vadd.f32 %v5755, %v6043
          %v6045 = vpop.f32.mrf.mxu0
          %v6046 = vpop.f32.mrf.mxu0
          %v6047 = vadd.f32 %v5758, %v6046
          %v6048 = vpop.f32.mrf.mxu0
          %6049 = vmatprep.mubr.bf16.mxu0 0
          %6050 = vmatmul.mubr.bf16.gmra.mxu0 %v5573
          %v6051 = vpop.f32.mrf.mxu0
          %v6052 = vadd.f32 %v5763, %v6051
          %v6053 = vpop.f32.mrf.mxu0
          %v6054 = vpop.f32.mrf.mxu0
          %v6055 = vadd.f32 %v5766, %v6054
          %v6056 = vpop.f32.mrf.mxu0
          %6057 = vmatprep.mubr.bf16.mxu0 0
          %6058 = vmatmul.mubr.bf16.gmra.mxu0 %v5574
          %v6059 = vpop.f32.mrf.mxu0
          %v6060 = vadd.f32 %v5771, %v6059
          %v6061 = vpop.f32.mrf.mxu0
          %v6062 = vpop.f32.mrf.mxu0
          %v6063 = vadd.f32 %v5774, %v6062
          %v6064 = vpop.f32.mrf.mxu0
          %6065 = vmatprep.mubr.bf16.mxu0 0
          %6066 = vmatmul.mubr.bf16.gmra.mxu0 %v5575
          %v6067 = vpop.f32.mrf.mxu0
          %v6068 = vadd.f32 %v5779, %v6067
          %v6069 = vpop.f32.mrf.mxu0
          %v6070 = vpop.f32.mrf.mxu0
          %v6071 = vadd.f32 %v5782, %v6070
          %v6072 = vpop.f32.mrf.mxu0
          %6073 = vmatprep.mubr.bf16.mxu0 0
          %6074 = vmatmul.mubr.bf16.gmra.mxu0 %v5576
          %v6075 = vpop.f32.mrf.mxu0
          %v6076 = vadd.f32 %v5787, %v6075
          %v6077 = vpop.f32.mrf.mxu0
          %v6078 = vpop.f32.mrf.mxu0
          %v6079 = vadd.f32 %v5790, %v6078
          %v6080 = vpop.f32.mrf.mxu0
          %6081 = vmatprep.mubr.bf16.mxu0 0
          %6082 = vmatmul.mubr.bf16.gmra.mxu0 %v5577
          %v6083 = vpop.f32.mrf.mxu0
          %v6084 = vadd.f32 %v5795, %v6083
          %v6085 = vpop.f32.mrf.mxu0
          %v6086 = vpop.f32.mrf.mxu0
          %v6087 = vadd.f32 %v5798, %v6086
          %v6088 = vpop.f32.mrf.mxu0
          %6089 = vmatprep.mubr.bf16.mxu0 0
          %6090 = vmatmul.mubr.bf16.gmra.mxu0 %v5578
          %v6091 = vpop.f32.mrf.mxu0
          %v6092 = vadd.f32 %v5803, %v6091
          %v6093 = vpop.f32.mrf.mxu0
          %v6094 = vpop.f32.mrf.mxu0
          %v6095 = vadd.f32 %v5806, %v6094
          %v6096 = vpop.f32.mrf.mxu0
          %6097 = vmatprep.mubr.bf16.mxu0 0
          %6098 = vmatmul.mubr.bf16.gmra.mxu0 %v5579
          %v6099 = vpop.f32.mrf.mxu0
          %v6100 = vadd.f32 %v5811, %v6099
          %v6101 = vpop.f32.mrf.mxu0
          %v6102 = vpop.f32.mrf.mxu0
          %v6103 = vadd.f32 %v5814, %v6102
          %v6104 = vpop.f32.mrf.mxu0
          %6105 = vmatprep.mubr.bf16.mxu0 0
          %6106 = vmatmul.mubr.bf16.gmra.mxu0 %v5580
          %v6107 = vpop.f32.mrf.mxu0
          %v6108 = vadd.f32 %v5819, %v6107
          %v6109 = vpop.f32.mrf.mxu0
          %v6110 = vpop.f32.mrf.mxu0
          %v6111 = vadd.f32 %v5822, %v6110
          %v6112 = vpop.f32.mrf.mxu0
          %6113 = vmatprep.mubr.bf16.mxu0 0
          %6114 = vmatmul.mubr.bf16.gmra.mxu0 %v5581
          %v6115 = vpop.f32.mrf.mxu0
          %v6116 = vadd.f32 %v5827, %v6115
          %v6117 = vpop.f32.mrf.mxu0
          %v6118 = vpop.f32.mrf.mxu0
          %v6119 = vadd.f32 %v5830, %v6118
          %v6120 = vpop.f32.mrf.mxu0
          %6121 = vmatprep.mubr.bf16.mxu0 0
          %6122 = vmatmul.mubr.bf16.gmra.mxu0 %v5582
          %v6123 = vpop.f32.mrf.mxu0
          %v6124 = vadd.f32 %v5835, %v6123
          %v6125 = vpop.f32.mrf.mxu0
          %v6126 = vpop.f32.mrf.mxu0
          %v6127 = vadd.f32 %v5838, %v6126
          %v6128 = vpop.f32.mrf.mxu0
          %6129 = vmatprep.mubr.bf16.mxu0 0
          %6130 = vmatmul.mubr.bf16.gmra.mxu0 %v5583
          %v6131 = vpop.f32.mrf.mxu0
          %v6132 = vadd.f32 %v5843, %v6131
          %v6133 = vpop.f32.mrf.mxu0
          %v6134 = vpop.f32.mrf.mxu0
          %v6135 = vadd.f32 %v5846, %v6134
          %v6136 = vpop.f32.mrf.mxu0
          %6137 = vmatprep.mubr.bf16.mxu0 0
          %6138 = vmatmul.mubr.bf16.gmra.mxu0 %v5584
          %v6139 = vpop.f32.mrf.mxu0
          %v6140 = vadd.f32 %v5851, %v6139
          %v6141 = vpop.f32.mrf.mxu0
          %v6142 = vpop.f32.mrf.mxu0
          %v6143 = vadd.f32 %v5854, %v6142
          %v6144 = vpop.f32.mrf.mxu0
          %6145 = vmatprep.mubr.bf16.mxu0 0
          %6146 = vmatmul.mubr.bf16.gmra.mxu0 %v5585
          %v6147 = vpop.f32.mrf.mxu0
          %v6148 = vadd.f32 %v5859, %v6147
          %v6149 = vpop.f32.mrf.mxu0
          %v6150 = vpop.f32.mrf.mxu0
          %v6151 = vadd.f32 %v5862, %v6150
          %v6152 = vpop.f32.mrf.mxu0
          %6153 = vmatprep.mubr.bf16.mxu0 0
          %6154 = vmatmul.mubr.bf16.gmra.mxu0 %v5586
          %v6155 = vpop.f32.mrf.mxu0
          %v6156 = vadd.f32 %v5867, %v6155
          %v6157 = vpop.f32.mrf.mxu0
          %v6158 = vpop.f32.mrf.mxu0
          %v6159 = vadd.f32 %v5870, %v6158
          %v6160 = vpop.f32.mrf.mxu0
          %6161 = vmatprep.mubr.bf16.mxu0 0
          %6162 = vmatmul.mubr.bf16.gmra.mxu0 %v5587
          %v6163 = vpop.f32.mrf.mxu0
          %v6164 = vadd.f32 %v5875, %v6163
          %v6165 = vpop.f32.mrf.mxu0
          %v6166 = vpop.f32.mrf.mxu0
          %v6167 = vadd.f32 %v5878, %v6166
          %v6168 = vpop.f32.mrf.mxu0
          %6169 = vmatprep.mubr.bf16.mxu0 0
          %6170 = vmatmul.mubr.bf16.gmra.mxu0 %v5588
          %v6171 = vpop.f32.mrf.mxu0
          %v6172 = vadd.f32 %v5883, %v6171
          %v6173 = vpop.f32.mrf.mxu0
          %v6174 = vpop.f32.mrf.mxu0
          %v6175 = vadd.f32 %v5886, %v6174
          %v6176 = vpop.f32.mrf.mxu0
          %6177 = vmatprep.mubr.bf16.mxu0 0
          %6178 = vmatmul.mubr.bf16.gmra.mxu0 %v5589
          %v6179 = vpop.f32.mrf.mxu0
          %v6180 = vadd.f32 %v5891, %v6179
          %v6181 = vpop.f32.mrf.mxu0
          %v6182 = vpop.f32.mrf.mxu0
          %v6183 = vadd.f32 %v5894, %v6182
          %v6184 = vpop.f32.mrf.mxu0
          %6185 = vmatprep.mubr.bf16.mxu0 0
          %6186 = vmatmul.mubr.bf16.gmra.mxu0 %v5590
          %v6187 = vpop.f32.mrf.mxu0
          %v6188 = vadd.f32 %v5899, %v6187
          %v6189 = vpop.f32.mrf.mxu0
          %v6190 = vpop.f32.mrf.mxu0
          %v6191 = vadd.f32 %v5902, %v6190
          %v6192 = vpop.f32.mrf.mxu0
          %6193 = vmatprep.mubr.bf16.mxu0 0
          %6194 = vmatmul.mubr.bf16.gmra.mxu0 %v5591
          %v6195 = vpop.f32.mrf.mxu0
          %v6196 = vadd.f32 %v5907, %v6195
          %v6197 = vpop.f32.mrf.mxu0
          %v6198 = vpop.f32.mrf.mxu0
          %v6199 = vadd.f32 %v5910, %v6198
          %v6200 = vpop.f32.mrf.mxu0
          %6201 = vdwg.mxu0
          %v6202 = vld [vmem:[%s306] sm:$0xff]
          %v6203 = vld [vmem:[%s306 + $0x8] sm:$0xff]
          %v6204 = vld [vmem:[%s306 + $0x10] sm:$0xff]
          %v6205 = vld [vmem:[%s306 + $0x18] sm:$0xff]
          %v6206 = vld [vmem:[%s306 + $0x20] sm:$0xff]
          %v6207 = vld [vmem:[%s306 + $0x28] sm:$0xff]
          %v6208 = vld [vmem:[%s306 + $0x30] sm:$0xff]
          %v6209 = vld [vmem:[%s306 + $0x38] sm:$0xff]
          %v6210 = vld [vmem:[%s306 + $0x40] sm:$0xff]
          %v6211 = vld [vmem:[%s306 + $0x48] sm:$0xff]
          %v6212 = vld [vmem:[%s306 + $0x50] sm:$0xff]
          %v6213 = vld [vmem:[%s306 + $0x58] sm:$0xff]
          %v6214 = vld [vmem:[%s306 + $0x60] sm:$0xff]
          %v6215 = vld [vmem:[%s306 + $0x68] sm:$0xff]
          %v6216 = vld [vmem:[%s306 + $0x70] sm:$0xff]
          %v6217 = vld [vmem:[%s306 + $0x78] sm:$0xff]
          %v6218 = vld [vmem:[%s306 + $0x80] sm:$0xff]
          %v6219 = vld [vmem:[%s306 + $0x88] sm:$0xff]
          %v6220 = vld [vmem:[%s306 + $0x90] sm:$0xff]
          %v6221 = vld [vmem:[%s306 + $0x98] sm:$0xff]
          %v6222 = vld [vmem:[%s306 + $0xa0] sm:$0xff]
          %v6223 = vld [vmem:[%s306 + $0xa8] sm:$0xff]
          %v6224 = vld [vmem:[%s306 + $0xb0] sm:$0xff]
          %v6225 = vld [vmem:[%s306 + $0xb8] sm:$0xff]
          %v6226 = vld [vmem:[%s306 + $0xc0] sm:$0xff]
          %v6227 = vld [vmem:[%s306 + $0xc8] sm:$0xff]
          %v6228 = vld [vmem:[%s306 + $0xd0] sm:$0xff]
          %v6229 = vld [vmem:[%s306 + $0xd8] sm:$0xff]
          %v6230 = vld [vmem:[%s306 + $0xe0] sm:$0xff]
          %v6231 = vld [vmem:[%s306 + $0xe8] sm:$0xff]
          %v6232 = vld [vmem:[%s306 + $0xf0] sm:$0xff]
          %v6233 = vld [vmem:[%s306 + $0xf8] sm:$0xff]
          %v6234 = vld [vmem:[%s306 + $0x100] sm:$0xff]
          %v6235 = vld [vmem:[%s306 + $0x108] sm:$0xff]
          %v6236 = vld [vmem:[%s306 + $0x110] sm:$0xff]
          %v6237 = vld [vmem:[%s306 + $0x118] sm:$0xff]
          %v6238 = vld [vmem:[%s306 + $0x120] sm:$0xff]
          %v6239 = vld [vmem:[%s306 + $0x128] sm:$0xff]
          %v6240 = vld [vmem:[%s306 + $0x130] sm:$0xff]
          %v6241 = vld [vmem:[%s306 + $0x138] sm:$0xff]
          %v6242 = vld [vmem:[%s306 + $0x140] sm:$0xff]
          %v6243 = vld [vmem:[%s306 + $0x148] sm:$0xff]
          %v6244 = vld [vmem:[%s306 + $0x150] sm:$0xff]
          %v6245 = vld [vmem:[%s306 + $0x158] sm:$0xff]
          %v6246 = vld [vmem:[%s306 + $0x160] sm:$0xff]
          %v6247 = vld [vmem:[%s306 + $0x168] sm:$0xff]
          %v6248 = vld [vmem:[%s306 + $0x170] sm:$0xff]
          %v6249 = vld [vmem:[%s306 + $0x178] sm:$0xff]
          %v6250 = vld [vmem:[%s306 + $0x180] sm:$0xff]
          %v6251 = vld [vmem:[%s306 + $0x188] sm:$0xff]
          %v6252 = vld [vmem:[%s306 + $0x190] sm:$0xff]
          %v6253 = vld [vmem:[%s306 + $0x198] sm:$0xff]
          %v6254 = vld [vmem:[%s306 + $0x1a0] sm:$0xff]
          %v6255 = vld [vmem:[%s306 + $0x1a8] sm:$0xff]
          %v6256 = vld [vmem:[%s306 + $0x1b0] sm:$0xff]
          %v6257 = vld [vmem:[%s306 + $0x1b8] sm:$0xff]
          %v6258 = vld [vmem:[%s306 + $0x1c0] sm:$0xff]
          %v6259 = vld [vmem:[%s306 + $0x1c8] sm:$0xff]
          %v6260 = vld [vmem:[%s306 + $0x1d0] sm:$0xff]
          %v6261 = vld [vmem:[%s306 + $0x1d8] sm:$0xff]
          %v6262 = vld [vmem:[%s306 + $0x1e0] sm:$0xff]
          %v6263 = vld [vmem:[%s306 + $0x1e8] sm:$0xff]
          %v6264 = vld [vmem:[%s306 + $0x1f0] sm:$0xff]
          %v6265 = vld [vmem:[%s306 + $0x1f8] sm:$0xff]
          %v6266 = vadd.f32 %v5948, %v3591
          %v6267 = vadd.f32 %v5951, %v3592
          %v6268 = vadd.f32 %v5956, %v3593
          %v6269 = vadd.f32 %v5959, %v3594
          %v6270 = vadd.f32 %v5964, %v3595
          %v6271 = vadd.f32 %v5967, %v3596
          %v6272 = vadd.f32 %v5972, %v3597
          %v6273 = vadd.f32 %v5975, %v3598
          %v6274 = vadd.f32 %v5980, %v3599
          %v6275 = vadd.f32 %v5983, %v3600
          %v6276 = vadd.f32 %v5988, %v3601
          %v6277 = vadd.f32 %v5991, %v3602
          %v6278 = vadd.f32 %v5996, %v3603
          %v6279 = vadd.f32 %v5999, %v3604
          %v6280 = vadd.f32 %v6004, %v3605
          %v6281 = vadd.f32 %v6007, %v3606
          %v6282 = vadd.f32 %v6012, %v3607
          %v6283 = vadd.f32 %v6015, %v3608
          %v6284 = vadd.f32 %v6020, %v3609
          %v6285 = vadd.f32 %v6023, %v3610
          %v6286 = vadd.f32 %v6028, %v3611
          %v6287 = vadd.f32 %v6031, %v3612
          %v6288 = vadd.f32 %v6036, %v3613
          %v6289 = vadd.f32 %v6039, %v3614
          %v6290 = vadd.f32 %v6044, %v3615
          %v6291 = vadd.f32 %v6047, %v3616
          %v6292 = vadd.f32 %v6052, %v3617
          %v6293 = vadd.f32 %v6055, %v3618
          %v6294 = vadd.f32 %v6060, %v3619
          %v6295 = vadd.f32 %v6063, %v3620
          %v6296 = vadd.f32 %v6068, %v3621
          %v6297 = vadd.f32 %v6071, %v3622
          %v6298 = vadd.f32 %v6076, %v3623
          %v6299 = vadd.f32 %v6079, %v3624
          %v6300 = vadd.f32 %v6084, %v3625
          %v6301 = vadd.f32 %v6087, %v3626
          %v6302 = vadd.f32 %v6092, %v3627
          %v6303 = vadd.f32 %v6095, %v3628
          %v6304 = vadd.f32 %v6100, %v3629
          %v6305 = vadd.f32 %v6103, %v3630
          %v6306 = vadd.f32 %v6108, %v3631
          %v6307 = vadd.f32 %v6111, %v3632
          %v6308 = vadd.f32 %v6116, %v3633
          %v6309 = vadd.f32 %v6119, %v3634
          %v6310 = vadd.f32 %v6124, %v3635
          %v6311 = vadd.f32 %v6127, %v3636
          %v6312 = vadd.f32 %v6132, %v3637
          %v6313 = vadd.f32 %v6135, %v3638
          %v6314 = vadd.f32 %v6140, %v3639
          %v6315 = vadd.f32 %v6143, %v3640
          %v6316 = vadd.f32 %v6148, %v3641
          %v6317 = vadd.f32 %v6151, %v3642
          %v6318 = vadd.f32 %v6156, %v3643
          %v6319 = vadd.f32 %v6159, %v3644
          %v6320 = vadd.f32 %v6164, %v3645
          %v6321 = vadd.f32 %v6167, %v3646
          %v6322 = vadd.f32 %v6172, %v3647
          %v6323 = vadd.f32 %v6175, %v3648
          %v6324 = vadd.f32 %v6180, %v3649
          %v6325 = vadd.f32 %v6183, %v3650
          %v6326 = vadd.f32 %v6188, %v3651
          %v6327 = vadd.f32 %v6191, %v3652
          %v6328 = vadd.f32 %v6196, %v3653
          %v6329 = vadd.f32 %v6199, %v3654
          %v6330 = vadd.f32 %v6202, %v6266
          %v6331 = vadd.f32 %v6203, %v6267
          %v6332 = vadd.f32 %v6204, %v6268
          %v6333 = vadd.f32 %v6205, %v6269
          %v6334 = vadd.f32 %v6206, %v6270
          %v6335 = vadd.f32 %v6207, %v6271
          %v6336 = vadd.f32 %v6208, %v6272
          %v6337 = vadd.f32 %v6209, %v6273
          %v6338 = vadd.f32 %v6210, %v6274
          %v6339 = vadd.f32 %v6211, %v6275
          %v6340 = vadd.f32 %v6212, %v6276
          %v6341 = vadd.f32 %v6213, %v6277
          %v6342 = vadd.f32 %v6214, %v6278
          %v6343 = vadd.f32 %v6215, %v6279
          %v6344 = vadd.f32 %v6216, %v6280
          %v6345 = vadd.f32 %v6217, %v6281
          %v6346 = vadd.f32 %v6218, %v6282
          %v6347 = vadd.f32 %v6219, %v6283
          %v6348 = vadd.f32 %v6220, %v6284
          %v6349 = vadd.f32 %v6221, %v6285
          %v6350 = vadd.f32 %v6222, %v6286
          %v6351 = vadd.f32 %v6223, %v6287
          %v6352 = vadd.f32 %v6224, %v6288
          %v6353 = vadd.f32 %v6225, %v6289
          %v6354 = vadd.f32 %v6226, %v6290
          %v6355 = vadd.f32 %v6227, %v6291
          %v6356 = vadd.f32 %v6228, %v6292
          %v6357 = vadd.f32 %v6229, %v6293
          %v6358 = vadd.f32 %v6230, %v6294
          %v6359 = vadd.f32 %v6231, %v6295
          %v6360 = vadd.f32 %v6232, %v6296
          %v6361 = vadd.f32 %v6233, %v6297
          %v6362 = vadd.f32 %v6234, %v6298
          %v6363 = vadd.f32 %v6235, %v6299
          %v6364 = vadd.f32 %v6236, %v6300
          %v6365 = vadd.f32 %v6237, %v6301
          %v6366 = vadd.f32 %v6238, %v6302
          %v6367 = vadd.f32 %v6239, %v6303
          %v6368 = vadd.f32 %v6240, %v6304
          %v6369 = vadd.f32 %v6241, %v6305
          %v6370 = vadd.f32 %v6242, %v6306
          %v6371 = vadd.f32 %v6243, %v6307
          %v6372 = vadd.f32 %v6244, %v6308
          %v6373 = vadd.f32 %v6245, %v6309
          %v6374 = vadd.f32 %v6246, %v6310
          %v6375 = vadd.f32 %v6247, %v6311
          %v6376 = vadd.f32 %v6248, %v6312
          %v6377 = vadd.f32 %v6249, %v6313
          %v6378 = vadd.f32 %v6250, %v6314
          %v6379 = vadd.f32 %v6251, %v6315
          %v6380 = vadd.f32 %v6252, %v6316
          %v6381 = vadd.f32 %v6253, %v6317
          %v6382 = vadd.f32 %v6254, %v6318
          %v6383 = vadd.f32 %v6255, %v6319
          %v6384 = vadd.f32 %v6256, %v6320
          %v6385 = vadd.f32 %v6257, %v6321
          %v6386 = vadd.f32 %v6258, %v6322
          %v6387 = vadd.f32 %v6259, %v6323
          %v6388 = vadd.f32 %v6260, %v6324
          %v6389 = vadd.f32 %v6261, %v6325
          %v6390 = vadd.f32 %v6262, %v6326
          %v6391 = vadd.f32 %v6263, %v6327
          %v6392 = vadd.f32 %v6264, %v6328
          %v6393 = vadd.f32 %v6265, %v6329
          %6394 = vst [vmem:[%s306] sm:$0xff] %v6330
          %6395 = vst [vmem:[%s306 + $0x8] sm:$0xff] %v6331
          %6396 = vst [vmem:[%s306 + $0x10] sm:$0xff] %v6332
          %6397 = vst [vmem:[%s306 + $0x18] sm:$0xff] %v6333
          %6398 = vst [vmem:[%s306 + $0x20] sm:$0xff] %v6334
          %6399 = vst [vmem:[%s306 + $0x28] sm:$0xff] %v6335
          %6400 = vst [vmem:[%s306 + $0x30] sm:$0xff] %v6336
          %6401 = vst [vmem:[%s306 + $0x38] sm:$0xff] %v6337
          %6402 = vst [vmem:[%s306 + $0x40] sm:$0xff] %v6338
          %6403 = vst [vmem:[%s306 + $0x48] sm:$0xff] %v6339
          %6404 = vst [vmem:[%s306 + $0x50] sm:$0xff] %v6340
          %6405 = vst [vmem:[%s306 + $0x58] sm:$0xff] %v6341
          %6406 = vst [vmem:[%s306 + $0x60] sm:$0xff] %v6342
          %6407 = vst [vmem:[%s306 + $0x68] sm:$0xff] %v6343
          %6408 = vst [vmem:[%s306 + $0x70] sm:$0xff] %v6344
          %6409 = vst [vmem:[%s306 + $0x78] sm:$0xff] %v6345
          %6410 = vst [vmem:[%s306 + $0x80] sm:$0xff] %v6346
          %6411 = vst [vmem:[%s306 + $0x88] sm:$0xff] %v6347
          %6412 = vst [vmem:[%s306 + $0x90] sm:$0xff] %v6348
          %6413 = vst [vmem:[%s306 + $0x98] sm:$0xff] %v6349
          %6414 = vst [vmem:[%s306 + $0xa0] sm:$0xff] %v6350
          %6415 = vst [vmem:[%s306 + $0xa8] sm:$0xff] %v6351
          %6416 = vst [vmem:[%s306 + $0xb0] sm:$0xff] %v6352
          %6417 = vst [vmem:[%s306 + $0xb8] sm:$0xff] %v6353
          %6418 = vst [vmem:[%s306 + $0xc0] sm:$0xff] %v6354
          %6419 = vst [vmem:[%s306 + $0xc8] sm:$0xff] %v6355
          %6420 = vst [vmem:[%s306 + $0xd0] sm:$0xff] %v6356
          %6421 = vst [vmem:[%s306 + $0xd8] sm:$0xff] %v6357
          %6422 = vst [vmem:[%s306 + $0xe0] sm:$0xff] %v6358
          %6423 = vst [vmem:[%s306 + $0xe8] sm:$0xff] %v6359
          %6424 = vst [vmem:[%s306 + $0xf0] sm:$0xff] %v6360
          %6425 = vst [vmem:[%s306 + $0xf8] sm:$0xff] %v6361
          %6426 = vst [vmem:[%s306 + $0x100] sm:$0xff] %v6362
          %6427 = vst [vmem:[%s306 + $0x108] sm:$0xff] %v6363
          %6428 = vst [vmem:[%s306 + $0x110] sm:$0xff] %v6364
          %6429 = vst [vmem:[%s306 + $0x118] sm:$0xff] %v6365
          %6430 = vst [vmem:[%s306 + $0x120] sm:$0xff] %v6366
          %6431 = vst [vmem:[%s306 + $0x128] sm:$0xff] %v6367
          %6432 = vst [vmem:[%s306 + $0x130] sm:$0xff] %v6368
          %6433 = vst [vmem:[%s306 + $0x138] sm:$0xff] %v6369
          %6434 = vst [vmem:[%s306 + $0x140] sm:$0xff] %v6370
          %6435 = vst [vmem:[%s306 + $0x148] sm:$0xff] %v6371
          %6436 = vst [vmem:[%s306 + $0x150] sm:$0xff] %v6372
          %6437 = vst [vmem:[%s306 + $0x158] sm:$0xff] %v6373
          %6438 = vst [vmem:[%s306 + $0x160] sm:$0xff] %v6374
          %6439 = vst [vmem:[%s306 + $0x168] sm:$0xff] %v6375
          %6440 = vst [vmem:[%s306 + $0x170] sm:$0xff] %v6376
          %6441 = vst [vmem:[%s306 + $0x178] sm:$0xff] %v6377
          %6442 = vst [vmem:[%s306 + $0x180] sm:$0xff] %v6378
          %6443 = vst [vmem:[%s306 + $0x188] sm:$0xff] %v6379
          %6444 = vst [vmem:[%s306 + $0x190] sm:$0xff] %v6380
          %6445 = vst [vmem:[%s306 + $0x198] sm:$0xff] %v6381
          %6446 = vst [vmem:[%s306 + $0x1a0] sm:$0xff] %v6382
          %6447 = vst [vmem:[%s306 + $0x1a8] sm:$0xff] %v6383
          %6448 = vst [vmem:[%s306 + $0x1b0] sm:$0xff] %v6384
          %6449 = vst [vmem:[%s306 + $0x1b8] sm:$0xff] %v6385
          %6450 = vst [vmem:[%s306 + $0x1c0] sm:$0xff] %v6386
          %6451 = vst [vmem:[%s306 + $0x1c8] sm:$0xff] %v6387
          %6452 = vst [vmem:[%s306 + $0x1d0] sm:$0xff] %v6388
          %6453 = vst [vmem:[%s306 + $0x1d8] sm:$0xff] %v6389
          %6454 = vst [vmem:[%s306 + $0x1e0] sm:$0xff] %v6390
          %6455 = vst [vmem:[%s306 + $0x1e8] sm:$0xff] %v6391
          %6456 = vst [vmem:[%s306 + $0x1f0] sm:$0xff] %v6392
          %6457 = vst [vmem:[%s306 + $0x1f8] sm:$0xff] %v6393
        $region60: #{tpu_custom_call.1} parent=35 // pred_fallthru
          _
        %s6458 = sand.u32 %s143, 1
        %s6459 = scalar_lea.sflag [#allocation4], %s6458
        %s6460 = sand.u32 %s143, 1
        %s6461 = smul.addr %s6460, 512
        %s6462 = scalar_lea.vmem [#allocation9], %s6461
        // Predicated region
        $region61: #{tpu_custom_call.1} parent=35 // pred_check
          %p6463 = pneg %p153
        $region62: #{tpu_custom_call.1} parent=35 // pred_check_branch
          %6465 = sbr.rel (%p6463) target = $region64
        $region63: #{tpu_custom_call.1} parent=35 // pred_region
          %s6466 = smul.u32 64, %s26
          %s6468 = ssub.s32 8192, 8192
          %6469 = vsyncadd %s6459, %s6468
          %s6470 = smul.addr %s6466, 128
          %s6471 = scalar_lea.hbm %s4, %s6470
          %s6472 = sshll.u32 %s6462, 4
          %s6473 = int_to_ptr.vmem [resolvable:$true] %s6472
          %6478 = dma.vmem_to_hbm [thread:$0]  %s6473, 8192, %s6471, %s6459, 128, 128, 8
        $region64: #{tpu_custom_call.1} parent=35 // pred_fallthru
          _
      $region36: #{tpu_custom_call.1} parent=5 // pred_fallthru
        _
      %p6479 = scmp.le.s32.totalorder 2, %s17
      // Predicated region
      $region65: #{tpu_custom_call.1} parent=5 // pred_check
        %p6480 = pneg %p6479
      $region66: #{tpu_custom_call.1} parent=5 // pred_check_branch
        %6482 = sbr.rel (%p6480) target = $region68
      $region67: #{tpu_custom_call.1} parent=5 // pred_region
        %s6483 = ssub.s32 %s17, 2
        // Predicated region
        $region69: #{tpu_custom_call.1} parent=67 // pred_check
          %p6484 = pneg %p159
        $region70: #{tpu_custom_call.1} parent=67 // pred_check_branch
          %6486 = sbr.rel (%p6484) target = $region72
        $region71: #{tpu_custom_call.1} parent=67 // pred_region
          %s6487 = sand.u32 %s144, 1
          %s6488 = scalar_lea.sflag [#allocation4], %s6487
          %s6489 = sand.u32 %s144, 1
          %s6490 = smul.addr %s6489, 512
          %s6491 = scalar_lea.vmem [#allocation9], %s6490
          %6492 = dma.done %s6488, 8192
        $region72: #{tpu_custom_call.1} parent=67 // pred_fallthru
          _
      $region68: #{tpu_custom_call.1} parent=5 // pred_fallthru
        _
    $region6: #{tpu_custom_call.1} parent=1 // loop_footer
      %s21 = sadd.s32 1, %s17
    $region7: #{tpu_custom_call.1} parent=1 // loop_footer_branch
      %16 = sbr.rel target = $region3
    $region8: #{tpu_custom_call.1} parent=1 // loop_exit
      _
    %6493 = vsyncpa [#allocation3], 1
    %s6494 = scalar_lea.sflag [#allocation3], 1
    %6495 = vsyncpa %s6494, 1
    %6496 = vsyncpa [#allocation6], 1
    %6497 = vsyncpa [#allocation4], 1
    %s6498 = scalar_lea.sflag [#allocation4], 1
    %6499 = vsyncpa %s6498, 1

</llo_original>
